<compile_context>
chip_gen: v6e
topology: v6e:2x2x1
jax: 0.10.0
libtpu: 0.0.40
codegen_flags: <defaults>
</compile_context>

<pallas_src>
import functools

import jax
import jax.numpy as jnp
import numpy as np
from jax.experimental import pallas as pl
from jax.experimental.pallas import tpu as pltpu

EPS = 1e-5  # nn.InstanceNorm2d default eps


def resnet_block_kernel(xpad_ref, w_ref, o_ref, *, H, W, Wp, tile_rows):
    # xpad_ref : (1, P_rows, Cp) bf16  reflect-padded image, rows of pitch Wp,
    #                                  flattened, plus zero tail rows
    # w_ref    : (9, Cp, Cp)     bf16  conv taps, [ky*3+kx, Cin, Cout]
    # o_ref    : (1, L, Cp)      f32   output slab; also used as the staging
    #                                  buffer for the un-normalized conv tiles
    L = H * Wp
    Cp = o_ref.shape[2]
    n_tiles = L // tile_rows

    # Validity predicate: slab row i is a real output pixel iff (i % Wp) < W.
    # tile_rows is a multiple of Wp, so the predicate is identical for every
    # tile -- build it once (hoisted; JAX does not CSE broadcast_in_dim).
    col = jax.lax.broadcasted_iota(jnp.int32, (tile_rows, Cp), 0) % Wp
    valid = col < W

    inv_n = 1.0 / float(H * W)
    s1 = jnp.zeros((1, Cp), jnp.float32)
    s2 = jnp.zeros((1, Cp), jnp.float32)

    # ---- phase A: 3x3 conv as nine shifted MXU matmuls, row-tiled ----------
    # Each tap's LHS is a pure sublane slice of the flattened padded image
    # (no patch materialization); the f32 accumulator is tile-sized.
    for t in range(n_tiles):
        base = t * tile_rows
        acc = jnp.zeros((tile_rows, Cp), jnp.float32)
        for dy in range(3):
            for dx in range(3):
                off = base + dy * Wp + dx
                acc = acc + jnp.dot(xpad_ref[0, off:off + tile_rows, :],
                                    w_ref[dy * 3 + dx],
                                    preferred_element_type=jnp.float32)
        am = jnp.where(valid, acc, 0.0)
        s1 = s1 + jnp.sum(am, axis=0, keepdims=True)
        s2 = s2 + jnp.sum(am * acc, axis=0, keepdims=True)
        o_ref[0, base:base + tile_rows, :] = acc          # stage conv tile

    # InstanceNorm2d (no affine, biased variance), one-pass masked statistics.
    mean = s1 * inv_n
    var = jnp.maximum(s2 * inv_n - mean * mean, 0.0)
    inv_std = jax.lax.rsqrt(var + EPS)

    # ---- phase B: normalize + residual add, per tile ------------------------
    # Residual is the interior of the padded slab (centre-tap offset Wp+1).
    for t in range(n_tiles):
        base = t * tile_rows
        acc = o_ref[0, base:base + tile_rows, :]
        resid = xpad_ref[0, base + Wp + 1:base + Wp + 1 + tile_rows, :]
        o_ref[0, base:base + tile_rows, :] = (
            resid.astype(jnp.float32) + (acc - mean) * inv_std)


def _pick_tile_rows(H, Wp, target_rows=256):
    """Largest multiple of Wp that divides H*Wp and is <= target_rows."""
    k_best = 1
    for k in range(1, H + 1):
        if H % k == 0 and k * Wp <= target_rows:
            k_best = k
    return k_best * Wp


def resnet_block_pallas(x_nchw, w_oihw, bias):
    """x_nchw: (N,C,H,W) f32; w_oihw: (C,C,3,3) f32 OIHW; bias: (C,) f32.

    `bias` is intentionally unused by the kernel: with a no-affine
    InstanceNorm2d directly after the conv, a per-channel constant bias is
    cancelled exactly by the mean subtraction (variance is shift-invariant).
    """
    del bias  # mathematically dead -- see docstring / module semantics proof.
    N, C, H, W = x_nchw.shape
    Cp = ((C + 127) // 128) * 128            # lane-dense channel count
    Wp = ((W + 2 + 7) // 8) * 8              # 8-sublane-aligned row pitch
    L = H * Wp                               # slab rows covering every output
    P = (H + 2) * Wp                         # padded-image rows in the slab
    P_rows = ((P + 2 + 7) // 8) * 8          # +2 tail rows, sublane-rounded

    # --- wrapper glue (pure data movement): bf16 cast first (half the bytes),
    #     NHWC transpose, reflection pad, zero pitch/lane padding, flatten ---
    x_nhwc = jnp.transpose(x_nchw.astype(jnp.bfloat16), (0, 2, 3, 1))
    xpad = jnp.pad(x_nhwc, ((0, 0), (1, 1), (1, 1), (0, 0)), mode="reflect")
    xpad = jnp.pad(xpad, ((0, 0), (0, 0), (0, Wp - (W + 2)), (0, Cp - C)))
    xflat = xpad.reshape(N, P, Cp)
    xflat = jnp.pad(xflat, ((0, 0), (0, P_rows - P), (0, 0)))

    w = jnp.transpose(w_oihw, (2, 3, 1, 0))                    # (3,3,Cin,Cout)
    w = jnp.pad(w, ((0, 0), (0, 0), (0, Cp - C), (0, Cp - C)))
    w9 = w.reshape(9, Cp, Cp).astype(jnp.bfloat16)

    tile_rows = _pick_tile_rows(H, Wp)
    kernel = functools.partial(resnet_block_kernel,
                               H=H, W=W, Wp=Wp, tile_rows=tile_rows)

    # VMEM budget from actual block sizes (double-buffered in/out + weights)
    # with headroom, capped below v7x's 64 MiB physical VMEM.
    block_bytes = (2 * P_rows * Cp * 2       # input slab, 2 buffers, bf16
                   + 2 * 9 * Cp * Cp * 2     # weights, 2 buffers, bf16
                   + 2 * L * Cp * 4)         # output slab, 2 buffers, f32
    vmem_limit = int(min(max(2 * block_bytes, 32 * 1024 * 1024),
                         48 * 1024 * 1024))

    out_slab = pl.pallas_call(
        kernel,
        out_shape=jax.ShapeDtypeStruct((N, L, Cp), jnp.float32),
        grid_spec=pltpu.PrefetchScalarGridSpec(
            num_scalar_prefetch=0,
            grid=(N,),
            in_specs=[
                pl.BlockSpec((1, P_rows, Cp), lambda n: (n, 0, 0)),
                pl.BlockSpec((9, Cp, Cp), lambda n: (0, 0, 0)),
            ],
            out_specs=pl.BlockSpec((1, L, Cp), lambda n: (n, 0, 0)),
        ),
        compiler_params=pltpu.CompilerParams(
            dimension_semantics=("parallel",),
            vmem_limit_bytes=vmem_limit),
    )(xflat, w9)

    # Drop the pitch-padding / wrap-around columns and the channel padding;
    # this slice fuses into the NHWC->NCHW transpose that is needed anyway.
    out = out_slab.reshape(N, H, Wp, Cp)[:, :, :W, :C]
    return jnp.transpose(out, (0, 3, 1, 2))


def resnet_block_reference(x_nchw, w_oihw, bias, *, conv_dtype=jnp.float32):
    """Pure-JAX reference of the PyTorch module (bias INCLUDED, proving that
    the kernel's bias removal is exact). conv_dtype=bfloat16 mirrors the
    kernel's MXU operand precision; accumulation / norm / residual stay f32."""
    xq = x_nchw.astype(conv_dtype).astype(jnp.float32)
    xp = jnp.pad(xq, ((0, 0), (0, 0), (1, 1), (1, 1)), mode="reflect")
    y = jax.lax.conv_general_dilated(
        xp.astype(conv_dtype), w_oihw.astype(conv_dtype),
        window_strides=(1, 1), padding="VALID",
        dimension_numbers=("NCHW", "OIHW", "NCHW"),
        preferred_element_type=jnp.float32)
    y = y + bias[None, :, None, None].astype(jnp.float32)
    mean = jnp.mean(y, axis=(2, 3), keepdims=True)
    var = jnp.mean((y - mean) ** 2, axis=(2, 3), keepdims=True)
    y = (y - mean) * jax.lax.rsqrt(var + EPS)
    return xq + y


if __name__ == "__main__":
    key = jax.random.PRNGKey(0)
    kx, kw, kb = jax.random.split(key, 3)

    N, C, H, W = 2, 4, 16, 16
    x = jax.random.normal(kx, (N, C, H, W), dtype=jnp.float32)
    w = 0.1 * jax.random.normal(kw, (C, C, 3, 3), dtype=jnp.float32)  # OIHW
    b = 0.1 * jax.random.normal(kb, (C,), dtype=jnp.float32)

    out = jax.block_until_ready(resnet_block_pallas(x, w, b))
    assert out.shape == (N, C, H, W)

    # Tight check vs. a reference matching the kernel's bf16 MXU-operand
    # precision (also verifies the exact bias cancellation).
    ref_bf16 = jax.block_until_ready(
        resnet_block_reference(x, w, b, conv_dtype=jnp.bfloat16))
    np.testing.assert_allclose(np.asarray(out), np.asarray(ref_bf16),
                               rtol=2e-3, atol=2e-3)

    # Loose sanity check vs. exact f32 module semantics (difference is only the
    # bf16 operand rounding of the conv inputs / residual).
    ref_f32 = jax.block_until_ready(resnet_block_reference(x, w, b))
    np.testing.assert_allclose(np.asarray(out), np.asarray(ref_f32),
                               rtol=5e-2, atol=0.25)

    print("KERNEL_OK")
</pallas_src>

<mosaic_0001>
module attributes {stable_mosaic.version = 11 : i64} {
  func.func @resnet_block_kernel(%arg0: i32, %arg1: memref<1x440x128xbf16, #tpu.memory_space<vmem>>, %arg2: memref<9x128x128xbf16, #tpu.memory_space<vmem>>, %arg3: memref<1x384x128xf32, #tpu.memory_space<vmem>>) attributes {dimension_semantics = [#tpu.dimension_semantics<parallel>], iteration_bounds = array<i64: 2>, scalar_prefetch = 0 : i64, scratch_operands = 0 : i64, tpu.core_type = #tpu.core_type<tc>, window_params = [{transform_indices = @transform_0, window_bounds = array<i64: 1, 440, 128>}, {pipeline_mode = #tpu.pipeline_mode<synchronous>, transform_indices = @transform_1, window_bounds = array<i64: 9, 128, 128>}, {transform_indices = @transform_2, window_bounds = array<i64: 1, 384, 128>}]} {
    %0 = tpu.iota {dimensions = array<i32: 0>} : vector<192x128xi32>
    %c24_i32 = arith.constant 24 : i32
    %c0_i32 = arith.constant 0 : i32
    %1 = arith.cmpi eq, %c24_i32, %c0_i32 : i32
    %c1_i32 = arith.constant 1 : i32
    %2 = arith.select %1, %c1_i32, %c24_i32 : i32
    %3 = vector.broadcast %2 : i32 to vector<192x128xi32>
    %4 = arith.remsi %0, %3 : vector<192x128xi32>
    %c0_i32_0 = arith.constant 0 : i32
    %5 = vector.broadcast %c0_i32_0 : i32 to vector<192x128xi32>
    %6 = arith.cmpi ne, %4, %5 : vector<192x128xi32>
    %c0_i32_1 = arith.constant 0 : i32
    %7 = vector.broadcast %c0_i32_1 : i32 to vector<192x128xi32>
    %8 = arith.cmpi slt, %4, %7 : vector<192x128xi32>
    %c0_i32_2 = arith.constant 0 : i32
    %9 = arith.cmpi slt, %2, %c0_i32_2 : i32
    %10 = vector.broadcast %9 : i1 to vector<192x128xi1>
    %11 = vector.broadcast %10 : vector<192x128xi1> to vector<192x128xi1>
    %12 = arith.xori %8, %11 : vector<192x128xi1>
    %13 = arith.andi %12, %6 : vector<192x128xi1>
    %14 = vector.broadcast %2 : i32 to vector<192x128xi32>
    %15 = arith.addi %4, %14 : vector<192x128xi32>
    %16 = arith.select %13, %15, %4 : vector<192x128xi1>, vector<192x128xi32>
    %c16_i32 = arith.constant 16 : i32
    %17 = vector.broadcast %c16_i32 : i32 to vector<192x128xi32>
    %18 = arith.cmpi slt, %16, %17 : vector<192x128xi32>
    %cst = arith.constant 0.000000e+00 : f32
    %19 = vector.broadcast %cst : f32 to vector<1x128xf32>
    %cst_3 = arith.constant 0.000000e+00 : f32
    %20 = vector.broadcast %cst_3 : f32 to vector<1x128xf32>
    %cst_4 = arith.constant 0.000000e+00 : f32
    %21 = vector.broadcast %cst_4 : f32 to vector<192x128xf32>
    %c0 = arith.constant 0 : index
    %c0_5 = arith.constant 0 : index
    %c0_6 = arith.constant 0 : index
    %22 = vector.load %arg1[%c0, %c0_5, %c0_6] : memref<1x440x128xbf16, #tpu.memory_space<vmem>>, vector<1x192x128xbf16>
    %23 = vector.shape_cast %22 : vector<1x192x128xbf16> to vector<192x128xbf16>
    %c0_7 = arith.constant 0 : index
    %c0_8 = arith.constant 0 : index
    %c0_9 = arith.constant 0 : index
    %24 = vector.load %arg2[%c0_7, %c0_8, %c0_9] : memref<9x128x128xbf16, #tpu.memory_space<vmem>>, vector<1x128x128xbf16>
    %25 = vector.shape_cast %24 : vector<1x128x128xbf16> to vector<128x128xbf16>
    %cst_10 = arith.constant dense<0.000000e+00> : vector<192x128xf32>
    %26 = tpu.matmul %23, %25, %cst_10 {dimension_numbers = #tpu.dot_dimension_numbers<[1], [0], [0], [1], [0, 0, 1, 1], [], []>} : vector<192x128xbf16>, vector<128x128xbf16>, vector<192x128xf32> -> vector<192x128xf32>
    %27 = arith.addf %21, %26 : vector<192x128xf32>
    %c0_11 = arith.constant 0 : index
    %c1 = arith.constant 1 : index
    %c0_12 = arith.constant 0 : index
    %28 = vector.load %arg1[%c0_11, %c1, %c0_12] : memref<1x440x128xbf16, #tpu.memory_space<vmem>>, vector<1x192x128xbf16>
    %29 = vector.shape_cast %28 : vector<1x192x128xbf16> to vector<192x128xbf16>
    %c1_13 = arith.constant 1 : index
    %c0_14 = arith.constant 0 : index
    %c0_15 = arith.constant 0 : index
    %30 = vector.load %arg2[%c1_13, %c0_14, %c0_15] : memref<9x128x128xbf16, #tpu.memory_space<vmem>>, vector<1x128x128xbf16>
    %31 = vector.shape_cast %30 : vector<1x128x128xbf16> to vector<128x128xbf16>
    %cst_16 = arith.constant dense<0.000000e+00> : vector<192x128xf32>
    %32 = tpu.matmul %29, %31, %cst_16 {dimension_numbers = #tpu.dot_dimension_numbers<[1], [0], [0], [1], [0, 0, 1, 1], [], []>} : vector<192x128xbf16>, vector<128x128xbf16>, vector<192x128xf32> -> vector<192x128xf32>
    %33 = arith.addf %27, %32 : vector<192x128xf32>
    %c0_17 = arith.constant 0 : index
    %c2 = arith.constant 2 : index
    %c0_18 = arith.constant 0 : index
    %34 = vector.load %arg1[%c0_17, %c2, %c0_18] : memref<1x440x128xbf16, #tpu.memory_space<vmem>>, vector<1x192x128xbf16>
    %35 = vector.shape_cast %34 : vector<1x192x128xbf16> to vector<192x128xbf16>
    %c2_19 = arith.constant 2 : index
    %c0_20 = arith.constant 0 : index
    %c0_21 = arith.constant 0 : index
    %36 = vector.load %arg2[%c2_19, %c0_20, %c0_21] : memref<9x128x128xbf16, #tpu.memory_space<vmem>>, vector<1x128x128xbf16>
    %37 = vector.shape_cast %36 : vector<1x128x128xbf16> to vector<128x128xbf16>
    %cst_22 = arith.constant dense<0.000000e+00> : vector<192x128xf32>
    %38 = tpu.matmul %35, %37, %cst_22 {dimension_numbers = #tpu.dot_dimension_numbers<[1], [0], [0], [1], [0, 0, 1, 1], [], []>} : vector<192x128xbf16>, vector<128x128xbf16>, vector<192x128xf32> -> vector<192x128xf32>
    %39 = arith.addf %33, %38 : vector<192x128xf32>
    %c0_23 = arith.constant 0 : index
    %c24 = arith.constant 24 : index
    %c0_24 = arith.constant 0 : index
    %40 = vector.load %arg1[%c0_23, %c24, %c0_24] : memref<1x440x128xbf16, #tpu.memory_space<vmem>>, vector<1x192x128xbf16>
    %41 = vector.shape_cast %40 : vector<1x192x128xbf16> to vector<192x128xbf16>
    %c3 = arith.constant 3 : index
    %c0_25 = arith.constant 0 : index
    %c0_26 = arith.constant 0 : index
    %42 = vector.load %arg2[%c3, %c0_25, %c0_26] : memref<9x128x128xbf16, #tpu.memory_space<vmem>>, vector<1x128x128xbf16>
    %43 = vector.shape_cast %42 : vector<1x128x128xbf16> to vector<128x128xbf16>
    %cst_27 = arith.constant dense<0.000000e+00> : vector<192x128xf32>
    %44 = tpu.matmul %41, %43, %cst_27 {dimension_numbers = #tpu.dot_dimension_numbers<[1], [0], [0], [1], [0, 0, 1, 1], [], []>} : vector<192x128xbf16>, vector<128x128xbf16>, vector<192x128xf32> -> vector<192x128xf32>
    %45 = arith.addf %39, %44 : vector<192x128xf32>
    %c0_28 = arith.constant 0 : index
    %c25 = arith.constant 25 : index
    %c0_29 = arith.constant 0 : index
    %46 = vector.load %arg1[%c0_28, %c25, %c0_29] : memref<1x440x128xbf16, #tpu.memory_space<vmem>>, vector<1x192x128xbf16>
    %47 = vector.shape_cast %46 : vector<1x192x128xbf16> to vector<192x128xbf16>
    %c4 = arith.constant 4 : index
    %c0_30 = arith.constant 0 : index
    %c0_31 = arith.constant 0 : index
    %48 = vector.load %arg2[%c4, %c0_30, %c0_31] : memref<9x128x128xbf16, #tpu.memory_space<vmem>>, vector<1x128x128xbf16>
    %49 = vector.shape_cast %48 : vector<1x128x128xbf16> to vector<128x128xbf16>
    %cst_32 = arith.constant dense<0.000000e+00> : vector<192x128xf32>
    %50 = tpu.matmul %47, %49, %cst_32 {dimension_numbers = #tpu.dot_dimension_numbers<[1], [0], [0], [1], [0, 0, 1, 1], [], []>} : vector<192x128xbf16>, vector<128x128xbf16>, vector<192x128xf32> -> vector<192x128xf32>
    %51 = arith.addf %45, %50 : vector<192x128xf32>
    %c0_33 = arith.constant 0 : index
    %c26 = arith.constant 26 : index
    %c0_34 = arith.constant 0 : index
    %52 = vector.load %arg1[%c0_33, %c26, %c0_34] : memref<1x440x128xbf16, #tpu.memory_space<vmem>>, vector<1x192x128xbf16>
    %53 = vector.shape_cast %52 : vector<1x192x128xbf16> to vector<192x128xbf16>
    %c5 = arith.constant 5 : index
    %c0_35 = arith.constant 0 : index
    %c0_36 = arith.constant 0 : index
    %54 = vector.load %arg2[%c5, %c0_35, %c0_36] : memref<9x128x128xbf16, #tpu.memory_space<vmem>>, vector<1x128x128xbf16>
    %55 = vector.shape_cast %54 : vector<1x128x128xbf16> to vector<128x128xbf16>
    %cst_37 = arith.constant dense<0.000000e+00> : vector<192x128xf32>
    %56 = tpu.matmul %53, %55, %cst_37 {dimension_numbers = #tpu.dot_dimension_numbers<[1], [0], [0], [1], [0, 0, 1, 1], [], []>} : vector<192x128xbf16>, vector<128x128xbf16>, vector<192x128xf32> -> vector<192x128xf32>
    %57 = arith.addf %51, %56 : vector<192x128xf32>
    %c0_38 = arith.constant 0 : index
    %c48 = arith.constant 48 : index
    %c0_39 = arith.constant 0 : index
    %58 = vector.load %arg1[%c0_38, %c48, %c0_39] : memref<1x440x128xbf16, #tpu.memory_space<vmem>>, vector<1x192x128xbf16>
    %59 = vector.shape_cast %58 : vector<1x192x128xbf16> to vector<192x128xbf16>
    %c6 = arith.constant 6 : index
    %c0_40 = arith.constant 0 : index
    %c0_41 = arith.constant 0 : index
    %60 = vector.load %arg2[%c6, %c0_40, %c0_41] : memref<9x128x128xbf16, #tpu.memory_space<vmem>>, vector<1x128x128xbf16>
    %61 = vector.shape_cast %60 : vector<1x128x128xbf16> to vector<128x128xbf16>
    %cst_42 = arith.constant dense<0.000000e+00> : vector<192x128xf32>
    %62 = tpu.matmul %59, %61, %cst_42 {dimension_numbers = #tpu.dot_dimension_numbers<[1], [0], [0], [1], [0, 0, 1, 1], [], []>} : vector<192x128xbf16>, vector<128x128xbf16>, vector<192x128xf32> -> vector<192x128xf32>
    %63 = arith.addf %57, %62 : vector<192x128xf32>
    %c0_43 = arith.constant 0 : index
    %c49 = arith.constant 49 : index
    %c0_44 = arith.constant 0 : index
    %64 = vector.load %arg1[%c0_43, %c49, %c0_44] : memref<1x440x128xbf16, #tpu.memory_space<vmem>>, vector<1x192x128xbf16>
    %65 = vector.shape_cast %64 : vector<1x192x128xbf16> to vector<192x128xbf16>
    %c7 = arith.constant 7 : index
    %c0_45 = arith.constant 0 : index
    %c0_46 = arith.constant 0 : index
    %66 = vector.load %arg2[%c7, %c0_45, %c0_46] : memref<9x128x128xbf16, #tpu.memory_space<vmem>>, vector<1x128x128xbf16>
    %67 = vector.shape_cast %66 : vector<1x128x128xbf16> to vector<128x128xbf16>
    %cst_47 = arith.constant dense<0.000000e+00> : vector<192x128xf32>
    %68 = tpu.matmul %65, %67, %cst_47 {dimension_numbers = #tpu.dot_dimension_numbers<[1], [0], [0], [1], [0, 0, 1, 1], [], []>} : vector<192x128xbf16>, vector<128x128xbf16>, vector<192x128xf32> -> vector<192x128xf32>
    %69 = arith.addf %63, %68 : vector<192x128xf32>
    %c0_48 = arith.constant 0 : index
    %c50 = arith.constant 50 : index
    %c0_49 = arith.constant 0 : index
    %70 = vector.load %arg1[%c0_48, %c50, %c0_49] : memref<1x440x128xbf16, #tpu.memory_space<vmem>>, vector<1x192x128xbf16>
    %71 = vector.shape_cast %70 : vector<1x192x128xbf16> to vector<192x128xbf16>
    %c8 = arith.constant 8 : index
    %c0_50 = arith.constant 0 : index
    %c0_51 = arith.constant 0 : index
    %72 = vector.load %arg2[%c8, %c0_50, %c0_51] : memref<9x128x128xbf16, #tpu.memory_space<vmem>>, vector<1x128x128xbf16>
    %73 = vector.shape_cast %72 : vector<1x128x128xbf16> to vector<128x128xbf16>
    %cst_52 = arith.constant dense<0.000000e+00> : vector<192x128xf32>
    %74 = tpu.matmul %71, %73, %cst_52 {dimension_numbers = #tpu.dot_dimension_numbers<[1], [0], [0], [1], [0, 0, 1, 1], [], []>} : vector<192x128xbf16>, vector<128x128xbf16>, vector<192x128xf32> -> vector<192x128xf32>
    %75 = arith.addf %69, %74 : vector<192x128xf32>
    %cst_53 = arith.constant 0.000000e+00 : f32
    %76 = vector.broadcast %cst_53 : f32 to vector<192x128xf32>
    %77 = arith.select %18, %75, %76 : vector<192x128xi1>, vector<192x128xf32>
    %cst_54 = arith.constant dense<0.000000e+00> : vector<128xf32>
    %78 = vector.multi_reduction <add>, %77, %cst_54 [0] : vector<192x128xf32> to vector<128xf32>
    %79 = vector.shape_cast %78 : vector<128xf32> to vector<1x128xf32>
    %80 = arith.addf %19, %79 : vector<1x128xf32>
    %81 = arith.mulf %77, %75 : vector<192x128xf32>
    %cst_55 = arith.constant dense<0.000000e+00> : vector<128xf32>
    %82 = vector.multi_reduction <add>, %81, %cst_55 [0] : vector<192x128xf32> to vector<128xf32>
    %83 = vector.shape_cast %82 : vector<128xf32> to vector<1x128xf32>
    %84 = arith.addf %20, %83 : vector<1x128xf32>
    %c0_56 = arith.constant 0 : index
    %c0_57 = arith.constant 0 : index
    %c0_58 = arith.constant 0 : index
    %85 = vector.load %arg3[%c0_56, %c0_57, %c0_58] : memref<1x384x128xf32, #tpu.memory_space<vmem>>, vector<1x192x128xf32>
    %86 = vector.shape_cast %85 : vector<1x192x128xf32> to vector<192x128xf32>
    %87 = vector.shape_cast %75 : vector<192x128xf32> to vector<1x192x128xf32>
    tpu.vector_store %arg3[%c0_56, %c0_57, %c0_58], %87 {strides = array<i32>} : memref<1x384x128xf32, #tpu.memory_space<vmem>>, vector<1x192x128xf32>,
    %cst_59 = arith.constant 0.000000e+00 : f32
    %88 = vector.broadcast %cst_59 : f32 to vector<192x128xf32>
    %c0_60 = arith.constant 0 : index
    %c192 = arith.constant 192 : index
    %c0_61 = arith.constant 0 : index
    %89 = vector.load %arg1[%c0_60, %c192, %c0_61] : memref<1x440x128xbf16, #tpu.memory_space<vmem>>, vector<1x192x128xbf16>
    %90 = vector.shape_cast %89 : vector<1x192x128xbf16> to vector<192x128xbf16>
    %c0_62 = arith.constant 0 : index
    %c0_63 = arith.constant 0 : index
    %c0_64 = arith.constant 0 : index
    %91 = vector.load %arg2[%c0_62, %c0_63, %c0_64] : memref<9x128x128xbf16, #tpu.memory_space<vmem>>, vector<1x128x128xbf16>
    %92 = vector.shape_cast %91 : vector<1x128x128xbf16> to vector<128x128xbf16>
    %cst_65 = arith.constant dense<0.000000e+00> : vector<192x128xf32>
    %93 = tpu.matmul %90, %92, %cst_65 {dimension_numbers = #tpu.dot_dimension_numbers<[1], [0], [0], [1], [0, 0, 1, 1], [], []>} : vector<192x128xbf16>, vector<128x128xbf16>, vector<192x128xf32> -> vector<192x128xf32>
    %94 = arith.addf %88, %93 : vector<192x128xf32>
    %c0_66 = arith.constant 0 : index
    %c193 = arith.constant 193 : index
    %c0_67 = arith.constant 0 : index
    %95 = vector.load %arg1[%c0_66, %c193, %c0_67] : memref<1x440x128xbf16, #tpu.memory_space<vmem>>, vector<1x192x128xbf16>
    %96 = vector.shape_cast %95 : vector<1x192x128xbf16> to vector<192x128xbf16>
    %c1_68 = arith.constant 1 : index
    %c0_69 = arith.constant 0 : index
    %c0_70 = arith.constant 0 : index
    %97 = vector.load %arg2[%c1_68, %c0_69, %c0_70] : memref<9x128x128xbf16, #tpu.memory_space<vmem>>, vector<1x128x128xbf16>
    %98 = vector.shape_cast %97 : vector<1x128x128xbf16> to vector<128x128xbf16>
    %cst_71 = arith.constant dense<0.000000e+00> : vector<192x128xf32>
    %99 = tpu.matmul %96, %98, %cst_71 {dimension_numbers = #tpu.dot_dimension_numbers<[1], [0], [0], [1], [0, 0, 1, 1], [], []>} : vector<192x128xbf16>, vector<128x128xbf16>, vector<192x128xf32> -> vector<192x128xf32>
    %100 = arith.addf %94, %99 : vector<192x128xf32>
    %c0_72 = arith.constant 0 : index
    %c194 = arith.constant 194 : index
    %c0_73 = arith.constant 0 : index
    %101 = vector.load %arg1[%c0_72, %c194, %c0_73] : memref<1x440x128xbf16, #tpu.memory_space<vmem>>, vector<1x192x128xbf16>
    %102 = vector.shape_cast %101 : vector<1x192x128xbf16> to vector<192x128xbf16>
    %c2_74 = arith.constant 2 : index
    %c0_75 = arith.constant 0 : index
    %c0_76 = arith.constant 0 : index
    %103 = vector.load %arg2[%c2_74, %c0_75, %c0_76] : memref<9x128x128xbf16, #tpu.memory_space<vmem>>, vector<1x128x128xbf16>
    %104 = vector.shape_cast %103 : vector<1x128x128xbf16> to vector<128x128xbf16>
    %cst_77 = arith.constant dense<0.000000e+00> : vector<192x128xf32>
    %105 = tpu.matmul %102, %104, %cst_77 {dimension_numbers = #tpu.dot_dimension_numbers<[1], [0], [0], [1], [0, 0, 1, 1], [], []>} : vector<192x128xbf16>, vector<128x128xbf16>, vector<192x128xf32> -> vector<192x128xf32>
    %106 = arith.addf %100, %105 : vector<192x128xf32>
    %c0_78 = arith.constant 0 : index
    %c216 = arith.constant 216 : index
    %c0_79 = arith.constant 0 : index
    %107 = vector.load %arg1[%c0_78, %c216, %c0_79] : memref<1x440x128xbf16, #tpu.memory_space<vmem>>, vector<1x192x128xbf16>
    %108 = vector.shape_cast %107 : vector<1x192x128xbf16> to vector<192x128xbf16>
    %c3_80 = arith.constant 3 : index
    %c0_81 = arith.constant 0 : index
    %c0_82 = arith.constant 0 : index
    %109 = vector.load %arg2[%c3_80, %c0_81, %c0_82] : memref<9x128x128xbf16, #tpu.memory_space<vmem>>, vector<1x128x128xbf16>
    %110 = vector.shape_cast %109 : vector<1x128x128xbf16> to vector<128x128xbf16>
    %cst_83 = arith.constant dense<0.000000e+00> : vector<192x128xf32>
    %111 = tpu.matmul %108, %110, %cst_83 {dimension_numbers = #tpu.dot_dimension_numbers<[1], [0], [0], [1], [0, 0, 1, 1], [], []>} : vector<192x128xbf16>, vector<128x128xbf16>, vector<192x128xf32> -> vector<192x128xf32>
    %112 = arith.addf %106, %111 : vector<192x128xf32>
    %c0_84 = arith.constant 0 : index
    %c217 = arith.constant 217 : index
    %c0_85 = arith.constant 0 : index
    %113 = vector.load %arg1[%c0_84, %c217, %c0_85] : memref<1x440x128xbf16, #tpu.memory_space<vmem>>, vector<1x192x128xbf16>
    %114 = vector.shape_cast %113 : vector<1x192x128xbf16> to vector<192x128xbf16>
    %c4_86 = arith.constant 4 : index
    %c0_87 = arith.constant 0 : index
    %c0_88 = arith.constant 0 : index
    %115 = vector.load %arg2[%c4_86, %c0_87, %c0_88] : memref<9x128x128xbf16, #tpu.memory_space<vmem>>, vector<1x128x128xbf16>
    %116 = vector.shape_cast %115 : vector<1x128x128xbf16> to vector<128x128xbf16>
    %cst_89 = arith.constant dense<0.000000e+00> : vector<192x128xf32>
    %117 = tpu.matmul %114, %116, %cst_89 {dimension_numbers = #tpu.dot_dimension_numbers<[1], [0], [0], [1], [0, 0, 1, 1], [], []>} : vector<192x128xbf16>, vector<128x128xbf16>, vector<192x128xf32> -> vector<192x128xf32>
    %118 = arith.addf %112, %117 : vector<192x128xf32>
    %c0_90 = arith.constant 0 : index
    %c218 = arith.constant 218 : index
    %c0_91 = arith.constant 0 : index
    %119 = vector.load %arg1[%c0_90, %c218, %c0_91] : memref<1x440x128xbf16, #tpu.memory_space<vmem>>, vector<1x192x128xbf16>
    %120 = vector.shape_cast %119 : vector<1x192x128xbf16> to vector<192x128xbf16>
    %c5_92 = arith.constant 5 : index
    %c0_93 = arith.constant 0 : index
    %c0_94 = arith.constant 0 : index
    %121 = vector.load %arg2[%c5_92, %c0_93, %c0_94] : memref<9x128x128xbf16, #tpu.memory_space<vmem>>, vector<1x128x128xbf16>
    %122 = vector.shape_cast %121 : vector<1x128x128xbf16> to vector<128x128xbf16>
    %cst_95 = arith.constant dense<0.000000e+00> : vector<192x128xf32>
    %123 = tpu.matmul %120, %122, %cst_95 {dimension_numbers = #tpu.dot_dimension_numbers<[1], [0], [0], [1], [0, 0, 1, 1], [], []>} : vector<192x128xbf16>, vector<128x128xbf16>, vector<192x128xf32> -> vector<192x128xf32>
    %124 = arith.addf %118, %123 : vector<192x128xf32>
    %c0_96 = arith.constant 0 : index
    %c240 = arith.constant 240 : index
    %c0_97 = arith.constant 0 : index
    %125 = vector.load %arg1[%c0_96, %c240, %c0_97] : memref<1x440x128xbf16, #tpu.memory_space<vmem>>, vector<1x192x128xbf16>
    %126 = vector.shape_cast %125 : vector<1x192x128xbf16> to vector<192x128xbf16>
    %c6_98 = arith.constant 6 : index
    %c0_99 = arith.constant 0 : index
    %c0_100 = arith.constant 0 : index
    %127 = vector.load %arg2[%c6_98, %c0_99, %c0_100] : memref<9x128x128xbf16, #tpu.memory_space<vmem>>, vector<1x128x128xbf16>
    %128 = vector.shape_cast %127 : vector<1x128x128xbf16> to vector<128x128xbf16>
    %cst_101 = arith.constant dense<0.000000e+00> : vector<192x128xf32>
    %129 = tpu.matmul %126, %128, %cst_101 {dimension_numbers = #tpu.dot_dimension_numbers<[1], [0], [0], [1], [0, 0, 1, 1], [], []>} : vector<192x128xbf16>, vector<128x128xbf16>, vector<192x128xf32> -> vector<192x128xf32>
    %130 = arith.addf %124, %129 : vector<192x128xf32>
    %c0_102 = arith.constant 0 : index
    %c241 = arith.constant 241 : index
    %c0_103 = arith.constant 0 : index
    %131 = vector.load %arg1[%c0_102, %c241, %c0_103] : memref<1x440x128xbf16, #tpu.memory_space<vmem>>, vector<1x192x128xbf16>
    %132 = vector.shape_cast %131 : vector<1x192x128xbf16> to vector<192x128xbf16>
    %c7_104 = arith.constant 7 : index
    %c0_105 = arith.constant 0 : index
    %c0_106 = arith.constant 0 : index
    %133 = vector.load %arg2[%c7_104, %c0_105, %c0_106] : memref<9x128x128xbf16, #tpu.memory_space<vmem>>, vector<1x128x128xbf16>
    %134 = vector.shape_cast %133 : vector<1x128x128xbf16> to vector<128x128xbf16>
    %cst_107 = arith.constant dense<0.000000e+00> : vector<192x128xf32>
    %135 = tpu.matmul %132, %134, %cst_107 {dimension_numbers = #tpu.dot_dimension_numbers<[1], [0], [0], [1], [0, 0, 1, 1], [], []>} : vector<192x128xbf16>, vector<128x128xbf16>, vector<192x128xf32> -> vector<192x128xf32>
    %136 = arith.addf %130, %135 : vector<192x128xf32>
    %c0_108 = arith.constant 0 : index
    %c242 = arith.constant 242 : index
    %c0_109 = arith.constant 0 : index
    %137 = vector.load %arg1[%c0_108, %c242, %c0_109] : memref<1x440x128xbf16, #tpu.memory_space<vmem>>, vector<1x192x128xbf16>
    %138 = vector.shape_cast %137 : vector<1x192x128xbf16> to vector<192x128xbf16>
    %c8_110 = arith.constant 8 : index
    %c0_111 = arith.constant 0 : index
    %c0_112 = arith.constant 0 : index
    %139 = vector.load %arg2[%c8_110, %c0_111, %c0_112] : memref<9x128x128xbf16, #tpu.memory_space<vmem>>, vector<1x128x128xbf16>
    %140 = vector.shape_cast %139 : vector<1x128x128xbf16> to vector<128x128xbf16>
    %cst_113 = arith.constant dense<0.000000e+00> : vector<192x128xf32>
    %141 = tpu.matmul %138, %140, %cst_113 {dimension_numbers = #tpu.dot_dimension_numbers<[1], [0], [0], [1], [0, 0, 1, 1], [], []>} : vector<192x128xbf16>, vector<128x128xbf16>, vector<192x128xf32> -> vector<192x128xf32>
    %142 = arith.addf %136, %141 : vector<192x128xf32>
    %cst_114 = arith.constant 0.000000e+00 : f32
    %143 = vector.broadcast %cst_114 : f32 to vector<192x128xf32>
    %144 = arith.select %18, %142, %143 : vector<192x128xi1>, vector<192x128xf32>
    %cst_115 = arith.constant dense<0.000000e+00> : vector<128xf32>
    %145 = vector.multi_reduction <add>, %144, %cst_115 [0] : vector<192x128xf32> to vector<128xf32>
    %146 = vector.shape_cast %145 : vector<128xf32> to vector<1x128xf32>
    %147 = arith.addf %80, %146 : vector<1x128xf32>
    %148 = arith.mulf %144, %142 : vector<192x128xf32>
    %cst_116 = arith.constant dense<0.000000e+00> : vector<128xf32>
    %149 = vector.multi_reduction <add>, %148, %cst_116 [0] : vector<192x128xf32> to vector<128xf32>
    %150 = vector.shape_cast %149 : vector<128xf32> to vector<1x128xf32>
    %151 = arith.addf %84, %150 : vector<1x128xf32>
    %c0_117 = arith.constant 0 : index
    %c192_118 = arith.constant 192 : index
    %c0_119 = arith.constant 0 : index
    %152 = vector.load %arg3[%c0_117, %c192_118, %c0_119] : memref<1x384x128xf32, #tpu.memory_space<vmem>>, vector<1x192x128xf32>
    %153 = vector.shape_cast %152 : vector<1x192x128xf32> to vector<192x128xf32>
    %154 = vector.shape_cast %142 : vector<192x128xf32> to vector<1x192x128xf32>
    tpu.vector_store %arg3[%c0_117, %c192_118, %c0_119], %154 {strides = array<i32>} : memref<1x384x128xf32, #tpu.memory_space<vmem>>, vector<1x192x128xf32>,
    %cst_120 = arith.constant 3.906250e-03 : f32
    %155 = vector.broadcast %cst_120 : f32 to vector<1x128xf32>
    %156 = arith.mulf %147, %155 : vector<1x128xf32>
    %cst_121 = arith.constant 3.906250e-03 : f32
    %157 = vector.broadcast %cst_121 : f32 to vector<1x128xf32>
    %158 = arith.mulf %151, %157 : vector<1x128xf32>
    %159 = arith.mulf %156, %156 : vector<1x128xf32>
    %160 = arith.subf %158, %159 : vector<1x128xf32>
    %cst_122 = arith.constant 0.000000e+00 : f32
    %161 = vector.broadcast %cst_122 : f32 to vector<1x128xf32>
    %162 = arith.maximumf %160, %161 : vector<1x128xf32>
    %cst_123 = arith.constant 9.99999974E-6 : f32
    %163 = vector.broadcast %cst_123 : f32 to vector<1x128xf32>
    %164 = arith.addf %162, %163 : vector<1x128xf32>
    %165 = math.rsqrt %164 : vector<1x128xf32>
    %c0_124 = arith.constant 0 : index
    %c0_125 = arith.constant 0 : index
    %c0_126 = arith.constant 0 : index
    %166 = vector.load %arg3[%c0_124, %c0_125, %c0_126] : memref<1x384x128xf32, #tpu.memory_space<vmem>>, vector<1x192x128xf32>
    %167 = vector.shape_cast %166 : vector<1x192x128xf32> to vector<192x128xf32>
    %c0_127 = arith.constant 0 : index
    %c25_128 = arith.constant 25 : index
    %c0_129 = arith.constant 0 : index
    %168 = vector.load %arg1[%c0_127, %c25_128, %c0_129] : memref<1x440x128xbf16, #tpu.memory_space<vmem>>, vector<1x192x128xbf16>
    %169 = vector.shape_cast %168 : vector<1x192x128xbf16> to vector<192x128xbf16>
    %170 = arith.extf %169 : vector<192x128xbf16> to vector<192x128xf32>
    %171 = vector.broadcast %156 : vector<1x128xf32> to vector<192x128xf32>
    %172 = arith.subf %167, %171 : vector<192x128xf32>
    %173 = vector.broadcast %165 : vector<1x128xf32> to vector<192x128xf32>
    %174 = arith.mulf %172, %173 : vector<192x128xf32>
    %175 = arith.addf %170, %174 : vector<192x128xf32>
    %c0_130 = arith.constant 0 : index
    %c0_131 = arith.constant 0 : index
    %c0_132 = arith.constant 0 : index
    %176 = vector.load %arg3[%c0_130, %c0_131, %c0_132] : memref<1x384x128xf32, #tpu.memory_space<vmem>>, vector<1x192x128xf32>
    %177 = vector.shape_cast %176 : vector<1x192x128xf32> to vector<192x128xf32>
    %178 = vector.shape_cast %175 : vector<192x128xf32> to vector<1x192x128xf32>
    tpu.vector_store %arg3[%c0_130, %c0_131, %c0_132], %178 {strides = array<i32>} : memref<1x384x128xf32, #tpu.memory_space<vmem>>, vector<1x192x128xf32>,
    %c0_133 = arith.constant 0 : index
    %c192_134 = arith.constant 192 : index
    %c0_135 = arith.constant 0 : index
    %179 = vector.load %arg3[%c0_133, %c192_134, %c0_135] : memref<1x384x128xf32, #tpu.memory_space<vmem>>, vector<1x192x128xf32>
    %180 = vector.shape_cast %179 : vector<1x192x128xf32> to vector<192x128xf32>
    %c0_136 = arith.constant 0 : index
    %c217_137 = arith.constant 217 : index
    %c0_138 = arith.constant 0 : index
    %181 = vector.load %arg1[%c0_136, %c217_137, %c0_138] : memref<1x440x128xbf16, #tpu.memory_space<vmem>>, vector<1x192x128xbf16>
    %182 = vector.shape_cast %181 : vector<1x192x128xbf16> to vector<192x128xbf16>
    %183 = arith.extf %182 : vector<192x128xbf16> to vector<192x128xf32>
    %184 = vector.broadcast %156 : vector<1x128xf32> to vector<192x128xf32>
    %185 = arith.subf %180, %184 : vector<192x128xf32>
    %186 = vector.broadcast %165 : vector<1x128xf32> to vector<192x128xf32>
    %187 = arith.mulf %185, %186 : vector<192x128xf32>
    %188 = arith.addf %183, %187 : vector<192x128xf32>
    %c0_139 = arith.constant 0 : index
    %c192_140 = arith.constant 192 : index
    %c0_141 = arith.constant 0 : index
    %189 = vector.load %arg3[%c0_139, %c192_140, %c0_141] : memref<1x384x128xf32, #tpu.memory_space<vmem>>, vector<1x192x128xf32>
    %190 = vector.shape_cast %189 : vector<1x192x128xf32> to vector<192x128xf32>
    %191 = vector.shape_cast %188 : vector<192x128xf32> to vector<1x192x128xf32>
    tpu.vector_store %arg3[%c0_139, %c192_140, %c0_141], %191 {strides = array<i32>} : memref<1x384x128xf32, #tpu.memory_space<vmem>>, vector<1x192x128xf32>,
    return
  }
  func.func @transform_0(%arg0: i32) -> (i32, i32, i32) {
    %c0_i32 = arith.constant 0 : i32
    %c0_i32_0 = arith.constant 0 : i32
    %c0_i32_1 = arith.constant 0 : i32
    return %arg0, %c0_i32, %c0_i32_0 : i32, i32, i32
  }
  func.func @transform_1(%arg0: i32) -> (i32, i32, i32) {
    %c0_i32 = arith.constant 0 : i32
    %c0_i32_0 = arith.constant 0 : i32
    %c0_i32_1 = arith.constant 0 : i32
    %c0_i32_2 = arith.constant 0 : i32
    return %c0_i32, %c0_i32_0, %c0_i32_1 : i32, i32, i32
  }
  func.func @transform_2(%arg0: i32) -> (i32, i32, i32) {
    %c0_i32 = arith.constant 0 : i32
    %c0_i32_0 = arith.constant 0 : i32
    %c0_i32_1 = arith.constant 0 : i32
    return %arg0, %c0_i32, %c0_i32_0 : i32, i32, i32
  }
}

</mosaic_0001>

<llo_original>
// kernel: tpu_custom_call.1
$region0: #{tpu_custom_call.1}
  #allocation0 [shape = 'u32[]', space=smem, size = 0x4, offset = 0x4, fixed_abs, tag = 'smem constant byte address 0x4 - core index']
  #allocation1 [shape = 'u32[144,128]{1,0:T(1,128)}', space=vmem, size = 0x12000, scoped, tag = 'internal scratch']
  %s0 = inlined_call_operand.hbm [shape: bf16[2,440,128], index: 0, kind: input, shape index: {}]
  %s1 = inlined_call_operand.hbm [shape: bf16[9,128,128], index: 1, kind: input, shape index: {}]
  %s2 = inlined_call_operand.hbm [shape: f32[2,384,128], index: 2, kind: output, shape index: {}]
  %s3 = sld [smem:[#allocation0]]
  $region49: #{tpu_custom_call.1} parent=0
    _
  %s5 = ssub.s32 1, %s3
  %s6 = scalar_select 0, %s5, %s3
  $region1: #{tpu_custom_call.1} parent=0
    #allocation2 [shape = 'u8[225280]{0}', space=vmem, size = 0x37000, scoped, tag = 'input window, operand 0']
    #allocation3 [shape = 's32[2]{0}', space=sflag, size = 0x8, scoped, tag = 'scoped memory for tpu_custom_call.1']
    #allocation4 [shape = 's32[2]{0}', space=sflag, size = 0x8, scoped, tag = 'scoped memory for tpu_custom_call.1']
    #allocation5 [shape = 'u8[294912]{0}', space=vmem, size = 0x48000, scoped, tag = 'input window, operand 1, single buffered']
    #allocation6 [shape = 's32[1]{0}', space=sflag, size = 0x4, scoped, tag = 'scoped memory for tpu_custom_call.1']
    #allocation7 [shape = 'u8[393216]{0}', space=vmem, size = 0x60000, scoped, tag = 'output window, operand 0']
    %7 = vsyncpa [#allocation3], 0
    %s8 = scalar_lea.sflag [#allocation3], 1
    %9 = vsyncpa %s8, 0
    %10 = vsyncpa [#allocation6], 0
    %11 = vsyncpa [#allocation4], 0
    %s12 = scalar_lea.sflag [#allocation4], 1
    %13 = vsyncpa %s12, 0
    loop: start=0, step=1, limit=4
    $region2: #{tpu_custom_call.1} parent=1 // loop_pre_header
      _
    $region3: #{tpu_custom_call.1} parent=1 // loop_header
      %s15 = sphi 0, %s19
      %p16 = scmp.ge.s32.totalorder %s15, 4
      %s25 = sphi 0, %s27
      %s28 = sphi 0, %s25
      %s29 = sphi 0, %s28
      %s45 = sphi 0, %s29
      %s49 = sphi 0, %s49
      %s51 = sphi 0, %s49
      %s52 = sphi 0, %s51
      %s66 = sphi 0, %s52
      %s72 = sphi 0, %s74
      %s75 = sphi 0, %s72
      %s76 = sphi 0, %s75
      %s92 = sphi 0, %s76
    $region4: #{tpu_custom_call.1} parent=1 // loop_header_branch
      %18 = sbr.rel (%p16) target = $region8
    $region5: #{tpu_custom_call.1} parent=1 // loop_body
      %s20 = ssub.s32 %s15, 1
      %s21 = ssub.s32 %s15, 2
      %s22 = sadd.s32 %s15, 1
      %s23 = ssub.s32 %s15, %s22
      %p24 = scmp.eq.s32.totalorder %s23, 0
      %s26 = sadd.s32 %s25, 1
      %s27 = scalar_select %p24, %s25, %s26
      %p30 = pneg %p24
      %p31 = scmp.eq.s32.totalorder %s15, 1
      %p32 = por %p30, %p31
      %p33 = scmp.ne.s32.totalorder %s25, %s28
      %p34 = scmp.eq.s32.totalorder %s15, 0
      %p35 = por %p33, %p34
      %p36 = scmp.ne.s32.totalorder %s25, %s28
      %p37 = scmp.eq.s32.totalorder %s20, 1
      %p38 = por %p36, %p37
      %p39 = scmp.ne.s32.totalorder %s28, %s29
      %p40 = scmp.eq.s32.totalorder %s20, 0
      %p41 = por %p39, %p40
      %p42 = scmp.ne.s32.totalorder %s28, %s29
      %p43 = scmp.eq.s32.totalorder %s21, 1
      %p44 = por %p42, %p43
      %p46 = scmp.ne.s32.totalorder %s29, %s45
      %p47 = scmp.eq.s32.totalorder %s21, 0
      %p48 = por %p46, %p47
      %s50 = sadd.s32 %s49, 1
      %p53 = scmp.eq.s32.totalorder %s15, 1
      %p54 = scmp.ne.s32.totalorder %s49, %s51
      %p55 = scmp.eq.s32.totalorder %s15, 0
      %p56 = por %p54, %p55
      %p57 = scmp.ne.s32.totalorder %s49, %s51
      %p58 = scmp.eq.s32.totalorder %s20, 1
      %p59 = por %p57, %p58
      %p60 = scmp.ne.s32.totalorder %s51, %s52
      %p61 = scmp.eq.s32.totalorder %s20, 0
      %p62 = por %p60, %p61
      %p63 = scmp.ne.s32.totalorder %s51, %s52
      %p64 = scmp.eq.s32.totalorder %s21, 1
      %p65 = por %p63, %p64
      %p67 = scmp.ne.s32.totalorder %s52, %s66
      %p68 = scmp.eq.s32.totalorder %s21, 0
      %p69 = por %p67, %p68
      %s70 = ssub.s32 %s15, %s22
      %p71 = scmp.eq.s32.totalorder %s70, 0
      %s73 = sadd.s32 %s72, 1
      %s74 = scalar_select %p71, %s72, %s73
      %p77 = pneg %p71
      %p78 = scmp.eq.s32.totalorder %s15, 1
      %p79 = por %p77, %p78
      %p80 = scmp.ne.s32.totalorder %s72, %s75
      %p81 = scmp.eq.s32.totalorder %s15, 0
      %p82 = por %p80, %p81
      %p83 = scmp.ne.s32.totalorder %s72, %s75
      %p84 = scmp.eq.s32.totalorder %s20, 1
      %p85 = por %p83, %p84
      %p86 = scmp.ne.s32.totalorder %s75, %s76
      %p87 = scmp.eq.s32.totalorder %s20, 0
      %p88 = por %p86, %p87
      %p89 = scmp.ne.s32.totalorder %s75, %s76
      %p90 = scmp.eq.s32.totalorder %s21, 1
      %p91 = por %p89, %p90
      %p93 = scmp.ne.s32.totalorder %s76, %s92
      %p94 = scmp.eq.s32.totalorder %s21, 0
      %p95 = por %p93, %p94
      %p96 = scmp.le.s32.totalorder 1, %s15
      %p97 = scmp.lt.s32.totalorder %s15, 3
      %p98 = pnand %p96, %p97
      %p99 = pneg %p98
      // Predicated region
      $region9: #{tpu_custom_call.1} parent=5 // pred_check
        _
      $region10: #{tpu_custom_call.1} parent=5 // pred_check_branch
        %101 = sbr.rel (%p98) target = $region12
      $region11: #{tpu_custom_call.1} parent=5 // pred_region
        %s102 = ssub.s32 %s15, 1
        // Predicated region
        $region13: #{tpu_custom_call.1} parent=11 // pred_check
          %p103 = pneg %p62
        $region14: #{tpu_custom_call.1} parent=11 // pred_check_branch
          %105 = sbr.rel (%p103) target = $region16
        $region15: #{tpu_custom_call.1} parent=11 // pred_region
          %s107 = ssub.s32 9216, 9216
          %108 = vsyncadd [#allocation6], %s107
          %s109 = sshll.u32 [#allocation5], 4
          %s110 = int_to_ptr.vmem [resolvable:$true] %s109
          %115 = dma.hbm_to_vmem [thread:$0]  %s1, 9216, %s110, [#allocation6], 64, 64, 4
        $region16: #{tpu_custom_call.1} parent=11 // pred_fallthru
          _
      $region12: #{tpu_custom_call.1} parent=5 // pred_fallthru
        _
      %p116 = scmp.lt.s32.totalorder %s15, 2
      // Predicated region
      $region17: #{tpu_custom_call.1} parent=5 // pred_check
        %p117 = pneg %p116
      $region18: #{tpu_custom_call.1} parent=5 // pred_check_branch
        %119 = sbr.rel (%p117) target = $region20
      $region19: #{tpu_custom_call.1} parent=5 // pred_region
        // Predicated region
        $region21: #{tpu_custom_call.1} parent=19 // pred_check
          %p120 = pneg %p35
        $region22: #{tpu_custom_call.1} parent=19 // pred_check_branch
          %122 = sbr.rel (%p120) target = $region24
        $region23: #{tpu_custom_call.1} parent=19 // pred_region
          %s123 = sand.u32 %s25, 1
          %s124 = scalar_lea.sflag [#allocation3], %s123
          %s125 = sand.u32 %s25, 1
          %s126 = smul.addr %s125, 220
          %s127 = scalar_lea.vmem [#allocation2], %s126
          %s129 = ssub.s32 3520, 3520
          %130 = vsyncadd %s124, %s129
          %s131 = smul.addr %s15, 55
          %s132 = smul.addr %s131, 64
          %s133 = scalar_lea.hbm %s0, %s132
          %s134 = sshll.u32 %s127, 4
          %s135 = int_to_ptr.vmem [resolvable:$true] %s134
          %140 = dma.hbm_to_vmem [thread:$0]  %s133, 3520, %s135, %s124, 64, 64, 4
        $region24: #{tpu_custom_call.1} parent=19 // pred_fallthru
          _
      $region20: #{tpu_custom_call.1} parent=5 // pred_fallthru
        _
      %p141 = scmp.le.s32.totalorder 1, %s15
      %p142 = scmp.lt.s32.totalorder %s15, 3
      %p143 = pnand %p141, %p142
      %p144 = pneg %p143
      // Predicated region
      $region25: #{tpu_custom_call.1} parent=5 // pred_check
        _
      $region26: #{tpu_custom_call.1} parent=5 // pred_check_branch
        %146 = sbr.rel (%p143) target = $region28
      $region27: #{tpu_custom_call.1} parent=5 // pred_region
        %s147 = ssub.s32 %s15, 1
        %s148 = sand.u32 %s28, 1
        %s149 = scalar_lea.sflag [#allocation3], %s148
        %s150 = sand.u32 %s28, 1
        %s151 = smul.addr %s150, 220
        %s152 = scalar_lea.vmem [#allocation2], %s151
        // Predicated region
        $region29: #{tpu_custom_call.1} parent=27 // pred_check
          %p153 = pneg %p41
        $region30: #{tpu_custom_call.1} parent=27 // pred_check_branch
          %155 = sbr.rel (%p153) target = $region32
        $region31: #{tpu_custom_call.1} parent=27 // pred_region
          %156 = dma.done %s149, 3520
        $region32: #{tpu_custom_call.1} parent=27 // pred_fallthru
          _
        // Predicated region
        $region33: #{tpu_custom_call.1} parent=27 // pred_check
          %p157 = pneg %p62
        $region34: #{tpu_custom_call.1} parent=27 // pred_check_branch
          %159 = sbr.rel (%p157) target = $region36
        $region35: #{tpu_custom_call.1} parent=27 // pred_region
          %160 = dma.done [#allocation6], 9216
        $region36: #{tpu_custom_call.1} parent=27 // pred_fallthru
          _
        %s161 = sand.u32 %s28, 1
        %s162 = scalar_lea.sflag [#allocation3], %s161
        %s163 = sand.u32 %s28, 1
        %s164 = smul.addr %s163, 220
        %s165 = scalar_lea.vmem [#allocation2], %s164
        %p166 = pneg %p41
        %p167 = pneg %p38
        %p168 = pneg %p62
        %p169 = pneg %p59
        %p170 = pneg %p88
        %p171 = pneg %p85
        %s172 = sand.u32 %s75, 1
        %s173 = scalar_lea.sflag [#allocation4], %s172
        %s174 = sand.u32 %s75, 1
        %s175 = smul.addr %s174, 384
        %s176 = scalar_lea.vmem [#allocation7], %s175
        %v178 = vlaneseq
        %v179 = vshrl.u32 %v178, 7
        %v180 = vadd.s32 %v179, 8
        %v181 = vadd.s32 %v179, 16
        %v182 = vadd.s32 %v179, 24
        %v183 = vadd.s32 %v179, 32
        %v184 = vadd.s32 %v179, 40
        %v185 = vadd.s32 %v179, 48
        %v186 = vadd.s32 %v179, 56
        %v187 = vadd.s32 %v179, 64
        %v188 = vadd.s32 %v179, 72
        %v189 = vadd.s32 %v179, 80
        %v190 = vadd.s32 %v179, 88
        %v191 = vadd.s32 %v179, 96
        %v192 = vadd.s32 %v179, 104
        %v193 = vadd.s32 %v179, 112
        %v194 = vadd.s32 %v179, 120
        %v195 = vadd.s32 %v179, 128
        %v196 = vadd.s32 %v179, 136
        %v197 = vadd.s32 %v179, 144
        %v198 = vadd.s32 %v179, 152
        %v199 = vadd.s32 %v179, 160
        %v200 = vadd.s32 %v179, 168
        %v201 = vadd.s32 %v179, 176
        %v202 = vadd.s32 %v179, 184
        %vm203 = vcmp.lt.s32.totalorder %v179, 0
        %v204 = vsub.s32 0, %v179
        %v205 = vsel %vm203, %v204, %v179
        %v206 = vmul.u32.u64.compose %v205, 2863311531
        %v207 = vextract.low.u32 %v206
        %v208 = vextract.high.u32 %v206
        %v209 = vshrl.u32 %v208, 4
        %v210 = vmul.u32 %v209, 24
        %v211 = vsub.s32 %v205, %v210
        %v212 = vsub.s32 0, %v211
        %v213 = vsel %vm203, %v212, %v211
        %vm214 = vcmp.lt.s32.totalorder %v180, 0
        %v215 = vsub.s32 0, %v180
        %v216 = vsel %vm214, %v215, %v180
        %v217 = vmul.u32.u64.compose %v216, 2863311531
        %v218 = vextract.low.u32 %v217
        %v219 = vextract.high.u32 %v217
        %v220 = vshrl.u32 %v219, 4
        %v221 = vmul.u32 %v220, 24
        %v222 = vsub.s32 %v216, %v221
        %v223 = vsub.s32 0, %v222
        %v224 = vsel %vm214, %v223, %v222
        %vm225 = vcmp.lt.s32.totalorder %v181, 0
        %v226 = vsub.s32 0, %v181
        %v227 = vsel %vm225, %v226, %v181
        %v228 = vmul.u32.u64.compose %v227, 2863311531
        %v229 = vextract.low.u32 %v228
        %v230 = vextract.high.u32 %v228
        %v231 = vshrl.u32 %v230, 4
        %v232 = vmul.u32 %v231, 24
        %v233 = vsub.s32 %v227, %v232
        %v234 = vsub.s32 0, %v233
        %v235 = vsel %vm225, %v234, %v233
        %vm236 = vcmp.lt.s32.totalorder %v182, 0
        %v237 = vsub.s32 0, %v182
        %v238 = vsel %vm236, %v237, %v182
        %v239 = vmul.u32.u64.compose %v238, 2863311531
        %v240 = vextract.low.u32 %v239
        %v241 = vextract.high.u32 %v239
        %v242 = vshrl.u32 %v241, 4
        %v243 = vmul.u32 %v242, 24
        %v244 = vsub.s32 %v238, %v243
        %v245 = vsub.s32 0, %v244
        %v246 = vsel %vm236, %v245, %v244
        %vm247 = vcmp.lt.s32.totalorder %v183, 0
        %v248 = vsub.s32 0, %v183
        %v249 = vsel %vm247, %v248, %v183
        %v250 = vmul.u32.u64.compose %v249, 2863311531
        %v251 = vextract.low.u32 %v250
        %v252 = vextract.high.u32 %v250
        %v253 = vshrl.u32 %v252, 4
        %v254 = vmul.u32 %v253, 24
        %v255 = vsub.s32 %v249, %v254
        %v256 = vsub.s32 0, %v255
        %v257 = vsel %vm247, %v256, %v255
        %vm258 = vcmp.lt.s32.totalorder %v184, 0
        %v259 = vsub.s32 0, %v184
        %v260 = vsel %vm258, %v259, %v184
        %v261 = vmul.u32.u64.compose %v260, 2863311531
        %v262 = vextract.low.u32 %v261
        %v263 = vextract.high.u32 %v261
        %v264 = vshrl.u32 %v263, 4
        %v265 = vmul.u32 %v264, 24
        %v266 = vsub.s32 %v260, %v265
        %v267 = vsub.s32 0, %v266
        %v268 = vsel %vm258, %v267, %v266
        %vm269 = vcmp.lt.s32.totalorder %v185, 0
        %v270 = vsub.s32 0, %v185
        %v271 = vsel %vm269, %v270, %v185
        %v272 = vmul.u32.u64.compose %v271, 2863311531
        %v273 = vextract.low.u32 %v272
        %v274 = vextract.high.u32 %v272
        %v275 = vshrl.u32 %v274, 4
        %v276 = vmul.u32 %v275, 24
        %v277 = vsub.s32 %v271, %v276
        %v278 = vsub.s32 0, %v277
        %v279 = vsel %vm269, %v278, %v277
        %vm280 = vcmp.lt.s32.totalorder %v186, 0
        %v281 = vsub.s32 0, %v186
        %v282 = vsel %vm280, %v281, %v186
        %v283 = vmul.u32.u64.compose %v282, 2863311531
        %v284 = vextract.low.u32 %v283
        %v285 = vextract.high.u32 %v283
        %v286 = vshrl.u32 %v285, 4
        %v287 = vmul.u32 %v286, 24
        %v288 = vsub.s32 %v282, %v287
        %v289 = vsub.s32 0, %v288
        %v290 = vsel %vm280, %v289, %v288
        %vm291 = vcmp.lt.s32.totalorder %v187, 0
        %v292 = vsub.s32 0, %v187
        %v293 = vsel %vm291, %v292, %v187
        %v294 = vmul.u32.u64.compose %v293, 2863311531
        %v295 = vextract.low.u32 %v294
        %v296 = vextract.high.u32 %v294
        %v297 = vshrl.u32 %v296, 4
        %v298 = vmul.u32 %v297, 24
        %v299 = vsub.s32 %v293, %v298
        %v300 = vsub.s32 0, %v299
        %v301 = vsel %vm291, %v300, %v299
        %vm302 = vcmp.lt.s32.totalorder %v188, 0
        %v303 = vsub.s32 0, %v188
        %v304 = vsel %vm302, %v303, %v188
        %v305 = vmul.u32.u64.compose %v304, 2863311531
        %v306 = vextract.low.u32 %v305
        %v307 = vextract.high.u32 %v305
        %v308 = vshrl.u32 %v307, 4
        %v309 = vmul.u32 %v308, 24
        %v310 = vsub.s32 %v304, %v309
        %v311 = vsub.s32 0, %v310
        %v312 = vsel %vm302, %v311, %v310
        %vm313 = vcmp.lt.s32.totalorder %v189, 0
        %v314 = vsub.s32 0, %v189
        %v315 = vsel %vm313, %v314, %v189
        %v316 = vmul.u32.u64.compose %v315, 2863311531
        %v317 = vextract.low.u32 %v316
        %v318 = vextract.high.u32 %v316
        %v319 = vshrl.u32 %v318, 4
        %v320 = vmul.u32 %v319, 24
        %v321 = vsub.s32 %v315, %v320
        %v322 = vsub.s32 0, %v321
        %v323 = vsel %vm313, %v322, %v321
        %vm324 = vcmp.lt.s32.totalorder %v190, 0
        %v325 = vsub.s32 0, %v190
        %v326 = vsel %vm324, %v325, %v190
        %v327 = vmul.u32.u64.compose %v326, 2863311531
        %v328 = vextract.low.u32 %v327
        %v329 = vextract.high.u32 %v327
        %v330 = vshrl.u32 %v329, 4
        %v331 = vmul.u32 %v330, 24
        %v332 = vsub.s32 %v326, %v331
        %v333 = vsub.s32 0, %v332
        %v334 = vsel %vm324, %v333, %v332
        %vm335 = vcmp.lt.s32.totalorder %v191, 0
        %v336 = vsub.s32 0, %v191
        %v337 = vsel %vm335, %v336, %v191
        %v338 = vmul.u32.u64.compose %v337, 2863311531
        %v339 = vextract.low.u32 %v338
        %v340 = vextract.high.u32 %v338
        %v341 = vshrl.u32 %v340, 4
        %v342 = vmul.u32 %v341, 24
        %v343 = vsub.s32 %v337, %v342
        %v344 = vsub.s32 0, %v343
        %v345 = vsel %vm335, %v344, %v343
        %vm346 = vcmp.lt.s32.totalorder %v192, 0
        %v347 = vsub.s32 0, %v192
        %v348 = vsel %vm346, %v347, %v192
        %v349 = vmul.u32.u64.compose %v348, 2863311531
        %v350 = vextract.low.u32 %v349
        %v351 = vextract.high.u32 %v349
        %v352 = vshrl.u32 %v351, 4
        %v353 = vmul.u32 %v352, 24
        %v354 = vsub.s32 %v348, %v353
        %v355 = vsub.s32 0, %v354
        %v356 = vsel %vm346, %v355, %v354
        %vm357 = vcmp.lt.s32.totalorder %v193, 0
        %v358 = vsub.s32 0, %v193
        %v359 = vsel %vm357, %v358, %v193
        %v360 = vmul.u32.u64.compose %v359, 2863311531
        %v361 = vextract.low.u32 %v360
        %v362 = vextract.high.u32 %v360
        %v363 = vshrl.u32 %v362, 4
        %v364 = vmul.u32 %v363, 24
        %v365 = vsub.s32 %v359, %v364
        %v366 = vsub.s32 0, %v365
        %v367 = vsel %vm357, %v366, %v365
        %vm368 = vcmp.lt.s32.totalorder %v194, 0
        %v369 = vsub.s32 0, %v194
        %v370 = vsel %vm368, %v369, %v194
        %v371 = vmul.u32.u64.compose %v370, 2863311531
        %v372 = vextract.low.u32 %v371
        %v373 = vextract.high.u32 %v371
        %v374 = vshrl.u32 %v373, 4
        %v375 = vmul.u32 %v374, 24
        %v376 = vsub.s32 %v370, %v375
        %v377 = vsub.s32 0, %v376
        %v378 = vsel %vm368, %v377, %v376
        %vm379 = vcmp.lt.s32.totalorder %v195, 0
        %v380 = vsub.s32 0, %v195
        %v381 = vsel %vm379, %v380, %v195
        %v382 = vmul.u32.u64.compose %v381, 2863311531
        %v383 = vextract.low.u32 %v382
        %v384 = vextract.high.u32 %v382
        %v385 = vshrl.u32 %v384, 4
        %v386 = vmul.u32 %v385, 24
        %v387 = vsub.s32 %v381, %v386
        %v388 = vsub.s32 0, %v387
        %v389 = vsel %vm379, %v388, %v387
        %vm390 = vcmp.lt.s32.totalorder %v196, 0
        %v391 = vsub.s32 0, %v196
        %v392 = vsel %vm390, %v391, %v196
        %v393 = vmul.u32.u64.compose %v392, 2863311531
        %v394 = vextract.low.u32 %v393
        %v395 = vextract.high.u32 %v393
        %v396 = vshrl.u32 %v395, 4
        %v397 = vmul.u32 %v396, 24
        %v398 = vsub.s32 %v392, %v397
        %v399 = vsub.s32 0, %v398
        %v400 = vsel %vm390, %v399, %v398
        %vm401 = vcmp.lt.s32.totalorder %v197, 0
        %v402 = vsub.s32 0, %v197
        %v403 = vsel %vm401, %v402, %v197
        %v404 = vmul.u32.u64.compose %v403, 2863311531
        %v405 = vextract.low.u32 %v404
        %v406 = vextract.high.u32 %v404
        %v407 = vshrl.u32 %v406, 4
        %v408 = vmul.u32 %v407, 24
        %v409 = vsub.s32 %v403, %v408
        %v410 = vsub.s32 0, %v409
        %v411 = vsel %vm401, %v410, %v409
        %vm412 = vcmp.lt.s32.totalorder %v198, 0
        %v413 = vsub.s32 0, %v198
        %v414 = vsel %vm412, %v413, %v198
        %v415 = vmul.u32.u64.compose %v414, 2863311531
        %v416 = vextract.low.u32 %v415
        %v417 = vextract.high.u32 %v415
        %v418 = vshrl.u32 %v417, 4
        %v419 = vmul.u32 %v418, 24
        %v420 = vsub.s32 %v414, %v419
        %v421 = vsub.s32 0, %v420
        %v422 = vsel %vm412, %v421, %v420
        %vm423 = vcmp.lt.s32.totalorder %v199, 0
        %v424 = vsub.s32 0, %v199
        %v425 = vsel %vm423, %v424, %v199
        %v426 = vmul.u32.u64.compose %v425, 2863311531
        %v427 = vextract.low.u32 %v426
        %v428 = vextract.high.u32 %v426
        %v429 = vshrl.u32 %v428, 4
        %v430 = vmul.u32 %v429, 24
        %v431 = vsub.s32 %v425, %v430
        %v432 = vsub.s32 0, %v431
        %v433 = vsel %vm423, %v432, %v431
        %vm434 = vcmp.lt.s32.totalorder %v200, 0
        %v435 = vsub.s32 0, %v200
        %v436 = vsel %vm434, %v435, %v200
        %v437 = vmul.u32.u64.compose %v436, 2863311531
        %v438 = vextract.low.u32 %v437
        %v439 = vextract.high.u32 %v437
        %v440 = vshrl.u32 %v439, 4
        %v441 = vmul.u32 %v440, 24
        %v442 = vsub.s32 %v436, %v441
        %v443 = vsub.s32 0, %v442
        %v444 = vsel %vm434, %v443, %v442
        %vm445 = vcmp.lt.s32.totalorder %v201, 0
        %v446 = vsub.s32 0, %v201
        %v447 = vsel %vm445, %v446, %v201
        %v448 = vmul.u32.u64.compose %v447, 2863311531
        %v449 = vextract.low.u32 %v448
        %v450 = vextract.high.u32 %v448
        %v451 = vshrl.u32 %v450, 4
        %v452 = vmul.u32 %v451, 24
        %v453 = vsub.s32 %v447, %v452
        %v454 = vsub.s32 0, %v453
        %v455 = vsel %vm445, %v454, %v453
        %vm456 = vcmp.lt.s32.totalorder %v202, 0
        %v457 = vsub.s32 0, %v202
        %v458 = vsel %vm456, %v457, %v202
        %v459 = vmul.u32.u64.compose %v458, 2863311531
        %v460 = vextract.low.u32 %v459
        %v461 = vextract.high.u32 %v459
        %v462 = vshrl.u32 %v461, 4
        %v463 = vmul.u32 %v462, 24
        %v464 = vsub.s32 %v458, %v463
        %v465 = vsub.s32 0, %v464
        %v466 = vsel %vm456, %v465, %v464
        %vm467 = vcmp.ne.s32.totalorder %v213, 0
        %vm468 = vcmp.ne.s32.totalorder %v224, 0
        %vm469 = vcmp.ne.s32.totalorder %v235, 0
        %vm470 = vcmp.ne.s32.totalorder %v246, 0
        %vm471 = vcmp.ne.s32.totalorder %v257, 0
        %vm472 = vcmp.ne.s32.totalorder %v268, 0
        %vm473 = vcmp.ne.s32.totalorder %v279, 0
        %vm474 = vcmp.ne.s32.totalorder %v290, 0
        %vm475 = vcmp.ne.s32.totalorder %v301, 0
        %vm476 = vcmp.ne.s32.totalorder %v312, 0
        %vm477 = vcmp.ne.s32.totalorder %v323, 0
        %vm478 = vcmp.ne.s32.totalorder %v334, 0
        %vm479 = vcmp.ne.s32.totalorder %v345, 0
        %vm480 = vcmp.ne.s32.totalorder %v356, 0
        %vm481 = vcmp.ne.s32.totalorder %v367, 0
        %vm482 = vcmp.ne.s32.totalorder %v378, 0
        %vm483 = vcmp.ne.s32.totalorder %v389, 0
        %vm484 = vcmp.ne.s32.totalorder %v400, 0
        %vm485 = vcmp.ne.s32.totalorder %v411, 0
        %vm486 = vcmp.ne.s32.totalorder %v422, 0
        %vm487 = vcmp.ne.s32.totalorder %v433, 0
        %vm488 = vcmp.ne.s32.totalorder %v444, 0
        %vm489 = vcmp.ne.s32.totalorder %v455, 0
        %vm490 = vcmp.ne.s32.totalorder %v466, 0
        %vm491 = vcmp.lt.s32.totalorder %v213, 0
        %vm492 = vcmp.lt.s32.totalorder %v224, 0
        %vm493 = vcmp.lt.s32.totalorder %v235, 0
        %vm494 = vcmp.lt.s32.totalorder %v246, 0
        %vm495 = vcmp.lt.s32.totalorder %v257, 0
        %vm496 = vcmp.lt.s32.totalorder %v268, 0
        %vm497 = vcmp.lt.s32.totalorder %v279, 0
        %vm498 = vcmp.lt.s32.totalorder %v290, 0
        %vm499 = vcmp.lt.s32.totalorder %v301, 0
        %vm500 = vcmp.lt.s32.totalorder %v312, 0
        %vm501 = vcmp.lt.s32.totalorder %v323, 0
        %vm502 = vcmp.lt.s32.totalorder %v334, 0
        %vm503 = vcmp.lt.s32.totalorder %v345, 0
        %vm504 = vcmp.lt.s32.totalorder %v356, 0
        %vm505 = vcmp.lt.s32.totalorder %v367, 0
        %vm506 = vcmp.lt.s32.totalorder %v378, 0
        %vm507 = vcmp.lt.s32.totalorder %v389, 0
        %vm508 = vcmp.lt.s32.totalorder %v400, 0
        %vm509 = vcmp.lt.s32.totalorder %v411, 0
        %vm510 = vcmp.lt.s32.totalorder %v422, 0
        %vm511 = vcmp.lt.s32.totalorder %v433, 0
        %vm512 = vcmp.lt.s32.totalorder %v444, 0
        %vm513 = vcmp.lt.s32.totalorder %v455, 0
        %vm514 = vcmp.lt.s32.totalorder %v466, 0
        %vm515 = vmand %vm491, %vm467
        %vm516 = vmand %vm492, %vm468
        %vm517 = vmand %vm493, %vm469
        %vm518 = vmand %vm494, %vm470
        %vm519 = vmand %vm495, %vm471
        %vm520 = vmand %vm496, %vm472
        %vm521 = vmand %vm497, %vm473
        %vm522 = vmand %vm498, %vm474
        %vm523 = vmand %vm499, %vm475
        %vm524 = vmand %vm500, %vm476
        %vm525 = vmand %vm501, %vm477
        %vm526 = vmand %vm502, %vm478
        %vm527 = vmand %vm503, %vm479
        %vm528 = vmand %vm504, %vm480
        %vm529 = vmand %vm505, %vm481
        %vm530 = vmand %vm506, %vm482
        %vm531 = vmand %vm507, %vm483
        %vm532 = vmand %vm508, %vm484
        %vm533 = vmand %vm509, %vm485
        %vm534 = vmand %vm510, %vm486
        %vm535 = vmand %vm511, %vm487
        %vm536 = vmand %vm512, %vm488
        %vm537 = vmand %vm513, %vm489
        %vm538 = vmand %vm514, %vm490
        %v539 = vadd.s32 %v213, 24
        %v540 = vadd.s32 %v224, 24
        %v541 = vadd.s32 %v235, 24
        %v542 = vadd.s32 %v246, 24
        %v543 = vadd.s32 %v257, 24
        %v544 = vadd.s32 %v268, 24
        %v545 = vadd.s32 %v279, 24
        %v546 = vadd.s32 %v290, 24
        %v547 = vadd.s32 %v301, 24
        %v548 = vadd.s32 %v312, 24
        %v549 = vadd.s32 %v323, 24
        %v550 = vadd.s32 %v334, 24
        %v551 = vadd.s32 %v345, 24
        %v552 = vadd.s32 %v356, 24
        %v553 = vadd.s32 %v367, 24
        %v554 = vadd.s32 %v378, 24
        %v555 = vadd.s32 %v389, 24
        %v556 = vadd.s32 %v400, 24
        %v557 = vadd.s32 %v411, 24
        %v558 = vadd.s32 %v422, 24
        %v559 = vadd.s32 %v433, 24
        %v560 = vadd.s32 %v444, 24
        %v561 = vadd.s32 %v455, 24
        %v562 = vadd.s32 %v466, 24
        %v563 = vsel %vm515, %v539, %v213
        %v564 = vsel %vm516, %v540, %v224
        %v565 = vsel %vm517, %v541, %v235
        %v566 = vsel %vm518, %v542, %v246
        %v567 = vsel %vm519, %v543, %v257
        %v568 = vsel %vm520, %v544, %v268
        %v569 = vsel %vm521, %v545, %v279
        %v570 = vsel %vm522, %v546, %v290
        %v571 = vsel %vm523, %v547, %v301
        %v572 = vsel %vm524, %v548, %v312
        %v573 = vsel %vm525, %v549, %v323
        %v574 = vsel %vm526, %v550, %v334
        %v575 = vsel %vm527, %v551, %v345
        %v576 = vsel %vm528, %v552, %v356
        %v577 = vsel %vm529, %v553, %v367
        %v578 = vsel %vm530, %v554, %v378
        %v579 = vsel %vm531, %v555, %v389
        %v580 = vsel %vm532, %v556, %v400
        %v581 = vsel %vm533, %v557, %v411
        %v582 = vsel %vm534, %v558, %v422
        %v583 = vsel %vm535, %v559, %v433
        %v584 = vsel %vm536, %v560, %v444
        %v585 = vsel %vm537, %v561, %v455
        %v586 = vsel %vm538, %v562, %v466
        %vm587 = vcmp.lt.s32.totalorder %v563, 16
        %vm588 = vcmp.lt.s32.totalorder %v564, 16
        %vm589 = vcmp.lt.s32.totalorder %v565, 16
        %vm590 = vcmp.lt.s32.totalorder %v566, 16
        %vm591 = vcmp.lt.s32.totalorder %v567, 16
        %vm592 = vcmp.lt.s32.totalorder %v568, 16
        %vm593 = vcmp.lt.s32.totalorder %v569, 16
        %vm594 = vcmp.lt.s32.totalorder %v570, 16
        %vm595 = vcmp.lt.s32.totalorder %v571, 16
        %vm596 = vcmp.lt.s32.totalorder %v572, 16
        %vm597 = vcmp.lt.s32.totalorder %v573, 16
        %vm598 = vcmp.lt.s32.totalorder %v574, 16
        %vm599 = vcmp.lt.s32.totalorder %v575, 16
        %vm600 = vcmp.lt.s32.totalorder %v576, 16
        %vm601 = vcmp.lt.s32.totalorder %v577, 16
        %vm602 = vcmp.lt.s32.totalorder %v578, 16
        %vm603 = vcmp.lt.s32.totalorder %v579, 16
        %vm604 = vcmp.lt.s32.totalorder %v580, 16
        %vm605 = vcmp.lt.s32.totalorder %v581, 16
        %vm606 = vcmp.lt.s32.totalorder %v582, 16
        %vm607 = vcmp.lt.s32.totalorder %v583, 16
        %vm608 = vcmp.lt.s32.totalorder %v584, 16
        %vm609 = vcmp.lt.s32.totalorder %v585, 16
        %vm610 = vcmp.lt.s32.totalorder %v586, 16
        %v611 = vld [vmem:[%s152] sm:$0xf]
        %v612 = vld [vmem:[%s152 + $0x4] sm:$0xf]
        %v613 = vld [vmem:[%s152 + $0x8] sm:$0xf]
        %v614 = vld [vmem:[%s152 + $0xc] sm:$0xf]
        %v615 = vld [vmem:[%s152 + $0x10] sm:$0xf]
        %v616 = vld [vmem:[%s152 + $0x14] sm:$0xf]
        %v617 = vld [vmem:[%s152 + $0x18] sm:$0xf]
        %v618 = vld [vmem:[%s152 + $0x1c] sm:$0xf]
        %v619 = vld [vmem:[%s152 + $0x20] sm:$0xf]
        %v620 = vld [vmem:[%s152 + $0x24] sm:$0xf]
        %v621 = vld [vmem:[%s152 + $0x28] sm:$0xf]
        %v622 = vld [vmem:[%s152 + $0x2c] sm:$0xf]
        %v623 = vld [vmem:[%s152 + $0x30] sm:$0xf]
        %v624 = vld [vmem:[%s152 + $0x34] sm:$0xf]
        %v625 = vld [vmem:[%s152 + $0x38] sm:$0xf]
        %v626 = vld [vmem:[%s152 + $0x3c] sm:$0xf]
        %v627 = vld [vmem:[%s152 + $0x40] sm:$0xf]
        %v628 = vld [vmem:[%s152 + $0x44] sm:$0xf]
        %v629 = vld [vmem:[%s152 + $0x48] sm:$0xf]
        %v630 = vld [vmem:[%s152 + $0x4c] sm:$0xf]
        %v631 = vld [vmem:[%s152 + $0x50] sm:$0xf]
        %v632 = vld [vmem:[%s152 + $0x54] sm:$0xf]
        %v633 = vld [vmem:[%s152 + $0x58] sm:$0xf]
        %v634 = vld [vmem:[%s152 + $0x5c] sm:$0xf]
        %v635 = vld [vmem:[#allocation5] sm:$0xf]
        %v636 = vld [vmem:[#allocation5 + $0x4] sm:$0xf]
        %v637 = vld [vmem:[#allocation5 + $0x8] sm:$0xf]
        %v638 = vld [vmem:[#allocation5 + $0xc] sm:$0xf]
        %v639 = vld [vmem:[#allocation5 + $0x10] sm:$0xf]
        %v640 = vld [vmem:[#allocation5 + $0x14] sm:$0xf]
        %v641 = vld [vmem:[#allocation5 + $0x18] sm:$0xf]
        %v642 = vld [vmem:[#allocation5 + $0x1c] sm:$0xf]
        %v643 = vld [vmem:[#allocation5 + $0x20] sm:$0xf]
        %v644 = vld [vmem:[#allocation5 + $0x24] sm:$0xf]
        %v645 = vld [vmem:[#allocation5 + $0x28] sm:$0xf]
        %v646 = vld [vmem:[#allocation5 + $0x2c] sm:$0xf]
        %v647 = vld [vmem:[#allocation5 + $0x30] sm:$0xf]
        %v648 = vld [vmem:[#allocation5 + $0x34] sm:$0xf]
        %v649 = vld [vmem:[#allocation5 + $0x38] sm:$0xf]
        %v650 = vld [vmem:[#allocation5 + $0x3c] sm:$0xf]
        %v651 = vld [vmem:[%s152 + $0x60] sm:$0x1]
        %s652 = scalar_lea.vmem [#allocation5], 64
        %v653 = vld [vmem:[%s652] sm:$0xf]
        %v654 = vld [vmem:[%s652 + $0x4] sm:$0xf]
        %v655 = vld [vmem:[%s652 + $0x8] sm:$0xf]
        %v656 = vld [vmem:[%s652 + $0xc] sm:$0xf]
        %v657 = vld [vmem:[%s652 + $0x10] sm:$0xf]
        %v658 = vld [vmem:[%s652 + $0x14] sm:$0xf]
        %v659 = vld [vmem:[%s652 + $0x18] sm:$0xf]
        %v660 = vld [vmem:[%s652 + $0x1c] sm:$0xf]
        %v661 = vld [vmem:[%s652 + $0x20] sm:$0xf]
        %v662 = vld [vmem:[%s652 + $0x24] sm:$0xf]
        %v663 = vld [vmem:[%s652 + $0x28] sm:$0xf]
        %v664 = vld [vmem:[%s652 + $0x2c] sm:$0xf]
        %v665 = vld [vmem:[%s652 + $0x30] sm:$0xf]
        %v666 = vld [vmem:[%s652 + $0x34] sm:$0xf]
        %v667 = vld [vmem:[%s652 + $0x38] sm:$0xf]
        %v668 = vld [vmem:[%s652 + $0x3c] sm:$0xf]
        %v694 = vunpack.c.l.b16 %v611
        %v695 = vunpack.c.l.b16 %v612
        %v696 = vunpack.c.l.b16 %v613
        %v697 = vunpack.c.l.b16 %v614
        %v698 = vunpack.c.l.b16 %v615
        %v699 = vunpack.c.l.b16 %v616
        %v700 = vunpack.c.l.b16 %v617
        %v701 = vunpack.c.l.b16 %v618
        %v702 = vunpack.c.l.b16 %v619
        %v703 = vunpack.c.l.b16 %v620
        %v704 = vunpack.c.l.b16 %v621
        %v705 = vunpack.c.l.b16 %v622
        %v706 = vunpack.c.l.b16 %v623
        %v707 = vunpack.c.l.b16 %v624
        %v708 = vunpack.c.l.b16 %v625
        %v709 = vunpack.c.l.b16 %v626
        %v710 = vunpack.c.l.b16 %v627
        %v711 = vunpack.c.l.b16 %v628
        %v712 = vunpack.c.l.b16 %v629
        %v713 = vunpack.c.l.b16 %v630
        %v714 = vunpack.c.l.b16 %v631
        %v715 = vunpack.c.l.b16 %v632
        %v716 = vunpack.c.l.b16 %v633
        %v717 = vunpack.c.l.b16 %v634
        %v718 = vunpack.c.l.b16 %v651
        %v719 = vpack.c.b16 %v695, %v694
        %v720 = vpack.c.b16 %v697, %v696
        %v721 = vpack.c.b16 %v699, %v698
        %v722 = vpack.c.b16 %v701, %v700
        %v723 = vpack.c.b16 %v703, %v702
        %v724 = vpack.c.b16 %v705, %v704
        %v725 = vpack.c.b16 %v707, %v706
        %v726 = vpack.c.b16 %v709, %v708
        %v727 = vpack.c.b16 %v711, %v710
        %v728 = vpack.c.b16 %v713, %v712
        %v729 = vpack.c.b16 %v715, %v714
        %v730 = vpack.c.b16 %v717, %v716
        %v731 = vpack.c.b16 %v718, %v718
        %vm732 = vsmask.f32 7424
        %v734 = vshrl.u32 %v719, 16
        %v736 = vshll.u32 %v719, 16
        %v738 = vrot.slane %v736, 1
        %v739 = vor.u32 %v734, %v738
        %v741 = vshll.u32 %v720, 16
        %v743 = vrot.slane %v741, 1
        %v744 = vsel %vm732, %v739, %v743
        %v745 = vshrl.u32 %v720, 16
        %v747 = vor.u32 %v745, %v743
        %v749 = vshll.u32 %v721, 16
        %v751 = vrot.slane %v749, 1
        %v752 = vsel %vm732, %v747, %v751
        %v753 = vshrl.u32 %v721, 16
        %v755 = vor.u32 %v753, %v751
        %v757 = vshll.u32 %v722, 16
        %v759 = vrot.slane %v757, 1
        %v760 = vsel %vm732, %v755, %v759
        %v761 = vshrl.u32 %v722, 16
        %v763 = vor.u32 %v761, %v759
        %v765 = vshll.u32 %v723, 16
        %v767 = vrot.slane %v765, 1
        %v768 = vsel %vm732, %v763, %v767
        %v769 = vshrl.u32 %v723, 16
        %v771 = vor.u32 %v769, %v767
        %v773 = vshll.u32 %v724, 16
        %v775 = vrot.slane %v773, 1
        %v776 = vsel %vm732, %v771, %v775
        %v777 = vshrl.u32 %v724, 16
        %v779 = vor.u32 %v777, %v775
        %v781 = vshll.u32 %v725, 16
        %v783 = vrot.slane %v781, 1
        %v784 = vsel %vm732, %v779, %v783
        %v785 = vshrl.u32 %v725, 16
        %v787 = vor.u32 %v785, %v783
        %v789 = vshll.u32 %v726, 16
        %v791 = vrot.slane %v789, 1
        %v792 = vsel %vm732, %v787, %v791
        %v793 = vshrl.u32 %v726, 16
        %v795 = vor.u32 %v793, %v791
        %v797 = vshll.u32 %v727, 16
        %v799 = vrot.slane %v797, 1
        %v800 = vsel %vm732, %v795, %v799
        %v801 = vshrl.u32 %v727, 16
        %v803 = vor.u32 %v801, %v799
        %v805 = vshll.u32 %v728, 16
        %v807 = vrot.slane %v805, 1
        %v808 = vsel %vm732, %v803, %v807
        %v809 = vshrl.u32 %v728, 16
        %v811 = vor.u32 %v809, %v807
        %v813 = vshll.u32 %v729, 16
        %v815 = vrot.slane %v813, 1
        %v816 = vsel %vm732, %v811, %v815
        %v817 = vshrl.u32 %v729, 16
        %v819 = vor.u32 %v817, %v815
        %v821 = vshll.u32 %v730, 16
        %v823 = vrot.slane %v821, 1
        %v824 = vsel %vm732, %v819, %v823
        %v825 = vshrl.u32 %v730, 16
        %v827 = vor.u32 %v825, %v823
        %v829 = vshll.u32 %v731, 16
        %v831 = vrot.slane %v829, 1
        %v832 = vsel %vm732, %v827, %v831
        %v861 = vunpack.c.l.b16 %v653
        %v862 = vunpack.c.l.b16 %v654
        %v863 = vunpack.c.l.b16 %v655
        %v864 = vunpack.c.l.b16 %v656
        %v865 = vunpack.c.l.b16 %v657
        %v866 = vunpack.c.l.b16 %v658
        %v867 = vunpack.c.l.b16 %v659
        %v868 = vunpack.c.l.b16 %v660
        %v869 = vunpack.c.l.b16 %v661
        %v870 = vunpack.c.l.b16 %v662
        %v871 = vunpack.c.l.b16 %v663
        %v872 = vunpack.c.l.b16 %v664
        %v873 = vunpack.c.l.b16 %v665
        %v874 = vunpack.c.l.b16 %v666
        %v875 = vunpack.c.l.b16 %v667
        %v876 = vunpack.c.l.b16 %v668
        %v877 = vpack.c.b16 %v862, %v861
        %v878 = vpack.c.b16 %v864, %v863
        %v879 = vpack.c.b16 %v866, %v865
        %v880 = vpack.c.b16 %v868, %v867
        %v881 = vpack.c.b16 %v870, %v869
        %v882 = vpack.c.b16 %v872, %v871
        %v883 = vpack.c.b16 %v874, %v873
        %v884 = vpack.c.b16 %v876, %v875
        %893 = vmatprep.subr.bf16.mxu0 0
        %894 = vmatpush1.bf16.msra.mxu0 %v884
        %895 = vmatprep.subr.bf16.mxu0 0
        %896 = vmatpush1.bf16.msra.mxu0 %v883
        %897 = vmatprep.subr.bf16.mxu0 0
        %898 = vmatpush1.bf16.msra.mxu0 %v882
        %899 = vmatprep.subr.bf16.mxu0 0
        %900 = vmatpush1.bf16.msra.mxu0 %v881
        %901 = vmatprep.subr.bf16.mxu0 0
        %902 = vmatpush1.bf16.msra.mxu0 %v880
        %903 = vmatprep.subr.bf16.mxu0 0
        %904 = vmatpush1.bf16.msra.mxu0 %v879
        %905 = vmatprep.subr.bf16.mxu0 0
        %906 = vmatpush1.bf16.msra.mxu0 %v878
        %907 = vmatprep.subr.bf16.mxu0 0
        %908 = vmatpush1.bf16.msra.mxu0 %v877
        %909 = vmatprep.subr.bf16.mxu0 0
        %910 = vmatpush2.bf16.msra.mxu0 0
        %911 = vmatprep.subr.bf16.mxu0 0
        %912 = vmatpush2.bf16.msra.mxu0 0
        %913 = vmatprep.subr.bf16.mxu0 0
        %914 = vmatpush2.bf16.msra.mxu0 0
        %915 = vmatprep.subr.bf16.mxu0 0
        %916 = vmatpush2.bf16.msra.mxu0 0
        %917 = vmatprep.subr.bf16.mxu0 0
        %918 = vmatpush2.bf16.msra.mxu0 0
        %919 = vmatprep.subr.bf16.mxu0 0
        %920 = vmatpush2.bf16.msra.mxu0 0
        %921 = vmatprep.subr.bf16.mxu0 0
        %922 = vmatpush2.bf16.msra.mxu0 0
        %923 = vmatprep.subr.bf16.mxu0 0
        %924 = vmatpush2.bf16.msra.mxu0 0
        %925 = vmatprep.mubr.bf16.mxu0 0
        %926 = vmatmul.mubr.bf16.gmra.mxu0 %v744
        %v927 = vpop.f32.mrf.mxu0
        %v928 = vadd.f32 0.0, %v927
        %v929 = vpop.f32.mrf.mxu0
        %v930 = vpop.f32.mrf.mxu0
        %v931 = vadd.f32 0.0, %v930
        %v932 = vpop.f32.mrf.mxu0
        %933 = vmatprep.mubr.bf16.mxu0 0
        %934 = vmatmul.mubr.bf16.gmra.mxu0 %v752
        %v935 = vpop.f32.mrf.mxu0
        %v936 = vadd.f32 0.0, %v935
        %v937 = vpop.f32.mrf.mxu0
        %v938 = vpop.f32.mrf.mxu0
        %v939 = vadd.f32 0.0, %v938
        %v940 = vpop.f32.mrf.mxu0
        %941 = vmatprep.mubr.bf16.mxu0 0
        %942 = vmatmul.mubr.bf16.gmra.mxu0 %v760
        %v943 = vpop.f32.mrf.mxu0
        %v944 = vadd.f32 0.0, %v943
        %v945 = vpop.f32.mrf.mxu0
        %v946 = vpop.f32.mrf.mxu0
        %v947 = vadd.f32 0.0, %v946
        %v948 = vpop.f32.mrf.mxu0
        %949 = vmatprep.mubr.bf16.mxu0 0
        %950 = vmatmul.mubr.bf16.gmra.mxu0 %v768
        %v951 = vpop.f32.mrf.mxu0
        %v952 = vadd.f32 0.0, %v951
        %v953 = vpop.f32.mrf.mxu0
        %v954 = vpop.f32.mrf.mxu0
        %v955 = vadd.f32 0.0, %v954
        %v956 = vpop.f32.mrf.mxu0
        %957 = vmatprep.mubr.bf16.mxu0 0
        %958 = vmatmul.mubr.bf16.gmra.mxu0 %v776
        %v959 = vpop.f32.mrf.mxu0
        %v960 = vadd.f32 0.0, %v959
        %v961 = vpop.f32.mrf.mxu0
        %v962 = vpop.f32.mrf.mxu0
        %v963 = vadd.f32 0.0, %v962
        %v964 = vpop.f32.mrf.mxu0
        %965 = vmatprep.mubr.bf16.mxu0 0
        %966 = vmatmul.mubr.bf16.gmra.mxu0 %v784
        %v967 = vpop.f32.mrf.mxu0
        %v968 = vadd.f32 0.0, %v967
        %v969 = vpop.f32.mrf.mxu0
        %v970 = vpop.f32.mrf.mxu0
        %v971 = vadd.f32 0.0, %v970
        %v972 = vpop.f32.mrf.mxu0
        %973 = vmatprep.mubr.bf16.mxu0 0
        %974 = vmatmul.mubr.bf16.gmra.mxu0 %v792
        %v975 = vpop.f32.mrf.mxu0
        %v976 = vadd.f32 0.0, %v975
        %v977 = vpop.f32.mrf.mxu0
        %v978 = vpop.f32.mrf.mxu0
        %v979 = vadd.f32 0.0, %v978
        %v980 = vpop.f32.mrf.mxu0
        %981 = vmatprep.mubr.bf16.mxu0 0
        %982 = vmatmul.mubr.bf16.gmra.mxu0 %v800
        %v983 = vpop.f32.mrf.mxu0
        %v984 = vadd.f32 0.0, %v983
        %v985 = vpop.f32.mrf.mxu0
        %v986 = vpop.f32.mrf.mxu0
        %v987 = vadd.f32 0.0, %v986
        %v988 = vpop.f32.mrf.mxu0
        %989 = vmatprep.mubr.bf16.mxu0 0
        %990 = vmatmul.mubr.bf16.gmra.mxu0 %v808
        %v991 = vpop.f32.mrf.mxu0
        %v992 = vadd.f32 0.0, %v991
        %v993 = vpop.f32.mrf.mxu0
        %v994 = vpop.f32.mrf.mxu0
        %v995 = vadd.f32 0.0, %v994
        %v996 = vpop.f32.mrf.mxu0
        %997 = vmatprep.mubr.bf16.mxu0 0
        %998 = vmatmul.mubr.bf16.gmra.mxu0 %v816
        %v999 = vpop.f32.mrf.mxu0
        %v1000 = vadd.f32 0.0, %v999
        %v1001 = vpop.f32.mrf.mxu0
        %v1002 = vpop.f32.mrf.mxu0
        %v1003 = vadd.f32 0.0, %v1002
        %v1004 = vpop.f32.mrf.mxu0
        %1005 = vmatprep.mubr.bf16.mxu0 0
        %1006 = vmatmul.mubr.bf16.gmra.mxu0 %v824
        %v1007 = vpop.f32.mrf.mxu0
        %v1008 = vadd.f32 0.0, %v1007
        %v1009 = vpop.f32.mrf.mxu0
        %v1010 = vpop.f32.mrf.mxu0
        %v1011 = vadd.f32 0.0, %v1010
        %v1012 = vpop.f32.mrf.mxu0
        %1013 = vmatprep.mubr.bf16.mxu0 0
        %1014 = vmatmul.mubr.bf16.gmra.mxu0 %v832
        %v1015 = vpop.f32.mrf.mxu0
        %v1016 = vadd.f32 0.0, %v1015
        %v1017 = vpop.f32.mrf.mxu0
        %v1018 = vpop.f32.mrf.mxu0
        %v1019 = vadd.f32 0.0, %v1018
        %v1020 = vpop.f32.mrf.mxu0
        %1021 = vdwg.mxu0
        %v1050 = vunpack.c.l.b16 %v635
        %v1051 = vunpack.c.l.b16 %v636
        %v1052 = vunpack.c.l.b16 %v637
        %v1053 = vunpack.c.l.b16 %v638
        %v1054 = vunpack.c.l.b16 %v639
        %v1055 = vunpack.c.l.b16 %v640
        %v1056 = vunpack.c.l.b16 %v641
        %v1057 = vunpack.c.l.b16 %v642
        %v1058 = vunpack.c.l.b16 %v643
        %v1059 = vunpack.c.l.b16 %v644
        %v1060 = vunpack.c.l.b16 %v645
        %v1061 = vunpack.c.l.b16 %v646
        %v1062 = vunpack.c.l.b16 %v647
        %v1063 = vunpack.c.l.b16 %v648
        %v1064 = vunpack.c.l.b16 %v649
        %v1065 = vunpack.c.l.b16 %v650
        %v1066 = vpack.c.b16 %v1051, %v1050
        %v1067 = vpack.c.b16 %v1053, %v1052
        %v1068 = vpack.c.b16 %v1055, %v1054
        %v1069 = vpack.c.b16 %v1057, %v1056
        %v1070 = vpack.c.b16 %v1059, %v1058
        %v1071 = vpack.c.b16 %v1061, %v1060
        %v1072 = vpack.c.b16 %v1063, %v1062
        %v1073 = vpack.c.b16 %v1065, %v1064
        %1082 = vmatprep.subr.bf16.mxu0 0
        %1083 = vmatpush1.bf16.msra.mxu0 %v1073
        %1084 = vmatprep.subr.bf16.mxu0 0
        %1085 = vmatpush1.bf16.msra.mxu0 %v1072
        %1086 = vmatprep.subr.bf16.mxu0 0
        %1087 = vmatpush1.bf16.msra.mxu0 %v1071
        %1088 = vmatprep.subr.bf16.mxu0 0
        %1089 = vmatpush1.bf16.msra.mxu0 %v1070
        %1090 = vmatprep.subr.bf16.mxu0 0
        %1091 = vmatpush1.bf16.msra.mxu0 %v1069
        %1092 = vmatprep.subr.bf16.mxu0 0
        %1093 = vmatpush1.bf16.msra.mxu0 %v1068
        %1094 = vmatprep.subr.bf16.mxu0 0
        %1095 = vmatpush1.bf16.msra.mxu0 %v1067
        %1096 = vmatprep.subr.bf16.mxu0 0
        %1097 = vmatpush1.bf16.msra.mxu0 %v1066
        %1098 = vmatprep.subr.bf16.mxu0 0
        %1099 = vmatpush2.bf16.msra.mxu0 0
        %1100 = vmatprep.subr.bf16.mxu0 0
        %1101 = vmatpush2.bf16.msra.mxu0 0
        %1102 = vmatprep.subr.bf16.mxu0 0
        %1103 = vmatpush2.bf16.msra.mxu0 0
        %1104 = vmatprep.subr.bf16.mxu0 0
        %1105 = vmatpush2.bf16.msra.mxu0 0
        %1106 = vmatprep.subr.bf16.mxu0 0
        %1107 = vmatpush2.bf16.msra.mxu0 0
        %1108 = vmatprep.subr.bf16.mxu0 0
        %1109 = vmatpush2.bf16.msra.mxu0 0
        %1110 = vmatprep.subr.bf16.mxu0 0
        %1111 = vmatpush2.bf16.msra.mxu0 0
        %1112 = vmatprep.subr.bf16.mxu0 0
        %1113 = vmatpush2.bf16.msra.mxu0 0
        %1114 = vmatprep.mubr.bf16.mxu0 0
        %1115 = vmatmul.mubr.bf16.gmra.mxu0 %v719
        %v1116 = vpop.f32.mrf.mxu0
        %v1117 = vadd.f32 %v928, %v1116
        %v1118 = vpop.f32.mrf.mxu0
        %v1119 = vpop.f32.mrf.mxu0
        %v1120 = vadd.f32 %v931, %v1119
        %v1121 = vpop.f32.mrf.mxu0
        %1122 = vmatprep.mubr.bf16.mxu0 0
        %1123 = vmatmul.mubr.bf16.gmra.mxu0 %v720
        %v1124 = vpop.f32.mrf.mxu0
        %v1125 = vadd.f32 %v936, %v1124
        %v1126 = vpop.f32.mrf.mxu0
        %v1127 = vpop.f32.mrf.mxu0
        %v1128 = vadd.f32 %v939, %v1127
        %v1129 = vpop.f32.mrf.mxu0
        %1130 = vmatprep.mubr.bf16.mxu0 0
        %1131 = vmatmul.mubr.bf16.gmra.mxu0 %v721
        %v1132 = vpop.f32.mrf.mxu0
        %v1133 = vadd.f32 %v944, %v1132
        %v1134 = vpop.f32.mrf.mxu0
        %v1135 = vpop.f32.mrf.mxu0
        %v1136 = vadd.f32 %v947, %v1135
        %v1137 = vpop.f32.mrf.mxu0
        %1138 = vmatprep.mubr.bf16.mxu0 0
        %1139 = vmatmul.mubr.bf16.gmra.mxu0 %v722
        %v1140 = vpop.f32.mrf.mxu0
        %v1141 = vadd.f32 %v952, %v1140
        %v1142 = vpop.f32.mrf.mxu0
        %v1143 = vpop.f32.mrf.mxu0
        %v1144 = vadd.f32 %v955, %v1143
        %v1145 = vpop.f32.mrf.mxu0
        %1146 = vmatprep.mubr.bf16.mxu0 0
        %1147 = vmatmul.mubr.bf16.gmra.mxu0 %v723
        %v1148 = vpop.f32.mrf.mxu0
        %v1149 = vadd.f32 %v960, %v1148
        %v1150 = vpop.f32.mrf.mxu0
        %v1151 = vpop.f32.mrf.mxu0
        %v1152 = vadd.f32 %v963, %v1151
        %v1153 = vpop.f32.mrf.mxu0
        %1154 = vmatprep.mubr.bf16.mxu0 0
        %1155 = vmatmul.mubr.bf16.gmra.mxu0 %v724
        %v1156 = vpop.f32.mrf.mxu0
        %v1157 = vadd.f32 %v968, %v1156
        %v1158 = vpop.f32.mrf.mxu0
        %v1159 = vpop.f32.mrf.mxu0
        %v1160 = vadd.f32 %v971, %v1159
        %v1161 = vpop.f32.mrf.mxu0
        %1162 = vmatprep.mubr.bf16.mxu0 0
        %1163 = vmatmul.mubr.bf16.gmra.mxu0 %v725
        %v1164 = vpop.f32.mrf.mxu0
        %v1165 = vadd.f32 %v976, %v1164
        %v1166 = vpop.f32.mrf.mxu0
        %v1167 = vpop.f32.mrf.mxu0
        %v1168 = vadd.f32 %v979, %v1167
        %v1169 = vpop.f32.mrf.mxu0
        %1170 = vmatprep.mubr.bf16.mxu0 0
        %1171 = vmatmul.mubr.bf16.gmra.mxu0 %v726
        %v1172 = vpop.f32.mrf.mxu0
        %v1173 = vadd.f32 %v984, %v1172
        %v1174 = vpop.f32.mrf.mxu0
        %v1175 = vpop.f32.mrf.mxu0
        %v1176 = vadd.f32 %v987, %v1175
        %v1177 = vpop.f32.mrf.mxu0
        %1178 = vmatprep.mubr.bf16.mxu0 0
        %1179 = vmatmul.mubr.bf16.gmra.mxu0 %v727
        %v1180 = vpop.f32.mrf.mxu0
        %v1181 = vadd.f32 %v992, %v1180
        %v1182 = vpop.f32.mrf.mxu0
        %v1183 = vpop.f32.mrf.mxu0
        %v1184 = vadd.f32 %v995, %v1183
        %v1185 = vpop.f32.mrf.mxu0
        %1186 = vmatprep.mubr.bf16.mxu0 0
        %1187 = vmatmul.mubr.bf16.gmra.mxu0 %v728
        %v1188 = vpop.f32.mrf.mxu0
        %v1189 = vadd.f32 %v1000, %v1188
        %v1190 = vpop.f32.mrf.mxu0
        %v1191 = vpop.f32.mrf.mxu0
        %v1192 = vadd.f32 %v1003, %v1191
        %v1193 = vpop.f32.mrf.mxu0
        %1194 = vmatprep.mubr.bf16.mxu0 0
        %1195 = vmatmul.mubr.bf16.gmra.mxu0 %v729
        %v1196 = vpop.f32.mrf.mxu0
        %v1197 = vadd.f32 %v1008, %v1196
        %v1198 = vpop.f32.mrf.mxu0
        %v1199 = vpop.f32.mrf.mxu0
        %v1200 = vadd.f32 %v1011, %v1199
        %v1201 = vpop.f32.mrf.mxu0
        %1202 = vmatprep.mubr.bf16.mxu0 0
        %1203 = vmatmul.mubr.bf16.gmra.mxu0 %v730
        %v1204 = vpop.f32.mrf.mxu0
        %v1205 = vadd.f32 %v1016, %v1204
        %v1206 = vpop.f32.mrf.mxu0
        %v1207 = vpop.f32.mrf.mxu0
        %v1208 = vadd.f32 %v1019, %v1207
        %v1209 = vpop.f32.mrf.mxu0
        %1210 = vdwg.mxu0
        %v1211 = vld [vmem:[%s152] sm:$0xe]
        %s1212 = scalar_lea.vmem [#allocation5], 128
        %v1213 = vld [vmem:[%s1212] sm:$0xf]
        %v1214 = vld [vmem:[%s1212 + $0x4] sm:$0xf]
        %v1215 = vld [vmem:[%s1212 + $0x8] sm:$0xf]
        %v1216 = vld [vmem:[%s1212 + $0xc] sm:$0xf]
        %v1217 = vld [vmem:[%s1212 + $0x10] sm:$0xf]
        %v1218 = vld [vmem:[%s1212 + $0x14] sm:$0xf]
        %v1219 = vld [vmem:[%s1212 + $0x18] sm:$0xf]
        %v1220 = vld [vmem:[%s1212 + $0x1c] sm:$0xf]
        %v1221 = vld [vmem:[%s1212 + $0x20] sm:$0xf]
        %v1222 = vld [vmem:[%s1212 + $0x24] sm:$0xf]
        %v1223 = vld [vmem:[%s1212 + $0x28] sm:$0xf]
        %v1224 = vld [vmem:[%s1212 + $0x2c] sm:$0xf]
        %v1225 = vld [vmem:[%s1212 + $0x30] sm:$0xf]
        %v1226 = vld [vmem:[%s1212 + $0x34] sm:$0xf]
        %v1227 = vld [vmem:[%s1212 + $0x38] sm:$0xf]
        %v1228 = vld [vmem:[%s1212 + $0x3c] sm:$0xf]
        %v1230 = vunpack.c.l.b16 %v1211
        %v1231 = vpack.c.b16 %v695, %v1230
        %vm1232 = vcmask 1046528
        %v1233 = vrot.slane %v1231, 1
        %v1234 = vrot.slane %v720, 1
        %v1235 = vsel %vm1232, %v1233, %v1234
        %v1236 = vrot.slane %v721, 1
        %v1237 = vsel %vm1232, %v1234, %v1236
        %v1238 = vrot.slane %v722, 1
        %v1239 = vsel %vm1232, %v1236, %v1238
        %v1240 = vrot.slane %v723, 1
        %v1241 = vsel %vm1232, %v1238, %v1240
        %v1242 = vrot.slane %v724, 1
        %v1243 = vsel %vm1232, %v1240, %v1242
        %v1244 = vrot.slane %v725, 1
        %v1245 = vsel %vm1232, %v1242, %v1244
        %v1246 = vrot.slane %v726, 1
        %v1247 = vsel %vm1232, %v1244, %v1246
        %v1248 = vrot.slane %v727, 1
        %v1249 = vsel %vm1232, %v1246, %v1248
        %v1250 = vrot.slane %v728, 1
        %v1251 = vsel %vm1232, %v1248, %v1250
        %v1252 = vrot.slane %v729, 1
        %v1253 = vsel %vm1232, %v1250, %v1252
        %v1254 = vrot.slane %v730, 1
        %v1255 = vsel %vm1232, %v1252, %v1254
        %v1256 = vrot.slane %v731, 1
        %v1257 = vsel %vm1232, %v1254, %v1256
        %v1286 = vunpack.c.l.b16 %v1213
        %v1287 = vunpack.c.l.b16 %v1214
        %v1288 = vunpack.c.l.b16 %v1215
        %v1289 = vunpack.c.l.b16 %v1216
        %v1290 = vunpack.c.l.b16 %v1217
        %v1291 = vunpack.c.l.b16 %v1218
        %v1292 = vunpack.c.l.b16 %v1219
        %v1293 = vunpack.c.l.b16 %v1220
        %v1294 = vunpack.c.l.b16 %v1221
        %v1295 = vunpack.c.l.b16 %v1222
        %v1296 = vunpack.c.l.b16 %v1223
        %v1297 = vunpack.c.l.b16 %v1224
        %v1298 = vunpack.c.l.b16 %v1225
        %v1299 = vunpack.c.l.b16 %v1226
        %v1300 = vunpack.c.l.b16 %v1227
        %v1301 = vunpack.c.l.b16 %v1228
        %v1302 = vpack.c.b16 %v1287, %v1286
        %v1303 = vpack.c.b16 %v1289, %v1288
        %v1304 = vpack.c.b16 %v1291, %v1290
        %v1305 = vpack.c.b16 %v1293, %v1292
        %v1306 = vpack.c.b16 %v1295, %v1294
        %v1307 = vpack.c.b16 %v1297, %v1296
        %v1308 = vpack.c.b16 %v1299, %v1298
        %v1309 = vpack.c.b16 %v1301, %v1300
        %1318 = vmatprep.subr.bf16.mxu0 0
        %1319 = vmatpush1.bf16.msra.mxu0 %v1309
        %1320 = vmatprep.subr.bf16.mxu0 0
        %1321 = vmatpush1.bf16.msra.mxu0 %v1308
        %1322 = vmatprep.subr.bf16.mxu0 0
        %1323 = vmatpush1.bf16.msra.mxu0 %v1307
        %1324 = vmatprep.subr.bf16.mxu0 0
        %1325 = vmatpush1.bf16.msra.mxu0 %v1306
        %1326 = vmatprep.subr.bf16.mxu0 0
        %1327 = vmatpush1.bf16.msra.mxu0 %v1305
        %1328 = vmatprep.subr.bf16.mxu0 0
        %1329 = vmatpush1.bf16.msra.mxu0 %v1304
        %1330 = vmatprep.subr.bf16.mxu0 0
        %1331 = vmatpush1.bf16.msra.mxu0 %v1303
        %1332 = vmatprep.subr.bf16.mxu0 0
        %1333 = vmatpush1.bf16.msra.mxu0 %v1302
        %1334 = vmatprep.subr.bf16.mxu0 0
        %1335 = vmatpush2.bf16.msra.mxu0 0
        %1336 = vmatprep.subr.bf16.mxu0 0
        %1337 = vmatpush2.bf16.msra.mxu0 0
        %1338 = vmatprep.subr.bf16.mxu0 0
        %1339 = vmatpush2.bf16.msra.mxu0 0
        %1340 = vmatprep.subr.bf16.mxu0 0
        %1341 = vmatpush2.bf16.msra.mxu0 0
        %1342 = vmatprep.subr.bf16.mxu0 0
        %1343 = vmatpush2.bf16.msra.mxu0 0
        %1344 = vmatprep.subr.bf16.mxu0 0
        %1345 = vmatpush2.bf16.msra.mxu0 0
        %1346 = vmatprep.subr.bf16.mxu0 0
        %1347 = vmatpush2.bf16.msra.mxu0 0
        %1348 = vmatprep.subr.bf16.mxu0 0
        %1349 = vmatpush2.bf16.msra.mxu0 0
        %1350 = vmatprep.mubr.bf16.mxu0 0
        %1351 = vmatmul.mubr.bf16.gmra.mxu0 %v1235
        %v1352 = vpop.f32.mrf.mxu0
        %v1353 = vadd.f32 0.0, %v1352
        %v1354 = vpop.f32.mrf.mxu0
        %v1355 = vpop.f32.mrf.mxu0
        %v1356 = vadd.f32 0.0, %v1355
        %v1357 = vpop.f32.mrf.mxu0
        %1358 = vmatprep.mubr.bf16.mxu0 0
        %1359 = vmatmul.mubr.bf16.gmra.mxu0 %v1237
        %v1360 = vpop.f32.mrf.mxu0
        %v1361 = vadd.f32 0.0, %v1360
        %v1362 = vpop.f32.mrf.mxu0
        %v1363 = vpop.f32.mrf.mxu0
        %v1364 = vadd.f32 0.0, %v1363
        %v1365 = vpop.f32.mrf.mxu0
        %1366 = vmatprep.mubr.bf16.mxu0 0
        %1367 = vmatmul.mubr.bf16.gmra.mxu0 %v1239
        %v1368 = vpop.f32.mrf.mxu0
        %v1369 = vadd.f32 0.0, %v1368
        %v1370 = vpop.f32.mrf.mxu0
        %v1371 = vpop.f32.mrf.mxu0
        %v1372 = vadd.f32 0.0, %v1371
        %v1373 = vpop.f32.mrf.mxu0
        %1374 = vmatprep.mubr.bf16.mxu0 0
        %1375 = vmatmul.mubr.bf16.gmra.mxu0 %v1241
        %v1376 = vpop.f32.mrf.mxu0
        %v1377 = vadd.f32 0.0, %v1376
        %v1378 = vpop.f32.mrf.mxu0
        %v1379 = vpop.f32.mrf.mxu0
        %v1380 = vadd.f32 0.0, %v1379
        %v1381 = vpop.f32.mrf.mxu0
        %1382 = vmatprep.mubr.bf16.mxu0 0
        %1383 = vmatmul.mubr.bf16.gmra.mxu0 %v1243
        %v1384 = vpop.f32.mrf.mxu0
        %v1385 = vadd.f32 0.0, %v1384
        %v1386 = vpop.f32.mrf.mxu0
        %v1387 = vpop.f32.mrf.mxu0
        %v1388 = vadd.f32 0.0, %v1387
        %v1389 = vpop.f32.mrf.mxu0
        %1390 = vmatprep.mubr.bf16.mxu0 0
        %1391 = vmatmul.mubr.bf16.gmra.mxu0 %v1245
        %v1392 = vpop.f32.mrf.mxu0
        %v1393 = vadd.f32 0.0, %v1392
        %v1394 = vpop.f32.mrf.mxu0
        %v1395 = vpop.f32.mrf.mxu0
        %v1396 = vadd.f32 0.0, %v1395
        %v1397 = vpop.f32.mrf.mxu0
        %1398 = vmatprep.mubr.bf16.mxu0 0
        %1399 = vmatmul.mubr.bf16.gmra.mxu0 %v1247
        %v1400 = vpop.f32.mrf.mxu0
        %v1401 = vadd.f32 0.0, %v1400
        %v1402 = vpop.f32.mrf.mxu0
        %v1403 = vpop.f32.mrf.mxu0
        %v1404 = vadd.f32 0.0, %v1403
        %v1405 = vpop.f32.mrf.mxu0
        %1406 = vmatprep.mubr.bf16.mxu0 0
        %1407 = vmatmul.mubr.bf16.gmra.mxu0 %v1249
        %v1408 = vpop.f32.mrf.mxu0
        %v1409 = vadd.f32 0.0, %v1408
        %v1410 = vpop.f32.mrf.mxu0
        %v1411 = vpop.f32.mrf.mxu0
        %v1412 = vadd.f32 0.0, %v1411
        %v1413 = vpop.f32.mrf.mxu0
        %1414 = vmatprep.mubr.bf16.mxu0 0
        %1415 = vmatmul.mubr.bf16.gmra.mxu0 %v1251
        %v1416 = vpop.f32.mrf.mxu0
        %v1417 = vadd.f32 0.0, %v1416
        %v1418 = vpop.f32.mrf.mxu0
        %v1419 = vpop.f32.mrf.mxu0
        %v1420 = vadd.f32 0.0, %v1419
        %v1421 = vpop.f32.mrf.mxu0
        %1422 = vmatprep.mubr.bf16.mxu0 0
        %1423 = vmatmul.mubr.bf16.gmra.mxu0 %v1253
        %v1424 = vpop.f32.mrf.mxu0
        %v1425 = vadd.f32 0.0, %v1424
        %v1426 = vpop.f32.mrf.mxu0
        %v1427 = vpop.f32.mrf.mxu0
        %v1428 = vadd.f32 0.0, %v1427
        %v1429 = vpop.f32.mrf.mxu0
        %1430 = vmatprep.mubr.bf16.mxu0 0
        %1431 = vmatmul.mubr.bf16.gmra.mxu0 %v1255
        %v1432 = vpop.f32.mrf.mxu0
        %v1433 = vadd.f32 0.0, %v1432
        %v1434 = vpop.f32.mrf.mxu0
        %v1435 = vpop.f32.mrf.mxu0
        %v1436 = vadd.f32 0.0, %v1435
        %v1437 = vpop.f32.mrf.mxu0
        %1438 = vmatprep.mubr.bf16.mxu0 0
        %1439 = vmatmul.mubr.bf16.gmra.mxu0 %v1257
        %v1440 = vpop.f32.mrf.mxu0
        %v1441 = vadd.f32 0.0, %v1440
        %v1442 = vpop.f32.mrf.mxu0
        %v1443 = vpop.f32.mrf.mxu0
        %v1444 = vadd.f32 0.0, %v1443
        %v1445 = vpop.f32.mrf.mxu0
        %1446 = vdwg.mxu0
        %v1447 = vadd.f32 %v1117, %v1353
        %v1448 = vadd.f32 %v1120, %v1356
        %v1449 = vadd.f32 %v1125, %v1361
        %v1450 = vadd.f32 %v1128, %v1364
        %v1451 = vadd.f32 %v1133, %v1369
        %v1452 = vadd.f32 %v1136, %v1372
        %v1453 = vadd.f32 %v1141, %v1377
        %v1454 = vadd.f32 %v1144, %v1380
        %v1455 = vadd.f32 %v1149, %v1385
        %v1456 = vadd.f32 %v1152, %v1388
        %v1457 = vadd.f32 %v1157, %v1393
        %v1458 = vadd.f32 %v1160, %v1396
        %v1459 = vadd.f32 %v1165, %v1401
        %v1460 = vadd.f32 %v1168, %v1404
        %v1461 = vadd.f32 %v1173, %v1409
        %v1462 = vadd.f32 %v1176, %v1412
        %v1463 = vadd.f32 %v1181, %v1417
        %v1464 = vadd.f32 %v1184, %v1420
        %v1465 = vadd.f32 %v1189, %v1425
        %v1466 = vadd.f32 %v1192, %v1428
        %v1467 = vadd.f32 %v1197, %v1433
        %v1468 = vadd.f32 %v1200, %v1436
        %v1469 = vadd.f32 %v1205, %v1441
        %v1470 = vadd.f32 %v1208, %v1444
        %v1471 = vld [vmem:[%s152 + $0xc] sm:$0xf]
        %v1472 = vld [vmem:[%s152 + $0x10] sm:$0xf]
        %v1473 = vld [vmem:[%s152 + $0x14] sm:$0xf]
        %v1474 = vld [vmem:[%s152 + $0x18] sm:$0xf]
        %v1475 = vld [vmem:[%s152 + $0x1c] sm:$0xf]
        %v1476 = vld [vmem:[%s152 + $0x20] sm:$0xf]
        %v1477 = vld [vmem:[%s152 + $0x24] sm:$0xf]
        %v1478 = vld [vmem:[%s152 + $0x28] sm:$0xf]
        %v1479 = vld [vmem:[%s152 + $0x2c] sm:$0xf]
        %v1480 = vld [vmem:[%s152 + $0x30] sm:$0xf]
        %v1481 = vld [vmem:[%s152 + $0x34] sm:$0xf]
        %v1482 = vld [vmem:[%s152 + $0x38] sm:$0xf]
        %v1483 = vld [vmem:[%s152 + $0x3c] sm:$0xf]
        %v1484 = vld [vmem:[%s152 + $0x40] sm:$0xf]
        %v1485 = vld [vmem:[%s152 + $0x44] sm:$0xf]
        %v1486 = vld [vmem:[%s152 + $0x48] sm:$0xf]
        %v1487 = vld [vmem:[%s152 + $0x4c] sm:$0xf]
        %v1488 = vld [vmem:[%s152 + $0x50] sm:$0xf]
        %v1489 = vld [vmem:[%s152 + $0x54] sm:$0xf]
        %v1490 = vld [vmem:[%s152 + $0x58] sm:$0xf]
        %v1491 = vld [vmem:[%s152 + $0x5c] sm:$0xf]
        %v1492 = vld [vmem:[%s152 + $0x60] sm:$0xf]
        %v1493 = vld [vmem:[%s152 + $0x64] sm:$0xf]
        %v1494 = vld [vmem:[%s152 + $0x68] sm:$0xf]
        %s1495 = scalar_lea.vmem [#allocation5], 192
        %v1496 = vld [vmem:[%s1495] sm:$0xf]
        %v1497 = vld [vmem:[%s1495 + $0x4] sm:$0xf]
        %v1498 = vld [vmem:[%s1495 + $0x8] sm:$0xf]
        %v1499 = vld [vmem:[%s1495 + $0xc] sm:$0xf]
        %v1500 = vld [vmem:[%s1495 + $0x10] sm:$0xf]
        %v1501 = vld [vmem:[%s1495 + $0x14] sm:$0xf]
        %v1502 = vld [vmem:[%s1495 + $0x18] sm:$0xf]
        %v1503 = vld [vmem:[%s1495 + $0x1c] sm:$0xf]
        %v1504 = vld [vmem:[%s1495 + $0x20] sm:$0xf]
        %v1505 = vld [vmem:[%s1495 + $0x24] sm:$0xf]
        %v1506 = vld [vmem:[%s1495 + $0x28] sm:$0xf]
        %v1507 = vld [vmem:[%s1495 + $0x2c] sm:$0xf]
        %v1508 = vld [vmem:[%s1495 + $0x30] sm:$0xf]
        %v1509 = vld [vmem:[%s1495 + $0x34] sm:$0xf]
        %v1510 = vld [vmem:[%s1495 + $0x38] sm:$0xf]
        %v1511 = vld [vmem:[%s1495 + $0x3c] sm:$0xf]
        %v1536 = vunpack.c.l.b16 %v1471
        %v1537 = vunpack.c.l.b16 %v1472
        %v1538 = vunpack.c.l.b16 %v1473
        %v1539 = vunpack.c.l.b16 %v1474
        %v1540 = vunpack.c.l.b16 %v1475
        %v1541 = vunpack.c.l.b16 %v1476
        %v1542 = vunpack.c.l.b16 %v1477
        %v1543 = vunpack.c.l.b16 %v1478
        %v1544 = vunpack.c.l.b16 %v1479
        %v1545 = vunpack.c.l.b16 %v1480
        %v1546 = vunpack.c.l.b16 %v1481
        %v1547 = vunpack.c.l.b16 %v1482
        %v1548 = vunpack.c.l.b16 %v1483
        %v1549 = vunpack.c.l.b16 %v1484
        %v1550 = vunpack.c.l.b16 %v1485
        %v1551 = vunpack.c.l.b16 %v1486
        %v1552 = vunpack.c.l.b16 %v1487
        %v1553 = vunpack.c.l.b16 %v1488
        %v1554 = vunpack.c.l.b16 %v1489
        %v1555 = vunpack.c.l.b16 %v1490
        %v1556 = vunpack.c.l.b16 %v1491
        %v1557 = vunpack.c.l.b16 %v1492
        %v1558 = vunpack.c.l.b16 %v1493
        %v1559 = vunpack.c.l.b16 %v1494
        %v1560 = vpack.c.b16 %v1537, %v1536
        %v1561 = vpack.c.b16 %v1539, %v1538
        %v1562 = vpack.c.b16 %v1541, %v1540
        %v1563 = vpack.c.b16 %v1543, %v1542
        %v1564 = vpack.c.b16 %v1545, %v1544
        %v1565 = vpack.c.b16 %v1547, %v1546
        %v1566 = vpack.c.b16 %v1549, %v1548
        %v1567 = vpack.c.b16 %v1551, %v1550
        %v1568 = vpack.c.b16 %v1553, %v1552
        %v1569 = vpack.c.b16 %v1555, %v1554
        %v1570 = vpack.c.b16 %v1557, %v1556
        %v1571 = vpack.c.b16 %v1559, %v1558
        %v1600 = vunpack.c.l.b16 %v1496
        %v1601 = vunpack.c.l.b16 %v1497
        %v1602 = vunpack.c.l.b16 %v1498
        %v1603 = vunpack.c.l.b16 %v1499
        %v1604 = vunpack.c.l.b16 %v1500
        %v1605 = vunpack.c.l.b16 %v1501
        %v1606 = vunpack.c.l.b16 %v1502
        %v1607 = vunpack.c.l.b16 %v1503
        %v1608 = vunpack.c.l.b16 %v1504
        %v1609 = vunpack.c.l.b16 %v1505
        %v1610 = vunpack.c.l.b16 %v1506
        %v1611 = vunpack.c.l.b16 %v1507
        %v1612 = vunpack.c.l.b16 %v1508
        %v1613 = vunpack.c.l.b16 %v1509
        %v1614 = vunpack.c.l.b16 %v1510
        %v1615 = vunpack.c.l.b16 %v1511
        %v1616 = vpack.c.b16 %v1601, %v1600
        %v1617 = vpack.c.b16 %v1603, %v1602
        %v1618 = vpack.c.b16 %v1605, %v1604
        %v1619 = vpack.c.b16 %v1607, %v1606
        %v1620 = vpack.c.b16 %v1609, %v1608
        %v1621 = vpack.c.b16 %v1611, %v1610
        %v1622 = vpack.c.b16 %v1613, %v1612
        %v1623 = vpack.c.b16 %v1615, %v1614
        %1632 = vmatprep.subr.bf16.mxu0 0
        %1633 = vmatpush1.bf16.msra.mxu0 %v1623
        %1634 = vmatprep.subr.bf16.mxu0 0
        %1635 = vmatpush1.bf16.msra.mxu0 %v1622
        %1636 = vmatprep.subr.bf16.mxu0 0
        %1637 = vmatpush1.bf16.msra.mxu0 %v1621
        %1638 = vmatprep.subr.bf16.mxu0 0
        %1639 = vmatpush1.bf16.msra.mxu0 %v1620
        %1640 = vmatprep.subr.bf16.mxu0 0
        %1641 = vmatpush1.bf16.msra.mxu0 %v1619
        %1642 = vmatprep.subr.bf16.mxu0 0
        %1643 = vmatpush1.bf16.msra.mxu0 %v1618
        %1644 = vmatprep.subr.bf16.mxu0 0
        %1645 = vmatpush1.bf16.msra.mxu0 %v1617
        %1646 = vmatprep.subr.bf16.mxu0 0
        %1647 = vmatpush1.bf16.msra.mxu0 %v1616
        %1648 = vmatprep.subr.bf16.mxu0 0
        %1649 = vmatpush2.bf16.msra.mxu0 0
        %1650 = vmatprep.subr.bf16.mxu0 0
        %1651 = vmatpush2.bf16.msra.mxu0 0
        %1652 = vmatprep.subr.bf16.mxu0 0
        %1653 = vmatpush2.bf16.msra.mxu0 0
        %1654 = vmatprep.subr.bf16.mxu0 0
        %1655 = vmatpush2.bf16.msra.mxu0 0
        %1656 = vmatprep.subr.bf16.mxu0 0
        %1657 = vmatpush2.bf16.msra.mxu0 0
        %1658 = vmatprep.subr.bf16.mxu0 0
        %1659 = vmatpush2.bf16.msra.mxu0 0
        %1660 = vmatprep.subr.bf16.mxu0 0
        %1661 = vmatpush2.bf16.msra.mxu0 0
        %1662 = vmatprep.subr.bf16.mxu0 0
        %1663 = vmatpush2.bf16.msra.mxu0 0
        %1664 = vmatprep.mubr.bf16.mxu0 0
        %1665 = vmatmul.mubr.bf16.gmra.mxu0 %v1560
        %v1666 = vpop.f32.mrf.mxu0
        %v1667 = vadd.f32 0.0, %v1666
        %v1668 = vpop.f32.mrf.mxu0
        %v1669 = vpop.f32.mrf.mxu0
        %v1670 = vadd.f32 0.0, %v1669
        %v1671 = vpop.f32.mrf.mxu0
        %1672 = vmatprep.mubr.bf16.mxu0 0
        %1673 = vmatmul.mubr.bf16.gmra.mxu0 %v1561
        %v1674 = vpop.f32.mrf.mxu0
        %v1675 = vadd.f32 0.0, %v1674
        %v1676 = vpop.f32.mrf.mxu0
        %v1677 = vpop.f32.mrf.mxu0
        %v1678 = vadd.f32 0.0, %v1677
        %v1679 = vpop.f32.mrf.mxu0
        %1680 = vmatprep.mubr.bf16.mxu0 0
        %1681 = vmatmul.mubr.bf16.gmra.mxu0 %v1562
        %v1682 = vpop.f32.mrf.mxu0
        %v1683 = vadd.f32 0.0, %v1682
        %v1684 = vpop.f32.mrf.mxu0
        %v1685 = vpop.f32.mrf.mxu0
        %v1686 = vadd.f32 0.0, %v1685
        %v1687 = vpop.f32.mrf.mxu0
        %1688 = vmatprep.mubr.bf16.mxu0 0
        %1689 = vmatmul.mubr.bf16.gmra.mxu0 %v1563
        %v1690 = vpop.f32.mrf.mxu0
        %v1691 = vadd.f32 0.0, %v1690
        %v1692 = vpop.f32.mrf.mxu0
        %v1693 = vpop.f32.mrf.mxu0
        %v1694 = vadd.f32 0.0, %v1693
        %v1695 = vpop.f32.mrf.mxu0
        %1696 = vmatprep.mubr.bf16.mxu0 0
        %1697 = vmatmul.mubr.bf16.gmra.mxu0 %v1564
        %v1698 = vpop.f32.mrf.mxu0
        %v1699 = vadd.f32 0.0, %v1698
        %v1700 = vpop.f32.mrf.mxu0
        %v1701 = vpop.f32.mrf.mxu0
        %v1702 = vadd.f32 0.0, %v1701
        %v1703 = vpop.f32.mrf.mxu0
        %1704 = vmatprep.mubr.bf16.mxu0 0
        %1705 = vmatmul.mubr.bf16.gmra.mxu0 %v1565
        %v1706 = vpop.f32.mrf.mxu0
        %v1707 = vadd.f32 0.0, %v1706
        %v1708 = vpop.f32.mrf.mxu0
        %v1709 = vpop.f32.mrf.mxu0
        %v1710 = vadd.f32 0.0, %v1709
        %v1711 = vpop.f32.mrf.mxu0
        %1712 = vmatprep.mubr.bf16.mxu0 0
        %1713 = vmatmul.mubr.bf16.gmra.mxu0 %v1566
        %v1714 = vpop.f32.mrf.mxu0
        %v1715 = vadd.f32 0.0, %v1714
        %v1716 = vpop.f32.mrf.mxu0
        %v1717 = vpop.f32.mrf.mxu0
        %v1718 = vadd.f32 0.0, %v1717
        %v1719 = vpop.f32.mrf.mxu0
        %1720 = vmatprep.mubr.bf16.mxu0 0
        %1721 = vmatmul.mubr.bf16.gmra.mxu0 %v1567
        %v1722 = vpop.f32.mrf.mxu0
        %v1723 = vadd.f32 0.0, %v1722
        %v1724 = vpop.f32.mrf.mxu0
        %v1725 = vpop.f32.mrf.mxu0
        %v1726 = vadd.f32 0.0, %v1725
        %v1727 = vpop.f32.mrf.mxu0
        %1728 = vmatprep.mubr.bf16.mxu0 0
        %1729 = vmatmul.mubr.bf16.gmra.mxu0 %v1568
        %v1730 = vpop.f32.mrf.mxu0
        %v1731 = vadd.f32 0.0, %v1730
        %v1732 = vpop.f32.mrf.mxu0
        %v1733 = vpop.f32.mrf.mxu0
        %v1734 = vadd.f32 0.0, %v1733
        %v1735 = vpop.f32.mrf.mxu0
        %1736 = vmatprep.mubr.bf16.mxu0 0
        %1737 = vmatmul.mubr.bf16.gmra.mxu0 %v1569
        %v1738 = vpop.f32.mrf.mxu0
        %v1739 = vadd.f32 0.0, %v1738
        %v1740 = vpop.f32.mrf.mxu0
        %v1741 = vpop.f32.mrf.mxu0
        %v1742 = vadd.f32 0.0, %v1741
        %v1743 = vpop.f32.mrf.mxu0
        %1744 = vmatprep.mubr.bf16.mxu0 0
        %1745 = vmatmul.mubr.bf16.gmra.mxu0 %v1570
        %v1746 = vpop.f32.mrf.mxu0
        %v1747 = vadd.f32 0.0, %v1746
        %v1748 = vpop.f32.mrf.mxu0
        %v1749 = vpop.f32.mrf.mxu0
        %v1750 = vadd.f32 0.0, %v1749
        %v1751 = vpop.f32.mrf.mxu0
        %1752 = vmatprep.mubr.bf16.mxu0 0
        %1753 = vmatmul.mubr.bf16.gmra.mxu0 %v1571
        %v1754 = vpop.f32.mrf.mxu0
        %v1755 = vadd.f32 0.0, %v1754
        %v1756 = vpop.f32.mrf.mxu0
        %v1757 = vpop.f32.mrf.mxu0
        %v1758 = vadd.f32 0.0, %v1757
        %v1759 = vpop.f32.mrf.mxu0
        %1760 = vdwg.mxu0
        %v1761 = vadd.f32 %v1447, %v1667
        %v1762 = vadd.f32 %v1448, %v1670
        %v1763 = vadd.f32 %v1449, %v1675
        %v1764 = vadd.f32 %v1450, %v1678
        %v1765 = vadd.f32 %v1451, %v1683
        %v1766 = vadd.f32 %v1452, %v1686
        %v1767 = vadd.f32 %v1453, %v1691
        %v1768 = vadd.f32 %v1454, %v1694
        %v1769 = vadd.f32 %v1455, %v1699
        %v1770 = vadd.f32 %v1456, %v1702
        %v1771 = vadd.f32 %v1457, %v1707
        %v1772 = vadd.f32 %v1458, %v1710
        %v1773 = vadd.f32 %v1459, %v1715
        %v1774 = vadd.f32 %v1460, %v1718
        %v1775 = vadd.f32 %v1461, %v1723
        %v1776 = vadd.f32 %v1462, %v1726
        %v1777 = vadd.f32 %v1463, %v1731
        %v1778 = vadd.f32 %v1464, %v1734
        %v1779 = vadd.f32 %v1465, %v1739
        %v1780 = vadd.f32 %v1466, %v1742
        %v1781 = vadd.f32 %v1467, %v1747
        %v1782 = vadd.f32 %v1468, %v1750
        %v1783 = vadd.f32 %v1469, %v1755
        %v1784 = vadd.f32 %v1470, %v1758
        %v1785 = vld [vmem:[%s152 + $0xc] sm:$0xf]
        %v1786 = vld [vmem:[%s152 + $0x10] sm:$0xf]
        %v1787 = vld [vmem:[%s152 + $0x14] sm:$0xf]
        %v1788 = vld [vmem:[%s152 + $0x18] sm:$0xf]
        %v1789 = vld [vmem:[%s152 + $0x1c] sm:$0xf]
        %v1790 = vld [vmem:[%s152 + $0x20] sm:$0xf]
        %v1791 = vld [vmem:[%s152 + $0x24] sm:$0xf]
        %v1792 = vld [vmem:[%s152 + $0x28] sm:$0xf]
        %v1793 = vld [vmem:[%s152 + $0x2c] sm:$0xf]
        %v1794 = vld [vmem:[%s152 + $0x30] sm:$0xf]
        %v1795 = vld [vmem:[%s152 + $0x34] sm:$0xf]
        %v1796 = vld [vmem:[%s152 + $0x38] sm:$0xf]
        %v1797 = vld [vmem:[%s152 + $0x3c] sm:$0xf]
        %v1798 = vld [vmem:[%s152 + $0x40] sm:$0xf]
        %v1799 = vld [vmem:[%s152 + $0x44] sm:$0xf]
        %v1800 = vld [vmem:[%s152 + $0x48] sm:$0xf]
        %v1801 = vld [vmem:[%s152 + $0x4c] sm:$0xf]
        %v1802 = vld [vmem:[%s152 + $0x50] sm:$0xf]
        %v1803 = vld [vmem:[%s152 + $0x54] sm:$0xf]
        %v1804 = vld [vmem:[%s152 + $0x58] sm:$0xf]
        %v1805 = vld [vmem:[%s152 + $0x5c] sm:$0xf]
        %v1806 = vld [vmem:[%s152 + $0x60] sm:$0xf]
        %v1807 = vld [vmem:[%s152 + $0x64] sm:$0xf]
        %v1808 = vld [vmem:[%s152 + $0x68] sm:$0xf]
        %v1809 = vld [vmem:[%s152 + $0x6c] sm:$0x1]
        %s1810 = scalar_lea.vmem [#allocation5], 256
        %v1811 = vld [vmem:[%s1810] sm:$0xf]
        %v1812 = vld [vmem:[%s1810 + $0x4] sm:$0xf]
        %v1813 = vld [vmem:[%s1810 + $0x8] sm:$0xf]
        %v1814 = vld [vmem:[%s1810 + $0xc] sm:$0xf]
        %v1815 = vld [vmem:[%s1810 + $0x10] sm:$0xf]
        %v1816 = vld [vmem:[%s1810 + $0x14] sm:$0xf]
        %v1817 = vld [vmem:[%s1810 + $0x18] sm:$0xf]
        %v1818 = vld [vmem:[%s1810 + $0x1c] sm:$0xf]
        %v1819 = vld [vmem:[%s1810 + $0x20] sm:$0xf]
        %v1820 = vld [vmem:[%s1810 + $0x24] sm:$0xf]
        %v1821 = vld [vmem:[%s1810 + $0x28] sm:$0xf]
        %v1822 = vld [vmem:[%s1810 + $0x2c] sm:$0xf]
        %v1823 = vld [vmem:[%s1810 + $0x30] sm:$0xf]
        %v1824 = vld [vmem:[%s1810 + $0x34] sm:$0xf]
        %v1825 = vld [vmem:[%s1810 + $0x38] sm:$0xf]
        %v1826 = vld [vmem:[%s1810 + $0x3c] sm:$0xf]
        %v1852 = vunpack.c.l.b16 %v1785
        %v1853 = vunpack.c.l.b16 %v1786
        %v1854 = vunpack.c.l.b16 %v1787
        %v1855 = vunpack.c.l.b16 %v1788
        %v1856 = vunpack.c.l.b16 %v1789
        %v1857 = vunpack.c.l.b16 %v1790
        %v1858 = vunpack.c.l.b16 %v1791
        %v1859 = vunpack.c.l.b16 %v1792
        %v1860 = vunpack.c.l.b16 %v1793
        %v1861 = vunpack.c.l.b16 %v1794
        %v1862 = vunpack.c.l.b16 %v1795
        %v1863 = vunpack.c.l.b16 %v1796
        %v1864 = vunpack.c.l.b16 %v1797
        %v1865 = vunpack.c.l.b16 %v1798
        %v1866 = vunpack.c.l.b16 %v1799
        %v1867 = vunpack.c.l.b16 %v1800
        %v1868 = vunpack.c.l.b16 %v1801
        %v1869 = vunpack.c.l.b16 %v1802
        %v1870 = vunpack.c.l.b16 %v1803
        %v1871 = vunpack.c.l.b16 %v1804
        %v1872 = vunpack.c.l.b16 %v1805
        %v1873 = vunpack.c.l.b16 %v1806
        %v1874 = vunpack.c.l.b16 %v1807
        %v1875 = vunpack.c.l.b16 %v1808
        %v1876 = vunpack.c.l.b16 %v1809
        %v1877 = vpack.c.b16 %v1853, %v1852
        %v1878 = vpack.c.b16 %v1855, %v1854
        %v1879 = vpack.c.b16 %v1857, %v1856
        %v1880 = vpack.c.b16 %v1859, %v1858
        %v1881 = vpack.c.b16 %v1861, %v1860
        %v1882 = vpack.c.b16 %v1863, %v1862
        %v1883 = vpack.c.b16 %v1865, %v1864
        %v1884 = vpack.c.b16 %v1867, %v1866
        %v1885 = vpack.c.b16 %v1869, %v1868
        %v1886 = vpack.c.b16 %v1871, %v1870
        %v1887 = vpack.c.b16 %v1873, %v1872
        %v1888 = vpack.c.b16 %v1875, %v1874
        %v1889 = vpack.c.b16 %v1876, %v1876
        %v1891 = vshrl.u32 %v1877, 16
        %v1893 = vshll.u32 %v1877, 16
        %v1895 = vrot.slane %v1893, 1
        %v1896 = vor.u32 %v1891, %v1895
        %v1898 = vshll.u32 %v1878, 16
        %v1900 = vrot.slane %v1898, 1
        %v1901 = vsel %vm732, %v1896, %v1900
        %v1902 = vshrl.u32 %v1878, 16
        %v1904 = vor.u32 %v1902, %v1900
        %v1906 = vshll.u32 %v1879, 16
        %v1908 = vrot.slane %v1906, 1
        %v1909 = vsel %vm732, %v1904, %v1908
        %v1910 = vshrl.u32 %v1879, 16
        %v1912 = vor.u32 %v1910, %v1908
        %v1914 = vshll.u32 %v1880, 16
        %v1916 = vrot.slane %v1914, 1
        %v1917 = vsel %vm732, %v1912, %v1916
        %v1918 = vshrl.u32 %v1880, 16
        %v1920 = vor.u32 %v1918, %v1916
        %v1922 = vshll.u32 %v1881, 16
        %v1924 = vrot.slane %v1922, 1
        %v1925 = vsel %vm732, %v1920, %v1924
        %v1926 = vshrl.u32 %v1881, 16
        %v1928 = vor.u32 %v1926, %v1924
        %v1930 = vshll.u32 %v1882, 16
        %v1932 = vrot.slane %v1930, 1
        %v1933 = vsel %vm732, %v1928, %v1932
        %v1934 = vshrl.u32 %v1882, 16
        %v1936 = vor.u32 %v1934, %v1932
        %v1938 = vshll.u32 %v1883, 16
        %v1940 = vrot.slane %v1938, 1
        %v1941 = vsel %vm732, %v1936, %v1940
        %v1942 = vshrl.u32 %v1883, 16
        %v1944 = vor.u32 %v1942, %v1940
        %v1946 = vshll.u32 %v1884, 16
        %v1948 = vrot.slane %v1946, 1
        %v1949 = vsel %vm732, %v1944, %v1948
        %v1950 = vshrl.u32 %v1884, 16
        %v1952 = vor.u32 %v1950, %v1948
        %v1954 = vshll.u32 %v1885, 16
        %v1956 = vrot.slane %v1954, 1
        %v1957 = vsel %vm732, %v1952, %v1956
        %v1958 = vshrl.u32 %v1885, 16
        %v1960 = vor.u32 %v1958, %v1956
        %v1962 = vshll.u32 %v1886, 16
        %v1964 = vrot.slane %v1962, 1
        %v1965 = vsel %vm732, %v1960, %v1964
        %v1966 = vshrl.u32 %v1886, 16
        %v1968 = vor.u32 %v1966, %v1964
        %v1970 = vshll.u32 %v1887, 16
        %v1972 = vrot.slane %v1970, 1
        %v1973 = vsel %vm732, %v1968, %v1972
        %v1974 = vshrl.u32 %v1887, 16
        %v1976 = vor.u32 %v1974, %v1972
        %v1978 = vshll.u32 %v1888, 16
        %v1980 = vrot.slane %v1978, 1
        %v1981 = vsel %vm732, %v1976, %v1980
        %v1982 = vshrl.u32 %v1888, 16
        %v1984 = vor.u32 %v1982, %v1980
        %v1986 = vshll.u32 %v1889, 16
        %v1988 = vrot.slane %v1986, 1
        %v1989 = vsel %vm732, %v1984, %v1988
        %v2018 = vunpack.c.l.b16 %v1811
        %v2019 = vunpack.c.l.b16 %v1812
        %v2020 = vunpack.c.l.b16 %v1813
        %v2021 = vunpack.c.l.b16 %v1814
        %v2022 = vunpack.c.l.b16 %v1815
        %v2023 = vunpack.c.l.b16 %v1816
        %v2024 = vunpack.c.l.b16 %v1817
        %v2025 = vunpack.c.l.b16 %v1818
        %v2026 = vunpack.c.l.b16 %v1819
        %v2027 = vunpack.c.l.b16 %v1820
        %v2028 = vunpack.c.l.b16 %v1821
        %v2029 = vunpack.c.l.b16 %v1822
        %v2030 = vunpack.c.l.b16 %v1823
        %v2031 = vunpack.c.l.b16 %v1824
        %v2032 = vunpack.c.l.b16 %v1825
        %v2033 = vunpack.c.l.b16 %v1826
        %v2034 = vpack.c.b16 %v2019, %v2018
        %v2035 = vpack.c.b16 %v2021, %v2020
        %v2036 = vpack.c.b16 %v2023, %v2022
        %v2037 = vpack.c.b16 %v2025, %v2024
        %v2038 = vpack.c.b16 %v2027, %v2026
        %v2039 = vpack.c.b16 %v2029, %v2028
        %v2040 = vpack.c.b16 %v2031, %v2030
        %v2041 = vpack.c.b16 %v2033, %v2032
        %2050 = vmatprep.subr.bf16.mxu0 0
        %2051 = vmatpush1.bf16.msra.mxu0 %v2041
        %2052 = vmatprep.subr.bf16.mxu0 0
        %2053 = vmatpush1.bf16.msra.mxu0 %v2040
        %2054 = vmatprep.subr.bf16.mxu0 0
        %2055 = vmatpush1.bf16.msra.mxu0 %v2039
        %2056 = vmatprep.subr.bf16.mxu0 0
        %2057 = vmatpush1.bf16.msra.mxu0 %v2038
        %2058 = vmatprep.subr.bf16.mxu0 0
        %2059 = vmatpush1.bf16.msra.mxu0 %v2037
        %2060 = vmatprep.subr.bf16.mxu0 0
        %2061 = vmatpush1.bf16.msra.mxu0 %v2036
        %2062 = vmatprep.subr.bf16.mxu0 0
        %2063 = vmatpush1.bf16.msra.mxu0 %v2035
        %2064 = vmatprep.subr.bf16.mxu0 0
        %2065 = vmatpush1.bf16.msra.mxu0 %v2034
        %2066 = vmatprep.subr.bf16.mxu0 0
        %2067 = vmatpush2.bf16.msra.mxu0 0
        %2068 = vmatprep.subr.bf16.mxu0 0
        %2069 = vmatpush2.bf16.msra.mxu0 0
        %2070 = vmatprep.subr.bf16.mxu0 0
        %2071 = vmatpush2.bf16.msra.mxu0 0
        %2072 = vmatprep.subr.bf16.mxu0 0
        %2073 = vmatpush2.bf16.msra.mxu0 0
        %2074 = vmatprep.subr.bf16.mxu0 0
        %2075 = vmatpush2.bf16.msra.mxu0 0
        %2076 = vmatprep.subr.bf16.mxu0 0
        %2077 = vmatpush2.bf16.msra.mxu0 0
        %2078 = vmatprep.subr.bf16.mxu0 0
        %2079 = vmatpush2.bf16.msra.mxu0 0
        %2080 = vmatprep.subr.bf16.mxu0 0
        %2081 = vmatpush2.bf16.msra.mxu0 0
        %2082 = vmatprep.mubr.bf16.mxu0 0
        %2083 = vmatmul.mubr.bf16.gmra.mxu0 %v1901
        %v2084 = vpop.f32.mrf.mxu0
        %v2085 = vadd.f32 0.0, %v2084
        %v2086 = vpop.f32.mrf.mxu0
        %v2087 = vpop.f32.mrf.mxu0
        %v2088 = vadd.f32 0.0, %v2087
        %v2089 = vpop.f32.mrf.mxu0
        %2090 = vmatprep.mubr.bf16.mxu0 0
        %2091 = vmatmul.mubr.bf16.gmra.mxu0 %v1909
        %v2092 = vpop.f32.mrf.mxu0
        %v2093 = vadd.f32 0.0, %v2092
        %v2094 = vpop.f32.mrf.mxu0
        %v2095 = vpop.f32.mrf.mxu0
        %v2096 = vadd.f32 0.0, %v2095
        %v2097 = vpop.f32.mrf.mxu0
        %2098 = vmatprep.mubr.bf16.mxu0 0
        %2099 = vmatmul.mubr.bf16.gmra.mxu0 %v1917
        %v2100 = vpop.f32.mrf.mxu0
        %v2101 = vadd.f32 0.0, %v2100
        %v2102 = vpop.f32.mrf.mxu0
        %v2103 = vpop.f32.mrf.mxu0
        %v2104 = vadd.f32 0.0, %v2103
        %v2105 = vpop.f32.mrf.mxu0
        %2106 = vmatprep.mubr.bf16.mxu0 0
        %2107 = vmatmul.mubr.bf16.gmra.mxu0 %v1925
        %v2108 = vpop.f32.mrf.mxu0
        %v2109 = vadd.f32 0.0, %v2108
        %v2110 = vpop.f32.mrf.mxu0
        %v2111 = vpop.f32.mrf.mxu0
        %v2112 = vadd.f32 0.0, %v2111
        %v2113 = vpop.f32.mrf.mxu0
        %2114 = vmatprep.mubr.bf16.mxu0 0
        %2115 = vmatmul.mubr.bf16.gmra.mxu0 %v1933
        %v2116 = vpop.f32.mrf.mxu0
        %v2117 = vadd.f32 0.0, %v2116
        %v2118 = vpop.f32.mrf.mxu0
        %v2119 = vpop.f32.mrf.mxu0
        %v2120 = vadd.f32 0.0, %v2119
        %v2121 = vpop.f32.mrf.mxu0
        %2122 = vmatprep.mubr.bf16.mxu0 0
        %2123 = vmatmul.mubr.bf16.gmra.mxu0 %v1941
        %v2124 = vpop.f32.mrf.mxu0
        %v2125 = vadd.f32 0.0, %v2124
        %v2126 = vpop.f32.mrf.mxu0
        %v2127 = vpop.f32.mrf.mxu0
        %v2128 = vadd.f32 0.0, %v2127
        %v2129 = vpop.f32.mrf.mxu0
        %2130 = vmatprep.mubr.bf16.mxu0 0
        %2131 = vmatmul.mubr.bf16.gmra.mxu0 %v1949
        %v2132 = vpop.f32.mrf.mxu0
        %v2133 = vadd.f32 0.0, %v2132
        %v2134 = vpop.f32.mrf.mxu0
        %v2135 = vpop.f32.mrf.mxu0
        %v2136 = vadd.f32 0.0, %v2135
        %v2137 = vpop.f32.mrf.mxu0
        %2138 = vmatprep.mubr.bf16.mxu0 0
        %2139 = vmatmul.mubr.bf16.gmra.mxu0 %v1957
        %v2140 = vpop.f32.mrf.mxu0
        %v2141 = vadd.f32 0.0, %v2140
        %v2142 = vpop.f32.mrf.mxu0
        %v2143 = vpop.f32.mrf.mxu0
        %v2144 = vadd.f32 0.0, %v2143
        %v2145 = vpop.f32.mrf.mxu0
        %2146 = vmatprep.mubr.bf16.mxu0 0
        %2147 = vmatmul.mubr.bf16.gmra.mxu0 %v1965
        %v2148 = vpop.f32.mrf.mxu0
        %v2149 = vadd.f32 0.0, %v2148
        %v2150 = vpop.f32.mrf.mxu0
        %v2151 = vpop.f32.mrf.mxu0
        %v2152 = vadd.f32 0.0, %v2151
        %v2153 = vpop.f32.mrf.mxu0
        %2154 = vmatprep.mubr.bf16.mxu0 0
        %2155 = vmatmul.mubr.bf16.gmra.mxu0 %v1973
        %v2156 = vpop.f32.mrf.mxu0
        %v2157 = vadd.f32 0.0, %v2156
        %v2158 = vpop.f32.mrf.mxu0
        %v2159 = vpop.f32.mrf.mxu0
        %v2160 = vadd.f32 0.0, %v2159
        %v2161 = vpop.f32.mrf.mxu0
        %2162 = vmatprep.mubr.bf16.mxu0 0
        %2163 = vmatmul.mubr.bf16.gmra.mxu0 %v1981
        %v2164 = vpop.f32.mrf.mxu0
        %v2165 = vadd.f32 0.0, %v2164
        %v2166 = vpop.f32.mrf.mxu0
        %v2167 = vpop.f32.mrf.mxu0
        %v2168 = vadd.f32 0.0, %v2167
        %v2169 = vpop.f32.mrf.mxu0
        %2170 = vmatprep.mubr.bf16.mxu0 0
        %2171 = vmatmul.mubr.bf16.gmra.mxu0 %v1989
        %v2172 = vpop.f32.mrf.mxu0
        %v2173 = vadd.f32 0.0, %v2172
        %v2174 = vpop.f32.mrf.mxu0
        %v2175 = vpop.f32.mrf.mxu0
        %v2176 = vadd.f32 0.0, %v2175
        %v2177 = vpop.f32.mrf.mxu0
        %2178 = vdwg.mxu0
        %v2179 = vadd.f32 %v1761, %v2085
        %v2180 = vadd.f32 %v1762, %v2088
        %v2181 = vadd.f32 %v1763, %v2093
        %v2182 = vadd.f32 %v1764, %v2096
        %v2183 = vadd.f32 %v1765, %v2101
        %v2184 = vadd.f32 %v1766, %v2104
        %v2185 = vadd.f32 %v1767, %v2109
        %v2186 = vadd.f32 %v1768, %v2112
        %v2187 = vadd.f32 %v1769, %v2117
        %v2188 = vadd.f32 %v1770, %v2120
        %v2189 = vadd.f32 %v1771, %v2125
        %v2190 = vadd.f32 %v1772, %v2128
        %v2191 = vadd.f32 %v1773, %v2133
        %v2192 = vadd.f32 %v1774, %v2136
        %v2193 = vadd.f32 %v1775, %v2141
        %v2194 = vadd.f32 %v1776, %v2144
        %v2195 = vadd.f32 %v1777, %v2149
        %v2196 = vadd.f32 %v1778, %v2152
        %v2197 = vadd.f32 %v1779, %v2157
        %v2198 = vadd.f32 %v1780, %v2160
        %v2199 = vadd.f32 %v1781, %v2165
        %v2200 = vadd.f32 %v1782, %v2168
        %v2201 = vadd.f32 %v1783, %v2173
        %v2202 = vadd.f32 %v1784, %v2176
        %v2203 = vld [vmem:[%s152 + $0xc] sm:$0xe]
        %s2204 = scalar_lea.vmem [#allocation5], 320
        %v2205 = vld [vmem:[%s2204] sm:$0xf]
        %v2206 = vld [vmem:[%s2204 + $0x4] sm:$0xf]
        %v2207 = vld [vmem:[%s2204 + $0x8] sm:$0xf]
        %v2208 = vld [vmem:[%s2204 + $0xc] sm:$0xf]
        %v2209 = vld [vmem:[%s2204 + $0x10] sm:$0xf]
        %v2210 = vld [vmem:[%s2204 + $0x14] sm:$0xf]
        %v2211 = vld [vmem:[%s2204 + $0x18] sm:$0xf]
        %v2212 = vld [vmem:[%s2204 + $0x1c] sm:$0xf]
        %v2213 = vld [vmem:[%s2204 + $0x20] sm:$0xf]
        %v2214 = vld [vmem:[%s2204 + $0x24] sm:$0xf]
        %v2215 = vld [vmem:[%s2204 + $0x28] sm:$0xf]
        %v2216 = vld [vmem:[%s2204 + $0x2c] sm:$0xf]
        %v2217 = vld [vmem:[%s2204 + $0x30] sm:$0xf]
        %v2218 = vld [vmem:[%s2204 + $0x34] sm:$0xf]
        %v2219 = vld [vmem:[%s2204 + $0x38] sm:$0xf]
        %v2220 = vld [vmem:[%s2204 + $0x3c] sm:$0xf]
        %v2222 = vunpack.c.l.b16 %v2203
        %v2223 = vpack.c.b16 %v1853, %v2222
        %v2224 = vrot.slane %v2223, 1
        %v2225 = vrot.slane %v1878, 1
        %v2226 = vsel %vm1232, %v2224, %v2225
        %v2227 = vrot.slane %v1879, 1
        %v2228 = vsel %vm1232, %v2225, %v2227
        %v2229 = vrot.slane %v1880, 1
        %v2230 = vsel %vm1232, %v2227, %v2229
        %v2231 = vrot.slane %v1881, 1
        %v2232 = vsel %vm1232, %v2229, %v2231
        %v2233 = vrot.slane %v1882, 1
        %v2234 = vsel %vm1232, %v2231, %v2233
        %v2235 = vrot.slane %v1883, 1
        %v2236 = vsel %vm1232, %v2233, %v2235
        %v2237 = vrot.slane %v1884, 1
        %v2238 = vsel %vm1232, %v2235, %v2237
        %v2239 = vrot.slane %v1885, 1
        %v2240 = vsel %vm1232, %v2237, %v2239
        %v2241 = vrot.slane %v1886, 1
        %v2242 = vsel %vm1232, %v2239, %v2241
        %v2243 = vrot.slane %v1887, 1
        %v2244 = vsel %vm1232, %v2241, %v2243
        %v2245 = vrot.slane %v1888, 1
        %v2246 = vsel %vm1232, %v2243, %v2245
        %v2247 = vrot.slane %v1889, 1
        %v2248 = vsel %vm1232, %v2245, %v2247
        %v2277 = vunpack.c.l.b16 %v2205
        %v2278 = vunpack.c.l.b16 %v2206
        %v2279 = vunpack.c.l.b16 %v2207
        %v2280 = vunpack.c.l.b16 %v2208
        %v2281 = vunpack.c.l.b16 %v2209
        %v2282 = vunpack.c.l.b16 %v2210
        %v2283 = vunpack.c.l.b16 %v2211
        %v2284 = vunpack.c.l.b16 %v2212
        %v2285 = vunpack.c.l.b16 %v2213
        %v2286 = vunpack.c.l.b16 %v2214
        %v2287 = vunpack.c.l.b16 %v2215
        %v2288 = vunpack.c.l.b16 %v2216
        %v2289 = vunpack.c.l.b16 %v2217
        %v2290 = vunpack.c.l.b16 %v2218
        %v2291 = vunpack.c.l.b16 %v2219
        %v2292 = vunpack.c.l.b16 %v2220
        %v2293 = vpack.c.b16 %v2278, %v2277
        %v2294 = vpack.c.b16 %v2280, %v2279
        %v2295 = vpack.c.b16 %v2282, %v2281
        %v2296 = vpack.c.b16 %v2284, %v2283
        %v2297 = vpack.c.b16 %v2286, %v2285
        %v2298 = vpack.c.b16 %v2288, %v2287
        %v2299 = vpack.c.b16 %v2290, %v2289
        %v2300 = vpack.c.b16 %v2292, %v2291
        %2309 = vmatprep.subr.bf16.mxu0 0
        %2310 = vmatpush1.bf16.msra.mxu0 %v2300
        %2311 = vmatprep.subr.bf16.mxu0 0
        %2312 = vmatpush1.bf16.msra.mxu0 %v2299
        %2313 = vmatprep.subr.bf16.mxu0 0
        %2314 = vmatpush1.bf16.msra.mxu0 %v2298
        %2315 = vmatprep.subr.bf16.mxu0 0
        %2316 = vmatpush1.bf16.msra.mxu0 %v2297
        %2317 = vmatprep.subr.bf16.mxu0 0
        %2318 = vmatpush1.bf16.msra.mxu0 %v2296
        %2319 = vmatprep.subr.bf16.mxu0 0
        %2320 = vmatpush1.bf16.msra.mxu0 %v2295
        %2321 = vmatprep.subr.bf16.mxu0 0
        %2322 = vmatpush1.bf16.msra.mxu0 %v2294
        %2323 = vmatprep.subr.bf16.mxu0 0
        %2324 = vmatpush1.bf16.msra.mxu0 %v2293
        %2325 = vmatprep.subr.bf16.mxu0 0
        %2326 = vmatpush2.bf16.msra.mxu0 0
        %2327 = vmatprep.subr.bf16.mxu0 0
        %2328 = vmatpush2.bf16.msra.mxu0 0
        %2329 = vmatprep.subr.bf16.mxu0 0
        %2330 = vmatpush2.bf16.msra.mxu0 0
        %2331 = vmatprep.subr.bf16.mxu0 0
        %2332 = vmatpush2.bf16.msra.mxu0 0
        %2333 = vmatprep.subr.bf16.mxu0 0
        %2334 = vmatpush2.bf16.msra.mxu0 0
        %2335 = vmatprep.subr.bf16.mxu0 0
        %2336 = vmatpush2.bf16.msra.mxu0 0
        %2337 = vmatprep.subr.bf16.mxu0 0
        %2338 = vmatpush2.bf16.msra.mxu0 0
        %2339 = vmatprep.subr.bf16.mxu0 0
        %2340 = vmatpush2.bf16.msra.mxu0 0
        %2341 = vmatprep.mubr.bf16.mxu0 0
        %2342 = vmatmul.mubr.bf16.gmra.mxu0 %v2226
        %v2343 = vpop.f32.mrf.mxu0
        %v2344 = vadd.f32 0.0, %v2343
        %v2345 = vpop.f32.mrf.mxu0
        %v2346 = vpop.f32.mrf.mxu0
        %v2347 = vadd.f32 0.0, %v2346
        %v2348 = vpop.f32.mrf.mxu0
        %2349 = vmatprep.mubr.bf16.mxu0 0
        %2350 = vmatmul.mubr.bf16.gmra.mxu0 %v2228
        %v2351 = vpop.f32.mrf.mxu0
        %v2352 = vadd.f32 0.0, %v2351
        %v2353 = vpop.f32.mrf.mxu0
        %v2354 = vpop.f32.mrf.mxu0
        %v2355 = vadd.f32 0.0, %v2354
        %v2356 = vpop.f32.mrf.mxu0
        %2357 = vmatprep.mubr.bf16.mxu0 0
        %2358 = vmatmul.mubr.bf16.gmra.mxu0 %v2230
        %v2359 = vpop.f32.mrf.mxu0
        %v2360 = vadd.f32 0.0, %v2359
        %v2361 = vpop.f32.mrf.mxu0
        %v2362 = vpop.f32.mrf.mxu0
        %v2363 = vadd.f32 0.0, %v2362
        %v2364 = vpop.f32.mrf.mxu0
        %2365 = vmatprep.mubr.bf16.mxu0 0
        %2366 = vmatmul.mubr.bf16.gmra.mxu0 %v2232
        %v2367 = vpop.f32.mrf.mxu0
        %v2368 = vadd.f32 0.0, %v2367
        %v2369 = vpop.f32.mrf.mxu0
        %v2370 = vpop.f32.mrf.mxu0
        %v2371 = vadd.f32 0.0, %v2370
        %v2372 = vpop.f32.mrf.mxu0
        %2373 = vmatprep.mubr.bf16.mxu0 0
        %2374 = vmatmul.mubr.bf16.gmra.mxu0 %v2234
        %v2375 = vpop.f32.mrf.mxu0
        %v2376 = vadd.f32 0.0, %v2375
        %v2377 = vpop.f32.mrf.mxu0
        %v2378 = vpop.f32.mrf.mxu0
        %v2379 = vadd.f32 0.0, %v2378
        %v2380 = vpop.f32.mrf.mxu0
        %2381 = vmatprep.mubr.bf16.mxu0 0
        %2382 = vmatmul.mubr.bf16.gmra.mxu0 %v2236
        %v2383 = vpop.f32.mrf.mxu0
        %v2384 = vadd.f32 0.0, %v2383
        %v2385 = vpop.f32.mrf.mxu0
        %v2386 = vpop.f32.mrf.mxu0
        %v2387 = vadd.f32 0.0, %v2386
        %v2388 = vpop.f32.mrf.mxu0
        %2389 = vmatprep.mubr.bf16.mxu0 0
        %2390 = vmatmul.mubr.bf16.gmra.mxu0 %v2238
        %v2391 = vpop.f32.mrf.mxu0
        %v2392 = vadd.f32 0.0, %v2391
        %v2393 = vpop.f32.mrf.mxu0
        %v2394 = vpop.f32.mrf.mxu0
        %v2395 = vadd.f32 0.0, %v2394
        %v2396 = vpop.f32.mrf.mxu0
        %2397 = vmatprep.mubr.bf16.mxu0 0
        %2398 = vmatmul.mubr.bf16.gmra.mxu0 %v2240
        %v2399 = vpop.f32.mrf.mxu0
        %v2400 = vadd.f32 0.0, %v2399
        %v2401 = vpop.f32.mrf.mxu0
        %v2402 = vpop.f32.mrf.mxu0
        %v2403 = vadd.f32 0.0, %v2402
        %v2404 = vpop.f32.mrf.mxu0
        %2405 = vmatprep.mubr.bf16.mxu0 0
        %2406 = vmatmul.mubr.bf16.gmra.mxu0 %v2242
        %v2407 = vpop.f32.mrf.mxu0
        %v2408 = vadd.f32 0.0, %v2407
        %v2409 = vpop.f32.mrf.mxu0
        %v2410 = vpop.f32.mrf.mxu0
        %v2411 = vadd.f32 0.0, %v2410
        %v2412 = vpop.f32.mrf.mxu0
        %2413 = vmatprep.mubr.bf16.mxu0 0
        %2414 = vmatmul.mubr.bf16.gmra.mxu0 %v2244
        %v2415 = vpop.f32.mrf.mxu0
        %v2416 = vadd.f32 0.0, %v2415
        %v2417 = vpop.f32.mrf.mxu0
        %v2418 = vpop.f32.mrf.mxu0
        %v2419 = vadd.f32 0.0, %v2418
        %v2420 = vpop.f32.mrf.mxu0
        %2421 = vmatprep.mubr.bf16.mxu0 0
        %2422 = vmatmul.mubr.bf16.gmra.mxu0 %v2246
        %v2423 = vpop.f32.mrf.mxu0
        %v2424 = vadd.f32 0.0, %v2423
        %v2425 = vpop.f32.mrf.mxu0
        %v2426 = vpop.f32.mrf.mxu0
        %v2427 = vadd.f32 0.0, %v2426
        %v2428 = vpop.f32.mrf.mxu0
        %2429 = vmatprep.mubr.bf16.mxu0 0
        %2430 = vmatmul.mubr.bf16.gmra.mxu0 %v2248
        %v2431 = vpop.f32.mrf.mxu0
        %v2432 = vadd.f32 0.0, %v2431
        %v2433 = vpop.f32.mrf.mxu0
        %v2434 = vpop.f32.mrf.mxu0
        %v2435 = vadd.f32 0.0, %v2434
        %v2436 = vpop.f32.mrf.mxu0
        %2437 = vdwg.mxu0
        %v2438 = vadd.f32 %v2179, %v2344
        %v2439 = vadd.f32 %v2180, %v2347
        %v2440 = vadd.f32 %v2181, %v2352
        %v2441 = vadd.f32 %v2182, %v2355
        %v2442 = vadd.f32 %v2183, %v2360
        %v2443 = vadd.f32 %v2184, %v2363
        %v2444 = vadd.f32 %v2185, %v2368
        %v2445 = vadd.f32 %v2186, %v2371
        %v2446 = vadd.f32 %v2187, %v2376
        %v2447 = vadd.f32 %v2188, %v2379
        %v2448 = vadd.f32 %v2189, %v2384
        %v2449 = vadd.f32 %v2190, %v2387
        %v2450 = vadd.f32 %v2191, %v2392
        %v2451 = vadd.f32 %v2192, %v2395
        %v2452 = vadd.f32 %v2193, %v2400
        %v2453 = vadd.f32 %v2194, %v2403
        %v2454 = vadd.f32 %v2195, %v2408
        %v2455 = vadd.f32 %v2196, %v2411
        %v2456 = vadd.f32 %v2197, %v2416
        %v2457 = vadd.f32 %v2198, %v2419
        %v2458 = vadd.f32 %v2199, %v2424
        %v2459 = vadd.f32 %v2200, %v2427
        %v2460 = vadd.f32 %v2201, %v2432
        %v2461 = vadd.f32 %v2202, %v2435
        %v2462 = vld [vmem:[%s152 + $0x18] sm:$0xf]
        %v2463 = vld [vmem:[%s152 + $0x1c] sm:$0xf]
        %v2464 = vld [vmem:[%s152 + $0x20] sm:$0xf]
        %v2465 = vld [vmem:[%s152 + $0x24] sm:$0xf]
        %v2466 = vld [vmem:[%s152 + $0x28] sm:$0xf]
        %v2467 = vld [vmem:[%s152 + $0x2c] sm:$0xf]
        %v2468 = vld [vmem:[%s152 + $0x30] sm:$0xf]
        %v2469 = vld [vmem:[%s152 + $0x34] sm:$0xf]
        %v2470 = vld [vmem:[%s152 + $0x38] sm:$0xf]
        %v2471 = vld [vmem:[%s152 + $0x3c] sm:$0xf]
        %v2472 = vld [vmem:[%s152 + $0x40] sm:$0xf]
        %v2473 = vld [vmem:[%s152 + $0x44] sm:$0xf]
        %v2474 = vld [vmem:[%s152 + $0x48] sm:$0xf]
        %v2475 = vld [vmem:[%s152 + $0x4c] sm:$0xf]
        %v2476 = vld [vmem:[%s152 + $0x50] sm:$0xf]
        %v2477 = vld [vmem:[%s152 + $0x54] sm:$0xf]
        %v2478 = vld [vmem:[%s152 + $0x58] sm:$0xf]
        %v2479 = vld [vmem:[%s152 + $0x5c] sm:$0xf]
        %v2480 = vld [vmem:[%s152 + $0x60] sm:$0xf]
        %v2481 = vld [vmem:[%s152 + $0x64] sm:$0xf]
        %v2482 = vld [vmem:[%s152 + $0x68] sm:$0xf]
        %v2483 = vld [vmem:[%s152 + $0x6c] sm:$0xf]
        %v2484 = vld [vmem:[%s152 + $0x70] sm:$0xf]
        %v2485 = vld [vmem:[%s152 + $0x74] sm:$0xf]
        %s2486 = scalar_lea.vmem [#allocation5], 384
        %v2487 = vld [vmem:[%s2486] sm:$0xf]
        %v2488 = vld [vmem:[%s2486 + $0x4] sm:$0xf]
        %v2489 = vld [vmem:[%s2486 + $0x8] sm:$0xf]
        %v2490 = vld [vmem:[%s2486 + $0xc] sm:$0xf]
        %v2491 = vld [vmem:[%s2486 + $0x10] sm:$0xf]
        %v2492 = vld [vmem:[%s2486 + $0x14] sm:$0xf]
        %v2493 = vld [vmem:[%s2486 + $0x18] sm:$0xf]
        %v2494 = vld [vmem:[%s2486 + $0x1c] sm:$0xf]
        %v2495 = vld [vmem:[%s2486 + $0x20] sm:$0xf]
        %v2496 = vld [vmem:[%s2486 + $0x24] sm:$0xf]
        %v2497 = vld [vmem:[%s2486 + $0x28] sm:$0xf]
        %v2498 = vld [vmem:[%s2486 + $0x2c] sm:$0xf]
        %v2499 = vld [vmem:[%s2486 + $0x30] sm:$0xf]
        %v2500 = vld [vmem:[%s2486 + $0x34] sm:$0xf]
        %v2501 = vld [vmem:[%s2486 + $0x38] sm:$0xf]
        %v2502 = vld [vmem:[%s2486 + $0x3c] sm:$0xf]
        %v2527 = vunpack.c.l.b16 %v2462
        %v2528 = vunpack.c.l.b16 %v2463
        %v2529 = vunpack.c.l.b16 %v2464
        %v2530 = vunpack.c.l.b16 %v2465
        %v2531 = vunpack.c.l.b16 %v2466
        %v2532 = vunpack.c.l.b16 %v2467
        %v2533 = vunpack.c.l.b16 %v2468
        %v2534 = vunpack.c.l.b16 %v2469
        %v2535 = vunpack.c.l.b16 %v2470
        %v2536 = vunpack.c.l.b16 %v2471
        %v2537 = vunpack.c.l.b16 %v2472
        %v2538 = vunpack.c.l.b16 %v2473
        %v2539 = vunpack.c.l.b16 %v2474
        %v2540 = vunpack.c.l.b16 %v2475
        %v2541 = vunpack.c.l.b16 %v2476
        %v2542 = vunpack.c.l.b16 %v2477
        %v2543 = vunpack.c.l.b16 %v2478
        %v2544 = vunpack.c.l.b16 %v2479
        %v2545 = vunpack.c.l.b16 %v2480
        %v2546 = vunpack.c.l.b16 %v2481
        %v2547 = vunpack.c.l.b16 %v2482
        %v2548 = vunpack.c.l.b16 %v2483
        %v2549 = vunpack.c.l.b16 %v2484
        %v2550 = vunpack.c.l.b16 %v2485
        %v2551 = vpack.c.b16 %v2528, %v2527
        %v2552 = vpack.c.b16 %v2530, %v2529
        %v2553 = vpack.c.b16 %v2532, %v2531
        %v2554 = vpack.c.b16 %v2534, %v2533
        %v2555 = vpack.c.b16 %v2536, %v2535
        %v2556 = vpack.c.b16 %v2538, %v2537
        %v2557 = vpack.c.b16 %v2540, %v2539
        %v2558 = vpack.c.b16 %v2542, %v2541
        %v2559 = vpack.c.b16 %v2544, %v2543
        %v2560 = vpack.c.b16 %v2546, %v2545
        %v2561 = vpack.c.b16 %v2548, %v2547
        %v2562 = vpack.c.b16 %v2550, %v2549
        %v2591 = vunpack.c.l.b16 %v2487
        %v2592 = vunpack.c.l.b16 %v2488
        %v2593 = vunpack.c.l.b16 %v2489
        %v2594 = vunpack.c.l.b16 %v2490
        %v2595 = vunpack.c.l.b16 %v2491
        %v2596 = vunpack.c.l.b16 %v2492
        %v2597 = vunpack.c.l.b16 %v2493
        %v2598 = vunpack.c.l.b16 %v2494
        %v2599 = vunpack.c.l.b16 %v2495
        %v2600 = vunpack.c.l.b16 %v2496
        %v2601 = vunpack.c.l.b16 %v2497
        %v2602 = vunpack.c.l.b16 %v2498
        %v2603 = vunpack.c.l.b16 %v2499
        %v2604 = vunpack.c.l.b16 %v2500
        %v2605 = vunpack.c.l.b16 %v2501
        %v2606 = vunpack.c.l.b16 %v2502
        %v2607 = vpack.c.b16 %v2592, %v2591
        %v2608 = vpack.c.b16 %v2594, %v2593
        %v2609 = vpack.c.b16 %v2596, %v2595
        %v2610 = vpack.c.b16 %v2598, %v2597
        %v2611 = vpack.c.b16 %v2600, %v2599
        %v2612 = vpack.c.b16 %v2602, %v2601
        %v2613 = vpack.c.b16 %v2604, %v2603
        %v2614 = vpack.c.b16 %v2606, %v2605
        %2623 = vmatprep.subr.bf16.mxu0 0
        %2624 = vmatpush1.bf16.msra.mxu0 %v2614
        %2625 = vmatprep.subr.bf16.mxu0 0
        %2626 = vmatpush1.bf16.msra.mxu0 %v2613
        %2627 = vmatprep.subr.bf16.mxu0 0
        %2628 = vmatpush1.bf16.msra.mxu0 %v2612
        %2629 = vmatprep.subr.bf16.mxu0 0
        %2630 = vmatpush1.bf16.msra.mxu0 %v2611
        %2631 = vmatprep.subr.bf16.mxu0 0
        %2632 = vmatpush1.bf16.msra.mxu0 %v2610
        %2633 = vmatprep.subr.bf16.mxu0 0
        %2634 = vmatpush1.bf16.msra.mxu0 %v2609
        %2635 = vmatprep.subr.bf16.mxu0 0
        %2636 = vmatpush1.bf16.msra.mxu0 %v2608
        %2637 = vmatprep.subr.bf16.mxu0 0
        %2638 = vmatpush1.bf16.msra.mxu0 %v2607
        %2639 = vmatprep.subr.bf16.mxu0 0
        %2640 = vmatpush2.bf16.msra.mxu0 0
        %2641 = vmatprep.subr.bf16.mxu0 0
        %2642 = vmatpush2.bf16.msra.mxu0 0
        %2643 = vmatprep.subr.bf16.mxu0 0
        %2644 = vmatpush2.bf16.msra.mxu0 0
        %2645 = vmatprep.subr.bf16.mxu0 0
        %2646 = vmatpush2.bf16.msra.mxu0 0
        %2647 = vmatprep.subr.bf16.mxu0 0
        %2648 = vmatpush2.bf16.msra.mxu0 0
        %2649 = vmatprep.subr.bf16.mxu0 0
        %2650 = vmatpush2.bf16.msra.mxu0 0
        %2651 = vmatprep.subr.bf16.mxu0 0
        %2652 = vmatpush2.bf16.msra.mxu0 0
        %2653 = vmatprep.subr.bf16.mxu0 0
        %2654 = vmatpush2.bf16.msra.mxu0 0
        %2655 = vmatprep.mubr.bf16.mxu0 0
        %2656 = vmatmul.mubr.bf16.gmra.mxu0 %v2551
        %v2657 = vpop.f32.mrf.mxu0
        %v2658 = vadd.f32 0.0, %v2657
        %v2659 = vpop.f32.mrf.mxu0
        %v2660 = vpop.f32.mrf.mxu0
        %v2661 = vadd.f32 0.0, %v2660
        %v2662 = vpop.f32.mrf.mxu0
        %2663 = vmatprep.mubr.bf16.mxu0 0
        %2664 = vmatmul.mubr.bf16.gmra.mxu0 %v2552
        %v2665 = vpop.f32.mrf.mxu0
        %v2666 = vadd.f32 0.0, %v2665
        %v2667 = vpop.f32.mrf.mxu0
        %v2668 = vpop.f32.mrf.mxu0
        %v2669 = vadd.f32 0.0, %v2668
        %v2670 = vpop.f32.mrf.mxu0
        %2671 = vmatprep.mubr.bf16.mxu0 0
        %2672 = vmatmul.mubr.bf16.gmra.mxu0 %v2553
        %v2673 = vpop.f32.mrf.mxu0
        %v2674 = vadd.f32 0.0, %v2673
        %v2675 = vpop.f32.mrf.mxu0
        %v2676 = vpop.f32.mrf.mxu0
        %v2677 = vadd.f32 0.0, %v2676
        %v2678 = vpop.f32.mrf.mxu0
        %2679 = vmatprep.mubr.bf16.mxu0 0
        %2680 = vmatmul.mubr.bf16.gmra.mxu0 %v2554
        %v2681 = vpop.f32.mrf.mxu0
        %v2682 = vadd.f32 0.0, %v2681
        %v2683 = vpop.f32.mrf.mxu0
        %v2684 = vpop.f32.mrf.mxu0
        %v2685 = vadd.f32 0.0, %v2684
        %v2686 = vpop.f32.mrf.mxu0
        %2687 = vmatprep.mubr.bf16.mxu0 0
        %2688 = vmatmul.mubr.bf16.gmra.mxu0 %v2555
        %v2689 = vpop.f32.mrf.mxu0
        %v2690 = vadd.f32 0.0, %v2689
        %v2691 = vpop.f32.mrf.mxu0
        %v2692 = vpop.f32.mrf.mxu0
        %v2693 = vadd.f32 0.0, %v2692
        %v2694 = vpop.f32.mrf.mxu0
        %2695 = vmatprep.mubr.bf16.mxu0 0
        %2696 = vmatmul.mubr.bf16.gmra.mxu0 %v2556
        %v2697 = vpop.f32.mrf.mxu0
        %v2698 = vadd.f32 0.0, %v2697
        %v2699 = vpop.f32.mrf.mxu0
        %v2700 = vpop.f32.mrf.mxu0
        %v2701 = vadd.f32 0.0, %v2700
        %v2702 = vpop.f32.mrf.mxu0
        %2703 = vmatprep.mubr.bf16.mxu0 0
        %2704 = vmatmul.mubr.bf16.gmra.mxu0 %v2557
        %v2705 = vpop.f32.mrf.mxu0
        %v2706 = vadd.f32 0.0, %v2705
        %v2707 = vpop.f32.mrf.mxu0
        %v2708 = vpop.f32.mrf.mxu0
        %v2709 = vadd.f32 0.0, %v2708
        %v2710 = vpop.f32.mrf.mxu0
        %2711 = vmatprep.mubr.bf16.mxu0 0
        %2712 = vmatmul.mubr.bf16.gmra.mxu0 %v2558
        %v2713 = vpop.f32.mrf.mxu0
        %v2714 = vadd.f32 0.0, %v2713
        %v2715 = vpop.f32.mrf.mxu0
        %v2716 = vpop.f32.mrf.mxu0
        %v2717 = vadd.f32 0.0, %v2716
        %v2718 = vpop.f32.mrf.mxu0
        %2719 = vmatprep.mubr.bf16.mxu0 0
        %2720 = vmatmul.mubr.bf16.gmra.mxu0 %v2559
        %v2721 = vpop.f32.mrf.mxu0
        %v2722 = vadd.f32 0.0, %v2721
        %v2723 = vpop.f32.mrf.mxu0
        %v2724 = vpop.f32.mrf.mxu0
        %v2725 = vadd.f32 0.0, %v2724
        %v2726 = vpop.f32.mrf.mxu0
        %2727 = vmatprep.mubr.bf16.mxu0 0
        %2728 = vmatmul.mubr.bf16.gmra.mxu0 %v2560
        %v2729 = vpop.f32.mrf.mxu0
        %v2730 = vadd.f32 0.0, %v2729
        %v2731 = vpop.f32.mrf.mxu0
        %v2732 = vpop.f32.mrf.mxu0
        %v2733 = vadd.f32 0.0, %v2732
        %v2734 = vpop.f32.mrf.mxu0
        %2735 = vmatprep.mubr.bf16.mxu0 0
        %2736 = vmatmul.mubr.bf16.gmra.mxu0 %v2561
        %v2737 = vpop.f32.mrf.mxu0
        %v2738 = vadd.f32 0.0, %v2737
        %v2739 = vpop.f32.mrf.mxu0
        %v2740 = vpop.f32.mrf.mxu0
        %v2741 = vadd.f32 0.0, %v2740
        %v2742 = vpop.f32.mrf.mxu0
        %2743 = vmatprep.mubr.bf16.mxu0 0
        %2744 = vmatmul.mubr.bf16.gmra.mxu0 %v2562
        %v2745 = vpop.f32.mrf.mxu0
        %v2746 = vadd.f32 0.0, %v2745
        %v2747 = vpop.f32.mrf.mxu0
        %v2748 = vpop.f32.mrf.mxu0
        %v2749 = vadd.f32 0.0, %v2748
        %v2750 = vpop.f32.mrf.mxu0
        %2751 = vdwg.mxu0
        %v2752 = vadd.f32 %v2438, %v2658
        %v2753 = vadd.f32 %v2439, %v2661
        %v2754 = vadd.f32 %v2440, %v2666
        %v2755 = vadd.f32 %v2441, %v2669
        %v2756 = vadd.f32 %v2442, %v2674
        %v2757 = vadd.f32 %v2443, %v2677
        %v2758 = vadd.f32 %v2444, %v2682
        %v2759 = vadd.f32 %v2445, %v2685
        %v2760 = vadd.f32 %v2446, %v2690
        %v2761 = vadd.f32 %v2447, %v2693
        %v2762 = vadd.f32 %v2448, %v2698
        %v2763 = vadd.f32 %v2449, %v2701
        %v2764 = vadd.f32 %v2450, %v2706
        %v2765 = vadd.f32 %v2451, %v2709
        %v2766 = vadd.f32 %v2452, %v2714
        %v2767 = vadd.f32 %v2453, %v2717
        %v2768 = vadd.f32 %v2454, %v2722
        %v2769 = vadd.f32 %v2455, %v2725
        %v2770 = vadd.f32 %v2456, %v2730
        %v2771 = vadd.f32 %v2457, %v2733
        %v2772 = vadd.f32 %v2458, %v2738
        %v2773 = vadd.f32 %v2459, %v2741
        %v2774 = vadd.f32 %v2460, %v2746
        %v2775 = vadd.f32 %v2461, %v2749
        %v2776 = vld [vmem:[%s152 + $0x18] sm:$0xf]
        %v2777 = vld [vmem:[%s152 + $0x1c] sm:$0xf]
        %v2778 = vld [vmem:[%s152 + $0x20] sm:$0xf]
        %v2779 = vld [vmem:[%s152 + $0x24] sm:$0xf]
        %v2780 = vld [vmem:[%s152 + $0x28] sm:$0xf]
        %v2781 = vld [vmem:[%s152 + $0x2c] sm:$0xf]
        %v2782 = vld [vmem:[%s152 + $0x30] sm:$0xf]
        %v2783 = vld [vmem:[%s152 + $0x34] sm:$0xf]
        %v2784 = vld [vmem:[%s152 + $0x38] sm:$0xf]
        %v2785 = vld [vmem:[%s152 + $0x3c] sm:$0xf]
        %v2786 = vld [vmem:[%s152 + $0x40] sm:$0xf]
        %v2787 = vld [vmem:[%s152 + $0x44] sm:$0xf]
        %v2788 = vld [vmem:[%s152 + $0x48] sm:$0xf]
        %v2789 = vld [vmem:[%s152 + $0x4c] sm:$0xf]
        %v2790 = vld [vmem:[%s152 + $0x50] sm:$0xf]
        %v2791 = vld [vmem:[%s152 + $0x54] sm:$0xf]
        %v2792 = vld [vmem:[%s152 + $0x58] sm:$0xf]
        %v2793 = vld [vmem:[%s152 + $0x5c] sm:$0xf]
        %v2794 = vld [vmem:[%s152 + $0x60] sm:$0xf]
        %v2795 = vld [vmem:[%s152 + $0x64] sm:$0xf]
        %v2796 = vld [vmem:[%s152 + $0x68] sm:$0xf]
        %v2797 = vld [vmem:[%s152 + $0x6c] sm:$0xf]
        %v2798 = vld [vmem:[%s152 + $0x70] sm:$0xf]
        %v2799 = vld [vmem:[%s152 + $0x74] sm:$0xf]
        %v2800 = vld [vmem:[%s152 + $0x78] sm:$0x1]
        %s2801 = scalar_lea.vmem [#allocation5], 448
        %v2802 = vld [vmem:[%s2801] sm:$0xf]
        %v2803 = vld [vmem:[%s2801 + $0x4] sm:$0xf]
        %v2804 = vld [vmem:[%s2801 + $0x8] sm:$0xf]
        %v2805 = vld [vmem:[%s2801 + $0xc] sm:$0xf]
        %v2806 = vld [vmem:[%s2801 + $0x10] sm:$0xf]
        %v2807 = vld [vmem:[%s2801 + $0x14] sm:$0xf]
        %v2808 = vld [vmem:[%s2801 + $0x18] sm:$0xf]
        %v2809 = vld [vmem:[%s2801 + $0x1c] sm:$0xf]
        %v2810 = vld [vmem:[%s2801 + $0x20] sm:$0xf]
        %v2811 = vld [vmem:[%s2801 + $0x24] sm:$0xf]
        %v2812 = vld [vmem:[%s2801 + $0x28] sm:$0xf]
        %v2813 = vld [vmem:[%s2801 + $0x2c] sm:$0xf]
        %v2814 = vld [vmem:[%s2801 + $0x30] sm:$0xf]
        %v2815 = vld [vmem:[%s2801 + $0x34] sm:$0xf]
        %v2816 = vld [vmem:[%s2801 + $0x38] sm:$0xf]
        %v2817 = vld [vmem:[%s2801 + $0x3c] sm:$0xf]
        %v2843 = vunpack.c.l.b16 %v2776
        %v2844 = vunpack.c.l.b16 %v2777
        %v2845 = vunpack.c.l.b16 %v2778
        %v2846 = vunpack.c.l.b16 %v2779
        %v2847 = vunpack.c.l.b16 %v2780
        %v2848 = vunpack.c.l.b16 %v2781
        %v2849 = vunpack.c.l.b16 %v2782
        %v2850 = vunpack.c.l.b16 %v2783
        %v2851 = vunpack.c.l.b16 %v2784
        %v2852 = vunpack.c.l.b16 %v2785
        %v2853 = vunpack.c.l.b16 %v2786
        %v2854 = vunpack.c.l.b16 %v2787
        %v2855 = vunpack.c.l.b16 %v2788
        %v2856 = vunpack.c.l.b16 %v2789
        %v2857 = vunpack.c.l.b16 %v2790
        %v2858 = vunpack.c.l.b16 %v2791
        %v2859 = vunpack.c.l.b16 %v2792
        %v2860 = vunpack.c.l.b16 %v2793
        %v2861 = vunpack.c.l.b16 %v2794
        %v2862 = vunpack.c.l.b16 %v2795
        %v2863 = vunpack.c.l.b16 %v2796
        %v2864 = vunpack.c.l.b16 %v2797
        %v2865 = vunpack.c.l.b16 %v2798
        %v2866 = vunpack.c.l.b16 %v2799
        %v2867 = vunpack.c.l.b16 %v2800
        %v2868 = vpack.c.b16 %v2844, %v2843
        %v2869 = vpack.c.b16 %v2846, %v2845
        %v2870 = vpack.c.b16 %v2848, %v2847
        %v2871 = vpack.c.b16 %v2850, %v2849
        %v2872 = vpack.c.b16 %v2852, %v2851
        %v2873 = vpack.c.b16 %v2854, %v2853
        %v2874 = vpack.c.b16 %v2856, %v2855
        %v2875 = vpack.c.b16 %v2858, %v2857
        %v2876 = vpack.c.b16 %v2860, %v2859
        %v2877 = vpack.c.b16 %v2862, %v2861
        %v2878 = vpack.c.b16 %v2864, %v2863
        %v2879 = vpack.c.b16 %v2866, %v2865
        %v2880 = vpack.c.b16 %v2867, %v2867
        %v2882 = vshrl.u32 %v2868, 16
        %v2884 = vshll.u32 %v2868, 16
        %v2886 = vrot.slane %v2884, 1
        %v2887 = vor.u32 %v2882, %v2886
        %v2889 = vshll.u32 %v2869, 16
        %v2891 = vrot.slane %v2889, 1
        %v2892 = vsel %vm732, %v2887, %v2891
        %v2893 = vshrl.u32 %v2869, 16
        %v2895 = vor.u32 %v2893, %v2891
        %v2897 = vshll.u32 %v2870, 16
        %v2899 = vrot.slane %v2897, 1
        %v2900 = vsel %vm732, %v2895, %v2899
        %v2901 = vshrl.u32 %v2870, 16
        %v2903 = vor.u32 %v2901, %v2899
        %v2905 = vshll.u32 %v2871, 16
        %v2907 = vrot.slane %v2905, 1
        %v2908 = vsel %vm732, %v2903, %v2907
        %v2909 = vshrl.u32 %v2871, 16
        %v2911 = vor.u32 %v2909, %v2907
        %v2913 = vshll.u32 %v2872, 16
        %v2915 = vrot.slane %v2913, 1
        %v2916 = vsel %vm732, %v2911, %v2915
        %v2917 = vshrl.u32 %v2872, 16
        %v2919 = vor.u32 %v2917, %v2915
        %v2921 = vshll.u32 %v2873, 16
        %v2923 = vrot.slane %v2921, 1
        %v2924 = vsel %vm732, %v2919, %v2923
        %v2925 = vshrl.u32 %v2873, 16
        %v2927 = vor.u32 %v2925, %v2923
        %v2929 = vshll.u32 %v2874, 16
        %v2931 = vrot.slane %v2929, 1
        %v2932 = vsel %vm732, %v2927, %v2931
        %v2933 = vshrl.u32 %v2874, 16
        %v2935 = vor.u32 %v2933, %v2931
        %v2937 = vshll.u32 %v2875, 16
        %v2939 = vrot.slane %v2937, 1
        %v2940 = vsel %vm732, %v2935, %v2939
        %v2941 = vshrl.u32 %v2875, 16
        %v2943 = vor.u32 %v2941, %v2939
        %v2945 = vshll.u32 %v2876, 16
        %v2947 = vrot.slane %v2945, 1
        %v2948 = vsel %vm732, %v2943, %v2947
        %v2949 = vshrl.u32 %v2876, 16
        %v2951 = vor.u32 %v2949, %v2947
        %v2953 = vshll.u32 %v2877, 16
        %v2955 = vrot.slane %v2953, 1
        %v2956 = vsel %vm732, %v2951, %v2955
        %v2957 = vshrl.u32 %v2877, 16
        %v2959 = vor.u32 %v2957, %v2955
        %v2961 = vshll.u32 %v2878, 16
        %v2963 = vrot.slane %v2961, 1
        %v2964 = vsel %vm732, %v2959, %v2963
        %v2965 = vshrl.u32 %v2878, 16
        %v2967 = vor.u32 %v2965, %v2963
        %v2969 = vshll.u32 %v2879, 16
        %v2971 = vrot.slane %v2969, 1
        %v2972 = vsel %vm732, %v2967, %v2971
        %v2973 = vshrl.u32 %v2879, 16
        %v2975 = vor.u32 %v2973, %v2971
        %v2977 = vshll.u32 %v2880, 16
        %v2979 = vrot.slane %v2977, 1
        %v2980 = vsel %vm732, %v2975, %v2979
        %v3009 = vunpack.c.l.b16 %v2802
        %v3010 = vunpack.c.l.b16 %v2803
        %v3011 = vunpack.c.l.b16 %v2804
        %v3012 = vunpack.c.l.b16 %v2805
        %v3013 = vunpack.c.l.b16 %v2806
        %v3014 = vunpack.c.l.b16 %v2807
        %v3015 = vunpack.c.l.b16 %v2808
        %v3016 = vunpack.c.l.b16 %v2809
        %v3017 = vunpack.c.l.b16 %v2810
        %v3018 = vunpack.c.l.b16 %v2811
        %v3019 = vunpack.c.l.b16 %v2812
        %v3020 = vunpack.c.l.b16 %v2813
        %v3021 = vunpack.c.l.b16 %v2814
        %v3022 = vunpack.c.l.b16 %v2815
        %v3023 = vunpack.c.l.b16 %v2816
        %v3024 = vunpack.c.l.b16 %v2817
        %v3025 = vpack.c.b16 %v3010, %v3009
        %v3026 = vpack.c.b16 %v3012, %v3011
        %v3027 = vpack.c.b16 %v3014, %v3013
        %v3028 = vpack.c.b16 %v3016, %v3015
        %v3029 = vpack.c.b16 %v3018, %v3017
        %v3030 = vpack.c.b16 %v3020, %v3019
        %v3031 = vpack.c.b16 %v3022, %v3021
        %v3032 = vpack.c.b16 %v3024, %v3023
        %3041 = vmatprep.subr.bf16.mxu0 0
        %3042 = vmatpush1.bf16.msra.mxu0 %v3032
        %3043 = vmatprep.subr.bf16.mxu0 0
        %3044 = vmatpush1.bf16.msra.mxu0 %v3031
        %3045 = vmatprep.subr.bf16.mxu0 0
        %3046 = vmatpush1.bf16.msra.mxu0 %v3030
        %3047 = vmatprep.subr.bf16.mxu0 0
        %3048 = vmatpush1.bf16.msra.mxu0 %v3029
        %3049 = vmatprep.subr.bf16.mxu0 0
        %3050 = vmatpush1.bf16.msra.mxu0 %v3028
        %3051 = vmatprep.subr.bf16.mxu0 0
        %3052 = vmatpush1.bf16.msra.mxu0 %v3027
        %3053 = vmatprep.subr.bf16.mxu0 0
        %3054 = vmatpush1.bf16.msra.mxu0 %v3026
        %3055 = vmatprep.subr.bf16.mxu0 0
        %3056 = vmatpush1.bf16.msra.mxu0 %v3025
        %3057 = vmatprep.subr.bf16.mxu0 0
        %3058 = vmatpush2.bf16.msra.mxu0 0
        %3059 = vmatprep.subr.bf16.mxu0 0
        %3060 = vmatpush2.bf16.msra.mxu0 0
        %3061 = vmatprep.subr.bf16.mxu0 0
        %3062 = vmatpush2.bf16.msra.mxu0 0
        %3063 = vmatprep.subr.bf16.mxu0 0
        %3064 = vmatpush2.bf16.msra.mxu0 0
        %3065 = vmatprep.subr.bf16.mxu0 0
        %3066 = vmatpush2.bf16.msra.mxu0 0
        %3067 = vmatprep.subr.bf16.mxu0 0
        %3068 = vmatpush2.bf16.msra.mxu0 0
        %3069 = vmatprep.subr.bf16.mxu0 0
        %3070 = vmatpush2.bf16.msra.mxu0 0
        %3071 = vmatprep.subr.bf16.mxu0 0
        %3072 = vmatpush2.bf16.msra.mxu0 0
        %3073 = vmatprep.mubr.bf16.mxu0 0
        %3074 = vmatmul.mubr.bf16.gmra.mxu0 %v2892
        %v3075 = vpop.f32.mrf.mxu0
        %v3076 = vadd.f32 0.0, %v3075
        %v3077 = vpop.f32.mrf.mxu0
        %v3078 = vpop.f32.mrf.mxu0
        %v3079 = vadd.f32 0.0, %v3078
        %v3080 = vpop.f32.mrf.mxu0
        %3081 = vmatprep.mubr.bf16.mxu0 0
        %3082 = vmatmul.mubr.bf16.gmra.mxu0 %v2900
        %v3083 = vpop.f32.mrf.mxu0
        %v3084 = vadd.f32 0.0, %v3083
        %v3085 = vpop.f32.mrf.mxu0
        %v3086 = vpop.f32.mrf.mxu0
        %v3087 = vadd.f32 0.0, %v3086
        %v3088 = vpop.f32.mrf.mxu0
        %3089 = vmatprep.mubr.bf16.mxu0 0
        %3090 = vmatmul.mubr.bf16.gmra.mxu0 %v2908
        %v3091 = vpop.f32.mrf.mxu0
        %v3092 = vadd.f32 0.0, %v3091
        %v3093 = vpop.f32.mrf.mxu0
        %v3094 = vpop.f32.mrf.mxu0
        %v3095 = vadd.f32 0.0, %v3094
        %v3096 = vpop.f32.mrf.mxu0
        %3097 = vmatprep.mubr.bf16.mxu0 0
        %3098 = vmatmul.mubr.bf16.gmra.mxu0 %v2916
        %v3099 = vpop.f32.mrf.mxu0
        %v3100 = vadd.f32 0.0, %v3099
        %v3101 = vpop.f32.mrf.mxu0
        %v3102 = vpop.f32.mrf.mxu0
        %v3103 = vadd.f32 0.0, %v3102
        %v3104 = vpop.f32.mrf.mxu0
        %3105 = vmatprep.mubr.bf16.mxu0 0
        %3106 = vmatmul.mubr.bf16.gmra.mxu0 %v2924
        %v3107 = vpop.f32.mrf.mxu0
        %v3108 = vadd.f32 0.0, %v3107
        %v3109 = vpop.f32.mrf.mxu0
        %v3110 = vpop.f32.mrf.mxu0
        %v3111 = vadd.f32 0.0, %v3110
        %v3112 = vpop.f32.mrf.mxu0
        %3113 = vmatprep.mubr.bf16.mxu0 0
        %3114 = vmatmul.mubr.bf16.gmra.mxu0 %v2932
        %v3115 = vpop.f32.mrf.mxu0
        %v3116 = vadd.f32 0.0, %v3115
        %v3117 = vpop.f32.mrf.mxu0
        %v3118 = vpop.f32.mrf.mxu0
        %v3119 = vadd.f32 0.0, %v3118
        %v3120 = vpop.f32.mrf.mxu0
        %3121 = vmatprep.mubr.bf16.mxu0 0
        %3122 = vmatmul.mubr.bf16.gmra.mxu0 %v2940
        %v3123 = vpop.f32.mrf.mxu0
        %v3124 = vadd.f32 0.0, %v3123
        %v3125 = vpop.f32.mrf.mxu0
        %v3126 = vpop.f32.mrf.mxu0
        %v3127 = vadd.f32 0.0, %v3126
        %v3128 = vpop.f32.mrf.mxu0
        %3129 = vmatprep.mubr.bf16.mxu0 0
        %3130 = vmatmul.mubr.bf16.gmra.mxu0 %v2948
        %v3131 = vpop.f32.mrf.mxu0
        %v3132 = vadd.f32 0.0, %v3131
        %v3133 = vpop.f32.mrf.mxu0
        %v3134 = vpop.f32.mrf.mxu0
        %v3135 = vadd.f32 0.0, %v3134
        %v3136 = vpop.f32.mrf.mxu0
        %3137 = vmatprep.mubr.bf16.mxu0 0
        %3138 = vmatmul.mubr.bf16.gmra.mxu0 %v2956
        %v3139 = vpop.f32.mrf.mxu0
        %v3140 = vadd.f32 0.0, %v3139
        %v3141 = vpop.f32.mrf.mxu0
        %v3142 = vpop.f32.mrf.mxu0
        %v3143 = vadd.f32 0.0, %v3142
        %v3144 = vpop.f32.mrf.mxu0
        %3145 = vmatprep.mubr.bf16.mxu0 0
        %3146 = vmatmul.mubr.bf16.gmra.mxu0 %v2964
        %v3147 = vpop.f32.mrf.mxu0
        %v3148 = vadd.f32 0.0, %v3147
        %v3149 = vpop.f32.mrf.mxu0
        %v3150 = vpop.f32.mrf.mxu0
        %v3151 = vadd.f32 0.0, %v3150
        %v3152 = vpop.f32.mrf.mxu0
        %3153 = vmatprep.mubr.bf16.mxu0 0
        %3154 = vmatmul.mubr.bf16.gmra.mxu0 %v2972
        %v3155 = vpop.f32.mrf.mxu0
        %v3156 = vadd.f32 0.0, %v3155
        %v3157 = vpop.f32.mrf.mxu0
        %v3158 = vpop.f32.mrf.mxu0
        %v3159 = vadd.f32 0.0, %v3158
        %v3160 = vpop.f32.mrf.mxu0
        %3161 = vmatprep.mubr.bf16.mxu0 0
        %3162 = vmatmul.mubr.bf16.gmra.mxu0 %v2980
        %v3163 = vpop.f32.mrf.mxu0
        %v3164 = vadd.f32 0.0, %v3163
        %v3165 = vpop.f32.mrf.mxu0
        %v3166 = vpop.f32.mrf.mxu0
        %v3167 = vadd.f32 0.0, %v3166
        %v3168 = vpop.f32.mrf.mxu0
        %3169 = vdwg.mxu0
        %v3170 = vadd.f32 %v2752, %v3076
        %v3171 = vadd.f32 %v2753, %v3079
        %v3172 = vadd.f32 %v2754, %v3084
        %v3173 = vadd.f32 %v2755, %v3087
        %v3174 = vadd.f32 %v2756, %v3092
        %v3175 = vadd.f32 %v2757, %v3095
        %v3176 = vadd.f32 %v2758, %v3100
        %v3177 = vadd.f32 %v2759, %v3103
        %v3178 = vadd.f32 %v2760, %v3108
        %v3179 = vadd.f32 %v2761, %v3111
        %v3180 = vadd.f32 %v2762, %v3116
        %v3181 = vadd.f32 %v2763, %v3119
        %v3182 = vadd.f32 %v2764, %v3124
        %v3183 = vadd.f32 %v2765, %v3127
        %v3184 = vadd.f32 %v2766, %v3132
        %v3185 = vadd.f32 %v2767, %v3135
        %v3186 = vadd.f32 %v2768, %v3140
        %v3187 = vadd.f32 %v2769, %v3143
        %v3188 = vadd.f32 %v2770, %v3148
        %v3189 = vadd.f32 %v2771, %v3151
        %v3190 = vadd.f32 %v2772, %v3156
        %v3191 = vadd.f32 %v2773, %v3159
        %v3192 = vadd.f32 %v2774, %v3164
        %v3193 = vadd.f32 %v2775, %v3167
        %v3194 = vld [vmem:[%s152 + $0x18] sm:$0xe]
        %s3195 = scalar_lea.vmem [#allocation5], 512
        %v3196 = vld [vmem:[%s3195] sm:$0xf]
        %v3197 = vld [vmem:[%s3195 + $0x4] sm:$0xf]
        %v3198 = vld [vmem:[%s3195 + $0x8] sm:$0xf]
        %v3199 = vld [vmem:[%s3195 + $0xc] sm:$0xf]
        %v3200 = vld [vmem:[%s3195 + $0x10] sm:$0xf]
        %v3201 = vld [vmem:[%s3195 + $0x14] sm:$0xf]
        %v3202 = vld [vmem:[%s3195 + $0x18] sm:$0xf]
        %v3203 = vld [vmem:[%s3195 + $0x1c] sm:$0xf]
        %v3204 = vld [vmem:[%s3195 + $0x20] sm:$0xf]
        %v3205 = vld [vmem:[%s3195 + $0x24] sm:$0xf]
        %v3206 = vld [vmem:[%s3195 + $0x28] sm:$0xf]
        %v3207 = vld [vmem:[%s3195 + $0x2c] sm:$0xf]
        %v3208 = vld [vmem:[%s3195 + $0x30] sm:$0xf]
        %v3209 = vld [vmem:[%s3195 + $0x34] sm:$0xf]
        %v3210 = vld [vmem:[%s3195 + $0x38] sm:$0xf]
        %v3211 = vld [vmem:[%s3195 + $0x3c] sm:$0xf]
        %v3213 = vunpack.c.l.b16 %v3194
        %v3214 = vpack.c.b16 %v2844, %v3213
        %v3215 = vrot.slane %v3214, 1
        %v3216 = vrot.slane %v2869, 1
        %v3217 = vsel %vm1232, %v3215, %v3216
        %v3218 = vrot.slane %v2870, 1
        %v3219 = vsel %vm1232, %v3216, %v3218
        %v3220 = vrot.slane %v2871, 1
        %v3221 = vsel %vm1232, %v3218, %v3220
        %v3222 = vrot.slane %v2872, 1
        %v3223 = vsel %vm1232, %v3220, %v3222
        %v3224 = vrot.slane %v2873, 1
        %v3225 = vsel %vm1232, %v3222, %v3224
        %v3226 = vrot.slane %v2874, 1
        %v3227 = vsel %vm1232, %v3224, %v3226
        %v3228 = vrot.slane %v2875, 1
        %v3229 = vsel %vm1232, %v3226, %v3228
        %v3230 = vrot.slane %v2876, 1
        %v3231 = vsel %vm1232, %v3228, %v3230
        %v3232 = vrot.slane %v2877, 1
        %v3233 = vsel %vm1232, %v3230, %v3232
        %v3234 = vrot.slane %v2878, 1
        %v3235 = vsel %vm1232, %v3232, %v3234
        %v3236 = vrot.slane %v2879, 1
        %v3237 = vsel %vm1232, %v3234, %v3236
        %v3238 = vrot.slane %v2880, 1
        %v3239 = vsel %vm1232, %v3236, %v3238
        %v3268 = vunpack.c.l.b16 %v3196
        %v3269 = vunpack.c.l.b16 %v3197
        %v3270 = vunpack.c.l.b16 %v3198
        %v3271 = vunpack.c.l.b16 %v3199
        %v3272 = vunpack.c.l.b16 %v3200
        %v3273 = vunpack.c.l.b16 %v3201
        %v3274 = vunpack.c.l.b16 %v3202
        %v3275 = vunpack.c.l.b16 %v3203
        %v3276 = vunpack.c.l.b16 %v3204
        %v3277 = vunpack.c.l.b16 %v3205
        %v3278 = vunpack.c.l.b16 %v3206
        %v3279 = vunpack.c.l.b16 %v3207
        %v3280 = vunpack.c.l.b16 %v3208
        %v3281 = vunpack.c.l.b16 %v3209
        %v3282 = vunpack.c.l.b16 %v3210
        %v3283 = vunpack.c.l.b16 %v3211
        %v3284 = vpack.c.b16 %v3269, %v3268
        %v3285 = vpack.c.b16 %v3271, %v3270
        %v3286 = vpack.c.b16 %v3273, %v3272
        %v3287 = vpack.c.b16 %v3275, %v3274
        %v3288 = vpack.c.b16 %v3277, %v3276
        %v3289 = vpack.c.b16 %v3279, %v3278
        %v3290 = vpack.c.b16 %v3281, %v3280
        %v3291 = vpack.c.b16 %v3283, %v3282
        %3300 = vmatprep.subr.bf16.mxu0 0
        %3301 = vmatpush1.bf16.msra.mxu0 %v3291
        %3302 = vmatprep.subr.bf16.mxu0 0
        %3303 = vmatpush1.bf16.msra.mxu0 %v3290
        %3304 = vmatprep.subr.bf16.mxu0 0
        %3305 = vmatpush1.bf16.msra.mxu0 %v3289
        %3306 = vmatprep.subr.bf16.mxu0 0
        %3307 = vmatpush1.bf16.msra.mxu0 %v3288
        %3308 = vmatprep.subr.bf16.mxu0 0
        %3309 = vmatpush1.bf16.msra.mxu0 %v3287
        %3310 = vmatprep.subr.bf16.mxu0 0
        %3311 = vmatpush1.bf16.msra.mxu0 %v3286
        %3312 = vmatprep.subr.bf16.mxu0 0
        %3313 = vmatpush1.bf16.msra.mxu0 %v3285
        %3314 = vmatprep.subr.bf16.mxu0 0
        %3315 = vmatpush1.bf16.msra.mxu0 %v3284
        %3316 = vmatprep.subr.bf16.mxu0 0
        %3317 = vmatpush2.bf16.msra.mxu0 0
        %3318 = vmatprep.subr.bf16.mxu0 0
        %3319 = vmatpush2.bf16.msra.mxu0 0
        %3320 = vmatprep.subr.bf16.mxu0 0
        %3321 = vmatpush2.bf16.msra.mxu0 0
        %3322 = vmatprep.subr.bf16.mxu0 0
        %3323 = vmatpush2.bf16.msra.mxu0 0
        %3324 = vmatprep.subr.bf16.mxu0 0
        %3325 = vmatpush2.bf16.msra.mxu0 0
        %3326 = vmatprep.subr.bf16.mxu0 0
        %3327 = vmatpush2.bf16.msra.mxu0 0
        %3328 = vmatprep.subr.bf16.mxu0 0
        %3329 = vmatpush2.bf16.msra.mxu0 0
        %3330 = vmatprep.subr.bf16.mxu0 0
        %3331 = vmatpush2.bf16.msra.mxu0 0
        %3332 = vmatprep.mubr.bf16.mxu0 0
        %3333 = vmatmul.mubr.bf16.gmra.mxu0 %v3217
        %v3334 = vpop.f32.mrf.mxu0
        %v3335 = vadd.f32 0.0, %v3334
        %v3336 = vpop.f32.mrf.mxu0
        %v3337 = vpop.f32.mrf.mxu0
        %v3338 = vadd.f32 0.0, %v3337
        %v3339 = vpop.f32.mrf.mxu0
        %3340 = vmatprep.mubr.bf16.mxu0 0
        %3341 = vmatmul.mubr.bf16.gmra.mxu0 %v3219
        %v3342 = vpop.f32.mrf.mxu0
        %v3343 = vadd.f32 0.0, %v3342
        %v3344 = vpop.f32.mrf.mxu0
        %v3345 = vpop.f32.mrf.mxu0
        %v3346 = vadd.f32 0.0, %v3345
        %v3347 = vpop.f32.mrf.mxu0
        %3348 = vmatprep.mubr.bf16.mxu0 0
        %3349 = vmatmul.mubr.bf16.gmra.mxu0 %v3221
        %v3350 = vpop.f32.mrf.mxu0
        %v3351 = vadd.f32 0.0, %v3350
        %v3352 = vpop.f32.mrf.mxu0
        %v3353 = vpop.f32.mrf.mxu0
        %v3354 = vadd.f32 0.0, %v3353
        %v3355 = vpop.f32.mrf.mxu0
        %3356 = vmatprep.mubr.bf16.mxu0 0
        %3357 = vmatmul.mubr.bf16.gmra.mxu0 %v3223
        %v3358 = vpop.f32.mrf.mxu0
        %v3359 = vadd.f32 0.0, %v3358
        %v3360 = vpop.f32.mrf.mxu0
        %v3361 = vpop.f32.mrf.mxu0
        %v3362 = vadd.f32 0.0, %v3361
        %v3363 = vpop.f32.mrf.mxu0
        %3364 = vmatprep.mubr.bf16.mxu0 0
        %3365 = vmatmul.mubr.bf16.gmra.mxu0 %v3225
        %v3366 = vpop.f32.mrf.mxu0
        %v3367 = vadd.f32 0.0, %v3366
        %v3368 = vpop.f32.mrf.mxu0
        %v3369 = vpop.f32.mrf.mxu0
        %v3370 = vadd.f32 0.0, %v3369
        %v3371 = vpop.f32.mrf.mxu0
        %3372 = vmatprep.mubr.bf16.mxu0 0
        %3373 = vmatmul.mubr.bf16.gmra.mxu0 %v3227
        %v3374 = vpop.f32.mrf.mxu0
        %v3375 = vadd.f32 0.0, %v3374
        %v3376 = vpop.f32.mrf.mxu0
        %v3377 = vpop.f32.mrf.mxu0
        %v3378 = vadd.f32 0.0, %v3377
        %v3379 = vpop.f32.mrf.mxu0
        %3380 = vmatprep.mubr.bf16.mxu0 0
        %3381 = vmatmul.mubr.bf16.gmra.mxu0 %v3229
        %v3382 = vpop.f32.mrf.mxu0
        %v3383 = vadd.f32 0.0, %v3382
        %v3384 = vpop.f32.mrf.mxu0
        %v3385 = vpop.f32.mrf.mxu0
        %v3386 = vadd.f32 0.0, %v3385
        %v3387 = vpop.f32.mrf.mxu0
        %3388 = vmatprep.mubr.bf16.mxu0 0
        %3389 = vmatmul.mubr.bf16.gmra.mxu0 %v3231
        %v3390 = vpop.f32.mrf.mxu0
        %v3391 = vadd.f32 0.0, %v3390
        %v3392 = vpop.f32.mrf.mxu0
        %v3393 = vpop.f32.mrf.mxu0
        %v3394 = vadd.f32 0.0, %v3393
        %v3395 = vpop.f32.mrf.mxu0
        %3396 = vmatprep.mubr.bf16.mxu0 0
        %3397 = vmatmul.mubr.bf16.gmra.mxu0 %v3233
        %v3398 = vpop.f32.mrf.mxu0
        %v3399 = vadd.f32 0.0, %v3398
        %v3400 = vpop.f32.mrf.mxu0
        %v3401 = vpop.f32.mrf.mxu0
        %v3402 = vadd.f32 0.0, %v3401
        %v3403 = vpop.f32.mrf.mxu0
        %3404 = vmatprep.mubr.bf16.mxu0 0
        %3405 = vmatmul.mubr.bf16.gmra.mxu0 %v3235
        %v3406 = vpop.f32.mrf.mxu0
        %v3407 = vadd.f32 0.0, %v3406
        %v3408 = vpop.f32.mrf.mxu0
        %v3409 = vpop.f32.mrf.mxu0
        %v3410 = vadd.f32 0.0, %v3409
        %v3411 = vpop.f32.mrf.mxu0
        %3412 = vmatprep.mubr.bf16.mxu0 0
        %3413 = vmatmul.mubr.bf16.gmra.mxu0 %v3237
        %v3414 = vpop.f32.mrf.mxu0
        %v3415 = vadd.f32 0.0, %v3414
        %v3416 = vpop.f32.mrf.mxu0
        %v3417 = vpop.f32.mrf.mxu0
        %v3418 = vadd.f32 0.0, %v3417
        %v3419 = vpop.f32.mrf.mxu0
        %3420 = vmatprep.mubr.bf16.mxu0 0
        %3421 = vmatmul.mubr.bf16.gmra.mxu0 %v3239
        %v3422 = vpop.f32.mrf.mxu0
        %v3423 = vadd.f32 0.0, %v3422
        %v3424 = vpop.f32.mrf.mxu0
        %v3425 = vpop.f32.mrf.mxu0
        %v3426 = vadd.f32 0.0, %v3425
        %v3427 = vpop.f32.mrf.mxu0
        %3428 = vdwg.mxu0
        %v3429 = vadd.f32 %v3170, %v3335
        %v3430 = vadd.f32 %v3171, %v3338
        %v3431 = vadd.f32 %v3172, %v3343
        %v3432 = vadd.f32 %v3173, %v3346
        %v3433 = vadd.f32 %v3174, %v3351
        %v3434 = vadd.f32 %v3175, %v3354
        %v3435 = vadd.f32 %v3176, %v3359
        %v3436 = vadd.f32 %v3177, %v3362
        %v3437 = vadd.f32 %v3178, %v3367
        %v3438 = vadd.f32 %v3179, %v3370
        %v3439 = vadd.f32 %v3180, %v3375
        %v3440 = vadd.f32 %v3181, %v3378
        %v3441 = vadd.f32 %v3182, %v3383
        %v3442 = vadd.f32 %v3183, %v3386
        %v3443 = vadd.f32 %v3184, %v3391
        %v3444 = vadd.f32 %v3185, %v3394
        %v3445 = vadd.f32 %v3186, %v3399
        %v3446 = vadd.f32 %v3187, %v3402
        %v3447 = vadd.f32 %v3188, %v3407
        %v3448 = vadd.f32 %v3189, %v3410
        %v3449 = vadd.f32 %v3190, %v3415
        %v3450 = vadd.f32 %v3191, %v3418
        %v3451 = vadd.f32 %v3192, %v3423
        %v3452 = vadd.f32 %v3193, %v3426
        %v3453 = vsel %vm587, %v3429, 0.0
        %v3454 = vsel %vm588, %v3430, 0.0
        %v3455 = vsel %vm589, %v3431, 0.0
        %v3456 = vsel %vm590, %v3432, 0.0
        %v3457 = vsel %vm591, %v3433, 0.0
        %v3458 = vsel %vm592, %v3434, 0.0
        %v3459 = vsel %vm593, %v3435, 0.0
        %v3460 = vsel %vm594, %v3436, 0.0
        %v3461 = vsel %vm595, %v3437, 0.0
        %v3462 = vsel %vm596, %v3438, 0.0
        %v3463 = vsel %vm597, %v3439, 0.0
        %v3464 = vsel %vm598, %v3440, 0.0
        %v3465 = vsel %vm599, %v3441, 0.0
        %v3466 = vsel %vm600, %v3442, 0.0
        %v3467 = vsel %vm601, %v3443, 0.0
        %v3468 = vsel %vm602, %v3444, 0.0
        %v3469 = vsel %vm603, %v3445, 0.0
        %v3470 = vsel %vm604, %v3446, 0.0
        %v3471 = vsel %vm605, %v3447, 0.0
        %v3472 = vsel %vm606, %v3448, 0.0
        %v3473 = vsel %vm607, %v3449, 0.0
        %v3474 = vsel %vm608, %v3450, 0.0
        %v3475 = vsel %vm609, %v3451, 0.0
        %v3476 = vsel %vm610, %v3452, 0.0
        %v3477 = vadd.f32 %v3453, %v3454
        %v3478 = vadd.f32 %v3477, %v3455
        %v3479 = vadd.f32 %v3478, %v3456
        %v3480 = vadd.f32 %v3479, %v3457
        %v3481 = vadd.f32 %v3480, %v3458
        %v3482 = vadd.f32 %v3481, %v3459
        %v3483 = vadd.f32 %v3482, %v3460
        %v3484 = vadd.f32 %v3483, %v3461
        %v3485 = vadd.f32 %v3484, %v3462
        %v3486 = vadd.f32 %v3485, %v3463
        %v3487 = vadd.f32 %v3486, %v3464
        %v3488 = vadd.f32 %v3487, %v3465
        %v3489 = vadd.f32 %v3488, %v3466
        %v3490 = vadd.f32 %v3489, %v3467
        %v3491 = vadd.f32 %v3490, %v3468
        %v3492 = vadd.f32 %v3491, %v3469
        %v3493 = vadd.f32 %v3492, %v3470
        %v3494 = vadd.f32 %v3493, %v3471
        %v3495 = vadd.f32 %v3494, %v3472
        %v3496 = vadd.f32 %v3495, %v3473
        %v3497 = vadd.f32 %v3496, %v3474
        %v3498 = vadd.f32 %v3497, %v3475
        %v3499 = vadd.f32 %v3498, %v3476
        %v3500 = vrot.slane %v3499, 4
        %v3501 = vadd.f32 %v3499, %v3500
        %v3502 = vrot.slane %v3501, 2
        %v3503 = vadd.f32 %v3501, %v3502
        %v3504 = vrot.slane %v3503, 1
        %v3505 = vadd.f32 %v3503, %v3504
        %v3506 = vadd.f32 %v3505, 0.0
        %v3507 = vmul.f32 %v3453, %v3429
        %v3508 = vmul.f32 %v3454, %v3430
        %v3509 = vmul.f32 %v3455, %v3431
        %v3510 = vmul.f32 %v3456, %v3432
        %v3511 = vmul.f32 %v3457, %v3433
        %v3512 = vmul.f32 %v3458, %v3434
        %v3513 = vmul.f32 %v3459, %v3435
        %v3514 = vmul.f32 %v3460, %v3436
        %v3515 = vmul.f32 %v3461, %v3437
        %v3516 = vmul.f32 %v3462, %v3438
        %v3517 = vmul.f32 %v3463, %v3439
        %v3518 = vmul.f32 %v3464, %v3440
        %v3519 = vmul.f32 %v3465, %v3441
        %v3520 = vmul.f32 %v3466, %v3442
        %v3521 = vmul.f32 %v3467, %v3443
        %v3522 = vmul.f32 %v3468, %v3444
        %v3523 = vmul.f32 %v3469, %v3445
        %v3524 = vmul.f32 %v3470, %v3446
        %v3525 = vmul.f32 %v3471, %v3447
        %v3526 = vmul.f32 %v3472, %v3448
        %v3527 = vmul.f32 %v3473, %v3449
        %v3528 = vmul.f32 %v3474, %v3450
        %v3529 = vmul.f32 %v3475, %v3451
        %v3530 = vmul.f32 %v3476, %v3452
        %v3531 = vadd.f32 %v3507, %v3508
        %v3532 = vadd.f32 %v3531, %v3509
        %v3533 = vadd.f32 %v3532, %v3510
        %v3534 = vadd.f32 %v3533, %v3511
        %v3535 = vadd.f32 %v3534, %v3512
        %v3536 = vadd.f32 %v3535, %v3513
        %v3537 = vadd.f32 %v3536, %v3514
        %v3538 = vadd.f32 %v3537, %v3515
        %v3539 = vadd.f32 %v3538, %v3516
        %v3540 = vadd.f32 %v3539, %v3517
        %v3541 = vadd.f32 %v3540, %v3518
        %v3542 = vadd.f32 %v3541, %v3519
        %v3543 = vadd.f32 %v3542, %v3520
        %v3544 = vadd.f32 %v3543, %v3521
        %v3545 = vadd.f32 %v3544, %v3522
        %v3546 = vadd.f32 %v3545, %v3523
        %v3547 = vadd.f32 %v3546, %v3524
        %v3548 = vadd.f32 %v3547, %v3525
        %v3549 = vadd.f32 %v3548, %v3526
        %v3550 = vadd.f32 %v3549, %v3527
        %v3551 = vadd.f32 %v3550, %v3528
        %v3552 = vadd.f32 %v3551, %v3529
        %v3553 = vadd.f32 %v3552, %v3530
        %v3554 = vrot.slane %v3553, 4
        %v3555 = vadd.f32 %v3553, %v3554
        %v3556 = vrot.slane %v3555, 2
        %v3557 = vadd.f32 %v3555, %v3556
        %v3558 = vrot.slane %v3557, 1
        %v3559 = vadd.f32 %v3557, %v3558
        %v3560 = vadd.f32 %v3559, 0.0
        %3561 = vst [vmem:[%s176] sm:$0xff] %v3429
        %3562 = vst [vmem:[%s176 + $0x8] sm:$0xff] %v3430
        %3563 = vst [vmem:[%s176 + $0x10] sm:$0xff] %v3431
        %3564 = vst [vmem:[%s176 + $0x18] sm:$0xff] %v3432
        %3565 = vst [vmem:[%s176 + $0x20] sm:$0xff] %v3433
        %3566 = vst [vmem:[%s176 + $0x28] sm:$0xff] %v3434
        %3567 = vst [vmem:[%s176 + $0x30] sm:$0xff] %v3435
        %3568 = vst [vmem:[%s176 + $0x38] sm:$0xff] %v3436
        %3569 = vst [vmem:[%s176 + $0x40] sm:$0xff] %v3437
        %3570 = vst [vmem:[%s176 + $0x48] sm:$0xff] %v3438
        %3571 = vst [vmem:[%s176 + $0x50] sm:$0xff] %v3439
        %3572 = vst [vmem:[%s176 + $0x58] sm:$0xff] %v3440
        %3573 = vst [vmem:[%s176 + $0x60] sm:$0xff] %v3441
        %3574 = vst [vmem:[%s176 + $0x68] sm:$0xff] %v3442
        %3575 = vst [vmem:[%s176 + $0x70] sm:$0xff] %v3443
        %3576 = vst [vmem:[%s176 + $0x78] sm:$0xff] %v3444
        %3577 = vst [vmem:[%s176 + $0x80] sm:$0xff] %v3445
        %3578 = vst [vmem:[%s176 + $0x88] sm:$0xff] %v3446
        %3579 = vst [vmem:[%s176 + $0x90] sm:$0xff] %v3447
        %3580 = vst [vmem:[%s176 + $0x98] sm:$0xff] %v3448
        %3581 = vst [vmem:[%s176 + $0xa0] sm:$0xff] %v3449
        %3582 = vst [vmem:[%s176 + $0xa8] sm:$0xff] %v3450
        %3583 = vst [vmem:[%s176 + $0xb0] sm:$0xff] %v3451
        %3584 = vst [vmem:[%s176 + $0xb8] sm:$0xff] %v3452
        %v3585 = vld [vmem:[%s152 + $0x60] sm:$0xf]
        %v3586 = vld [vmem:[%s152 + $0x64] sm:$0xf]
        %v3587 = vld [vmem:[%s152 + $0x68] sm:$0xf]
        %v3588 = vld [vmem:[%s152 + $0x6c] sm:$0xf]
        %v3589 = vld [vmem:[%s152 + $0x70] sm:$0xf]
        %v3590 = vld [vmem:[%s152 + $0x74] sm:$0xf]
        %v3591 = vld [vmem:[%s152 + $0x78] sm:$0xf]
        %v3592 = vld [vmem:[%s152 + $0x7c] sm:$0xf]
        %v3593 = vld [vmem:[%s152 + $0x80] sm:$0xf]
        %v3594 = vld [vmem:[%s152 + $0x84] sm:$0xf]
        %v3595 = vld [vmem:[%s152 + $0x88] sm:$0xf]
        %v3596 = vld [vmem:[%s152 + $0x8c] sm:$0xf]
        %v3597 = vld [vmem:[%s152 + $0x90] sm:$0xf]
        %v3598 = vld [vmem:[%s152 + $0x94] sm:$0xf]
        %v3599 = vld [vmem:[%s152 + $0x98] sm:$0xf]
        %v3600 = vld [vmem:[%s152 + $0x9c] sm:$0xf]
        %v3601 = vld [vmem:[%s152 + $0xa0] sm:$0xf]
        %v3602 = vld [vmem:[%s152 + $0xa4] sm:$0xf]
        %v3603 = vld [vmem:[%s152 + $0xa8] sm:$0xf]
        %v3604 = vld [vmem:[%s152 + $0xac] sm:$0xf]
        %v3605 = vld [vmem:[%s152 + $0xb0] sm:$0xf]
        %v3606 = vld [vmem:[%s152 + $0xb4] sm:$0xf]
        %v3607 = vld [vmem:[%s152 + $0xb8] sm:$0xf]
        %v3608 = vld [vmem:[%s152 + $0xbc] sm:$0xf]
        %v3609 = vld [vmem:[#allocation5] sm:$0xf]
        %v3610 = vld [vmem:[#allocation5 + $0x4] sm:$0xf]
        %v3611 = vld [vmem:[#allocation5 + $0x8] sm:$0xf]
        %v3612 = vld [vmem:[#allocation5 + $0xc] sm:$0xf]
        %v3613 = vld [vmem:[#allocation5 + $0x10] sm:$0xf]
        %v3614 = vld [vmem:[#allocation5 + $0x14] sm:$0xf]
        %v3615 = vld [vmem:[#allocation5 + $0x18] sm:$0xf]
        %v3616 = vld [vmem:[#allocation5 + $0x1c] sm:$0xf]
        %v3617 = vld [vmem:[#allocation5 + $0x20] sm:$0xf]
        %v3618 = vld [vmem:[#allocation5 + $0x24] sm:$0xf]
        %v3619 = vld [vmem:[#allocation5 + $0x28] sm:$0xf]
        %v3620 = vld [vmem:[#allocation5 + $0x2c] sm:$0xf]
        %v3621 = vld [vmem:[#allocation5 + $0x30] sm:$0xf]
        %v3622 = vld [vmem:[#allocation5 + $0x34] sm:$0xf]
        %v3623 = vld [vmem:[#allocation5 + $0x38] sm:$0xf]
        %v3624 = vld [vmem:[#allocation5 + $0x3c] sm:$0xf]
        %v3625 = vld [vmem:[%s152 + $0xc0] sm:$0x1]
        %v3626 = vld [vmem:[%s652] sm:$0xf]
        %v3627 = vld [vmem:[%s652 + $0x4] sm:$0xf]
        %v3628 = vld [vmem:[%s652 + $0x8] sm:$0xf]
        %v3629 = vld [vmem:[%s652 + $0xc] sm:$0xf]
        %v3630 = vld [vmem:[%s652 + $0x10] sm:$0xf]
        %v3631 = vld [vmem:[%s652 + $0x14] sm:$0xf]
        %v3632 = vld [vmem:[%s652 + $0x18] sm:$0xf]
        %v3633 = vld [vmem:[%s652 + $0x1c] sm:$0xf]
        %v3634 = vld [vmem:[%s652 + $0x20] sm:$0xf]
        %v3635 = vld [vmem:[%s652 + $0x24] sm:$0xf]
        %v3636 = vld [vmem:[%s652 + $0x28] sm:$0xf]
        %v3637 = vld [vmem:[%s652 + $0x2c] sm:$0xf]
        %v3638 = vld [vmem:[%s652 + $0x30] sm:$0xf]
        %v3639 = vld [vmem:[%s652 + $0x34] sm:$0xf]
        %v3640 = vld [vmem:[%s652 + $0x38] sm:$0xf]
        %v3641 = vld [vmem:[%s652 + $0x3c] sm:$0xf]
        %v3667 = vunpack.c.l.b16 %v3585
        %v3668 = vunpack.c.l.b16 %v3586
        %v3669 = vunpack.c.l.b16 %v3587
        %v3670 = vunpack.c.l.b16 %v3588
        %v3671 = vunpack.c.l.b16 %v3589
        %v3672 = vunpack.c.l.b16 %v3590
        %v3673 = vunpack.c.l.b16 %v3591
        %v3674 = vunpack.c.l.b16 %v3592
        %v3675 = vunpack.c.l.b16 %v3593
        %v3676 = vunpack.c.l.b16 %v3594
        %v3677 = vunpack.c.l.b16 %v3595
        %v3678 = vunpack.c.l.b16 %v3596
        %v3679 = vunpack.c.l.b16 %v3597
        %v3680 = vunpack.c.l.b16 %v3598
        %v3681 = vunpack.c.l.b16 %v3599
        %v3682 = vunpack.c.l.b16 %v3600
        %v3683 = vunpack.c.l.b16 %v3601
        %v3684 = vunpack.c.l.b16 %v3602
        %v3685 = vunpack.c.l.b16 %v3603
        %v3686 = vunpack.c.l.b16 %v3604
        %v3687 = vunpack.c.l.b16 %v3605
        %v3688 = vunpack.c.l.b16 %v3606
        %v3689 = vunpack.c.l.b16 %v3607
        %v3690 = vunpack.c.l.b16 %v3608
        %v3691 = vunpack.c.l.b16 %v3625
        %v3692 = vpack.c.b16 %v3668, %v3667
        %v3693 = vpack.c.b16 %v3670, %v3669
        %v3694 = vpack.c.b16 %v3672, %v3671
        %v3695 = vpack.c.b16 %v3674, %v3673
        %v3696 = vpack.c.b16 %v3676, %v3675
        %v3697 = vpack.c.b16 %v3678, %v3677
        %v3698 = vpack.c.b16 %v3680, %v3679
        %v3699 = vpack.c.b16 %v3682, %v3681
        %v3700 = vpack.c.b16 %v3684, %v3683
        %v3701 = vpack.c.b16 %v3686, %v3685
        %v3702 = vpack.c.b16 %v3688, %v3687
        %v3703 = vpack.c.b16 %v3690, %v3689
        %v3704 = vpack.c.b16 %v3691, %v3691
        %v3706 = vshrl.u32 %v3692, 16
        %v3708 = vshll.u32 %v3692, 16
        %v3710 = vrot.slane %v3708, 1
        %v3711 = vor.u32 %v3706, %v3710
        %v3713 = vshll.u32 %v3693, 16
        %v3715 = vrot.slane %v3713, 1
        %v3716 = vsel %vm732, %v3711, %v3715
        %v3717 = vshrl.u32 %v3693, 16
        %v3719 = vor.u32 %v3717, %v3715
        %v3721 = vshll.u32 %v3694, 16
        %v3723 = vrot.slane %v3721, 1
        %v3724 = vsel %vm732, %v3719, %v3723
        %v3725 = vshrl.u32 %v3694, 16
        %v3727 = vor.u32 %v3725, %v3723
        %v3729 = vshll.u32 %v3695, 16
        %v3731 = vrot.slane %v3729, 1
        %v3732 = vsel %vm732, %v3727, %v3731
        %v3733 = vshrl.u32 %v3695, 16
        %v3735 = vor.u32 %v3733, %v3731
        %v3737 = vshll.u32 %v3696, 16
        %v3739 = vrot.slane %v3737, 1
        %v3740 = vsel %vm732, %v3735, %v3739
        %v3741 = vshrl.u32 %v3696, 16
        %v3743 = vor.u32 %v3741, %v3739
        %v3745 = vshll.u32 %v3697, 16
        %v3747 = vrot.slane %v3745, 1
        %v3748 = vsel %vm732, %v3743, %v3747
        %v3749 = vshrl.u32 %v3697, 16
        %v3751 = vor.u32 %v3749, %v3747
        %v3753 = vshll.u32 %v3698, 16
        %v3755 = vrot.slane %v3753, 1
        %v3756 = vsel %vm732, %v3751, %v3755
        %v3757 = vshrl.u32 %v3698, 16
        %v3759 = vor.u32 %v3757, %v3755
        %v3761 = vshll.u32 %v3699, 16
        %v3763 = vrot.slane %v3761, 1
        %v3764 = vsel %vm732, %v3759, %v3763
        %v3765 = vshrl.u32 %v3699, 16
        %v3767 = vor.u32 %v3765, %v3763
        %v3769 = vshll.u32 %v3700, 16
        %v3771 = vrot.slane %v3769, 1
        %v3772 = vsel %vm732, %v3767, %v3771
        %v3773 = vshrl.u32 %v3700, 16
        %v3775 = vor.u32 %v3773, %v3771
        %v3777 = vshll.u32 %v3701, 16
        %v3779 = vrot.slane %v3777, 1
        %v3780 = vsel %vm732, %v3775, %v3779
        %v3781 = vshrl.u32 %v3701, 16
        %v3783 = vor.u32 %v3781, %v3779
        %v3785 = vshll.u32 %v3702, 16
        %v3787 = vrot.slane %v3785, 1
        %v3788 = vsel %vm732, %v3783, %v3787
        %v3789 = vshrl.u32 %v3702, 16
        %v3791 = vor.u32 %v3789, %v3787
        %v3793 = vshll.u32 %v3703, 16
        %v3795 = vrot.slane %v3793, 1
        %v3796 = vsel %vm732, %v3791, %v3795
        %v3797 = vshrl.u32 %v3703, 16
        %v3799 = vor.u32 %v3797, %v3795
        %v3801 = vshll.u32 %v3704, 16
        %v3803 = vrot.slane %v3801, 1
        %v3804 = vsel %vm732, %v3799, %v3803
        %v3833 = vunpack.c.l.b16 %v3626
        %v3834 = vunpack.c.l.b16 %v3627
        %v3835 = vunpack.c.l.b16 %v3628
        %v3836 = vunpack.c.l.b16 %v3629
        %v3837 = vunpack.c.l.b16 %v3630
        %v3838 = vunpack.c.l.b16 %v3631
        %v3839 = vunpack.c.l.b16 %v3632
        %v3840 = vunpack.c.l.b16 %v3633
        %v3841 = vunpack.c.l.b16 %v3634
        %v3842 = vunpack.c.l.b16 %v3635
        %v3843 = vunpack.c.l.b16 %v3636
        %v3844 = vunpack.c.l.b16 %v3637
        %v3845 = vunpack.c.l.b16 %v3638
        %v3846 = vunpack.c.l.b16 %v3639
        %v3847 = vunpack.c.l.b16 %v3640
        %v3848 = vunpack.c.l.b16 %v3641
        %v3849 = vpack.c.b16 %v3834, %v3833
        %v3850 = vpack.c.b16 %v3836, %v3835
        %v3851 = vpack.c.b16 %v3838, %v3837
        %v3852 = vpack.c.b16 %v3840, %v3839
        %v3853 = vpack.c.b16 %v3842, %v3841
        %v3854 = vpack.c.b16 %v3844, %v3843
        %v3855 = vpack.c.b16 %v3846, %v3845
        %v3856 = vpack.c.b16 %v3848, %v3847
        %3865 = vmatprep.subr.bf16.mxu0 0
        %3866 = vmatpush1.bf16.msra.mxu0 %v3856
        %3867 = vmatprep.subr.bf16.mxu0 0
        %3868 = vmatpush1.bf16.msra.mxu0 %v3855
        %3869 = vmatprep.subr.bf16.mxu0 0
        %3870 = vmatpush1.bf16.msra.mxu0 %v3854
        %3871 = vmatprep.subr.bf16.mxu0 0
        %3872 = vmatpush1.bf16.msra.mxu0 %v3853
        %3873 = vmatprep.subr.bf16.mxu0 0
        %3874 = vmatpush1.bf16.msra.mxu0 %v3852
        %3875 = vmatprep.subr.bf16.mxu0 0
        %3876 = vmatpush1.bf16.msra.mxu0 %v3851
        %3877 = vmatprep.subr.bf16.mxu0 0
        %3878 = vmatpush1.bf16.msra.mxu0 %v3850
        %3879 = vmatprep.subr.bf16.mxu0 0
        %3880 = vmatpush1.bf16.msra.mxu0 %v3849
        %3881 = vmatprep.subr.bf16.mxu0 0
        %3882 = vmatpush2.bf16.msra.mxu0 0
        %3883 = vmatprep.subr.bf16.mxu0 0
        %3884 = vmatpush2.bf16.msra.mxu0 0
        %3885 = vmatprep.subr.bf16.mxu0 0
        %3886 = vmatpush2.bf16.msra.mxu0 0
        %3887 = vmatprep.subr.bf16.mxu0 0
        %3888 = vmatpush2.bf16.msra.mxu0 0
        %3889 = vmatprep.subr.bf16.mxu0 0
        %3890 = vmatpush2.bf16.msra.mxu0 0
        %3891 = vmatprep.subr.bf16.mxu0 0
        %3892 = vmatpush2.bf16.msra.mxu0 0
        %3893 = vmatprep.subr.bf16.mxu0 0
        %3894 = vmatpush2.bf16.msra.mxu0 0
        %3895 = vmatprep.subr.bf16.mxu0 0
        %3896 = vmatpush2.bf16.msra.mxu0 0
        %3897 = vmatprep.mubr.bf16.mxu0 0
        %3898 = vmatmul.mubr.bf16.gmra.mxu0 %v3716
        %v3899 = vpop.f32.mrf.mxu0
        %v3900 = vadd.f32 0.0, %v3899
        %v3901 = vpop.f32.mrf.mxu0
        %v3902 = vpop.f32.mrf.mxu0
        %v3903 = vadd.f32 0.0, %v3902
        %v3904 = vpop.f32.mrf.mxu0
        %3905 = vmatprep.mubr.bf16.mxu0 0
        %3906 = vmatmul.mubr.bf16.gmra.mxu0 %v3724
        %v3907 = vpop.f32.mrf.mxu0
        %v3908 = vadd.f32 0.0, %v3907
        %v3909 = vpop.f32.mrf.mxu0
        %v3910 = vpop.f32.mrf.mxu0
        %v3911 = vadd.f32 0.0, %v3910
        %v3912 = vpop.f32.mrf.mxu0
        %3913 = vmatprep.mubr.bf16.mxu0 0
        %3914 = vmatmul.mubr.bf16.gmra.mxu0 %v3732
        %v3915 = vpop.f32.mrf.mxu0
        %v3916 = vadd.f32 0.0, %v3915
        %v3917 = vpop.f32.mrf.mxu0
        %v3918 = vpop.f32.mrf.mxu0
        %v3919 = vadd.f32 0.0, %v3918
        %v3920 = vpop.f32.mrf.mxu0
        %3921 = vmatprep.mubr.bf16.mxu0 0
        %3922 = vmatmul.mubr.bf16.gmra.mxu0 %v3740
        %v3923 = vpop.f32.mrf.mxu0
        %v3924 = vadd.f32 0.0, %v3923
        %v3925 = vpop.f32.mrf.mxu0
        %v3926 = vpop.f32.mrf.mxu0
        %v3927 = vadd.f32 0.0, %v3926
        %v3928 = vpop.f32.mrf.mxu0
        %3929 = vmatprep.mubr.bf16.mxu0 0
        %3930 = vmatmul.mubr.bf16.gmra.mxu0 %v3748
        %v3931 = vpop.f32.mrf.mxu0
        %v3932 = vadd.f32 0.0, %v3931
        %v3933 = vpop.f32.mrf.mxu0
        %v3934 = vpop.f32.mrf.mxu0
        %v3935 = vadd.f32 0.0, %v3934
        %v3936 = vpop.f32.mrf.mxu0
        %3937 = vmatprep.mubr.bf16.mxu0 0
        %3938 = vmatmul.mubr.bf16.gmra.mxu0 %v3756
        %v3939 = vpop.f32.mrf.mxu0
        %v3940 = vadd.f32 0.0, %v3939
        %v3941 = vpop.f32.mrf.mxu0
        %v3942 = vpop.f32.mrf.mxu0
        %v3943 = vadd.f32 0.0, %v3942
        %v3944 = vpop.f32.mrf.mxu0
        %3945 = vmatprep.mubr.bf16.mxu0 0
        %3946 = vmatmul.mubr.bf16.gmra.mxu0 %v3764
        %v3947 = vpop.f32.mrf.mxu0
        %v3948 = vadd.f32 0.0, %v3947
        %v3949 = vpop.f32.mrf.mxu0
        %v3950 = vpop.f32.mrf.mxu0
        %v3951 = vadd.f32 0.0, %v3950
        %v3952 = vpop.f32.mrf.mxu0
        %3953 = vmatprep.mubr.bf16.mxu0 0
        %3954 = vmatmul.mubr.bf16.gmra.mxu0 %v3772
        %v3955 = vpop.f32.mrf.mxu0
        %v3956 = vadd.f32 0.0, %v3955
        %v3957 = vpop.f32.mrf.mxu0
        %v3958 = vpop.f32.mrf.mxu0
        %v3959 = vadd.f32 0.0, %v3958
        %v3960 = vpop.f32.mrf.mxu0
        %3961 = vmatprep.mubr.bf16.mxu0 0
        %3962 = vmatmul.mubr.bf16.gmra.mxu0 %v3780
        %v3963 = vpop.f32.mrf.mxu0
        %v3964 = vadd.f32 0.0, %v3963
        %v3965 = vpop.f32.mrf.mxu0
        %v3966 = vpop.f32.mrf.mxu0
        %v3967 = vadd.f32 0.0, %v3966
        %v3968 = vpop.f32.mrf.mxu0
        %3969 = vmatprep.mubr.bf16.mxu0 0
        %3970 = vmatmul.mubr.bf16.gmra.mxu0 %v3788
        %v3971 = vpop.f32.mrf.mxu0
        %v3972 = vadd.f32 0.0, %v3971
        %v3973 = vpop.f32.mrf.mxu0
        %v3974 = vpop.f32.mrf.mxu0
        %v3975 = vadd.f32 0.0, %v3974
        %v3976 = vpop.f32.mrf.mxu0
        %3977 = vmatprep.mubr.bf16.mxu0 0
        %3978 = vmatmul.mubr.bf16.gmra.mxu0 %v3796
        %v3979 = vpop.f32.mrf.mxu0
        %v3980 = vadd.f32 0.0, %v3979
        %v3981 = vpop.f32.mrf.mxu0
        %v3982 = vpop.f32.mrf.mxu0
        %v3983 = vadd.f32 0.0, %v3982
        %v3984 = vpop.f32.mrf.mxu0
        %3985 = vmatprep.mubr.bf16.mxu0 0
        %3986 = vmatmul.mubr.bf16.gmra.mxu0 %v3804
        %v3987 = vpop.f32.mrf.mxu0
        %v3988 = vadd.f32 0.0, %v3987
        %v3989 = vpop.f32.mrf.mxu0
        %v3990 = vpop.f32.mrf.mxu0
        %v3991 = vadd.f32 0.0, %v3990
        %v3992 = vpop.f32.mrf.mxu0
        %3993 = vdwg.mxu0
        %v4022 = vunpack.c.l.b16 %v3609
        %v4023 = vunpack.c.l.b16 %v3610
        %v4024 = vunpack.c.l.b16 %v3611
        %v4025 = vunpack.c.l.b16 %v3612
        %v4026 = vunpack.c.l.b16 %v3613
        %v4027 = vunpack.c.l.b16 %v3614
        %v4028 = vunpack.c.l.b16 %v3615
        %v4029 = vunpack.c.l.b16 %v3616
        %v4030 = vunpack.c.l.b16 %v3617
        %v4031 = vunpack.c.l.b16 %v3618
        %v4032 = vunpack.c.l.b16 %v3619
        %v4033 = vunpack.c.l.b16 %v3620
        %v4034 = vunpack.c.l.b16 %v3621
        %v4035 = vunpack.c.l.b16 %v3622
        %v4036 = vunpack.c.l.b16 %v3623
        %v4037 = vunpack.c.l.b16 %v3624
        %v4038 = vpack.c.b16 %v4023, %v4022
        %v4039 = vpack.c.b16 %v4025, %v4024
        %v4040 = vpack.c.b16 %v4027, %v4026
        %v4041 = vpack.c.b16 %v4029, %v4028
        %v4042 = vpack.c.b16 %v4031, %v4030
        %v4043 = vpack.c.b16 %v4033, %v4032
        %v4044 = vpack.c.b16 %v4035, %v4034
        %v4045 = vpack.c.b16 %v4037, %v4036
        %4054 = vmatprep.subr.bf16.mxu0 0
        %4055 = vmatpush1.bf16.msra.mxu0 %v4045
        %4056 = vmatprep.subr.bf16.mxu0 0
        %4057 = vmatpush1.bf16.msra.mxu0 %v4044
        %4058 = vmatprep.subr.bf16.mxu0 0
        %4059 = vmatpush1.bf16.msra.mxu0 %v4043
        %4060 = vmatprep.subr.bf16.mxu0 0
        %4061 = vmatpush1.bf16.msra.mxu0 %v4042
        %4062 = vmatprep.subr.bf16.mxu0 0
        %4063 = vmatpush1.bf16.msra.mxu0 %v4041
        %4064 = vmatprep.subr.bf16.mxu0 0
        %4065 = vmatpush1.bf16.msra.mxu0 %v4040
        %4066 = vmatprep.subr.bf16.mxu0 0
        %4067 = vmatpush1.bf16.msra.mxu0 %v4039
        %4068 = vmatprep.subr.bf16.mxu0 0
        %4069 = vmatpush1.bf16.msra.mxu0 %v4038
        %4070 = vmatprep.subr.bf16.mxu0 0
        %4071 = vmatpush2.bf16.msra.mxu0 0
        %4072 = vmatprep.subr.bf16.mxu0 0
        %4073 = vmatpush2.bf16.msra.mxu0 0
        %4074 = vmatprep.subr.bf16.mxu0 0
        %4075 = vmatpush2.bf16.msra.mxu0 0
        %4076 = vmatprep.subr.bf16.mxu0 0
        %4077 = vmatpush2.bf16.msra.mxu0 0
        %4078 = vmatprep.subr.bf16.mxu0 0
        %4079 = vmatpush2.bf16.msra.mxu0 0
        %4080 = vmatprep.subr.bf16.mxu0 0
        %4081 = vmatpush2.bf16.msra.mxu0 0
        %4082 = vmatprep.subr.bf16.mxu0 0
        %4083 = vmatpush2.bf16.msra.mxu0 0
        %4084 = vmatprep.subr.bf16.mxu0 0
        %4085 = vmatpush2.bf16.msra.mxu0 0
        %4086 = vmatprep.mubr.bf16.mxu0 0
        %4087 = vmatmul.mubr.bf16.gmra.mxu0 %v3692
        %v4088 = vpop.f32.mrf.mxu0
        %v4089 = vadd.f32 %v3900, %v4088
        %v4090 = vpop.f32.mrf.mxu0
        %v4091 = vpop.f32.mrf.mxu0
        %v4092 = vadd.f32 %v3903, %v4091
        %v4093 = vpop.f32.mrf.mxu0
        %4094 = vmatprep.mubr.bf16.mxu0 0
        %4095 = vmatmul.mubr.bf16.gmra.mxu0 %v3693
        %v4096 = vpop.f32.mrf.mxu0
        %v4097 = vadd.f32 %v3908, %v4096
        %v4098 = vpop.f32.mrf.mxu0
        %v4099 = vpop.f32.mrf.mxu0
        %v4100 = vadd.f32 %v3911, %v4099
        %v4101 = vpop.f32.mrf.mxu0
        %4102 = vmatprep.mubr.bf16.mxu0 0
        %4103 = vmatmul.mubr.bf16.gmra.mxu0 %v3694
        %v4104 = vpop.f32.mrf.mxu0
        %v4105 = vadd.f32 %v3916, %v4104
        %v4106 = vpop.f32.mrf.mxu0
        %v4107 = vpop.f32.mrf.mxu0
        %v4108 = vadd.f32 %v3919, %v4107
        %v4109 = vpop.f32.mrf.mxu0
        %4110 = vmatprep.mubr.bf16.mxu0 0
        %4111 = vmatmul.mubr.bf16.gmra.mxu0 %v3695
        %v4112 = vpop.f32.mrf.mxu0
        %v4113 = vadd.f32 %v3924, %v4112
        %v4114 = vpop.f32.mrf.mxu0
        %v4115 = vpop.f32.mrf.mxu0
        %v4116 = vadd.f32 %v3927, %v4115
        %v4117 = vpop.f32.mrf.mxu0
        %4118 = vmatprep.mubr.bf16.mxu0 0
        %4119 = vmatmul.mubr.bf16.gmra.mxu0 %v3696
        %v4120 = vpop.f32.mrf.mxu0
        %v4121 = vadd.f32 %v3932, %v4120
        %v4122 = vpop.f32.mrf.mxu0
        %v4123 = vpop.f32.mrf.mxu0
        %v4124 = vadd.f32 %v3935, %v4123
        %v4125 = vpop.f32.mrf.mxu0
        %4126 = vmatprep.mubr.bf16.mxu0 0
        %4127 = vmatmul.mubr.bf16.gmra.mxu0 %v3697
        %v4128 = vpop.f32.mrf.mxu0
        %v4129 = vadd.f32 %v3940, %v4128
        %v4130 = vpop.f32.mrf.mxu0
        %v4131 = vpop.f32.mrf.mxu0
        %v4132 = vadd.f32 %v3943, %v4131
        %v4133 = vpop.f32.mrf.mxu0
        %4134 = vmatprep.mubr.bf16.mxu0 0
        %4135 = vmatmul.mubr.bf16.gmra.mxu0 %v3698
        %v4136 = vpop.f32.mrf.mxu0
        %v4137 = vadd.f32 %v3948, %v4136
        %v4138 = vpop.f32.mrf.mxu0
        %v4139 = vpop.f32.mrf.mxu0
        %v4140 = vadd.f32 %v3951, %v4139
        %v4141 = vpop.f32.mrf.mxu0
        %4142 = vmatprep.mubr.bf16.mxu0 0
        %4143 = vmatmul.mubr.bf16.gmra.mxu0 %v3699
        %v4144 = vpop.f32.mrf.mxu0
        %v4145 = vadd.f32 %v3956, %v4144
        %v4146 = vpop.f32.mrf.mxu0
        %v4147 = vpop.f32.mrf.mxu0
        %v4148 = vadd.f32 %v3959, %v4147
        %v4149 = vpop.f32.mrf.mxu0
        %4150 = vmatprep.mubr.bf16.mxu0 0
        %4151 = vmatmul.mubr.bf16.gmra.mxu0 %v3700
        %v4152 = vpop.f32.mrf.mxu0
        %v4153 = vadd.f32 %v3964, %v4152
        %v4154 = vpop.f32.mrf.mxu0
        %v4155 = vpop.f32.mrf.mxu0
        %v4156 = vadd.f32 %v3967, %v4155
        %v4157 = vpop.f32.mrf.mxu0
        %4158 = vmatprep.mubr.bf16.mxu0 0
        %4159 = vmatmul.mubr.bf16.gmra.mxu0 %v3701
        %v4160 = vpop.f32.mrf.mxu0
        %v4161 = vadd.f32 %v3972, %v4160
        %v4162 = vpop.f32.mrf.mxu0
        %v4163 = vpop.f32.mrf.mxu0
        %v4164 = vadd.f32 %v3975, %v4163
        %v4165 = vpop.f32.mrf.mxu0
        %4166 = vmatprep.mubr.bf16.mxu0 0
        %4167 = vmatmul.mubr.bf16.gmra.mxu0 %v3702
        %v4168 = vpop.f32.mrf.mxu0
        %v4169 = vadd.f32 %v3980, %v4168
        %v4170 = vpop.f32.mrf.mxu0
        %v4171 = vpop.f32.mrf.mxu0
        %v4172 = vadd.f32 %v3983, %v4171
        %v4173 = vpop.f32.mrf.mxu0
        %4174 = vmatprep.mubr.bf16.mxu0 0
        %4175 = vmatmul.mubr.bf16.gmra.mxu0 %v3703
        %v4176 = vpop.f32.mrf.mxu0
        %v4177 = vadd.f32 %v3988, %v4176
        %v4178 = vpop.f32.mrf.mxu0
        %v4179 = vpop.f32.mrf.mxu0
        %v4180 = vadd.f32 %v3991, %v4179
        %v4181 = vpop.f32.mrf.mxu0
        %4182 = vdwg.mxu0
        %v4183 = vld [vmem:[%s152 + $0x60] sm:$0xe]
        %v4184 = vld [vmem:[%s1212] sm:$0xf]
        %v4185 = vld [vmem:[%s1212 + $0x4] sm:$0xf]
        %v4186 = vld [vmem:[%s1212 + $0x8] sm:$0xf]
        %v4187 = vld [vmem:[%s1212 + $0xc] sm:$0xf]
        %v4188 = vld [vmem:[%s1212 + $0x10] sm:$0xf]
        %v4189 = vld [vmem:[%s1212 + $0x14] sm:$0xf]
        %v4190 = vld [vmem:[%s1212 + $0x18] sm:$0xf]
        %v4191 = vld [vmem:[%s1212 + $0x1c] sm:$0xf]
        %v4192 = vld [vmem:[%s1212 + $0x20] sm:$0xf]
        %v4193 = vld [vmem:[%s1212 + $0x24] sm:$0xf]
        %v4194 = vld [vmem:[%s1212 + $0x28] sm:$0xf]
        %v4195 = vld [vmem:[%s1212 + $0x2c] sm:$0xf]
        %v4196 = vld [vmem:[%s1212 + $0x30] sm:$0xf]
        %v4197 = vld [vmem:[%s1212 + $0x34] sm:$0xf]
        %v4198 = vld [vmem:[%s1212 + $0x38] sm:$0xf]
        %v4199 = vld [vmem:[%s1212 + $0x3c] sm:$0xf]
        %v4201 = vunpack.c.l.b16 %v4183
        %v4202 = vpack.c.b16 %v3668, %v4201
        %v4203 = vrot.slane %v4202, 1
        %v4204 = vrot.slane %v3693, 1
        %v4205 = vsel %vm1232, %v4203, %v4204
        %v4206 = vrot.slane %v3694, 1
        %v4207 = vsel %vm1232, %v4204, %v4206
        %v4208 = vrot.slane %v3695, 1
        %v4209 = vsel %vm1232, %v4206, %v4208
        %v4210 = vrot.slane %v3696, 1
        %v4211 = vsel %vm1232, %v4208, %v4210
        %v4212 = vrot.slane %v3697, 1
        %v4213 = vsel %vm1232, %v4210, %v4212
        %v4214 = vrot.slane %v3698, 1
        %v4215 = vsel %vm1232, %v4212, %v4214
        %v4216 = vrot.slane %v3699, 1
        %v4217 = vsel %vm1232, %v4214, %v4216
        %v4218 = vrot.slane %v3700, 1
        %v4219 = vsel %vm1232, %v4216, %v4218
        %v4220 = vrot.slane %v3701, 1
        %v4221 = vsel %vm1232, %v4218, %v4220
        %v4222 = vrot.slane %v3702, 1
        %v4223 = vsel %vm1232, %v4220, %v4222
        %v4224 = vrot.slane %v3703, 1
        %v4225 = vsel %vm1232, %v4222, %v4224
        %v4226 = vrot.slane %v3704, 1
        %v4227 = vsel %vm1232, %v4224, %v4226
        %v4256 = vunpack.c.l.b16 %v4184
        %v4257 = vunpack.c.l.b16 %v4185
        %v4258 = vunpack.c.l.b16 %v4186
        %v4259 = vunpack.c.l.b16 %v4187
        %v4260 = vunpack.c.l.b16 %v4188
        %v4261 = vunpack.c.l.b16 %v4189
        %v4262 = vunpack.c.l.b16 %v4190
        %v4263 = vunpack.c.l.b16 %v4191
        %v4264 = vunpack.c.l.b16 %v4192
        %v4265 = vunpack.c.l.b16 %v4193
        %v4266 = vunpack.c.l.b16 %v4194
        %v4267 = vunpack.c.l.b16 %v4195
        %v4268 = vunpack.c.l.b16 %v4196
        %v4269 = vunpack.c.l.b16 %v4197
        %v4270 = vunpack.c.l.b16 %v4198
        %v4271 = vunpack.c.l.b16 %v4199
        %v4272 = vpack.c.b16 %v4257, %v4256
        %v4273 = vpack.c.b16 %v4259, %v4258
        %v4274 = vpack.c.b16 %v4261, %v4260
        %v4275 = vpack.c.b16 %v4263, %v4262
        %v4276 = vpack.c.b16 %v4265, %v4264
        %v4277 = vpack.c.b16 %v4267, %v4266
        %v4278 = vpack.c.b16 %v4269, %v4268
        %v4279 = vpack.c.b16 %v4271, %v4270
        %4288 = vmatprep.subr.bf16.mxu0 0
        %4289 = vmatpush1.bf16.msra.mxu0 %v4279
        %4290 = vmatprep.subr.bf16.mxu0 0
        %4291 = vmatpush1.bf16.msra.mxu0 %v4278
        %4292 = vmatprep.subr.bf16.mxu0 0
        %4293 = vmatpush1.bf16.msra.mxu0 %v4277
        %4294 = vmatprep.subr.bf16.mxu0 0
        %4295 = vmatpush1.bf16.msra.mxu0 %v4276
        %4296 = vmatprep.subr.bf16.mxu0 0
        %4297 = vmatpush1.bf16.msra.mxu0 %v4275
        %4298 = vmatprep.subr.bf16.mxu0 0
        %4299 = vmatpush1.bf16.msra.mxu0 %v4274
        %4300 = vmatprep.subr.bf16.mxu0 0
        %4301 = vmatpush1.bf16.msra.mxu0 %v4273
        %4302 = vmatprep.subr.bf16.mxu0 0
        %4303 = vmatpush1.bf16.msra.mxu0 %v4272
        %4304 = vmatprep.subr.bf16.mxu0 0
        %4305 = vmatpush2.bf16.msra.mxu0 0
        %4306 = vmatprep.subr.bf16.mxu0 0
        %4307 = vmatpush2.bf16.msra.mxu0 0
        %4308 = vmatprep.subr.bf16.mxu0 0
        %4309 = vmatpush2.bf16.msra.mxu0 0
        %4310 = vmatprep.subr.bf16.mxu0 0
        %4311 = vmatpush2.bf16.msra.mxu0 0
        %4312 = vmatprep.subr.bf16.mxu0 0
        %4313 = vmatpush2.bf16.msra.mxu0 0
        %4314 = vmatprep.subr.bf16.mxu0 0
        %4315 = vmatpush2.bf16.msra.mxu0 0
        %4316 = vmatprep.subr.bf16.mxu0 0
        %4317 = vmatpush2.bf16.msra.mxu0 0
        %4318 = vmatprep.subr.bf16.mxu0 0
        %4319 = vmatpush2.bf16.msra.mxu0 0
        %4320 = vmatprep.mubr.bf16.mxu0 0
        %4321 = vmatmul.mubr.bf16.gmra.mxu0 %v4205
        %v4322 = vpop.f32.mrf.mxu0
        %v4323 = vadd.f32 0.0, %v4322
        %v4324 = vpop.f32.mrf.mxu0
        %v4325 = vpop.f32.mrf.mxu0
        %v4326 = vadd.f32 0.0, %v4325
        %v4327 = vpop.f32.mrf.mxu0
        %4328 = vmatprep.mubr.bf16.mxu0 0
        %4329 = vmatmul.mubr.bf16.gmra.mxu0 %v4207
        %v4330 = vpop.f32.mrf.mxu0
        %v4331 = vadd.f32 0.0, %v4330
        %v4332 = vpop.f32.mrf.mxu0
        %v4333 = vpop.f32.mrf.mxu0
        %v4334 = vadd.f32 0.0, %v4333
        %v4335 = vpop.f32.mrf.mxu0
        %4336 = vmatprep.mubr.bf16.mxu0 0
        %4337 = vmatmul.mubr.bf16.gmra.mxu0 %v4209
        %v4338 = vpop.f32.mrf.mxu0
        %v4339 = vadd.f32 0.0, %v4338
        %v4340 = vpop.f32.mrf.mxu0
        %v4341 = vpop.f32.mrf.mxu0
        %v4342 = vadd.f32 0.0, %v4341
        %v4343 = vpop.f32.mrf.mxu0
        %4344 = vmatprep.mubr.bf16.mxu0 0
        %4345 = vmatmul.mubr.bf16.gmra.mxu0 %v4211
        %v4346 = vpop.f32.mrf.mxu0
        %v4347 = vadd.f32 0.0, %v4346
        %v4348 = vpop.f32.mrf.mxu0
        %v4349 = vpop.f32.mrf.mxu0
        %v4350 = vadd.f32 0.0, %v4349
        %v4351 = vpop.f32.mrf.mxu0
        %4352 = vmatprep.mubr.bf16.mxu0 0
        %4353 = vmatmul.mubr.bf16.gmra.mxu0 %v4213
        %v4354 = vpop.f32.mrf.mxu0
        %v4355 = vadd.f32 0.0, %v4354
        %v4356 = vpop.f32.mrf.mxu0
        %v4357 = vpop.f32.mrf.mxu0
        %v4358 = vadd.f32 0.0, %v4357
        %v4359 = vpop.f32.mrf.mxu0
        %4360 = vmatprep.mubr.bf16.mxu0 0
        %4361 = vmatmul.mubr.bf16.gmra.mxu0 %v4215
        %v4362 = vpop.f32.mrf.mxu0
        %v4363 = vadd.f32 0.0, %v4362
        %v4364 = vpop.f32.mrf.mxu0
        %v4365 = vpop.f32.mrf.mxu0
        %v4366 = vadd.f32 0.0, %v4365
        %v4367 = vpop.f32.mrf.mxu0
        %4368 = vmatprep.mubr.bf16.mxu0 0
        %4369 = vmatmul.mubr.bf16.gmra.mxu0 %v4217
        %v4370 = vpop.f32.mrf.mxu0
        %v4371 = vadd.f32 0.0, %v4370
        %v4372 = vpop.f32.mrf.mxu0
        %v4373 = vpop.f32.mrf.mxu0
        %v4374 = vadd.f32 0.0, %v4373
        %v4375 = vpop.f32.mrf.mxu0
        %4376 = vmatprep.mubr.bf16.mxu0 0
        %4377 = vmatmul.mubr.bf16.gmra.mxu0 %v4219
        %v4378 = vpop.f32.mrf.mxu0
        %v4379 = vadd.f32 0.0, %v4378
        %v4380 = vpop.f32.mrf.mxu0
        %v4381 = vpop.f32.mrf.mxu0
        %v4382 = vadd.f32 0.0, %v4381
        %v4383 = vpop.f32.mrf.mxu0
        %4384 = vmatprep.mubr.bf16.mxu0 0
        %4385 = vmatmul.mubr.bf16.gmra.mxu0 %v4221
        %v4386 = vpop.f32.mrf.mxu0
        %v4387 = vadd.f32 0.0, %v4386
        %v4388 = vpop.f32.mrf.mxu0
        %v4389 = vpop.f32.mrf.mxu0
        %v4390 = vadd.f32 0.0, %v4389
        %v4391 = vpop.f32.mrf.mxu0
        %4392 = vmatprep.mubr.bf16.mxu0 0
        %4393 = vmatmul.mubr.bf16.gmra.mxu0 %v4223
        %v4394 = vpop.f32.mrf.mxu0
        %v4395 = vadd.f32 0.0, %v4394
        %v4396 = vpop.f32.mrf.mxu0
        %v4397 = vpop.f32.mrf.mxu0
        %v4398 = vadd.f32 0.0, %v4397
        %v4399 = vpop.f32.mrf.mxu0
        %4400 = vmatprep.mubr.bf16.mxu0 0
        %4401 = vmatmul.mubr.bf16.gmra.mxu0 %v4225
        %v4402 = vpop.f32.mrf.mxu0
        %v4403 = vadd.f32 0.0, %v4402
        %v4404 = vpop.f32.mrf.mxu0
        %v4405 = vpop.f32.mrf.mxu0
        %v4406 = vadd.f32 0.0, %v4405
        %v4407 = vpop.f32.mrf.mxu0
        %4408 = vmatprep.mubr.bf16.mxu0 0
        %4409 = vmatmul.mubr.bf16.gmra.mxu0 %v4227
        %v4410 = vpop.f32.mrf.mxu0
        %v4411 = vadd.f32 0.0, %v4410
        %v4412 = vpop.f32.mrf.mxu0
        %v4413 = vpop.f32.mrf.mxu0
        %v4414 = vadd.f32 0.0, %v4413
        %v4415 = vpop.f32.mrf.mxu0
        %4416 = vdwg.mxu0
        %v4417 = vadd.f32 %v4089, %v4323
        %v4418 = vadd.f32 %v4092, %v4326
        %v4419 = vadd.f32 %v4097, %v4331
        %v4420 = vadd.f32 %v4100, %v4334
        %v4421 = vadd.f32 %v4105, %v4339
        %v4422 = vadd.f32 %v4108, %v4342
        %v4423 = vadd.f32 %v4113, %v4347
        %v4424 = vadd.f32 %v4116, %v4350
        %v4425 = vadd.f32 %v4121, %v4355
        %v4426 = vadd.f32 %v4124, %v4358
        %v4427 = vadd.f32 %v4129, %v4363
        %v4428 = vadd.f32 %v4132, %v4366
        %v4429 = vadd.f32 %v4137, %v4371
        %v4430 = vadd.f32 %v4140, %v4374
        %v4431 = vadd.f32 %v4145, %v4379
        %v4432 = vadd.f32 %v4148, %v4382
        %v4433 = vadd.f32 %v4153, %v4387
        %v4434 = vadd.f32 %v4156, %v4390
        %v4435 = vadd.f32 %v4161, %v4395
        %v4436 = vadd.f32 %v4164, %v4398
        %v4437 = vadd.f32 %v4169, %v4403
        %v4438 = vadd.f32 %v4172, %v4406
        %v4439 = vadd.f32 %v4177, %v4411
        %v4440 = vadd.f32 %v4180, %v4414
        %v4441 = vld [vmem:[%s152 + $0x6c] sm:$0xf]
        %v4442 = vld [vmem:[%s152 + $0x70] sm:$0xf]
        %v4443 = vld [vmem:[%s152 + $0x74] sm:$0xf]
        %v4444 = vld [vmem:[%s152 + $0x78] sm:$0xf]
        %v4445 = vld [vmem:[%s152 + $0x7c] sm:$0xf]
        %v4446 = vld [vmem:[%s152 + $0x80] sm:$0xf]
        %v4447 = vld [vmem:[%s152 + $0x84] sm:$0xf]
        %v4448 = vld [vmem:[%s152 + $0x88] sm:$0xf]
        %v4449 = vld [vmem:[%s152 + $0x8c] sm:$0xf]
        %v4450 = vld [vmem:[%s152 + $0x90] sm:$0xf]
        %v4451 = vld [vmem:[%s152 + $0x94] sm:$0xf]
        %v4452 = vld [vmem:[%s152 + $0x98] sm:$0xf]
        %v4453 = vld [vmem:[%s152 + $0x9c] sm:$0xf]
        %v4454 = vld [vmem:[%s152 + $0xa0] sm:$0xf]
        %v4455 = vld [vmem:[%s152 + $0xa4] sm:$0xf]
        %v4456 = vld [vmem:[%s152 + $0xa8] sm:$0xf]
        %v4457 = vld [vmem:[%s152 + $0xac] sm:$0xf]
        %v4458 = vld [vmem:[%s152 + $0xb0] sm:$0xf]
        %v4459 = vld [vmem:[%s152 + $0xb4] sm:$0xf]
        %v4460 = vld [vmem:[%s152 + $0xb8] sm:$0xf]
        %v4461 = vld [vmem:[%s152 + $0xbc] sm:$0xf]
        %v4462 = vld [vmem:[%s152 + $0xc0] sm:$0xf]
        %v4463 = vld [vmem:[%s152 + $0xc4] sm:$0xf]
        %v4464 = vld [vmem:[%s152 + $0xc8] sm:$0xf]
        %v4465 = vld [vmem:[%s1495] sm:$0xf]
        %v4466 = vld [vmem:[%s1495 + $0x4] sm:$0xf]
        %v4467 = vld [vmem:[%s1495 + $0x8] sm:$0xf]
        %v4468 = vld [vmem:[%s1495 + $0xc] sm:$0xf]
        %v4469 = vld [vmem:[%s1495 + $0x10] sm:$0xf]
        %v4470 = vld [vmem:[%s1495 + $0x14] sm:$0xf]
        %v4471 = vld [vmem:[%s1495 + $0x18] sm:$0xf]
        %v4472 = vld [vmem:[%s1495 + $0x1c] sm:$0xf]
        %v4473 = vld [vmem:[%s1495 + $0x20] sm:$0xf]
        %v4474 = vld [vmem:[%s1495 + $0x24] sm:$0xf]
        %v4475 = vld [vmem:[%s1495 + $0x28] sm:$0xf]
        %v4476 = vld [vmem:[%s1495 + $0x2c] sm:$0xf]
        %v4477 = vld [vmem:[%s1495 + $0x30] sm:$0xf]
        %v4478 = vld [vmem:[%s1495 + $0x34] sm:$0xf]
        %v4479 = vld [vmem:[%s1495 + $0x38] sm:$0xf]
        %v4480 = vld [vmem:[%s1495 + $0x3c] sm:$0xf]
        %v4505 = vunpack.c.l.b16 %v4441
        %v4506 = vunpack.c.l.b16 %v4442
        %v4507 = vunpack.c.l.b16 %v4443
        %v4508 = vunpack.c.l.b16 %v4444
        %v4509 = vunpack.c.l.b16 %v4445
        %v4510 = vunpack.c.l.b16 %v4446
        %v4511 = vunpack.c.l.b16 %v4447
        %v4512 = vunpack.c.l.b16 %v4448
        %v4513 = vunpack.c.l.b16 %v4449
        %v4514 = vunpack.c.l.b16 %v4450
        %v4515 = vunpack.c.l.b16 %v4451
        %v4516 = vunpack.c.l.b16 %v4452
        %v4517 = vunpack.c.l.b16 %v4453
        %v4518 = vunpack.c.l.b16 %v4454
        %v4519 = vunpack.c.l.b16 %v4455
        %v4520 = vunpack.c.l.b16 %v4456
        %v4521 = vunpack.c.l.b16 %v4457
        %v4522 = vunpack.c.l.b16 %v4458
        %v4523 = vunpack.c.l.b16 %v4459
        %v4524 = vunpack.c.l.b16 %v4460
        %v4525 = vunpack.c.l.b16 %v4461
        %v4526 = vunpack.c.l.b16 %v4462
        %v4527 = vunpack.c.l.b16 %v4463
        %v4528 = vunpack.c.l.b16 %v4464
        %v4529 = vpack.c.b16 %v4506, %v4505
        %v4530 = vpack.c.b16 %v4508, %v4507
        %v4531 = vpack.c.b16 %v4510, %v4509
        %v4532 = vpack.c.b16 %v4512, %v4511
        %v4533 = vpack.c.b16 %v4514, %v4513
        %v4534 = vpack.c.b16 %v4516, %v4515
        %v4535 = vpack.c.b16 %v4518, %v4517
        %v4536 = vpack.c.b16 %v4520, %v4519
        %v4537 = vpack.c.b16 %v4522, %v4521
        %v4538 = vpack.c.b16 %v4524, %v4523
        %v4539 = vpack.c.b16 %v4526, %v4525
        %v4540 = vpack.c.b16 %v4528, %v4527
        %v4569 = vunpack.c.l.b16 %v4465
        %v4570 = vunpack.c.l.b16 %v4466
        %v4571 = vunpack.c.l.b16 %v4467
        %v4572 = vunpack.c.l.b16 %v4468
        %v4573 = vunpack.c.l.b16 %v4469
        %v4574 = vunpack.c.l.b16 %v4470
        %v4575 = vunpack.c.l.b16 %v4471
        %v4576 = vunpack.c.l.b16 %v4472
        %v4577 = vunpack.c.l.b16 %v4473
        %v4578 = vunpack.c.l.b16 %v4474
        %v4579 = vunpack.c.l.b16 %v4475
        %v4580 = vunpack.c.l.b16 %v4476
        %v4581 = vunpack.c.l.b16 %v4477
        %v4582 = vunpack.c.l.b16 %v4478
        %v4583 = vunpack.c.l.b16 %v4479
        %v4584 = vunpack.c.l.b16 %v4480
        %v4585 = vpack.c.b16 %v4570, %v4569
        %v4586 = vpack.c.b16 %v4572, %v4571
        %v4587 = vpack.c.b16 %v4574, %v4573
        %v4588 = vpack.c.b16 %v4576, %v4575
        %v4589 = vpack.c.b16 %v4578, %v4577
        %v4590 = vpack.c.b16 %v4580, %v4579
        %v4591 = vpack.c.b16 %v4582, %v4581
        %v4592 = vpack.c.b16 %v4584, %v4583
        %4601 = vmatprep.subr.bf16.mxu0 0
        %4602 = vmatpush1.bf16.msra.mxu0 %v4592
        %4603 = vmatprep.subr.bf16.mxu0 0
        %4604 = vmatpush1.bf16.msra.mxu0 %v4591
        %4605 = vmatprep.subr.bf16.mxu0 0
        %4606 = vmatpush1.bf16.msra.mxu0 %v4590
        %4607 = vmatprep.subr.bf16.mxu0 0
        %4608 = vmatpush1.bf16.msra.mxu0 %v4589
        %4609 = vmatprep.subr.bf16.mxu0 0
        %4610 = vmatpush1.bf16.msra.mxu0 %v4588
        %4611 = vmatprep.subr.bf16.mxu0 0
        %4612 = vmatpush1.bf16.msra.mxu0 %v4587
        %4613 = vmatprep.subr.bf16.mxu0 0
        %4614 = vmatpush1.bf16.msra.mxu0 %v4586
        %4615 = vmatprep.subr.bf16.mxu0 0
        %4616 = vmatpush1.bf16.msra.mxu0 %v4585
        %4617 = vmatprep.subr.bf16.mxu0 0
        %4618 = vmatpush2.bf16.msra.mxu0 0
        %4619 = vmatprep.subr.bf16.mxu0 0
        %4620 = vmatpush2.bf16.msra.mxu0 0
        %4621 = vmatprep.subr.bf16.mxu0 0
        %4622 = vmatpush2.bf16.msra.mxu0 0
        %4623 = vmatprep.subr.bf16.mxu0 0
        %4624 = vmatpush2.bf16.msra.mxu0 0
        %4625 = vmatprep.subr.bf16.mxu0 0
        %4626 = vmatpush2.bf16.msra.mxu0 0
        %4627 = vmatprep.subr.bf16.mxu0 0
        %4628 = vmatpush2.bf16.msra.mxu0 0
        %4629 = vmatprep.subr.bf16.mxu0 0
        %4630 = vmatpush2.bf16.msra.mxu0 0
        %4631 = vmatprep.subr.bf16.mxu0 0
        %4632 = vmatpush2.bf16.msra.mxu0 0
        %4633 = vmatprep.mubr.bf16.mxu0 0
        %4634 = vmatmul.mubr.bf16.gmra.mxu0 %v4529
        %v4635 = vpop.f32.mrf.mxu0
        %v4636 = vadd.f32 0.0, %v4635
        %v4637 = vpop.f32.mrf.mxu0
        %v4638 = vpop.f32.mrf.mxu0
        %v4639 = vadd.f32 0.0, %v4638
        %v4640 = vpop.f32.mrf.mxu0
        %4641 = vmatprep.mubr.bf16.mxu0 0
        %4642 = vmatmul.mubr.bf16.gmra.mxu0 %v4530
        %v4643 = vpop.f32.mrf.mxu0
        %v4644 = vadd.f32 0.0, %v4643
        %v4645 = vpop.f32.mrf.mxu0
        %v4646 = vpop.f32.mrf.mxu0
        %v4647 = vadd.f32 0.0, %v4646
        %v4648 = vpop.f32.mrf.mxu0
        %4649 = vmatprep.mubr.bf16.mxu0 0
        %4650 = vmatmul.mubr.bf16.gmra.mxu0 %v4531
        %v4651 = vpop.f32.mrf.mxu0
        %v4652 = vadd.f32 0.0, %v4651
        %v4653 = vpop.f32.mrf.mxu0
        %v4654 = vpop.f32.mrf.mxu0
        %v4655 = vadd.f32 0.0, %v4654
        %v4656 = vpop.f32.mrf.mxu0
        %4657 = vmatprep.mubr.bf16.mxu0 0
        %4658 = vmatmul.mubr.bf16.gmra.mxu0 %v4532
        %v4659 = vpop.f32.mrf.mxu0
        %v4660 = vadd.f32 0.0, %v4659
        %v4661 = vpop.f32.mrf.mxu0
        %v4662 = vpop.f32.mrf.mxu0
        %v4663 = vadd.f32 0.0, %v4662
        %v4664 = vpop.f32.mrf.mxu0
        %4665 = vmatprep.mubr.bf16.mxu0 0
        %4666 = vmatmul.mubr.bf16.gmra.mxu0 %v4533
        %v4667 = vpop.f32.mrf.mxu0
        %v4668 = vadd.f32 0.0, %v4667
        %v4669 = vpop.f32.mrf.mxu0
        %v4670 = vpop.f32.mrf.mxu0
        %v4671 = vadd.f32 0.0, %v4670
        %v4672 = vpop.f32.mrf.mxu0
        %4673 = vmatprep.mubr.bf16.mxu0 0
        %4674 = vmatmul.mubr.bf16.gmra.mxu0 %v4534
        %v4675 = vpop.f32.mrf.mxu0
        %v4676 = vadd.f32 0.0, %v4675
        %v4677 = vpop.f32.mrf.mxu0
        %v4678 = vpop.f32.mrf.mxu0
        %v4679 = vadd.f32 0.0, %v4678
        %v4680 = vpop.f32.mrf.mxu0
        %4681 = vmatprep.mubr.bf16.mxu0 0
        %4682 = vmatmul.mubr.bf16.gmra.mxu0 %v4535
        %v4683 = vpop.f32.mrf.mxu0
        %v4684 = vadd.f32 0.0, %v4683
        %v4685 = vpop.f32.mrf.mxu0
        %v4686 = vpop.f32.mrf.mxu0
        %v4687 = vadd.f32 0.0, %v4686
        %v4688 = vpop.f32.mrf.mxu0
        %4689 = vmatprep.mubr.bf16.mxu0 0
        %4690 = vmatmul.mubr.bf16.gmra.mxu0 %v4536
        %v4691 = vpop.f32.mrf.mxu0
        %v4692 = vadd.f32 0.0, %v4691
        %v4693 = vpop.f32.mrf.mxu0
        %v4694 = vpop.f32.mrf.mxu0
        %v4695 = vadd.f32 0.0, %v4694
        %v4696 = vpop.f32.mrf.mxu0
        %4697 = vmatprep.mubr.bf16.mxu0 0
        %4698 = vmatmul.mubr.bf16.gmra.mxu0 %v4537
        %v4699 = vpop.f32.mrf.mxu0
        %v4700 = vadd.f32 0.0, %v4699
        %v4701 = vpop.f32.mrf.mxu0
        %v4702 = vpop.f32.mrf.mxu0
        %v4703 = vadd.f32 0.0, %v4702
        %v4704 = vpop.f32.mrf.mxu0
        %4705 = vmatprep.mubr.bf16.mxu0 0
        %4706 = vmatmul.mubr.bf16.gmra.mxu0 %v4538
        %v4707 = vpop.f32.mrf.mxu0
        %v4708 = vadd.f32 0.0, %v4707
        %v4709 = vpop.f32.mrf.mxu0
        %v4710 = vpop.f32.mrf.mxu0
        %v4711 = vadd.f32 0.0, %v4710
        %v4712 = vpop.f32.mrf.mxu0
        %4713 = vmatprep.mubr.bf16.mxu0 0
        %4714 = vmatmul.mubr.bf16.gmra.mxu0 %v4539
        %v4715 = vpop.f32.mrf.mxu0
        %v4716 = vadd.f32 0.0, %v4715
        %v4717 = vpop.f32.mrf.mxu0
        %v4718 = vpop.f32.mrf.mxu0
        %v4719 = vadd.f32 0.0, %v4718
        %v4720 = vpop.f32.mrf.mxu0
        %4721 = vmatprep.mubr.bf16.mxu0 0
        %4722 = vmatmul.mubr.bf16.gmra.mxu0 %v4540
        %v4723 = vpop.f32.mrf.mxu0
        %v4724 = vadd.f32 0.0, %v4723
        %v4725 = vpop.f32.mrf.mxu0
        %v4726 = vpop.f32.mrf.mxu0
        %v4727 = vadd.f32 0.0, %v4726
        %v4728 = vpop.f32.mrf.mxu0
        %4729 = vdwg.mxu0
        %v4730 = vadd.f32 %v4417, %v4636
        %v4731 = vadd.f32 %v4418, %v4639
        %v4732 = vadd.f32 %v4419, %v4644
        %v4733 = vadd.f32 %v4420, %v4647
        %v4734 = vadd.f32 %v4421, %v4652
        %v4735 = vadd.f32 %v4422, %v4655
        %v4736 = vadd.f32 %v4423, %v4660
        %v4737 = vadd.f32 %v4424, %v4663
        %v4738 = vadd.f32 %v4425, %v4668
        %v4739 = vadd.f32 %v4426, %v4671
        %v4740 = vadd.f32 %v4427, %v4676
        %v4741 = vadd.f32 %v4428, %v4679
        %v4742 = vadd.f32 %v4429, %v4684
        %v4743 = vadd.f32 %v4430, %v4687
        %v4744 = vadd.f32 %v4431, %v4692
        %v4745 = vadd.f32 %v4432, %v4695
        %v4746 = vadd.f32 %v4433, %v4700
        %v4747 = vadd.f32 %v4434, %v4703
        %v4748 = vadd.f32 %v4435, %v4708
        %v4749 = vadd.f32 %v4436, %v4711
        %v4750 = vadd.f32 %v4437, %v4716
        %v4751 = vadd.f32 %v4438, %v4719
        %v4752 = vadd.f32 %v4439, %v4724
        %v4753 = vadd.f32 %v4440, %v4727
        %v4754 = vld [vmem:[%s152 + $0x6c] sm:$0xf]
        %v4755 = vld [vmem:[%s152 + $0x70] sm:$0xf]
        %v4756 = vld [vmem:[%s152 + $0x74] sm:$0xf]
        %v4757 = vld [vmem:[%s152 + $0x78] sm:$0xf]
        %v4758 = vld [vmem:[%s152 + $0x7c] sm:$0xf]
        %v4759 = vld [vmem:[%s152 + $0x80] sm:$0xf]
        %v4760 = vld [vmem:[%s152 + $0x84] sm:$0xf]
        %v4761 = vld [vmem:[%s152 + $0x88] sm:$0xf]
        %v4762 = vld [vmem:[%s152 + $0x8c] sm:$0xf]
        %v4763 = vld [vmem:[%s152 + $0x90] sm:$0xf]
        %v4764 = vld [vmem:[%s152 + $0x94] sm:$0xf]
        %v4765 = vld [vmem:[%s152 + $0x98] sm:$0xf]
        %v4766 = vld [vmem:[%s152 + $0x9c] sm:$0xf]
        %v4767 = vld [vmem:[%s152 + $0xa0] sm:$0xf]
        %v4768 = vld [vmem:[%s152 + $0xa4] sm:$0xf]
        %v4769 = vld [vmem:[%s152 + $0xa8] sm:$0xf]
        %v4770 = vld [vmem:[%s152 + $0xac] sm:$0xf]
        %v4771 = vld [vmem:[%s152 + $0xb0] sm:$0xf]
        %v4772 = vld [vmem:[%s152 + $0xb4] sm:$0xf]
        %v4773 = vld [vmem:[%s152 + $0xb8] sm:$0xf]
        %v4774 = vld [vmem:[%s152 + $0xbc] sm:$0xf]
        %v4775 = vld [vmem:[%s152 + $0xc0] sm:$0xf]
        %v4776 = vld [vmem:[%s152 + $0xc4] sm:$0xf]
        %v4777 = vld [vmem:[%s152 + $0xc8] sm:$0xf]
        %v4778 = vld [vmem:[%s152 + $0xcc] sm:$0x1]
        %v4779 = vld [vmem:[%s1810] sm:$0xf]
        %v4780 = vld [vmem:[%s1810 + $0x4] sm:$0xf]
        %v4781 = vld [vmem:[%s1810 + $0x8] sm:$0xf]
        %v4782 = vld [vmem:[%s1810 + $0xc] sm:$0xf]
        %v4783 = vld [vmem:[%s1810 + $0x10] sm:$0xf]
        %v4784 = vld [vmem:[%s1810 + $0x14] sm:$0xf]
        %v4785 = vld [vmem:[%s1810 + $0x18] sm:$0xf]
        %v4786 = vld [vmem:[%s1810 + $0x1c] sm:$0xf]
        %v4787 = vld [vmem:[%s1810 + $0x20] sm:$0xf]
        %v4788 = vld [vmem:[%s1810 + $0x24] sm:$0xf]
        %v4789 = vld [vmem:[%s1810 + $0x28] sm:$0xf]
        %v4790 = vld [vmem:[%s1810 + $0x2c] sm:$0xf]
        %v4791 = vld [vmem:[%s1810 + $0x30] sm:$0xf]
        %v4792 = vld [vmem:[%s1810 + $0x34] sm:$0xf]
        %v4793 = vld [vmem:[%s1810 + $0x38] sm:$0xf]
        %v4794 = vld [vmem:[%s1810 + $0x3c] sm:$0xf]
        %v4820 = vunpack.c.l.b16 %v4754
        %v4821 = vunpack.c.l.b16 %v4755
        %v4822 = vunpack.c.l.b16 %v4756
        %v4823 = vunpack.c.l.b16 %v4757
        %v4824 = vunpack.c.l.b16 %v4758
        %v4825 = vunpack.c.l.b16 %v4759
        %v4826 = vunpack.c.l.b16 %v4760
        %v4827 = vunpack.c.l.b16 %v4761
        %v4828 = vunpack.c.l.b16 %v4762
        %v4829 = vunpack.c.l.b16 %v4763
        %v4830 = vunpack.c.l.b16 %v4764
        %v4831 = vunpack.c.l.b16 %v4765
        %v4832 = vunpack.c.l.b16 %v4766
        %v4833 = vunpack.c.l.b16 %v4767
        %v4834 = vunpack.c.l.b16 %v4768
        %v4835 = vunpack.c.l.b16 %v4769
        %v4836 = vunpack.c.l.b16 %v4770
        %v4837 = vunpack.c.l.b16 %v4771
        %v4838 = vunpack.c.l.b16 %v4772
        %v4839 = vunpack.c.l.b16 %v4773
        %v4840 = vunpack.c.l.b16 %v4774
        %v4841 = vunpack.c.l.b16 %v4775
        %v4842 = vunpack.c.l.b16 %v4776
        %v4843 = vunpack.c.l.b16 %v4777
        %v4844 = vunpack.c.l.b16 %v4778
        %v4845 = vpack.c.b16 %v4821, %v4820
        %v4846 = vpack.c.b16 %v4823, %v4822
        %v4847 = vpack.c.b16 %v4825, %v4824
        %v4848 = vpack.c.b16 %v4827, %v4826
        %v4849 = vpack.c.b16 %v4829, %v4828
        %v4850 = vpack.c.b16 %v4831, %v4830
        %v4851 = vpack.c.b16 %v4833, %v4832
        %v4852 = vpack.c.b16 %v4835, %v4834
        %v4853 = vpack.c.b16 %v4837, %v4836
        %v4854 = vpack.c.b16 %v4839, %v4838
        %v4855 = vpack.c.b16 %v4841, %v4840
        %v4856 = vpack.c.b16 %v4843, %v4842
        %v4857 = vpack.c.b16 %v4844, %v4844
        %v4859 = vshrl.u32 %v4845, 16
        %v4861 = vshll.u32 %v4845, 16
        %v4863 = vrot.slane %v4861, 1
        %v4864 = vor.u32 %v4859, %v4863
        %v4866 = vshll.u32 %v4846, 16
        %v4868 = vrot.slane %v4866, 1
        %v4869 = vsel %vm732, %v4864, %v4868
        %v4870 = vshrl.u32 %v4846, 16
        %v4872 = vor.u32 %v4870, %v4868
        %v4874 = vshll.u32 %v4847, 16
        %v4876 = vrot.slane %v4874, 1
        %v4877 = vsel %vm732, %v4872, %v4876
        %v4878 = vshrl.u32 %v4847, 16
        %v4880 = vor.u32 %v4878, %v4876
        %v4882 = vshll.u32 %v4848, 16
        %v4884 = vrot.slane %v4882, 1
        %v4885 = vsel %vm732, %v4880, %v4884
        %v4886 = vshrl.u32 %v4848, 16
        %v4888 = vor.u32 %v4886, %v4884
        %v4890 = vshll.u32 %v4849, 16
        %v4892 = vrot.slane %v4890, 1
        %v4893 = vsel %vm732, %v4888, %v4892
        %v4894 = vshrl.u32 %v4849, 16
        %v4896 = vor.u32 %v4894, %v4892
        %v4898 = vshll.u32 %v4850, 16
        %v4900 = vrot.slane %v4898, 1
        %v4901 = vsel %vm732, %v4896, %v4900
        %v4902 = vshrl.u32 %v4850, 16
        %v4904 = vor.u32 %v4902, %v4900
        %v4906 = vshll.u32 %v4851, 16
        %v4908 = vrot.slane %v4906, 1
        %v4909 = vsel %vm732, %v4904, %v4908
        %v4910 = vshrl.u32 %v4851, 16
        %v4912 = vor.u32 %v4910, %v4908
        %v4914 = vshll.u32 %v4852, 16
        %v4916 = vrot.slane %v4914, 1
        %v4917 = vsel %vm732, %v4912, %v4916
        %v4918 = vshrl.u32 %v4852, 16
        %v4920 = vor.u32 %v4918, %v4916
        %v4922 = vshll.u32 %v4853, 16
        %v4924 = vrot.slane %v4922, 1
        %v4925 = vsel %vm732, %v4920, %v4924
        %v4926 = vshrl.u32 %v4853, 16
        %v4928 = vor.u32 %v4926, %v4924
        %v4930 = vshll.u32 %v4854, 16
        %v4932 = vrot.slane %v4930, 1
        %v4933 = vsel %vm732, %v4928, %v4932
        %v4934 = vshrl.u32 %v4854, 16
        %v4936 = vor.u32 %v4934, %v4932
        %v4938 = vshll.u32 %v4855, 16
        %v4940 = vrot.slane %v4938, 1
        %v4941 = vsel %vm732, %v4936, %v4940
        %v4942 = vshrl.u32 %v4855, 16
        %v4944 = vor.u32 %v4942, %v4940
        %v4946 = vshll.u32 %v4856, 16
        %v4948 = vrot.slane %v4946, 1
        %v4949 = vsel %vm732, %v4944, %v4948
        %v4950 = vshrl.u32 %v4856, 16
        %v4952 = vor.u32 %v4950, %v4948
        %v4954 = vshll.u32 %v4857, 16
        %v4956 = vrot.slane %v4954, 1
        %v4957 = vsel %vm732, %v4952, %v4956
        %v4986 = vunpack.c.l.b16 %v4779
        %v4987 = vunpack.c.l.b16 %v4780
        %v4988 = vunpack.c.l.b16 %v4781
        %v4989 = vunpack.c.l.b16 %v4782
        %v4990 = vunpack.c.l.b16 %v4783
        %v4991 = vunpack.c.l.b16 %v4784
        %v4992 = vunpack.c.l.b16 %v4785
        %v4993 = vunpack.c.l.b16 %v4786
        %v4994 = vunpack.c.l.b16 %v4787
        %v4995 = vunpack.c.l.b16 %v4788
        %v4996 = vunpack.c.l.b16 %v4789
        %v4997 = vunpack.c.l.b16 %v4790
        %v4998 = vunpack.c.l.b16 %v4791
        %v4999 = vunpack.c.l.b16 %v4792
        %v5000 = vunpack.c.l.b16 %v4793
        %v5001 = vunpack.c.l.b16 %v4794
        %v5002 = vpack.c.b16 %v4987, %v4986
        %v5003 = vpack.c.b16 %v4989, %v4988
        %v5004 = vpack.c.b16 %v4991, %v4990
        %v5005 = vpack.c.b16 %v4993, %v4992
        %v5006 = vpack.c.b16 %v4995, %v4994
        %v5007 = vpack.c.b16 %v4997, %v4996
        %v5008 = vpack.c.b16 %v4999, %v4998
        %v5009 = vpack.c.b16 %v5001, %v5000
        %5018 = vmatprep.subr.bf16.mxu0 0
        %5019 = vmatpush1.bf16.msra.mxu0 %v5009
        %5020 = vmatprep.subr.bf16.mxu0 0
        %5021 = vmatpush1.bf16.msra.mxu0 %v5008
        %5022 = vmatprep.subr.bf16.mxu0 0
        %5023 = vmatpush1.bf16.msra.mxu0 %v5007
        %5024 = vmatprep.subr.bf16.mxu0 0
        %5025 = vmatpush1.bf16.msra.mxu0 %v5006
        %5026 = vmatprep.subr.bf16.mxu0 0
        %5027 = vmatpush1.bf16.msra.mxu0 %v5005
        %5028 = vmatprep.subr.bf16.mxu0 0
        %5029 = vmatpush1.bf16.msra.mxu0 %v5004
        %5030 = vmatprep.subr.bf16.mxu0 0
        %5031 = vmatpush1.bf16.msra.mxu0 %v5003
        %5032 = vmatprep.subr.bf16.mxu0 0
        %5033 = vmatpush1.bf16.msra.mxu0 %v5002
        %5034 = vmatprep.subr.bf16.mxu0 0
        %5035 = vmatpush2.bf16.msra.mxu0 0
        %5036 = vmatprep.subr.bf16.mxu0 0
        %5037 = vmatpush2.bf16.msra.mxu0 0
        %5038 = vmatprep.subr.bf16.mxu0 0
        %5039 = vmatpush2.bf16.msra.mxu0 0
        %5040 = vmatprep.subr.bf16.mxu0 0
        %5041 = vmatpush2.bf16.msra.mxu0 0
        %5042 = vmatprep.subr.bf16.mxu0 0
        %5043 = vmatpush2.bf16.msra.mxu0 0
        %5044 = vmatprep.subr.bf16.mxu0 0
        %5045 = vmatpush2.bf16.msra.mxu0 0
        %5046 = vmatprep.subr.bf16.mxu0 0
        %5047 = vmatpush2.bf16.msra.mxu0 0
        %5048 = vmatprep.subr.bf16.mxu0 0
        %5049 = vmatpush2.bf16.msra.mxu0 0
        %5050 = vmatprep.mubr.bf16.mxu0 0
        %5051 = vmatmul.mubr.bf16.gmra.mxu0 %v4869
        %v5052 = vpop.f32.mrf.mxu0
        %v5053 = vadd.f32 0.0, %v5052
        %v5054 = vpop.f32.mrf.mxu0
        %v5055 = vpop.f32.mrf.mxu0
        %v5056 = vadd.f32 0.0, %v5055
        %v5057 = vpop.f32.mrf.mxu0
        %5058 = vmatprep.mubr.bf16.mxu0 0
        %5059 = vmatmul.mubr.bf16.gmra.mxu0 %v4877
        %v5060 = vpop.f32.mrf.mxu0
        %v5061 = vadd.f32 0.0, %v5060
        %v5062 = vpop.f32.mrf.mxu0
        %v5063 = vpop.f32.mrf.mxu0
        %v5064 = vadd.f32 0.0, %v5063
        %v5065 = vpop.f32.mrf.mxu0
        %5066 = vmatprep.mubr.bf16.mxu0 0
        %5067 = vmatmul.mubr.bf16.gmra.mxu0 %v4885
        %v5068 = vpop.f32.mrf.mxu0
        %v5069 = vadd.f32 0.0, %v5068
        %v5070 = vpop.f32.mrf.mxu0
        %v5071 = vpop.f32.mrf.mxu0
        %v5072 = vadd.f32 0.0, %v5071
        %v5073 = vpop.f32.mrf.mxu0
        %5074 = vmatprep.mubr.bf16.mxu0 0
        %5075 = vmatmul.mubr.bf16.gmra.mxu0 %v4893
        %v5076 = vpop.f32.mrf.mxu0
        %v5077 = vadd.f32 0.0, %v5076
        %v5078 = vpop.f32.mrf.mxu0
        %v5079 = vpop.f32.mrf.mxu0
        %v5080 = vadd.f32 0.0, %v5079
        %v5081 = vpop.f32.mrf.mxu0
        %5082 = vmatprep.mubr.bf16.mxu0 0
        %5083 = vmatmul.mubr.bf16.gmra.mxu0 %v4901
        %v5084 = vpop.f32.mrf.mxu0
        %v5085 = vadd.f32 0.0, %v5084
        %v5086 = vpop.f32.mrf.mxu0
        %v5087 = vpop.f32.mrf.mxu0
        %v5088 = vadd.f32 0.0, %v5087
        %v5089 = vpop.f32.mrf.mxu0
        %5090 = vmatprep.mubr.bf16.mxu0 0
        %5091 = vmatmul.mubr.bf16.gmra.mxu0 %v4909
        %v5092 = vpop.f32.mrf.mxu0
        %v5093 = vadd.f32 0.0, %v5092
        %v5094 = vpop.f32.mrf.mxu0
        %v5095 = vpop.f32.mrf.mxu0
        %v5096 = vadd.f32 0.0, %v5095
        %v5097 = vpop.f32.mrf.mxu0
        %5098 = vmatprep.mubr.bf16.mxu0 0
        %5099 = vmatmul.mubr.bf16.gmra.mxu0 %v4917
        %v5100 = vpop.f32.mrf.mxu0
        %v5101 = vadd.f32 0.0, %v5100
        %v5102 = vpop.f32.mrf.mxu0
        %v5103 = vpop.f32.mrf.mxu0
        %v5104 = vadd.f32 0.0, %v5103
        %v5105 = vpop.f32.mrf.mxu0
        %5106 = vmatprep.mubr.bf16.mxu0 0
        %5107 = vmatmul.mubr.bf16.gmra.mxu0 %v4925
        %v5108 = vpop.f32.mrf.mxu0
        %v5109 = vadd.f32 0.0, %v5108
        %v5110 = vpop.f32.mrf.mxu0
        %v5111 = vpop.f32.mrf.mxu0
        %v5112 = vadd.f32 0.0, %v5111
        %v5113 = vpop.f32.mrf.mxu0
        %5114 = vmatprep.mubr.bf16.mxu0 0
        %5115 = vmatmul.mubr.bf16.gmra.mxu0 %v4933
        %v5116 = vpop.f32.mrf.mxu0
        %v5117 = vadd.f32 0.0, %v5116
        %v5118 = vpop.f32.mrf.mxu0
        %v5119 = vpop.f32.mrf.mxu0
        %v5120 = vadd.f32 0.0, %v5119
        %v5121 = vpop.f32.mrf.mxu0
        %5122 = vmatprep.mubr.bf16.mxu0 0
        %5123 = vmatmul.mubr.bf16.gmra.mxu0 %v4941
        %v5124 = vpop.f32.mrf.mxu0
        %v5125 = vadd.f32 0.0, %v5124
        %v5126 = vpop.f32.mrf.mxu0
        %v5127 = vpop.f32.mrf.mxu0
        %v5128 = vadd.f32 0.0, %v5127
        %v5129 = vpop.f32.mrf.mxu0
        %5130 = vmatprep.mubr.bf16.mxu0 0
        %5131 = vmatmul.mubr.bf16.gmra.mxu0 %v4949
        %v5132 = vpop.f32.mrf.mxu0
        %v5133 = vadd.f32 0.0, %v5132
        %v5134 = vpop.f32.mrf.mxu0
        %v5135 = vpop.f32.mrf.mxu0
        %v5136 = vadd.f32 0.0, %v5135
        %v5137 = vpop.f32.mrf.mxu0
        %5138 = vmatprep.mubr.bf16.mxu0 0
        %5139 = vmatmul.mubr.bf16.gmra.mxu0 %v4957
        %v5140 = vpop.f32.mrf.mxu0
        %v5141 = vadd.f32 0.0, %v5140
        %v5142 = vpop.f32.mrf.mxu0
        %v5143 = vpop.f32.mrf.mxu0
        %v5144 = vadd.f32 0.0, %v5143
        %v5145 = vpop.f32.mrf.mxu0
        %5146 = vdwg.mxu0
        %v5147 = vadd.f32 %v4730, %v5053
        %v5148 = vadd.f32 %v4731, %v5056
        %v5149 = vadd.f32 %v4732, %v5061
        %v5150 = vadd.f32 %v4733, %v5064
        %v5151 = vadd.f32 %v4734, %v5069
        %v5152 = vadd.f32 %v4735, %v5072
        %v5153 = vadd.f32 %v4736, %v5077
        %v5154 = vadd.f32 %v4737, %v5080
        %v5155 = vadd.f32 %v4738, %v5085
        %v5156 = vadd.f32 %v4739, %v5088
        %v5157 = vadd.f32 %v4740, %v5093
        %v5158 = vadd.f32 %v4741, %v5096
        %v5159 = vadd.f32 %v4742, %v5101
        %v5160 = vadd.f32 %v4743, %v5104
        %v5161 = vadd.f32 %v4744, %v5109
        %v5162 = vadd.f32 %v4745, %v5112
        %v5163 = vadd.f32 %v4746, %v5117
        %v5164 = vadd.f32 %v4747, %v5120
        %v5165 = vadd.f32 %v4748, %v5125
        %v5166 = vadd.f32 %v4749, %v5128
        %v5167 = vadd.f32 %v4750, %v5133
        %v5168 = vadd.f32 %v4751, %v5136
        %v5169 = vadd.f32 %v4752, %v5141
        %v5170 = vadd.f32 %v4753, %v5144
        %v5171 = vld [vmem:[%s152 + $0x6c] sm:$0xe]
        %v5172 = vld [vmem:[%s2204] sm:$0xf]
        %v5173 = vld [vmem:[%s2204 + $0x4] sm:$0xf]
        %v5174 = vld [vmem:[%s2204 + $0x8] sm:$0xf]
        %v5175 = vld [vmem:[%s2204 + $0xc] sm:$0xf]
        %v5176 = vld [vmem:[%s2204 + $0x10] sm:$0xf]
        %v5177 = vld [vmem:[%s2204 + $0x14] sm:$0xf]
        %v5178 = vld [vmem:[%s2204 + $0x18] sm:$0xf]
        %v5179 = vld [vmem:[%s2204 + $0x1c] sm:$0xf]
        %v5180 = vld [vmem:[%s2204 + $0x20] sm:$0xf]
        %v5181 = vld [vmem:[%s2204 + $0x24] sm:$0xf]
        %v5182 = vld [vmem:[%s2204 + $0x28] sm:$0xf]
        %v5183 = vld [vmem:[%s2204 + $0x2c] sm:$0xf]
        %v5184 = vld [vmem:[%s2204 + $0x30] sm:$0xf]
        %v5185 = vld [vmem:[%s2204 + $0x34] sm:$0xf]
        %v5186 = vld [vmem:[%s2204 + $0x38] sm:$0xf]
        %v5187 = vld [vmem:[%s2204 + $0x3c] sm:$0xf]
        %v5189 = vunpack.c.l.b16 %v5171
        %v5190 = vpack.c.b16 %v4821, %v5189
        %v5191 = vrot.slane %v5190, 1
        %v5192 = vrot.slane %v4846, 1
        %v5193 = vsel %vm1232, %v5191, %v5192
        %v5194 = vrot.slane %v4847, 1
        %v5195 = vsel %vm1232, %v5192, %v5194
        %v5196 = vrot.slane %v4848, 1
        %v5197 = vsel %vm1232, %v5194, %v5196
        %v5198 = vrot.slane %v4849, 1
        %v5199 = vsel %vm1232, %v5196, %v5198
        %v5200 = vrot.slane %v4850, 1
        %v5201 = vsel %vm1232, %v5198, %v5200
        %v5202 = vrot.slane %v4851, 1
        %v5203 = vsel %vm1232, %v5200, %v5202
        %v5204 = vrot.slane %v4852, 1
        %v5205 = vsel %vm1232, %v5202, %v5204
        %v5206 = vrot.slane %v4853, 1
        %v5207 = vsel %vm1232, %v5204, %v5206
        %v5208 = vrot.slane %v4854, 1
        %v5209 = vsel %vm1232, %v5206, %v5208
        %v5210 = vrot.slane %v4855, 1
        %v5211 = vsel %vm1232, %v5208, %v5210
        %v5212 = vrot.slane %v4856, 1
        %v5213 = vsel %vm1232, %v5210, %v5212
        %v5214 = vrot.slane %v4857, 1
        %v5215 = vsel %vm1232, %v5212, %v5214
        %v5244 = vunpack.c.l.b16 %v5172
        %v5245 = vunpack.c.l.b16 %v5173
        %v5246 = vunpack.c.l.b16 %v5174
        %v5247 = vunpack.c.l.b16 %v5175
        %v5248 = vunpack.c.l.b16 %v5176
        %v5249 = vunpack.c.l.b16 %v5177
        %v5250 = vunpack.c.l.b16 %v5178
        %v5251 = vunpack.c.l.b16 %v5179
        %v5252 = vunpack.c.l.b16 %v5180
        %v5253 = vunpack.c.l.b16 %v5181
        %v5254 = vunpack.c.l.b16 %v5182
        %v5255 = vunpack.c.l.b16 %v5183
        %v5256 = vunpack.c.l.b16 %v5184
        %v5257 = vunpack.c.l.b16 %v5185
        %v5258 = vunpack.c.l.b16 %v5186
        %v5259 = vunpack.c.l.b16 %v5187
        %v5260 = vpack.c.b16 %v5245, %v5244
        %v5261 = vpack.c.b16 %v5247, %v5246
        %v5262 = vpack.c.b16 %v5249, %v5248
        %v5263 = vpack.c.b16 %v5251, %v5250
        %v5264 = vpack.c.b16 %v5253, %v5252
        %v5265 = vpack.c.b16 %v5255, %v5254
        %v5266 = vpack.c.b16 %v5257, %v5256
        %v5267 = vpack.c.b16 %v5259, %v5258
        %5276 = vmatprep.subr.bf16.mxu0 0
        %5277 = vmatpush1.bf16.msra.mxu0 %v5267
        %5278 = vmatprep.subr.bf16.mxu0 0
        %5279 = vmatpush1.bf16.msra.mxu0 %v5266
        %5280 = vmatprep.subr.bf16.mxu0 0
        %5281 = vmatpush1.bf16.msra.mxu0 %v5265
        %5282 = vmatprep.subr.bf16.mxu0 0
        %5283 = vmatpush1.bf16.msra.mxu0 %v5264
        %5284 = vmatprep.subr.bf16.mxu0 0
        %5285 = vmatpush1.bf16.msra.mxu0 %v5263
        %5286 = vmatprep.subr.bf16.mxu0 0
        %5287 = vmatpush1.bf16.msra.mxu0 %v5262
        %5288 = vmatprep.subr.bf16.mxu0 0
        %5289 = vmatpush1.bf16.msra.mxu0 %v5261
        %5290 = vmatprep.subr.bf16.mxu0 0
        %5291 = vmatpush1.bf16.msra.mxu0 %v5260
        %5292 = vmatprep.subr.bf16.mxu0 0
        %5293 = vmatpush2.bf16.msra.mxu0 0
        %5294 = vmatprep.subr.bf16.mxu0 0
        %5295 = vmatpush2.bf16.msra.mxu0 0
        %5296 = vmatprep.subr.bf16.mxu0 0
        %5297 = vmatpush2.bf16.msra.mxu0 0
        %5298 = vmatprep.subr.bf16.mxu0 0
        %5299 = vmatpush2.bf16.msra.mxu0 0
        %5300 = vmatprep.subr.bf16.mxu0 0
        %5301 = vmatpush2.bf16.msra.mxu0 0
        %5302 = vmatprep.subr.bf16.mxu0 0
        %5303 = vmatpush2.bf16.msra.mxu0 0
        %5304 = vmatprep.subr.bf16.mxu0 0
        %5305 = vmatpush2.bf16.msra.mxu0 0
        %5306 = vmatprep.subr.bf16.mxu0 0
        %5307 = vmatpush2.bf16.msra.mxu0 0
        %5308 = vmatprep.mubr.bf16.mxu0 0
        %5309 = vmatmul.mubr.bf16.gmra.mxu0 %v5193
        %v5310 = vpop.f32.mrf.mxu0
        %v5311 = vadd.f32 0.0, %v5310
        %v5312 = vpop.f32.mrf.mxu0
        %v5313 = vpop.f32.mrf.mxu0
        %v5314 = vadd.f32 0.0, %v5313
        %v5315 = vpop.f32.mrf.mxu0
        %5316 = vmatprep.mubr.bf16.mxu0 0
        %5317 = vmatmul.mubr.bf16.gmra.mxu0 %v5195
        %v5318 = vpop.f32.mrf.mxu0
        %v5319 = vadd.f32 0.0, %v5318
        %v5320 = vpop.f32.mrf.mxu0
        %v5321 = vpop.f32.mrf.mxu0
        %v5322 = vadd.f32 0.0, %v5321
        %v5323 = vpop.f32.mrf.mxu0
        %5324 = vmatprep.mubr.bf16.mxu0 0
        %5325 = vmatmul.mubr.bf16.gmra.mxu0 %v5197
        %v5326 = vpop.f32.mrf.mxu0
        %v5327 = vadd.f32 0.0, %v5326
        %v5328 = vpop.f32.mrf.mxu0
        %v5329 = vpop.f32.mrf.mxu0
        %v5330 = vadd.f32 0.0, %v5329
        %v5331 = vpop.f32.mrf.mxu0
        %5332 = vmatprep.mubr.bf16.mxu0 0
        %5333 = vmatmul.mubr.bf16.gmra.mxu0 %v5199
        %v5334 = vpop.f32.mrf.mxu0
        %v5335 = vadd.f32 0.0, %v5334
        %v5336 = vpop.f32.mrf.mxu0
        %v5337 = vpop.f32.mrf.mxu0
        %v5338 = vadd.f32 0.0, %v5337
        %v5339 = vpop.f32.mrf.mxu0
        %5340 = vmatprep.mubr.bf16.mxu0 0
        %5341 = vmatmul.mubr.bf16.gmra.mxu0 %v5201
        %v5342 = vpop.f32.mrf.mxu0
        %v5343 = vadd.f32 0.0, %v5342
        %v5344 = vpop.f32.mrf.mxu0
        %v5345 = vpop.f32.mrf.mxu0
        %v5346 = vadd.f32 0.0, %v5345
        %v5347 = vpop.f32.mrf.mxu0
        %5348 = vmatprep.mubr.bf16.mxu0 0
        %5349 = vmatmul.mubr.bf16.gmra.mxu0 %v5203
        %v5350 = vpop.f32.mrf.mxu0
        %v5351 = vadd.f32 0.0, %v5350
        %v5352 = vpop.f32.mrf.mxu0
        %v5353 = vpop.f32.mrf.mxu0
        %v5354 = vadd.f32 0.0, %v5353
        %v5355 = vpop.f32.mrf.mxu0
        %5356 = vmatprep.mubr.bf16.mxu0 0
        %5357 = vmatmul.mubr.bf16.gmra.mxu0 %v5205
        %v5358 = vpop.f32.mrf.mxu0
        %v5359 = vadd.f32 0.0, %v5358
        %v5360 = vpop.f32.mrf.mxu0
        %v5361 = vpop.f32.mrf.mxu0
        %v5362 = vadd.f32 0.0, %v5361
        %v5363 = vpop.f32.mrf.mxu0
        %5364 = vmatprep.mubr.bf16.mxu0 0
        %5365 = vmatmul.mubr.bf16.gmra.mxu0 %v5207
        %v5366 = vpop.f32.mrf.mxu0
        %v5367 = vadd.f32 0.0, %v5366
        %v5368 = vpop.f32.mrf.mxu0
        %v5369 = vpop.f32.mrf.mxu0
        %v5370 = vadd.f32 0.0, %v5369
        %v5371 = vpop.f32.mrf.mxu0
        %5372 = vmatprep.mubr.bf16.mxu0 0
        %5373 = vmatmul.mubr.bf16.gmra.mxu0 %v5209
        %v5374 = vpop.f32.mrf.mxu0
        %v5375 = vadd.f32 0.0, %v5374
        %v5376 = vpop.f32.mrf.mxu0
        %v5377 = vpop.f32.mrf.mxu0
        %v5378 = vadd.f32 0.0, %v5377
        %v5379 = vpop.f32.mrf.mxu0
        %5380 = vmatprep.mubr.bf16.mxu0 0
        %5381 = vmatmul.mubr.bf16.gmra.mxu0 %v5211
        %v5382 = vpop.f32.mrf.mxu0
        %v5383 = vadd.f32 0.0, %v5382
        %v5384 = vpop.f32.mrf.mxu0
        %v5385 = vpop.f32.mrf.mxu0
        %v5386 = vadd.f32 0.0, %v5385
        %v5387 = vpop.f32.mrf.mxu0
        %5388 = vmatprep.mubr.bf16.mxu0 0
        %5389 = vmatmul.mubr.bf16.gmra.mxu0 %v5213
        %v5390 = vpop.f32.mrf.mxu0
        %v5391 = vadd.f32 0.0, %v5390
        %v5392 = vpop.f32.mrf.mxu0
        %v5393 = vpop.f32.mrf.mxu0
        %v5394 = vadd.f32 0.0, %v5393
        %v5395 = vpop.f32.mrf.mxu0
        %5396 = vmatprep.mubr.bf16.mxu0 0
        %5397 = vmatmul.mubr.bf16.gmra.mxu0 %v5215
        %v5398 = vpop.f32.mrf.mxu0
        %v5399 = vadd.f32 0.0, %v5398
        %v5400 = vpop.f32.mrf.mxu0
        %v5401 = vpop.f32.mrf.mxu0
        %v5402 = vadd.f32 0.0, %v5401
        %v5403 = vpop.f32.mrf.mxu0
        %5404 = vdwg.mxu0
        %v5405 = vadd.f32 %v5147, %v5311
        %v5406 = vadd.f32 %v5148, %v5314
        %v5407 = vadd.f32 %v5149, %v5319
        %v5408 = vadd.f32 %v5150, %v5322
        %v5409 = vadd.f32 %v5151, %v5327
        %v5410 = vadd.f32 %v5152, %v5330
        %v5411 = vadd.f32 %v5153, %v5335
        %v5412 = vadd.f32 %v5154, %v5338
        %v5413 = vadd.f32 %v5155, %v5343
        %v5414 = vadd.f32 %v5156, %v5346
        %v5415 = vadd.f32 %v5157, %v5351
        %v5416 = vadd.f32 %v5158, %v5354
        %v5417 = vadd.f32 %v5159, %v5359
        %v5418 = vadd.f32 %v5160, %v5362
        %v5419 = vadd.f32 %v5161, %v5367
        %v5420 = vadd.f32 %v5162, %v5370
        %v5421 = vadd.f32 %v5163, %v5375
        %v5422 = vadd.f32 %v5164, %v5378
        %v5423 = vadd.f32 %v5165, %v5383
        %v5424 = vadd.f32 %v5166, %v5386
        %v5425 = vadd.f32 %v5167, %v5391
        %v5426 = vadd.f32 %v5168, %v5394
        %v5427 = vadd.f32 %v5169, %v5399
        %v5428 = vadd.f32 %v5170, %v5402
        %v5429 = vld [vmem:[%s152 + $0x78] sm:$0xf]
        %v5430 = vld [vmem:[%s152 + $0x7c] sm:$0xf]
        %v5431 = vld [vmem:[%s152 + $0x80] sm:$0xf]
        %v5432 = vld [vmem:[%s152 + $0x84] sm:$0xf]
        %v5433 = vld [vmem:[%s152 + $0x88] sm:$0xf]
        %v5434 = vld [vmem:[%s152 + $0x8c] sm:$0xf]
        %v5435 = vld [vmem:[%s152 + $0x90] sm:$0xf]
        %v5436 = vld [vmem:[%s152 + $0x94] sm:$0xf]
        %v5437 = vld [vmem:[%s152 + $0x98] sm:$0xf]
        %v5438 = vld [vmem:[%s152 + $0x9c] sm:$0xf]
        %v5439 = vld [vmem:[%s152 + $0xa0] sm:$0xf]
        %v5440 = vld [vmem:[%s152 + $0xa4] sm:$0xf]
        %v5441 = vld [vmem:[%s152 + $0xa8] sm:$0xf]
        %v5442 = vld [vmem:[%s152 + $0xac] sm:$0xf]
        %v5443 = vld [vmem:[%s152 + $0xb0] sm:$0xf]
        %v5444 = vld [vmem:[%s152 + $0xb4] sm:$0xf]
        %v5445 = vld [vmem:[%s152 + $0xb8] sm:$0xf]
        %v5446 = vld [vmem:[%s152 + $0xbc] sm:$0xf]
        %v5447 = vld [vmem:[%s152 + $0xc0] sm:$0xf]
        %v5448 = vld [vmem:[%s152 + $0xc4] sm:$0xf]
        %v5449 = vld [vmem:[%s152 + $0xc8] sm:$0xf]
        %v5450 = vld [vmem:[%s152 + $0xcc] sm:$0xf]
        %v5451 = vld [vmem:[%s152 + $0xd0] sm:$0xf]
        %v5452 = vld [vmem:[%s152 + $0xd4] sm:$0xf]
        %v5453 = vld [vmem:[%s2486] sm:$0xf]
        %v5454 = vld [vmem:[%s2486 + $0x4] sm:$0xf]
        %v5455 = vld [vmem:[%s2486 + $0x8] sm:$0xf]
        %v5456 = vld [vmem:[%s2486 + $0xc] sm:$0xf]
        %v5457 = vld [vmem:[%s2486 + $0x10] sm:$0xf]
        %v5458 = vld [vmem:[%s2486 + $0x14] sm:$0xf]
        %v5459 = vld [vmem:[%s2486 + $0x18] sm:$0xf]
        %v5460 = vld [vmem:[%s2486 + $0x1c] sm:$0xf]
        %v5461 = vld [vmem:[%s2486 + $0x20] sm:$0xf]
        %v5462 = vld [vmem:[%s2486 + $0x24] sm:$0xf]
        %v5463 = vld [vmem:[%s2486 + $0x28] sm:$0xf]
        %v5464 = vld [vmem:[%s2486 + $0x2c] sm:$0xf]
        %v5465 = vld [vmem:[%s2486 + $0x30] sm:$0xf]
        %v5466 = vld [vmem:[%s2486 + $0x34] sm:$0xf]
        %v5467 = vld [vmem:[%s2486 + $0x38] sm:$0xf]
        %v5468 = vld [vmem:[%s2486 + $0x3c] sm:$0xf]
        %v5493 = vunpack.c.l.b16 %v5429
        %v5494 = vunpack.c.l.b16 %v5430
        %v5495 = vunpack.c.l.b16 %v5431
        %v5496 = vunpack.c.l.b16 %v5432
        %v5497 = vunpack.c.l.b16 %v5433
        %v5498 = vunpack.c.l.b16 %v5434
        %v5499 = vunpack.c.l.b16 %v5435
        %v5500 = vunpack.c.l.b16 %v5436
        %v5501 = vunpack.c.l.b16 %v5437
        %v5502 = vunpack.c.l.b16 %v5438
        %v5503 = vunpack.c.l.b16 %v5439
        %v5504 = vunpack.c.l.b16 %v5440
        %v5505 = vunpack.c.l.b16 %v5441
        %v5506 = vunpack.c.l.b16 %v5442
        %v5507 = vunpack.c.l.b16 %v5443
        %v5508 = vunpack.c.l.b16 %v5444
        %v5509 = vunpack.c.l.b16 %v5445
        %v5510 = vunpack.c.l.b16 %v5446
        %v5511 = vunpack.c.l.b16 %v5447
        %v5512 = vunpack.c.l.b16 %v5448
        %v5513 = vunpack.c.l.b16 %v5449
        %v5514 = vunpack.c.l.b16 %v5450
        %v5515 = vunpack.c.l.b16 %v5451
        %v5516 = vunpack.c.l.b16 %v5452
        %v5517 = vpack.c.b16 %v5494, %v5493
        %v5518 = vpack.c.b16 %v5496, %v5495
        %v5519 = vpack.c.b16 %v5498, %v5497
        %v5520 = vpack.c.b16 %v5500, %v5499
        %v5521 = vpack.c.b16 %v5502, %v5501
        %v5522 = vpack.c.b16 %v5504, %v5503
        %v5523 = vpack.c.b16 %v5506, %v5505
        %v5524 = vpack.c.b16 %v5508, %v5507
        %v5525 = vpack.c.b16 %v5510, %v5509
        %v5526 = vpack.c.b16 %v5512, %v5511
        %v5527 = vpack.c.b16 %v5514, %v5513
        %v5528 = vpack.c.b16 %v5516, %v5515
        %v5557 = vunpack.c.l.b16 %v5453
        %v5558 = vunpack.c.l.b16 %v5454
        %v5559 = vunpack.c.l.b16 %v5455
        %v5560 = vunpack.c.l.b16 %v5456
        %v5561 = vunpack.c.l.b16 %v5457
        %v5562 = vunpack.c.l.b16 %v5458
        %v5563 = vunpack.c.l.b16 %v5459
        %v5564 = vunpack.c.l.b16 %v5460
        %v5565 = vunpack.c.l.b16 %v5461
        %v5566 = vunpack.c.l.b16 %v5462
        %v5567 = vunpack.c.l.b16 %v5463
        %v5568 = vunpack.c.l.b16 %v5464
        %v5569 = vunpack.c.l.b16 %v5465
        %v5570 = vunpack.c.l.b16 %v5466
        %v5571 = vunpack.c.l.b16 %v5467
        %v5572 = vunpack.c.l.b16 %v5468
        %v5573 = vpack.c.b16 %v5558, %v5557
        %v5574 = vpack.c.b16 %v5560, %v5559
        %v5575 = vpack.c.b16 %v5562, %v5561
        %v5576 = vpack.c.b16 %v5564, %v5563
        %v5577 = vpack.c.b16 %v5566, %v5565
        %v5578 = vpack.c.b16 %v5568, %v5567
        %v5579 = vpack.c.b16 %v5570, %v5569
        %v5580 = vpack.c.b16 %v5572, %v5571
        %5589 = vmatprep.subr.bf16.mxu0 0
        %5590 = vmatpush1.bf16.msra.mxu0 %v5580
        %5591 = vmatprep.subr.bf16.mxu0 0
        %5592 = vmatpush1.bf16.msra.mxu0 %v5579
        %5593 = vmatprep.subr.bf16.mxu0 0
        %5594 = vmatpush1.bf16.msra.mxu0 %v5578
        %5595 = vmatprep.subr.bf16.mxu0 0
        %5596 = vmatpush1.bf16.msra.mxu0 %v5577
        %5597 = vmatprep.subr.bf16.mxu0 0
        %5598 = vmatpush1.bf16.msra.mxu0 %v5576
        %5599 = vmatprep.subr.bf16.mxu0 0
        %5600 = vmatpush1.bf16.msra.mxu0 %v5575
        %5601 = vmatprep.subr.bf16.mxu0 0
        %5602 = vmatpush1.bf16.msra.mxu0 %v5574
        %5603 = vmatprep.subr.bf16.mxu0 0
        %5604 = vmatpush1.bf16.msra.mxu0 %v5573
        %5605 = vmatprep.subr.bf16.mxu0 0
        %5606 = vmatpush2.bf16.msra.mxu0 0
        %5607 = vmatprep.subr.bf16.mxu0 0
        %5608 = vmatpush2.bf16.msra.mxu0 0
        %5609 = vmatprep.subr.bf16.mxu0 0
        %5610 = vmatpush2.bf16.msra.mxu0 0
        %5611 = vmatprep.subr.bf16.mxu0 0
        %5612 = vmatpush2.bf16.msra.mxu0 0
        %5613 = vmatprep.subr.bf16.mxu0 0
        %5614 = vmatpush2.bf16.msra.mxu0 0
        %5615 = vmatprep.subr.bf16.mxu0 0
        %5616 = vmatpush2.bf16.msra.mxu0 0
        %5617 = vmatprep.subr.bf16.mxu0 0
        %5618 = vmatpush2.bf16.msra.mxu0 0
        %5619 = vmatprep.subr.bf16.mxu0 0
        %5620 = vmatpush2.bf16.msra.mxu0 0
        %5621 = vmatprep.mubr.bf16.mxu0 0
        %5622 = vmatmul.mubr.bf16.gmra.mxu0 %v5517
        %v5623 = vpop.f32.mrf.mxu0
        %v5624 = vadd.f32 0.0, %v5623
        %v5625 = vpop.f32.mrf.mxu0
        %v5626 = vpop.f32.mrf.mxu0
        %v5627 = vadd.f32 0.0, %v5626
        %v5628 = vpop.f32.mrf.mxu0
        %5629 = vmatprep.mubr.bf16.mxu0 0
        %5630 = vmatmul.mubr.bf16.gmra.mxu0 %v5518
        %v5631 = vpop.f32.mrf.mxu0
        %v5632 = vadd.f32 0.0, %v5631
        %v5633 = vpop.f32.mrf.mxu0
        %v5634 = vpop.f32.mrf.mxu0
        %v5635 = vadd.f32 0.0, %v5634
        %v5636 = vpop.f32.mrf.mxu0
        %5637 = vmatprep.mubr.bf16.mxu0 0
        %5638 = vmatmul.mubr.bf16.gmra.mxu0 %v5519
        %v5639 = vpop.f32.mrf.mxu0
        %v5640 = vadd.f32 0.0, %v5639
        %v5641 = vpop.f32.mrf.mxu0
        %v5642 = vpop.f32.mrf.mxu0
        %v5643 = vadd.f32 0.0, %v5642
        %v5644 = vpop.f32.mrf.mxu0
        %5645 = vmatprep.mubr.bf16.mxu0 0
        %5646 = vmatmul.mubr.bf16.gmra.mxu0 %v5520
        %v5647 = vpop.f32.mrf.mxu0
        %v5648 = vadd.f32 0.0, %v5647
        %v5649 = vpop.f32.mrf.mxu0
        %v5650 = vpop.f32.mrf.mxu0
        %v5651 = vadd.f32 0.0, %v5650
        %v5652 = vpop.f32.mrf.mxu0
        %5653 = vmatprep.mubr.bf16.mxu0 0
        %5654 = vmatmul.mubr.bf16.gmra.mxu0 %v5521
        %v5655 = vpop.f32.mrf.mxu0
        %v5656 = vadd.f32 0.0, %v5655
        %v5657 = vpop.f32.mrf.mxu0
        %v5658 = vpop.f32.mrf.mxu0
        %v5659 = vadd.f32 0.0, %v5658
        %v5660 = vpop.f32.mrf.mxu0
        %5661 = vmatprep.mubr.bf16.mxu0 0
        %5662 = vmatmul.mubr.bf16.gmra.mxu0 %v5522
        %v5663 = vpop.f32.mrf.mxu0
        %v5664 = vadd.f32 0.0, %v5663
        %v5665 = vpop.f32.mrf.mxu0
        %v5666 = vpop.f32.mrf.mxu0
        %v5667 = vadd.f32 0.0, %v5666
        %v5668 = vpop.f32.mrf.mxu0
        %5669 = vmatprep.mubr.bf16.mxu0 0
        %5670 = vmatmul.mubr.bf16.gmra.mxu0 %v5523
        %v5671 = vpop.f32.mrf.mxu0
        %v5672 = vadd.f32 0.0, %v5671
        %v5673 = vpop.f32.mrf.mxu0
        %v5674 = vpop.f32.mrf.mxu0
        %v5675 = vadd.f32 0.0, %v5674
        %v5676 = vpop.f32.mrf.mxu0
        %5677 = vmatprep.mubr.bf16.mxu0 0
        %5678 = vmatmul.mubr.bf16.gmra.mxu0 %v5524
        %v5679 = vpop.f32.mrf.mxu0
        %v5680 = vadd.f32 0.0, %v5679
        %v5681 = vpop.f32.mrf.mxu0
        %v5682 = vpop.f32.mrf.mxu0
        %v5683 = vadd.f32 0.0, %v5682
        %v5684 = vpop.f32.mrf.mxu0
        %5685 = vmatprep.mubr.bf16.mxu0 0
        %5686 = vmatmul.mubr.bf16.gmra.mxu0 %v5525
        %v5687 = vpop.f32.mrf.mxu0
        %v5688 = vadd.f32 0.0, %v5687
        %v5689 = vpop.f32.mrf.mxu0
        %v5690 = vpop.f32.mrf.mxu0
        %v5691 = vadd.f32 0.0, %v5690
        %v5692 = vpop.f32.mrf.mxu0
        %5693 = vmatprep.mubr.bf16.mxu0 0
        %5694 = vmatmul.mubr.bf16.gmra.mxu0 %v5526
        %v5695 = vpop.f32.mrf.mxu0
        %v5696 = vadd.f32 0.0, %v5695
        %v5697 = vpop.f32.mrf.mxu0
        %v5698 = vpop.f32.mrf.mxu0
        %v5699 = vadd.f32 0.0, %v5698
        %v5700 = vpop.f32.mrf.mxu0
        %5701 = vmatprep.mubr.bf16.mxu0 0
        %5702 = vmatmul.mubr.bf16.gmra.mxu0 %v5527
        %v5703 = vpop.f32.mrf.mxu0
        %v5704 = vadd.f32 0.0, %v5703
        %v5705 = vpop.f32.mrf.mxu0
        %v5706 = vpop.f32.mrf.mxu0
        %v5707 = vadd.f32 0.0, %v5706
        %v5708 = vpop.f32.mrf.mxu0
        %5709 = vmatprep.mubr.bf16.mxu0 0
        %5710 = vmatmul.mubr.bf16.gmra.mxu0 %v5528
        %v5711 = vpop.f32.mrf.mxu0
        %v5712 = vadd.f32 0.0, %v5711
        %v5713 = vpop.f32.mrf.mxu0
        %v5714 = vpop.f32.mrf.mxu0
        %v5715 = vadd.f32 0.0, %v5714
        %v5716 = vpop.f32.mrf.mxu0
        %5717 = vdwg.mxu0
        %v5718 = vadd.f32 %v5405, %v5624
        %v5719 = vadd.f32 %v5406, %v5627
        %v5720 = vadd.f32 %v5407, %v5632
        %v5721 = vadd.f32 %v5408, %v5635
        %v5722 = vadd.f32 %v5409, %v5640
        %v5723 = vadd.f32 %v5410, %v5643
        %v5724 = vadd.f32 %v5411, %v5648
        %v5725 = vadd.f32 %v5412, %v5651
        %v5726 = vadd.f32 %v5413, %v5656
        %v5727 = vadd.f32 %v5414, %v5659
        %v5728 = vadd.f32 %v5415, %v5664
        %v5729 = vadd.f32 %v5416, %v5667
        %v5730 = vadd.f32 %v5417, %v5672
        %v5731 = vadd.f32 %v5418, %v5675
        %v5732 = vadd.f32 %v5419, %v5680
        %v5733 = vadd.f32 %v5420, %v5683
        %v5734 = vadd.f32 %v5421, %v5688
        %v5735 = vadd.f32 %v5422, %v5691
        %v5736 = vadd.f32 %v5423, %v5696
        %v5737 = vadd.f32 %v5424, %v5699
        %v5738 = vadd.f32 %v5425, %v5704
        %v5739 = vadd.f32 %v5426, %v5707
        %v5740 = vadd.f32 %v5427, %v5712
        %v5741 = vadd.f32 %v5428, %v5715
        %v5742 = vld [vmem:[%s152 + $0x78] sm:$0xf]
        %v5743 = vld [vmem:[%s152 + $0x7c] sm:$0xf]
        %v5744 = vld [vmem:[%s152 + $0x80] sm:$0xf]
        %v5745 = vld [vmem:[%s152 + $0x84] sm:$0xf]
        %v5746 = vld [vmem:[%s152 + $0x88] sm:$0xf]
        %v5747 = vld [vmem:[%s152 + $0x8c] sm:$0xf]
        %v5748 = vld [vmem:[%s152 + $0x90] sm:$0xf]
        %v5749 = vld [vmem:[%s152 + $0x94] sm:$0xf]
        %v5750 = vld [vmem:[%s152 + $0x98] sm:$0xf]
        %v5751 = vld [vmem:[%s152 + $0x9c] sm:$0xf]
        %v5752 = vld [vmem:[%s152 + $0xa0] sm:$0xf]
        %v5753 = vld [vmem:[%s152 + $0xa4] sm:$0xf]
        %v5754 = vld [vmem:[%s152 + $0xa8] sm:$0xf]
        %v5755 = vld [vmem:[%s152 + $0xac] sm:$0xf]
        %v5756 = vld [vmem:[%s152 + $0xb0] sm:$0xf]
        %v5757 = vld [vmem:[%s152 + $0xb4] sm:$0xf]
        %v5758 = vld [vmem:[%s152 + $0xb8] sm:$0xf]
        %v5759 = vld [vmem:[%s152 + $0xbc] sm:$0xf]
        %v5760 = vld [vmem:[%s152 + $0xc0] sm:$0xf]
        %v5761 = vld [vmem:[%s152 + $0xc4] sm:$0xf]
        %v5762 = vld [vmem:[%s152 + $0xc8] sm:$0xf]
        %v5763 = vld [vmem:[%s152 + $0xcc] sm:$0xf]
        %v5764 = vld [vmem:[%s152 + $0xd0] sm:$0xf]
        %v5765 = vld [vmem:[%s152 + $0xd4] sm:$0xf]
        %v5766 = vld [vmem:[%s152 + $0xd8] sm:$0x1]
        %v5767 = vld [vmem:[%s2801] sm:$0xf]
        %v5768 = vld [vmem:[%s2801 + $0x4] sm:$0xf]
        %v5769 = vld [vmem:[%s2801 + $0x8] sm:$0xf]
        %v5770 = vld [vmem:[%s2801 + $0xc] sm:$0xf]
        %v5771 = vld [vmem:[%s2801 + $0x10] sm:$0xf]
        %v5772 = vld [vmem:[%s2801 + $0x14] sm:$0xf]
        %v5773 = vld [vmem:[%s2801 + $0x18] sm:$0xf]
        %v5774 = vld [vmem:[%s2801 + $0x1c] sm:$0xf]
        %v5775 = vld [vmem:[%s2801 + $0x20] sm:$0xf]
        %v5776 = vld [vmem:[%s2801 + $0x24] sm:$0xf]
        %v5777 = vld [vmem:[%s2801 + $0x28] sm:$0xf]
        %v5778 = vld [vmem:[%s2801 + $0x2c] sm:$0xf]
        %v5779 = vld [vmem:[%s2801 + $0x30] sm:$0xf]
        %v5780 = vld [vmem:[%s2801 + $0x34] sm:$0xf]
        %v5781 = vld [vmem:[%s2801 + $0x38] sm:$0xf]
        %v5782 = vld [vmem:[%s2801 + $0x3c] sm:$0xf]
        %v5808 = vunpack.c.l.b16 %v5742
        %v5809 = vunpack.c.l.b16 %v5743
        %v5810 = vunpack.c.l.b16 %v5744
        %v5811 = vunpack.c.l.b16 %v5745
        %v5812 = vunpack.c.l.b16 %v5746
        %v5813 = vunpack.c.l.b16 %v5747
        %v5814 = vunpack.c.l.b16 %v5748
        %v5815 = vunpack.c.l.b16 %v5749
        %v5816 = vunpack.c.l.b16 %v5750
        %v5817 = vunpack.c.l.b16 %v5751
        %v5818 = vunpack.c.l.b16 %v5752
        %v5819 = vunpack.c.l.b16 %v5753
        %v5820 = vunpack.c.l.b16 %v5754
        %v5821 = vunpack.c.l.b16 %v5755
        %v5822 = vunpack.c.l.b16 %v5756
        %v5823 = vunpack.c.l.b16 %v5757
        %v5824 = vunpack.c.l.b16 %v5758
        %v5825 = vunpack.c.l.b16 %v5759
        %v5826 = vunpack.c.l.b16 %v5760
        %v5827 = vunpack.c.l.b16 %v5761
        %v5828 = vunpack.c.l.b16 %v5762
        %v5829 = vunpack.c.l.b16 %v5763
        %v5830 = vunpack.c.l.b16 %v5764
        %v5831 = vunpack.c.l.b16 %v5765
        %v5832 = vunpack.c.l.b16 %v5766
        %v5833 = vpack.c.b16 %v5809, %v5808
        %v5834 = vpack.c.b16 %v5811, %v5810
        %v5835 = vpack.c.b16 %v5813, %v5812
        %v5836 = vpack.c.b16 %v5815, %v5814
        %v5837 = vpack.c.b16 %v5817, %v5816
        %v5838 = vpack.c.b16 %v5819, %v5818
        %v5839 = vpack.c.b16 %v5821, %v5820
        %v5840 = vpack.c.b16 %v5823, %v5822
        %v5841 = vpack.c.b16 %v5825, %v5824
        %v5842 = vpack.c.b16 %v5827, %v5826
        %v5843 = vpack.c.b16 %v5829, %v5828
        %v5844 = vpack.c.b16 %v5831, %v5830
        %v5845 = vpack.c.b16 %v5832, %v5832
        %v5847 = vshrl.u32 %v5833, 16
        %v5849 = vshll.u32 %v5833, 16
        %v5851 = vrot.slane %v5849, 1
        %v5852 = vor.u32 %v5847, %v5851
        %v5854 = vshll.u32 %v5834, 16
        %v5856 = vrot.slane %v5854, 1
        %v5857 = vsel %vm732, %v5852, %v5856
        %v5858 = vshrl.u32 %v5834, 16
        %v5860 = vor.u32 %v5858, %v5856
        %v5862 = vshll.u32 %v5835, 16
        %v5864 = vrot.slane %v5862, 1
        %v5865 = vsel %vm732, %v5860, %v5864
        %v5866 = vshrl.u32 %v5835, 16
        %v5868 = vor.u32 %v5866, %v5864
        %v5870 = vshll.u32 %v5836, 16
        %v5872 = vrot.slane %v5870, 1
        %v5873 = vsel %vm732, %v5868, %v5872
        %v5874 = vshrl.u32 %v5836, 16
        %v5876 = vor.u32 %v5874, %v5872
        %v5878 = vshll.u32 %v5837, 16
        %v5880 = vrot.slane %v5878, 1
        %v5881 = vsel %vm732, %v5876, %v5880
        %v5882 = vshrl.u32 %v5837, 16
        %v5884 = vor.u32 %v5882, %v5880
        %v5886 = vshll.u32 %v5838, 16
        %v5888 = vrot.slane %v5886, 1
        %v5889 = vsel %vm732, %v5884, %v5888
        %v5890 = vshrl.u32 %v5838, 16
        %v5892 = vor.u32 %v5890, %v5888
        %v5894 = vshll.u32 %v5839, 16
        %v5896 = vrot.slane %v5894, 1
        %v5897 = vsel %vm732, %v5892, %v5896
        %v5898 = vshrl.u32 %v5839, 16
        %v5900 = vor.u32 %v5898, %v5896
        %v5902 = vshll.u32 %v5840, 16
        %v5904 = vrot.slane %v5902, 1
        %v5905 = vsel %vm732, %v5900, %v5904
        %v5906 = vshrl.u32 %v5840, 16
        %v5908 = vor.u32 %v5906, %v5904
        %v5910 = vshll.u32 %v5841, 16
        %v5912 = vrot.slane %v5910, 1
        %v5913 = vsel %vm732, %v5908, %v5912
        %v5914 = vshrl.u32 %v5841, 16
        %v5916 = vor.u32 %v5914, %v5912
        %v5918 = vshll.u32 %v5842, 16
        %v5920 = vrot.slane %v5918, 1
        %v5921 = vsel %vm732, %v5916, %v5920
        %v5922 = vshrl.u32 %v5842, 16
        %v5924 = vor.u32 %v5922, %v5920
        %v5926 = vshll.u32 %v5843, 16
        %v5928 = vrot.slane %v5926, 1
        %v5929 = vsel %vm732, %v5924, %v5928
        %v5930 = vshrl.u32 %v5843, 16
        %v5932 = vor.u32 %v5930, %v5928
        %v5934 = vshll.u32 %v5844, 16
        %v5936 = vrot.slane %v5934, 1
        %v5937 = vsel %vm732, %v5932, %v5936
        %v5938 = vshrl.u32 %v5844, 16
        %v5940 = vor.u32 %v5938, %v5936
        %v5942 = vshll.u32 %v5845, 16
        %v5944 = vrot.slane %v5942, 1
        %v5945 = vsel %vm732, %v5940, %v5944
        %v5974 = vunpack.c.l.b16 %v5767
        %v5975 = vunpack.c.l.b16 %v5768
        %v5976 = vunpack.c.l.b16 %v5769
        %v5977 = vunpack.c.l.b16 %v5770
        %v5978 = vunpack.c.l.b16 %v5771
        %v5979 = vunpack.c.l.b16 %v5772
        %v5980 = vunpack.c.l.b16 %v5773
        %v5981 = vunpack.c.l.b16 %v5774
        %v5982 = vunpack.c.l.b16 %v5775
        %v5983 = vunpack.c.l.b16 %v5776
        %v5984 = vunpack.c.l.b16 %v5777
        %v5985 = vunpack.c.l.b16 %v5778
        %v5986 = vunpack.c.l.b16 %v5779
        %v5987 = vunpack.c.l.b16 %v5780
        %v5988 = vunpack.c.l.b16 %v5781
        %v5989 = vunpack.c.l.b16 %v5782
        %v5990 = vpack.c.b16 %v5975, %v5974
        %v5991 = vpack.c.b16 %v5977, %v5976
        %v5992 = vpack.c.b16 %v5979, %v5978
        %v5993 = vpack.c.b16 %v5981, %v5980
        %v5994 = vpack.c.b16 %v5983, %v5982
        %v5995 = vpack.c.b16 %v5985, %v5984
        %v5996 = vpack.c.b16 %v5987, %v5986
        %v5997 = vpack.c.b16 %v5989, %v5988
        %6006 = vmatprep.subr.bf16.mxu0 0
        %6007 = vmatpush1.bf16.msra.mxu0 %v5997
        %6008 = vmatprep.subr.bf16.mxu0 0
        %6009 = vmatpush1.bf16.msra.mxu0 %v5996
        %6010 = vmatprep.subr.bf16.mxu0 0
        %6011 = vmatpush1.bf16.msra.mxu0 %v5995
        %6012 = vmatprep.subr.bf16.mxu0 0
        %6013 = vmatpush1.bf16.msra.mxu0 %v5994
        %6014 = vmatprep.subr.bf16.mxu0 0
        %6015 = vmatpush1.bf16.msra.mxu0 %v5993
        %6016 = vmatprep.subr.bf16.mxu0 0
        %6017 = vmatpush1.bf16.msra.mxu0 %v5992
        %6018 = vmatprep.subr.bf16.mxu0 0
        %6019 = vmatpush1.bf16.msra.mxu0 %v5991
        %6020 = vmatprep.subr.bf16.mxu0 0
        %6021 = vmatpush1.bf16.msra.mxu0 %v5990
        %6022 = vmatprep.subr.bf16.mxu0 0
        %6023 = vmatpush2.bf16.msra.mxu0 0
        %6024 = vmatprep.subr.bf16.mxu0 0
        %6025 = vmatpush2.bf16.msra.mxu0 0
        %6026 = vmatprep.subr.bf16.mxu0 0
        %6027 = vmatpush2.bf16.msra.mxu0 0
        %6028 = vmatprep.subr.bf16.mxu0 0
        %6029 = vmatpush2.bf16.msra.mxu0 0
        %6030 = vmatprep.subr.bf16.mxu0 0
        %6031 = vmatpush2.bf16.msra.mxu0 0
        %6032 = vmatprep.subr.bf16.mxu0 0
        %6033 = vmatpush2.bf16.msra.mxu0 0
        %6034 = vmatprep.subr.bf16.mxu0 0
        %6035 = vmatpush2.bf16.msra.mxu0 0
        %6036 = vmatprep.subr.bf16.mxu0 0
        %6037 = vmatpush2.bf16.msra.mxu0 0
        %6038 = vmatprep.mubr.bf16.mxu0 0
        %6039 = vmatmul.mubr.bf16.gmra.mxu0 %v5857
        %v6040 = vpop.f32.mrf.mxu0
        %v6041 = vadd.f32 0.0, %v6040
        %v6042 = vpop.f32.mrf.mxu0
        %v6043 = vpop.f32.mrf.mxu0
        %v6044 = vadd.f32 0.0, %v6043
        %v6045 = vpop.f32.mrf.mxu0
        %6046 = vmatprep.mubr.bf16.mxu0 0
        %6047 = vmatmul.mubr.bf16.gmra.mxu0 %v5865
        %v6048 = vpop.f32.mrf.mxu0
        %v6049 = vadd.f32 0.0, %v6048
        %v6050 = vpop.f32.mrf.mxu0
        %v6051 = vpop.f32.mrf.mxu0
        %v6052 = vadd.f32 0.0, %v6051
        %v6053 = vpop.f32.mrf.mxu0
        %6054 = vmatprep.mubr.bf16.mxu0 0
        %6055 = vmatmul.mubr.bf16.gmra.mxu0 %v5873
        %v6056 = vpop.f32.mrf.mxu0
        %v6057 = vadd.f32 0.0, %v6056
        %v6058 = vpop.f32.mrf.mxu0
        %v6059 = vpop.f32.mrf.mxu0
        %v6060 = vadd.f32 0.0, %v6059
        %v6061 = vpop.f32.mrf.mxu0
        %6062 = vmatprep.mubr.bf16.mxu0 0
        %6063 = vmatmul.mubr.bf16.gmra.mxu0 %v5881
        %v6064 = vpop.f32.mrf.mxu0
        %v6065 = vadd.f32 0.0, %v6064
        %v6066 = vpop.f32.mrf.mxu0
        %v6067 = vpop.f32.mrf.mxu0
        %v6068 = vadd.f32 0.0, %v6067
        %v6069 = vpop.f32.mrf.mxu0
        %6070 = vmatprep.mubr.bf16.mxu0 0
        %6071 = vmatmul.mubr.bf16.gmra.mxu0 %v5889
        %v6072 = vpop.f32.mrf.mxu0
        %v6073 = vadd.f32 0.0, %v6072
        %v6074 = vpop.f32.mrf.mxu0
        %v6075 = vpop.f32.mrf.mxu0
        %v6076 = vadd.f32 0.0, %v6075
        %v6077 = vpop.f32.mrf.mxu0
        %6078 = vmatprep.mubr.bf16.mxu0 0
        %6079 = vmatmul.mubr.bf16.gmra.mxu0 %v5897
        %v6080 = vpop.f32.mrf.mxu0
        %v6081 = vadd.f32 0.0, %v6080
        %v6082 = vpop.f32.mrf.mxu0
        %v6083 = vpop.f32.mrf.mxu0
        %v6084 = vadd.f32 0.0, %v6083
        %v6085 = vpop.f32.mrf.mxu0
        %6086 = vmatprep.mubr.bf16.mxu0 0
        %6087 = vmatmul.mubr.bf16.gmra.mxu0 %v5905
        %v6088 = vpop.f32.mrf.mxu0
        %v6089 = vadd.f32 0.0, %v6088
        %v6090 = vpop.f32.mrf.mxu0
        %v6091 = vpop.f32.mrf.mxu0
        %v6092 = vadd.f32 0.0, %v6091
        %v6093 = vpop.f32.mrf.mxu0
        %6094 = vmatprep.mubr.bf16.mxu0 0
        %6095 = vmatmul.mubr.bf16.gmra.mxu0 %v5913
        %v6096 = vpop.f32.mrf.mxu0
        %v6097 = vadd.f32 0.0, %v6096
        %v6098 = vpop.f32.mrf.mxu0
        %v6099 = vpop.f32.mrf.mxu0
        %v6100 = vadd.f32 0.0, %v6099
        %v6101 = vpop.f32.mrf.mxu0
        %6102 = vmatprep.mubr.bf16.mxu0 0
        %6103 = vmatmul.mubr.bf16.gmra.mxu0 %v5921
        %v6104 = vpop.f32.mrf.mxu0
        %v6105 = vadd.f32 0.0, %v6104
        %v6106 = vpop.f32.mrf.mxu0
        %v6107 = vpop.f32.mrf.mxu0
        %v6108 = vadd.f32 0.0, %v6107
        %v6109 = vpop.f32.mrf.mxu0
        %6110 = vmatprep.mubr.bf16.mxu0 0
        %6111 = vmatmul.mubr.bf16.gmra.mxu0 %v5929
        %v6112 = vpop.f32.mrf.mxu0
        %v6113 = vadd.f32 0.0, %v6112
        %v6114 = vpop.f32.mrf.mxu0
        %v6115 = vpop.f32.mrf.mxu0
        %v6116 = vadd.f32 0.0, %v6115
        %v6117 = vpop.f32.mrf.mxu0
        %6118 = vmatprep.mubr.bf16.mxu0 0
        %6119 = vmatmul.mubr.bf16.gmra.mxu0 %v5937
        %v6120 = vpop.f32.mrf.mxu0
        %v6121 = vadd.f32 0.0, %v6120
        %v6122 = vpop.f32.mrf.mxu0
        %v6123 = vpop.f32.mrf.mxu0
        %v6124 = vadd.f32 0.0, %v6123
        %v6125 = vpop.f32.mrf.mxu0
        %6126 = vmatprep.mubr.bf16.mxu0 0
        %6127 = vmatmul.mubr.bf16.gmra.mxu0 %v5945
        %v6128 = vpop.f32.mrf.mxu0
        %v6129 = vadd.f32 0.0, %v6128
        %v6130 = vpop.f32.mrf.mxu0
        %v6131 = vpop.f32.mrf.mxu0
        %v6132 = vadd.f32 0.0, %v6131
        %v6133 = vpop.f32.mrf.mxu0
        %6134 = vdwg.mxu0
        %v6135 = vadd.f32 %v5718, %v6041
        %v6136 = vadd.f32 %v5719, %v6044
        %v6137 = vadd.f32 %v5720, %v6049
        %v6138 = vadd.f32 %v5721, %v6052
        %v6139 = vadd.f32 %v5722, %v6057
        %v6140 = vadd.f32 %v5723, %v6060
        %v6141 = vadd.f32 %v5724, %v6065
        %v6142 = vadd.f32 %v5725, %v6068
        %v6143 = vadd.f32 %v5726, %v6073
        %v6144 = vadd.f32 %v5727, %v6076
        %v6145 = vadd.f32 %v5728, %v6081
        %v6146 = vadd.f32 %v5729, %v6084
        %v6147 = vadd.f32 %v5730, %v6089
        %v6148 = vadd.f32 %v5731, %v6092
        %v6149 = vadd.f32 %v5732, %v6097
        %v6150 = vadd.f32 %v5733, %v6100
        %v6151 = vadd.f32 %v5734, %v6105
        %v6152 = vadd.f32 %v5735, %v6108
        %v6153 = vadd.f32 %v5736, %v6113
        %v6154 = vadd.f32 %v5737, %v6116
        %v6155 = vadd.f32 %v5738, %v6121
        %v6156 = vadd.f32 %v5739, %v6124
        %v6157 = vadd.f32 %v5740, %v6129
        %v6158 = vadd.f32 %v5741, %v6132
        %v6159 = vld [vmem:[%s152 + $0x78] sm:$0xe]
        %v6160 = vld [vmem:[%s3195] sm:$0xf]
        %v6161 = vld [vmem:[%s3195 + $0x4] sm:$0xf]
        %v6162 = vld [vmem:[%s3195 + $0x8] sm:$0xf]
        %v6163 = vld [vmem:[%s3195 + $0xc] sm:$0xf]
        %v6164 = vld [vmem:[%s3195 + $0x10] sm:$0xf]
        %v6165 = vld [vmem:[%s3195 + $0x14] sm:$0xf]
        %v6166 = vld [vmem:[%s3195 + $0x18] sm:$0xf]
        %v6167 = vld [vmem:[%s3195 + $0x1c] sm:$0xf]
        %v6168 = vld [vmem:[%s3195 + $0x20] sm:$0xf]
        %v6169 = vld [vmem:[%s3195 + $0x24] sm:$0xf]
        %v6170 = vld [vmem:[%s3195 + $0x28] sm:$0xf]
        %v6171 = vld [vmem:[%s3195 + $0x2c] sm:$0xf]
        %v6172 = vld [vmem:[%s3195 + $0x30] sm:$0xf]
        %v6173 = vld [vmem:[%s3195 + $0x34] sm:$0xf]
        %v6174 = vld [vmem:[%s3195 + $0x38] sm:$0xf]
        %v6175 = vld [vmem:[%s3195 + $0x3c] sm:$0xf]
        %v6177 = vunpack.c.l.b16 %v6159
        %v6178 = vpack.c.b16 %v5809, %v6177
        %v6179 = vrot.slane %v6178, 1
        %v6180 = vrot.slane %v5834, 1
        %v6181 = vsel %vm1232, %v6179, %v6180
        %v6182 = vrot.slane %v5835, 1
        %v6183 = vsel %vm1232, %v6180, %v6182
        %v6184 = vrot.slane %v5836, 1
        %v6185 = vsel %vm1232, %v6182, %v6184
        %v6186 = vrot.slane %v5837, 1
        %v6187 = vsel %vm1232, %v6184, %v6186
        %v6188 = vrot.slane %v5838, 1
        %v6189 = vsel %vm1232, %v6186, %v6188
        %v6190 = vrot.slane %v5839, 1
        %v6191 = vsel %vm1232, %v6188, %v6190
        %v6192 = vrot.slane %v5840, 1
        %v6193 = vsel %vm1232, %v6190, %v6192
        %v6194 = vrot.slane %v5841, 1
        %v6195 = vsel %vm1232, %v6192, %v6194
        %v6196 = vrot.slane %v5842, 1
        %v6197 = vsel %vm1232, %v6194, %v6196
        %v6198 = vrot.slane %v5843, 1
        %v6199 = vsel %vm1232, %v6196, %v6198
        %v6200 = vrot.slane %v5844, 1
        %v6201 = vsel %vm1232, %v6198, %v6200
        %v6202 = vrot.slane %v5845, 1
        %v6203 = vsel %vm1232, %v6200, %v6202
        %v6232 = vunpack.c.l.b16 %v6160
        %v6233 = vunpack.c.l.b16 %v6161
        %v6234 = vunpack.c.l.b16 %v6162
        %v6235 = vunpack.c.l.b16 %v6163
        %v6236 = vunpack.c.l.b16 %v6164
        %v6237 = vunpack.c.l.b16 %v6165
        %v6238 = vunpack.c.l.b16 %v6166
        %v6239 = vunpack.c.l.b16 %v6167
        %v6240 = vunpack.c.l.b16 %v6168
        %v6241 = vunpack.c.l.b16 %v6169
        %v6242 = vunpack.c.l.b16 %v6170
        %v6243 = vunpack.c.l.b16 %v6171
        %v6244 = vunpack.c.l.b16 %v6172
        %v6245 = vunpack.c.l.b16 %v6173
        %v6246 = vunpack.c.l.b16 %v6174
        %v6247 = vunpack.c.l.b16 %v6175
        %v6248 = vpack.c.b16 %v6233, %v6232
        %v6249 = vpack.c.b16 %v6235, %v6234
        %v6250 = vpack.c.b16 %v6237, %v6236
        %v6251 = vpack.c.b16 %v6239, %v6238
        %v6252 = vpack.c.b16 %v6241, %v6240
        %v6253 = vpack.c.b16 %v6243, %v6242
        %v6254 = vpack.c.b16 %v6245, %v6244
        %v6255 = vpack.c.b16 %v6247, %v6246
        %6264 = vmatprep.subr.bf16.mxu0 0
        %6265 = vmatpush1.bf16.msra.mxu0 %v6255
        %6266 = vmatprep.subr.bf16.mxu0 0
        %6267 = vmatpush1.bf16.msra.mxu0 %v6254
        %6268 = vmatprep.subr.bf16.mxu0 0
        %6269 = vmatpush1.bf16.msra.mxu0 %v6253
        %6270 = vmatprep.subr.bf16.mxu0 0
        %6271 = vmatpush1.bf16.msra.mxu0 %v6252
        %6272 = vmatprep.subr.bf16.mxu0 0
        %6273 = vmatpush1.bf16.msra.mxu0 %v6251
        %6274 = vmatprep.subr.bf16.mxu0 0
        %6275 = vmatpush1.bf16.msra.mxu0 %v6250
        %6276 = vmatprep.subr.bf16.mxu0 0
        %6277 = vmatpush1.bf16.msra.mxu0 %v6249
        %6278 = vmatprep.subr.bf16.mxu0 0
        %6279 = vmatpush1.bf16.msra.mxu0 %v6248
        %6280 = vmatprep.subr.bf16.mxu0 0
        %6281 = vmatpush2.bf16.msra.mxu0 0
        %6282 = vmatprep.subr.bf16.mxu0 0
        %6283 = vmatpush2.bf16.msra.mxu0 0
        %6284 = vmatprep.subr.bf16.mxu0 0
        %6285 = vmatpush2.bf16.msra.mxu0 0
        %6286 = vmatprep.subr.bf16.mxu0 0
        %6287 = vmatpush2.bf16.msra.mxu0 0
        %6288 = vmatprep.subr.bf16.mxu0 0
        %6289 = vmatpush2.bf16.msra.mxu0 0
        %6290 = vmatprep.subr.bf16.mxu0 0
        %6291 = vmatpush2.bf16.msra.mxu0 0
        %6292 = vmatprep.subr.bf16.mxu0 0
        %6293 = vmatpush2.bf16.msra.mxu0 0
        %6294 = vmatprep.subr.bf16.mxu0 0
        %6295 = vmatpush2.bf16.msra.mxu0 0
        %6296 = vmatprep.mubr.bf16.mxu0 0
        %6297 = vmatmul.mubr.bf16.gmra.mxu0 %v6181
        %v6298 = vpop.f32.mrf.mxu0
        %v6299 = vadd.f32 0.0, %v6298
        %v6300 = vpop.f32.mrf.mxu0
        %v6301 = vpop.f32.mrf.mxu0
        %v6302 = vadd.f32 0.0, %v6301
        %v6303 = vpop.f32.mrf.mxu0
        %6304 = vmatprep.mubr.bf16.mxu0 0
        %6305 = vmatmul.mubr.bf16.gmra.mxu0 %v6183
        %v6306 = vpop.f32.mrf.mxu0
        %v6307 = vadd.f32 0.0, %v6306
        %v6308 = vpop.f32.mrf.mxu0
        %v6309 = vpop.f32.mrf.mxu0
        %v6310 = vadd.f32 0.0, %v6309
        %v6311 = vpop.f32.mrf.mxu0
        %6312 = vmatprep.mubr.bf16.mxu0 0
        %6313 = vmatmul.mubr.bf16.gmra.mxu0 %v6185
        %v6314 = vpop.f32.mrf.mxu0
        %v6315 = vadd.f32 0.0, %v6314
        %v6316 = vpop.f32.mrf.mxu0
        %v6317 = vpop.f32.mrf.mxu0
        %v6318 = vadd.f32 0.0, %v6317
        %v6319 = vpop.f32.mrf.mxu0
        %6320 = vmatprep.mubr.bf16.mxu0 0
        %6321 = vmatmul.mubr.bf16.gmra.mxu0 %v6187
        %v6322 = vpop.f32.mrf.mxu0
        %v6323 = vadd.f32 0.0, %v6322
        %v6324 = vpop.f32.mrf.mxu0
        %v6325 = vpop.f32.mrf.mxu0
        %v6326 = vadd.f32 0.0, %v6325
        %v6327 = vpop.f32.mrf.mxu0
        %6328 = vmatprep.mubr.bf16.mxu0 0
        %6329 = vmatmul.mubr.bf16.gmra.mxu0 %v6189
        %v6330 = vpop.f32.mrf.mxu0
        %v6331 = vadd.f32 0.0, %v6330
        %v6332 = vpop.f32.mrf.mxu0
        %v6333 = vpop.f32.mrf.mxu0
        %v6334 = vadd.f32 0.0, %v6333
        %v6335 = vpop.f32.mrf.mxu0
        %6336 = vmatprep.mubr.bf16.mxu0 0
        %6337 = vmatmul.mubr.bf16.gmra.mxu0 %v6191
        %v6338 = vpop.f32.mrf.mxu0
        %v6339 = vadd.f32 0.0, %v6338
        %v6340 = vpop.f32.mrf.mxu0
        %v6341 = vpop.f32.mrf.mxu0
        %v6342 = vadd.f32 0.0, %v6341
        %v6343 = vpop.f32.mrf.mxu0
        %6344 = vmatprep.mubr.bf16.mxu0 0
        %6345 = vmatmul.mubr.bf16.gmra.mxu0 %v6193
        %v6346 = vpop.f32.mrf.mxu0
        %v6347 = vadd.f32 0.0, %v6346
        %v6348 = vpop.f32.mrf.mxu0
        %v6349 = vpop.f32.mrf.mxu0
        %v6350 = vadd.f32 0.0, %v6349
        %v6351 = vpop.f32.mrf.mxu0
        %6352 = vmatprep.mubr.bf16.mxu0 0
        %6353 = vmatmul.mubr.bf16.gmra.mxu0 %v6195
        %v6354 = vpop.f32.mrf.mxu0
        %v6355 = vadd.f32 0.0, %v6354
        %v6356 = vpop.f32.mrf.mxu0
        %v6357 = vpop.f32.mrf.mxu0
        %v6358 = vadd.f32 0.0, %v6357
        %v6359 = vpop.f32.mrf.mxu0
        %6360 = vmatprep.mubr.bf16.mxu0 0
        %6361 = vmatmul.mubr.bf16.gmra.mxu0 %v6197
        %v6362 = vpop.f32.mrf.mxu0
        %v6363 = vadd.f32 0.0, %v6362
        %v6364 = vpop.f32.mrf.mxu0
        %v6365 = vpop.f32.mrf.mxu0
        %v6366 = vadd.f32 0.0, %v6365
        %v6367 = vpop.f32.mrf.mxu0
        %6368 = vmatprep.mubr.bf16.mxu0 0
        %6369 = vmatmul.mubr.bf16.gmra.mxu0 %v6199
        %v6370 = vpop.f32.mrf.mxu0
        %v6371 = vadd.f32 0.0, %v6370
        %v6372 = vpop.f32.mrf.mxu0
        %v6373 = vpop.f32.mrf.mxu0
        %v6374 = vadd.f32 0.0, %v6373
        %v6375 = vpop.f32.mrf.mxu0
        %6376 = vmatprep.mubr.bf16.mxu0 0
        %6377 = vmatmul.mubr.bf16.gmra.mxu0 %v6201
        %v6378 = vpop.f32.mrf.mxu0
        %v6379 = vadd.f32 0.0, %v6378
        %v6380 = vpop.f32.mrf.mxu0
        %v6381 = vpop.f32.mrf.mxu0
        %v6382 = vadd.f32 0.0, %v6381
        %v6383 = vpop.f32.mrf.mxu0
        %6384 = vmatprep.mubr.bf16.mxu0 0
        %6385 = vmatmul.mubr.bf16.gmra.mxu0 %v6203
        %v6386 = vpop.f32.mrf.mxu0
        %v6387 = vadd.f32 0.0, %v6386
        %v6388 = vpop.f32.mrf.mxu0
        %v6389 = vpop.f32.mrf.mxu0
        %v6390 = vadd.f32 0.0, %v6389
        %v6391 = vpop.f32.mrf.mxu0
        %6392 = vdwg.mxu0
        %v6393 = vadd.f32 %v6135, %v6299
        %v6394 = vadd.f32 %v6136, %v6302
        %v6395 = vadd.f32 %v6137, %v6307
        %v6396 = vadd.f32 %v6138, %v6310
        %v6397 = vadd.f32 %v6139, %v6315
        %v6398 = vadd.f32 %v6140, %v6318
        %v6399 = vadd.f32 %v6141, %v6323
        %v6400 = vadd.f32 %v6142, %v6326
        %v6401 = vadd.f32 %v6143, %v6331
        %v6402 = vadd.f32 %v6144, %v6334
        %v6403 = vadd.f32 %v6145, %v6339
        %v6404 = vadd.f32 %v6146, %v6342
        %v6405 = vadd.f32 %v6147, %v6347
        %v6406 = vadd.f32 %v6148, %v6350
        %v6407 = vadd.f32 %v6149, %v6355
        %v6408 = vadd.f32 %v6150, %v6358
        %v6409 = vadd.f32 %v6151, %v6363
        %v6410 = vadd.f32 %v6152, %v6366
        %v6411 = vadd.f32 %v6153, %v6371
        %v6412 = vadd.f32 %v6154, %v6374
        %v6413 = vadd.f32 %v6155, %v6379
        %v6414 = vadd.f32 %v6156, %v6382
        %v6415 = vadd.f32 %v6157, %v6387
        %v6416 = vadd.f32 %v6158, %v6390
        %v6417 = vsel %vm587, %v6393, 0.0
        %v6418 = vsel %vm588, %v6394, 0.0
        %v6419 = vsel %vm589, %v6395, 0.0
        %v6420 = vsel %vm590, %v6396, 0.0
        %v6421 = vsel %vm591, %v6397, 0.0
        %v6422 = vsel %vm592, %v6398, 0.0
        %v6423 = vsel %vm593, %v6399, 0.0
        %v6424 = vsel %vm594, %v6400, 0.0
        %v6425 = vsel %vm595, %v6401, 0.0
        %v6426 = vsel %vm596, %v6402, 0.0
        %v6427 = vsel %vm597, %v6403, 0.0
        %v6428 = vsel %vm598, %v6404, 0.0
        %v6429 = vsel %vm599, %v6405, 0.0
        %v6430 = vsel %vm600, %v6406, 0.0
        %v6431 = vsel %vm601, %v6407, 0.0
        %v6432 = vsel %vm602, %v6408, 0.0
        %v6433 = vsel %vm603, %v6409, 0.0
        %v6434 = vsel %vm604, %v6410, 0.0
        %v6435 = vsel %vm605, %v6411, 0.0
        %v6436 = vsel %vm606, %v6412, 0.0
        %v6437 = vsel %vm607, %v6413, 0.0
        %v6438 = vsel %vm608, %v6414, 0.0
        %v6439 = vsel %vm609, %v6415, 0.0
        %v6440 = vsel %vm610, %v6416, 0.0
        %v6441 = vadd.f32 %v6417, %v6418
        %v6442 = vadd.f32 %v6441, %v6419
        %v6443 = vadd.f32 %v6442, %v6420
        %v6444 = vadd.f32 %v6443, %v6421
        %v6445 = vadd.f32 %v6444, %v6422
        %v6446 = vadd.f32 %v6445, %v6423
        %v6447 = vadd.f32 %v6446, %v6424
        %v6448 = vadd.f32 %v6447, %v6425
        %v6449 = vadd.f32 %v6448, %v6426
        %v6450 = vadd.f32 %v6449, %v6427
        %v6451 = vadd.f32 %v6450, %v6428
        %v6452 = vadd.f32 %v6451, %v6429
        %v6453 = vadd.f32 %v6452, %v6430
        %v6454 = vadd.f32 %v6453, %v6431
        %v6455 = vadd.f32 %v6454, %v6432
        %v6456 = vadd.f32 %v6455, %v6433
        %v6457 = vadd.f32 %v6456, %v6434
        %v6458 = vadd.f32 %v6457, %v6435
        %v6459 = vadd.f32 %v6458, %v6436
        %v6460 = vadd.f32 %v6459, %v6437
        %v6461 = vadd.f32 %v6460, %v6438
        %v6462 = vadd.f32 %v6461, %v6439
        %v6463 = vadd.f32 %v6462, %v6440
        %v6464 = vrot.slane %v6463, 4
        %v6465 = vadd.f32 %v6463, %v6464
        %v6466 = vrot.slane %v6465, 2
        %v6467 = vadd.f32 %v6465, %v6466
        %v6468 = vrot.slane %v6467, 1
        %v6469 = vadd.f32 %v6467, %v6468
        %v6470 = vadd.f32 %v3506, %v6469
        %v6471 = vmul.f32 %v6417, %v6393
        %v6472 = vmul.f32 %v6418, %v6394
        %v6473 = vmul.f32 %v6419, %v6395
        %v6474 = vmul.f32 %v6420, %v6396
        %v6475 = vmul.f32 %v6421, %v6397
        %v6476 = vmul.f32 %v6422, %v6398
        %v6477 = vmul.f32 %v6423, %v6399
        %v6478 = vmul.f32 %v6424, %v6400
        %v6479 = vmul.f32 %v6425, %v6401
        %v6480 = vmul.f32 %v6426, %v6402
        %v6481 = vmul.f32 %v6427, %v6403
        %v6482 = vmul.f32 %v6428, %v6404
        %v6483 = vmul.f32 %v6429, %v6405
        %v6484 = vmul.f32 %v6430, %v6406
        %v6485 = vmul.f32 %v6431, %v6407
        %v6486 = vmul.f32 %v6432, %v6408
        %v6487 = vmul.f32 %v6433, %v6409
        %v6488 = vmul.f32 %v6434, %v6410
        %v6489 = vmul.f32 %v6435, %v6411
        %v6490 = vmul.f32 %v6436, %v6412
        %v6491 = vmul.f32 %v6437, %v6413
        %v6492 = vmul.f32 %v6438, %v6414
        %v6493 = vmul.f32 %v6439, %v6415
        %v6494 = vmul.f32 %v6440, %v6416
        %v6495 = vadd.f32 %v6471, %v6472
        %v6496 = vadd.f32 %v6495, %v6473
        %v6497 = vadd.f32 %v6496, %v6474
        %v6498 = vadd.f32 %v6497, %v6475
        %v6499 = vadd.f32 %v6498, %v6476
        %v6500 = vadd.f32 %v6499, %v6477
        %v6501 = vadd.f32 %v6500, %v6478
        %v6502 = vadd.f32 %v6501, %v6479
        %v6503 = vadd.f32 %v6502, %v6480
        %v6504 = vadd.f32 %v6503, %v6481
        %v6505 = vadd.f32 %v6504, %v6482
        %v6506 = vadd.f32 %v6505, %v6483
        %v6507 = vadd.f32 %v6506, %v6484
        %v6508 = vadd.f32 %v6507, %v6485
        %v6509 = vadd.f32 %v6508, %v6486
        %v6510 = vadd.f32 %v6509, %v6487
        %v6511 = vadd.f32 %v6510, %v6488
        %v6512 = vadd.f32 %v6511, %v6489
        %v6513 = vadd.f32 %v6512, %v6490
        %v6514 = vadd.f32 %v6513, %v6491
        %v6515 = vadd.f32 %v6514, %v6492
        %v6516 = vadd.f32 %v6515, %v6493
        %v6517 = vadd.f32 %v6516, %v6494
        %v6518 = vrot.slane %v6517, 4
        %v6519 = vadd.f32 %v6517, %v6518
        %v6520 = vrot.slane %v6519, 2
        %v6521 = vadd.f32 %v6519, %v6520
        %v6522 = vrot.slane %v6521, 1
        %v6523 = vadd.f32 %v6521, %v6522
        %v6524 = vadd.f32 %v3560, %v6523
        %6525 = vst [vmem:[%s176 + $0xc0] sm:$0xff] %v6393
        %6526 = vst [vmem:[%s176 + $0xc8] sm:$0xff] %v6394
        %6527 = vst [vmem:[%s176 + $0xd0] sm:$0xff] %v6395
        %6528 = vst [vmem:[%s176 + $0xd8] sm:$0xff] %v6396
        %6529 = vst [vmem:[%s176 + $0xe0] sm:$0xff] %v6397
        %6530 = vst [vmem:[%s176 + $0xe8] sm:$0xff] %v6398
        %6531 = vst [vmem:[%s176 + $0xf0] sm:$0xff] %v6399
        %6532 = vst [vmem:[%s176 + $0xf8] sm:$0xff] %v6400
        %6533 = vst [vmem:[%s176 + $0x100] sm:$0xff] %v6401
        %6534 = vst [vmem:[%s176 + $0x108] sm:$0xff] %v6402
        %6535 = vst [vmem:[%s176 + $0x110] sm:$0xff] %v6403
        %6536 = vst [vmem:[%s176 + $0x118] sm:$0xff] %v6404
        %6537 = vst [vmem:[%s176 + $0x120] sm:$0xff] %v6405
        %6538 = vst [vmem:[%s176 + $0x128] sm:$0xff] %v6406
        %6539 = vst [vmem:[%s176 + $0x130] sm:$0xff] %v6407
        %6540 = vst [vmem:[%s176 + $0x138] sm:$0xff] %v6408
        %6541 = vst [vmem:[%s176 + $0x140] sm:$0xff] %v6409
        %6542 = vst [vmem:[%s176 + $0x148] sm:$0xff] %v6410
        %6543 = vst [vmem:[%s176 + $0x150] sm:$0xff] %v6411
        %6544 = vst [vmem:[%s176 + $0x158] sm:$0xff] %v6412
        %6545 = vst [vmem:[%s176 + $0x160] sm:$0xff] %v6413
        %6546 = vst [vmem:[%s176 + $0x168] sm:$0xff] %v6414
        %6547 = vst [vmem:[%s176 + $0x170] sm:$0xff] %v6415
        %6548 = vst [vmem:[%s176 + $0x178] sm:$0xff] %v6416
        %v6549 = vmul.f32 %v6470, 0.00390625
        %v6550 = vmul.f32 %v6524, 0.00390625
        %v6551 = vmul.f32 %v6549, %v6549
        %v6552 = vsub.f32 %v6550, %v6551
        %v6553 = vmax.f32 %v6552, 0.0
        %v6554 = vadd.f32 %v6553, 1e-05
        %v6555 = vrsqrt.pop %v6554
        %v6556 = vld [vmem:[%s176] sm:$0xff]
        %v6557 = vld [vmem:[%s176 + $0x8] sm:$0xff]
        %v6558 = vld [vmem:[%s176 + $0x10] sm:$0xff]
        %v6559 = vld [vmem:[%s176 + $0x18] sm:$0xff]
        %v6560 = vld [vmem:[%s176 + $0x20] sm:$0xff]
        %v6561 = vld [vmem:[%s176 + $0x28] sm:$0xff]
        %v6562 = vld [vmem:[%s176 + $0x30] sm:$0xff]
        %v6563 = vld [vmem:[%s176 + $0x38] sm:$0xff]
        %v6564 = vld [vmem:[%s176 + $0x40] sm:$0xff]
        %v6565 = vld [vmem:[%s176 + $0x48] sm:$0xff]
        %v6566 = vld [vmem:[%s176 + $0x50] sm:$0xff]
        %v6567 = vld [vmem:[%s176 + $0x58] sm:$0xff]
        %v6568 = vld [vmem:[%s176 + $0x60] sm:$0xff]
        %v6569 = vld [vmem:[%s176 + $0x68] sm:$0xff]
        %v6570 = vld [vmem:[%s176 + $0x70] sm:$0xff]
        %v6571 = vld [vmem:[%s176 + $0x78] sm:$0xff]
        %v6572 = vld [vmem:[%s176 + $0x80] sm:$0xff]
        %v6573 = vld [vmem:[%s176 + $0x88] sm:$0xff]
        %v6574 = vld [vmem:[%s176 + $0x90] sm:$0xff]
        %v6575 = vld [vmem:[%s176 + $0x98] sm:$0xff]
        %v6576 = vld [vmem:[%s176 + $0xa0] sm:$0xff]
        %v6577 = vld [vmem:[%s176 + $0xa8] sm:$0xff]
        %v6578 = vld [vmem:[%s176 + $0xb0] sm:$0xff]
        %v6579 = vld [vmem:[%s176 + $0xb8] sm:$0xff]
        %v6580 = vld [vmem:[%s152 + $0xc] sm:$0xf]
        %v6581 = vld [vmem:[%s152 + $0x10] sm:$0xf]
        %v6582 = vld [vmem:[%s152 + $0x14] sm:$0xf]
        %v6583 = vld [vmem:[%s152 + $0x18] sm:$0xf]
        %v6584 = vld [vmem:[%s152 + $0x1c] sm:$0xf]
        %v6585 = vld [vmem:[%s152 + $0x20] sm:$0xf]
        %v6586 = vld [vmem:[%s152 + $0x24] sm:$0xf]
        %v6587 = vld [vmem:[%s152 + $0x28] sm:$0xf]
        %v6588 = vld [vmem:[%s152 + $0x2c] sm:$0xf]
        %v6589 = vld [vmem:[%s152 + $0x30] sm:$0xf]
        %v6590 = vld [vmem:[%s152 + $0x34] sm:$0xf]
        %v6591 = vld [vmem:[%s152 + $0x38] sm:$0xf]
        %v6592 = vld [vmem:[%s152 + $0x3c] sm:$0xf]
        %v6593 = vld [vmem:[%s152 + $0x40] sm:$0xf]
        %v6594 = vld [vmem:[%s152 + $0x44] sm:$0xf]
        %v6595 = vld [vmem:[%s152 + $0x48] sm:$0xf]
        %v6596 = vld [vmem:[%s152 + $0x4c] sm:$0xf]
        %v6597 = vld [vmem:[%s152 + $0x50] sm:$0xf]
        %v6598 = vld [vmem:[%s152 + $0x54] sm:$0xf]
        %v6599 = vld [vmem:[%s152 + $0x58] sm:$0xf]
        %v6600 = vld [vmem:[%s152 + $0x5c] sm:$0xf]
        %v6601 = vld [vmem:[%s152 + $0x60] sm:$0xf]
        %v6602 = vld [vmem:[%s152 + $0x64] sm:$0xf]
        %v6603 = vld [vmem:[%s152 + $0x68] sm:$0xf]
        %v6604 = vld [vmem:[%s152 + $0x6c] sm:$0x1]
        %v6605 = vunpack.c.l.bf16 %v6580
        %v6606 = vunpack.c.l.bf16 %v6581
        %v6607 = vunpack.c.l.bf16 %v6582
        %v6608 = vunpack.c.l.bf16 %v6583
        %v6609 = vunpack.c.l.bf16 %v6584
        %v6610 = vunpack.c.l.bf16 %v6585
        %v6611 = vunpack.c.l.bf16 %v6586
        %v6612 = vunpack.c.l.bf16 %v6587
        %v6613 = vunpack.c.l.bf16 %v6588
        %v6614 = vunpack.c.l.bf16 %v6589
        %v6615 = vunpack.c.l.bf16 %v6590
        %v6616 = vunpack.c.l.bf16 %v6591
        %v6617 = vunpack.c.l.bf16 %v6592
        %v6618 = vunpack.c.l.bf16 %v6593
        %v6619 = vunpack.c.l.bf16 %v6594
        %v6620 = vunpack.c.l.bf16 %v6595
        %v6621 = vunpack.c.l.bf16 %v6596
        %v6622 = vunpack.c.l.bf16 %v6597
        %v6623 = vunpack.c.l.bf16 %v6598
        %v6624 = vunpack.c.l.bf16 %v6599
        %v6625 = vunpack.c.l.bf16 %v6600
        %v6626 = vunpack.c.l.bf16 %v6601
        %v6627 = vunpack.c.l.bf16 %v6602
        %v6628 = vunpack.c.l.bf16 %v6603
        %v6629 = vunpack.c.l.bf16 %v6604
        %v6630 = vsub.f32 %v6556, %v6549
        %v6631 = vsub.f32 %v6557, %v6549
        %v6632 = vsub.f32 %v6558, %v6549
        %v6633 = vsub.f32 %v6559, %v6549
        %v6634 = vsub.f32 %v6560, %v6549
        %v6635 = vsub.f32 %v6561, %v6549
        %v6636 = vsub.f32 %v6562, %v6549
        %v6637 = vsub.f32 %v6563, %v6549
        %v6638 = vsub.f32 %v6564, %v6549
        %v6639 = vsub.f32 %v6565, %v6549
        %v6640 = vsub.f32 %v6566, %v6549
        %v6641 = vsub.f32 %v6567, %v6549
        %v6642 = vsub.f32 %v6568, %v6549
        %v6643 = vsub.f32 %v6569, %v6549
        %v6644 = vsub.f32 %v6570, %v6549
        %v6645 = vsub.f32 %v6571, %v6549
        %v6646 = vsub.f32 %v6572, %v6549
        %v6647 = vsub.f32 %v6573, %v6549
        %v6648 = vsub.f32 %v6574, %v6549
        %v6649 = vsub.f32 %v6575, %v6549
        %v6650 = vsub.f32 %v6576, %v6549
        %v6651 = vsub.f32 %v6577, %v6549
        %v6652 = vsub.f32 %v6578, %v6549
        %v6653 = vsub.f32 %v6579, %v6549
        %v6654 = vmul.f32 %v6630, %v6555
        %v6655 = vmul.f32 %v6631, %v6555
        %v6656 = vmul.f32 %v6632, %v6555
        %v6657 = vmul.f32 %v6633, %v6555
        %v6658 = vmul.f32 %v6634, %v6555
        %v6659 = vmul.f32 %v6635, %v6555
        %v6660 = vmul.f32 %v6636, %v6555
        %v6661 = vmul.f32 %v6637, %v6555
        %v6662 = vmul.f32 %v6638, %v6555
        %v6663 = vmul.f32 %v6639, %v6555
        %v6664 = vmul.f32 %v6640, %v6555
        %v6665 = vmul.f32 %v6641, %v6555
        %v6666 = vmul.f32 %v6642, %v6555
        %v6667 = vmul.f32 %v6643, %v6555
        %v6668 = vmul.f32 %v6644, %v6555
        %v6669 = vmul.f32 %v6645, %v6555
        %v6670 = vmul.f32 %v6646, %v6555
        %v6671 = vmul.f32 %v6647, %v6555
        %v6672 = vmul.f32 %v6648, %v6555
        %v6673 = vmul.f32 %v6649, %v6555
        %v6674 = vmul.f32 %v6650, %v6555
        %v6675 = vmul.f32 %v6651, %v6555
        %v6676 = vmul.f32 %v6652, %v6555
        %v6677 = vmul.f32 %v6653, %v6555
        %vm6702 = vcmask 1040384
        %v6703 = vrot.slane %v6654, 7
        %v6704 = vrot.slane %v6655, 7
        %v6705 = vsel %vm6702, %v6703, %v6704
        %v6706 = vrot.slane %v6656, 7
        %v6707 = vsel %vm6702, %v6704, %v6706
        %v6708 = vrot.slane %v6657, 7
        %v6709 = vsel %vm6702, %v6706, %v6708
        %v6710 = vrot.slane %v6658, 7
        %v6711 = vsel %vm6702, %v6708, %v6710
        %v6712 = vrot.slane %v6659, 7
        %v6713 = vsel %vm6702, %v6710, %v6712
        %v6714 = vrot.slane %v6660, 7
        %v6715 = vsel %vm6702, %v6712, %v6714
        %v6716 = vrot.slane %v6661, 7
        %v6717 = vsel %vm6702, %v6714, %v6716
        %v6718 = vrot.slane %v6662, 7
        %v6719 = vsel %vm6702, %v6716, %v6718
        %v6720 = vrot.slane %v6663, 7
        %v6721 = vsel %vm6702, %v6718, %v6720
        %v6722 = vrot.slane %v6664, 7
        %v6723 = vsel %vm6702, %v6720, %v6722
        %v6724 = vrot.slane %v6665, 7
        %v6725 = vsel %vm6702, %v6722, %v6724
        %v6726 = vrot.slane %v6666, 7
        %v6727 = vsel %vm6702, %v6724, %v6726
        %v6728 = vrot.slane %v6667, 7
        %v6729 = vsel %vm6702, %v6726, %v6728
        %v6730 = vrot.slane %v6668, 7
        %v6731 = vsel %vm6702, %v6728, %v6730
        %v6732 = vrot.slane %v6669, 7
        %v6733 = vsel %vm6702, %v6730, %v6732
        %v6734 = vrot.slane %v6670, 7
        %v6735 = vsel %vm6702, %v6732, %v6734
        %v6736 = vrot.slane %v6671, 7
        %v6737 = vsel %vm6702, %v6734, %v6736
        %v6738 = vrot.slane %v6672, 7
        %v6739 = vsel %vm6702, %v6736, %v6738
        %v6740 = vrot.slane %v6673, 7
        %v6741 = vsel %vm6702, %v6738, %v6740
        %v6742 = vrot.slane %v6674, 7
        %v6743 = vsel %vm6702, %v6740, %v6742
        %v6744 = vrot.slane %v6675, 7
        %v6745 = vsel %vm6702, %v6742, %v6744
        %v6746 = vrot.slane %v6676, 7
        %v6747 = vsel %vm6702, %v6744, %v6746
        %v6748 = vrot.slane %v6677, 7
        %v6749 = vsel %vm6702, %v6746, %v6748
        %v6775 = vadd.f32 %v6605, %v6703
        %v6776 = vadd.f32 %v6606, %v6705
        %v6777 = vadd.f32 %v6607, %v6707
        %v6778 = vadd.f32 %v6608, %v6709
        %v6779 = vadd.f32 %v6609, %v6711
        %v6780 = vadd.f32 %v6610, %v6713
        %v6781 = vadd.f32 %v6611, %v6715
        %v6782 = vadd.f32 %v6612, %v6717
        %v6783 = vadd.f32 %v6613, %v6719
        %v6784 = vadd.f32 %v6614, %v6721
        %v6785 = vadd.f32 %v6615, %v6723
        %v6786 = vadd.f32 %v6616, %v6725
        %v6787 = vadd.f32 %v6617, %v6727
        %v6788 = vadd.f32 %v6618, %v6729
        %v6789 = vadd.f32 %v6619, %v6731
        %v6790 = vadd.f32 %v6620, %v6733
        %v6791 = vadd.f32 %v6621, %v6735
        %v6792 = vadd.f32 %v6622, %v6737
        %v6793 = vadd.f32 %v6623, %v6739
        %v6794 = vadd.f32 %v6624, %v6741
        %v6795 = vadd.f32 %v6625, %v6743
        %v6796 = vadd.f32 %v6626, %v6745
        %v6797 = vadd.f32 %v6627, %v6747
        %v6798 = vadd.f32 %v6628, %v6749
        %v6799 = vadd.f32 %v6629, %v6748
        %6800 = vst [vmem:[%s176 - $0x1] sm:$0xfe] %v6775
        %6801 = vst [vmem:[%s176 + $0x7] sm:$0xff] %v6776
        %6802 = vst [vmem:[%s176 + $0xf] sm:$0xff] %v6777
        %6803 = vst [vmem:[%s176 + $0x17] sm:$0xff] %v6778
        %6804 = vst [vmem:[%s176 + $0x1f] sm:$0xff] %v6779
        %6805 = vst [vmem:[%s176 + $0x27] sm:$0xff] %v6780
        %6806 = vst [vmem:[%s176 + $0x2f] sm:$0xff] %v6781
        %6807 = vst [vmem:[%s176 + $0x37] sm:$0xff] %v6782
        %6808 = vst [vmem:[%s176 + $0x3f] sm:$0xff] %v6783
        %6809 = vst [vmem:[%s176 + $0x47] sm:$0xff] %v6784
        %6810 = vst [vmem:[%s176 + $0x4f] sm:$0xff] %v6785
        %6811 = vst [vmem:[%s176 + $0x57] sm:$0xff] %v6786
        %6812 = vst [vmem:[%s176 + $0x5f] sm:$0xff] %v6787
        %6813 = vst [vmem:[%s176 + $0x67] sm:$0xff] %v6788
        %6814 = vst [vmem:[%s176 + $0x6f] sm:$0xff] %v6789
        %6815 = vst [vmem:[%s176 + $0x77] sm:$0xff] %v6790
        %6816 = vst [vmem:[%s176 + $0x7f] sm:$0xff] %v6791
        %6817 = vst [vmem:[%s176 + $0x87] sm:$0xff] %v6792
        %6818 = vst [vmem:[%s176 + $0x8f] sm:$0xff] %v6793
        %6819 = vst [vmem:[%s176 + $0x97] sm:$0xff] %v6794
        %6820 = vst [vmem:[%s176 + $0x9f] sm:$0xff] %v6795
        %6821 = vst [vmem:[%s176 + $0xa7] sm:$0xff] %v6796
        %6822 = vst [vmem:[%s176 + $0xaf] sm:$0xff] %v6797
        %6823 = vst [vmem:[%s176 + $0xb7] sm:$0xff] %v6798
        %6824 = vst [vmem:[%s176 + $0xbf] sm:$0x1] %v6799
        %v6825 = vld [vmem:[%s176 + $0xc0] sm:$0xff]
        %v6826 = vld [vmem:[%s176 + $0xc8] sm:$0xff]
        %v6827 = vld [vmem:[%s176 + $0xd0] sm:$0xff]
        %v6828 = vld [vmem:[%s176 + $0xd8] sm:$0xff]
        %v6829 = vld [vmem:[%s176 + $0xe0] sm:$0xff]
        %v6830 = vld [vmem:[%s176 + $0xe8] sm:$0xff]
        %v6831 = vld [vmem:[%s176 + $0xf0] sm:$0xff]
        %v6832 = vld [vmem:[%s176 + $0xf8] sm:$0xff]
        %v6833 = vld [vmem:[%s176 + $0x100] sm:$0xff]
        %v6834 = vld [vmem:[%s176 + $0x108] sm:$0xff]
        %v6835 = vld [vmem:[%s176 + $0x110] sm:$0xff]
        %v6836 = vld [vmem:[%s176 + $0x118] sm:$0xff]
        %v6837 = vld [vmem:[%s176 + $0x120] sm:$0xff]
        %v6838 = vld [vmem:[%s176 + $0x128] sm:$0xff]
        %v6839 = vld [vmem:[%s176 + $0x130] sm:$0xff]
        %v6840 = vld [vmem:[%s176 + $0x138] sm:$0xff]
        %v6841 = vld [vmem:[%s176 + $0x140] sm:$0xff]
        %v6842 = vld [vmem:[%s176 + $0x148] sm:$0xff]
        %v6843 = vld [vmem:[%s176 + $0x150] sm:$0xff]
        %v6844 = vld [vmem:[%s176 + $0x158] sm:$0xff]
        %v6845 = vld [vmem:[%s176 + $0x160] sm:$0xff]
        %v6846 = vld [vmem:[%s176 + $0x168] sm:$0xff]
        %v6847 = vld [vmem:[%s176 + $0x170] sm:$0xff]
        %v6848 = vld [vmem:[%s176 + $0x178] sm:$0xff]
        %v6849 = vld [vmem:[%s152 + $0x6c] sm:$0xf]
        %v6850 = vld [vmem:[%s152 + $0x70] sm:$0xf]
        %v6851 = vld [vmem:[%s152 + $0x74] sm:$0xf]
        %v6852 = vld [vmem:[%s152 + $0x78] sm:$0xf]
        %v6853 = vld [vmem:[%s152 + $0x7c] sm:$0xf]
        %v6854 = vld [vmem:[%s152 + $0x80] sm:$0xf]
        %v6855 = vld [vmem:[%s152 + $0x84] sm:$0xf]
        %v6856 = vld [vmem:[%s152 + $0x88] sm:$0xf]
        %v6857 = vld [vmem:[%s152 + $0x8c] sm:$0xf]
        %v6858 = vld [vmem:[%s152 + $0x90] sm:$0xf]
        %v6859 = vld [vmem:[%s152 + $0x94] sm:$0xf]
        %v6860 = vld [vmem:[%s152 + $0x98] sm:$0xf]
        %v6861 = vld [vmem:[%s152 + $0x9c] sm:$0xf]
        %v6862 = vld [vmem:[%s152 + $0xa0] sm:$0xf]
        %v6863 = vld [vmem:[%s152 + $0xa4] sm:$0xf]
        %v6864 = vld [vmem:[%s152 + $0xa8] sm:$0xf]
        %v6865 = vld [vmem:[%s152 + $0xac] sm:$0xf]
        %v6866 = vld [vmem:[%s152 + $0xb0] sm:$0xf]
        %v6867 = vld [vmem:[%s152 + $0xb4] sm:$0xf]
        %v6868 = vld [vmem:[%s152 + $0xb8] sm:$0xf]
        %v6869 = vld [vmem:[%s152 + $0xbc] sm:$0xf]
        %v6870 = vld [vmem:[%s152 + $0xc0] sm:$0xf]
        %v6871 = vld [vmem:[%s152 + $0xc4] sm:$0xf]
        %v6872 = vld [vmem:[%s152 + $0xc8] sm:$0xf]
        %v6873 = vld [vmem:[%s152 + $0xcc] sm:$0x1]
        %v6874 = vunpack.c.l.bf16 %v6849
        %v6875 = vunpack.c.l.bf16 %v6850
        %v6876 = vunpack.c.l.bf16 %v6851
        %v6877 = vunpack.c.l.bf16 %v6852
        %v6878 = vunpack.c.l.bf16 %v6853
        %v6879 = vunpack.c.l.bf16 %v6854
        %v6880 = vunpack.c.l.bf16 %v6855
        %v6881 = vunpack.c.l.bf16 %v6856
        %v6882 = vunpack.c.l.bf16 %v6857
        %v6883 = vunpack.c.l.bf16 %v6858
        %v6884 = vunpack.c.l.bf16 %v6859
        %v6885 = vunpack.c.l.bf16 %v6860
        %v6886 = vunpack.c.l.bf16 %v6861
        %v6887 = vunpack.c.l.bf16 %v6862
        %v6888 = vunpack.c.l.bf16 %v6863
        %v6889 = vunpack.c.l.bf16 %v6864
        %v6890 = vunpack.c.l.bf16 %v6865
        %v6891 = vunpack.c.l.bf16 %v6866
        %v6892 = vunpack.c.l.bf16 %v6867
        %v6893 = vunpack.c.l.bf16 %v6868
        %v6894 = vunpack.c.l.bf16 %v6869
        %v6895 = vunpack.c.l.bf16 %v6870
        %v6896 = vunpack.c.l.bf16 %v6871
        %v6897 = vunpack.c.l.bf16 %v6872
        %v6898 = vunpack.c.l.bf16 %v6873
        %v6899 = vsub.f32 %v6825, %v6549
        %v6900 = vsub.f32 %v6826, %v6549
        %v6901 = vsub.f32 %v6827, %v6549
        %v6902 = vsub.f32 %v6828, %v6549
        %v6903 = vsub.f32 %v6829, %v6549
        %v6904 = vsub.f32 %v6830, %v6549
        %v6905 = vsub.f32 %v6831, %v6549
        %v6906 = vsub.f32 %v6832, %v6549
        %v6907 = vsub.f32 %v6833, %v6549
        %v6908 = vsub.f32 %v6834, %v6549
        %v6909 = vsub.f32 %v6835, %v6549
        %v6910 = vsub.f32 %v6836, %v6549
        %v6911 = vsub.f32 %v6837, %v6549
        %v6912 = vsub.f32 %v6838, %v6549
        %v6913 = vsub.f32 %v6839, %v6549
        %v6914 = vsub.f32 %v6840, %v6549
        %v6915 = vsub.f32 %v6841, %v6549
        %v6916 = vsub.f32 %v6842, %v6549
        %v6917 = vsub.f32 %v6843, %v6549
        %v6918 = vsub.f32 %v6844, %v6549
        %v6919 = vsub.f32 %v6845, %v6549
        %v6920 = vsub.f32 %v6846, %v6549
        %v6921 = vsub.f32 %v6847, %v6549
        %v6922 = vsub.f32 %v6848, %v6549
        %v6923 = vmul.f32 %v6899, %v6555
        %v6924 = vmul.f32 %v6900, %v6555
        %v6925 = vmul.f32 %v6901, %v6555
        %v6926 = vmul.f32 %v6902, %v6555
        %v6927 = vmul.f32 %v6903, %v6555
        %v6928 = vmul.f32 %v6904, %v6555
        %v6929 = vmul.f32 %v6905, %v6555
        %v6930 = vmul.f32 %v6906, %v6555
        %v6931 = vmul.f32 %v6907, %v6555
        %v6932 = vmul.f32 %v6908, %v6555
        %v6933 = vmul.f32 %v6909, %v6555
        %v6934 = vmul.f32 %v6910, %v6555
        %v6935 = vmul.f32 %v6911, %v6555
        %v6936 = vmul.f32 %v6912, %v6555
        %v6937 = vmul.f32 %v6913, %v6555
        %v6938 = vmul.f32 %v6914, %v6555
        %v6939 = vmul.f32 %v6915, %v6555
        %v6940 = vmul.f32 %v6916, %v6555
        %v6941 = vmul.f32 %v6917, %v6555
        %v6942 = vmul.f32 %v6918, %v6555
        %v6943 = vmul.f32 %v6919, %v6555
        %v6944 = vmul.f32 %v6920, %v6555
        %v6945 = vmul.f32 %v6921, %v6555
        %v6946 = vmul.f32 %v6922, %v6555
        %v6971 = vrot.slane %v6923, 7
        %v6972 = vrot.slane %v6924, 7
        %v6973 = vsel %vm6702, %v6971, %v6972
        %v6974 = vrot.slane %v6925, 7
        %v6975 = vsel %vm6702, %v6972, %v6974
        %v6976 = vrot.slane %v6926, 7
        %v6977 = vsel %vm6702, %v6974, %v6976
        %v6978 = vrot.slane %v6927, 7
        %v6979 = vsel %vm6702, %v6976, %v6978
        %v6980 = vrot.slane %v6928, 7
        %v6981 = vsel %vm6702, %v6978, %v6980
        %v6982 = vrot.slane %v6929, 7
        %v6983 = vsel %vm6702, %v6980, %v6982
        %v6984 = vrot.slane %v6930, 7
        %v6985 = vsel %vm6702, %v6982, %v6984
        %v6986 = vrot.slane %v6931, 7
        %v6987 = vsel %vm6702, %v6984, %v6986
        %v6988 = vrot.slane %v6932, 7
        %v6989 = vsel %vm6702, %v6986, %v6988
        %v6990 = vrot.slane %v6933, 7
        %v6991 = vsel %vm6702, %v6988, %v6990
        %v6992 = vrot.slane %v6934, 7
        %v6993 = vsel %vm6702, %v6990, %v6992
        %v6994 = vrot.slane %v6935, 7
        %v6995 = vsel %vm6702, %v6992, %v6994
        %v6996 = vrot.slane %v6936, 7
        %v6997 = vsel %vm6702, %v6994, %v6996
        %v6998 = vrot.slane %v6937, 7
        %v6999 = vsel %vm6702, %v6996, %v6998
        %v7000 = vrot.slane %v6938, 7
        %v7001 = vsel %vm6702, %v6998, %v7000
        %v7002 = vrot.slane %v6939, 7
        %v7003 = vsel %vm6702, %v7000, %v7002
        %v7004 = vrot.slane %v6940, 7
        %v7005 = vsel %vm6702, %v7002, %v7004
        %v7006 = vrot.slane %v6941, 7
        %v7007 = vsel %vm6702, %v7004, %v7006
        %v7008 = vrot.slane %v6942, 7
        %v7009 = vsel %vm6702, %v7006, %v7008
        %v7010 = vrot.slane %v6943, 7
        %v7011 = vsel %vm6702, %v7008, %v7010
        %v7012 = vrot.slane %v6944, 7
        %v7013 = vsel %vm6702, %v7010, %v7012
        %v7014 = vrot.slane %v6945, 7
        %v7015 = vsel %vm6702, %v7012, %v7014
        %v7016 = vrot.slane %v6946, 7
        %v7017 = vsel %vm6702, %v7014, %v7016
        %v7043 = vadd.f32 %v6874, %v6971
        %v7044 = vadd.f32 %v6875, %v6973
        %v7045 = vadd.f32 %v6876, %v6975
        %v7046 = vadd.f32 %v6877, %v6977
        %v7047 = vadd.f32 %v6878, %v6979
        %v7048 = vadd.f32 %v6879, %v6981
        %v7049 = vadd.f32 %v6880, %v6983
        %v7050 = vadd.f32 %v6881, %v6985
        %v7051 = vadd.f32 %v6882, %v6987
        %v7052 = vadd.f32 %v6883, %v6989
        %v7053 = vadd.f32 %v6884, %v6991
        %v7054 = vadd.f32 %v6885, %v6993
        %v7055 = vadd.f32 %v6886, %v6995
        %v7056 = vadd.f32 %v6887, %v6997
        %v7057 = vadd.f32 %v6888, %v6999
        %v7058 = vadd.f32 %v6889, %v7001
        %v7059 = vadd.f32 %v6890, %v7003
        %v7060 = vadd.f32 %v6891, %v7005
        %v7061 = vadd.f32 %v6892, %v7007
        %v7062 = vadd.f32 %v6893, %v7009
        %v7063 = vadd.f32 %v6894, %v7011
        %v7064 = vadd.f32 %v6895, %v7013
        %v7065 = vadd.f32 %v6896, %v7015
        %v7066 = vadd.f32 %v6897, %v7017
        %v7067 = vadd.f32 %v6898, %v7016
        %7068 = vst [vmem:[%s176 + $0xbf] sm:$0xfe] %v7043
        %7069 = vst [vmem:[%s176 + $0xc7] sm:$0xff] %v7044
        %7070 = vst [vmem:[%s176 + $0xcf] sm:$0xff] %v7045
        %7071 = vst [vmem:[%s176 + $0xd7] sm:$0xff] %v7046
        %7072 = vst [vmem:[%s176 + $0xdf] sm:$0xff] %v7047
        %7073 = vst [vmem:[%s176 + $0xe7] sm:$0xff] %v7048
        %7074 = vst [vmem:[%s176 + $0xef] sm:$0xff] %v7049
        %7075 = vst [vmem:[%s176 + $0xf7] sm:$0xff] %v7050
        %7076 = vst [vmem:[%s176 + $0xff] sm:$0xff] %v7051
        %7077 = vst [vmem:[%s176 + $0x107] sm:$0xff] %v7052
        %7078 = vst [vmem:[%s176 + $0x10f] sm:$0xff] %v7053
        %7079 = vst [vmem:[%s176 + $0x117] sm:$0xff] %v7054
        %7080 = vst [vmem:[%s176 + $0x11f] sm:$0xff] %v7055
        %7081 = vst [vmem:[%s176 + $0x127] sm:$0xff] %v7056
        %7082 = vst [vmem:[%s176 + $0x12f] sm:$0xff] %v7057
        %7083 = vst [vmem:[%s176 + $0x137] sm:$0xff] %v7058
        %7084 = vst [vmem:[%s176 + $0x13f] sm:$0xff] %v7059
        %7085 = vst [vmem:[%s176 + $0x147] sm:$0xff] %v7060
        %7086 = vst [vmem:[%s176 + $0x14f] sm:$0xff] %v7061
        %7087 = vst [vmem:[%s176 + $0x157] sm:$0xff] %v7062
        %7088 = vst [vmem:[%s176 + $0x15f] sm:$0xff] %v7063
        %7089 = vst [vmem:[%s176 + $0x167] sm:$0xff] %v7064
        %7090 = vst [vmem:[%s176 + $0x16f] sm:$0xff] %v7065
        %7091 = vst [vmem:[%s176 + $0x177] sm:$0xff] %v7066
        %7092 = vst [vmem:[%s176 + $0x17f] sm:$0x1] %v7067
        %s7093 = sand.u32 %s75, 1
        %s7094 = scalar_lea.sflag [#allocation4], %s7093
        %s7095 = sand.u32 %s75, 1
        %s7096 = smul.addr %s7095, 384
        %s7097 = scalar_lea.vmem [#allocation7], %s7096
        // Predicated region
        $region37: #{tpu_custom_call.1} parent=27 // pred_check
          %p7098 = pneg %p85
        $region38: #{tpu_custom_call.1} parent=27 // pred_check_branch
          %7100 = sbr.rel (%p7098) target = $region40
        $region39: #{tpu_custom_call.1} parent=27 // pred_region
          %s7102 = ssub.s32 6144, 6144
          %7103 = vsyncadd %s7094, %s7102
          %s7104 = smul.addr %s20, 48
          %s7105 = smul.addr %s7104, 128
          %s7106 = scalar_lea.hbm %s2, %s7105
          %s7107 = sshll.u32 %s7097, 4
          %s7108 = int_to_ptr.vmem [resolvable:$true] %s7107
          %7113 = dma.vmem_to_hbm [thread:$0]  %s7108, 6144, %s7106, %s7094, 128, 128, 8
        $region40: #{tpu_custom_call.1} parent=27 // pred_fallthru
          _
      $region28: #{tpu_custom_call.1} parent=5 // pred_fallthru
        _
      %p7114 = scmp.le.s32.totalorder 2, %s15
      // Predicated region
      $region41: #{tpu_custom_call.1} parent=5 // pred_check
        %p7115 = pneg %p7114
      $region42: #{tpu_custom_call.1} parent=5 // pred_check_branch
        %7117 = sbr.rel (%p7115) target = $region44
      $region43: #{tpu_custom_call.1} parent=5 // pred_region
        %s7118 = ssub.s32 %s15, 2
        // Predicated region
        $region45: #{tpu_custom_call.1} parent=43 // pred_check
          %p7119 = pneg %p91
        $region46: #{tpu_custom_call.1} parent=43 // pred_check_branch
          %7121 = sbr.rel (%p7119) target = $region48
        $region47: #{tpu_custom_call.1} parent=43 // pred_region
          %s7122 = sand.u32 %s76, 1
          %s7123 = scalar_lea.sflag [#allocation4], %s7122
          %s7124 = sand.u32 %s76, 1
          %s7125 = smul.addr %s7124, 384
          %s7126 = scalar_lea.vmem [#allocation7], %s7125
          %7127 = dma.done %s7123, 6144
        $region48: #{tpu_custom_call.1} parent=43 // pred_fallthru
          _
      $region44: #{tpu_custom_call.1} parent=5 // pred_fallthru
        _
    $region6: #{tpu_custom_call.1} parent=1 // loop_footer
      %s19 = sadd.s32 1, %s15
    $region7: #{tpu_custom_call.1} parent=1 // loop_footer_branch
      %14 = sbr.rel target = $region3
    $region8: #{tpu_custom_call.1} parent=1 // loop_exit
      _
    %7128 = vsyncpa [#allocation3], 1
    %s7129 = scalar_lea.sflag [#allocation3], 1
    %7130 = vsyncpa %s7129, 1
    %7131 = vsyncpa [#allocation6], 1
    %7132 = vsyncpa [#allocation4], 1
    %s7133 = scalar_lea.sflag [#allocation4], 1
    %7134 = vsyncpa %s7133, 1

</llo_original>
